<compile_context>
chip_gen: v6e
topology: v6e:2x2x1
jax: 0.10.0
libtpu: 0.0.40
codegen_flags: <defaults>
</compile_context>

<pallas_src>
import functools

import jax
import jax.numpy as jnp
import numpy as np
from jax.experimental import pallas as pl
from jax.experimental.pallas import tpu as pltpu


def find_group_number(channels, min_group_channels=4, max_group_channels=32):
    for num_groups in range(channels, 0, -1):
        gc = channels // num_groups
        if channels % num_groups == 0 and min_group_channels <= gc <= max_group_channels:
            return num_groups
    return 1


# ----------------------------- Pallas kernels ------------------------------

def _per_dh_conv(xh, w, b, *, ksize, th, w_out):
    """k per-dh MXU matmuls accumulated in f32.

    xh: (th + ksize - 1, w_out, K) bf16   dw-expanded slab (K = ksize * Cin)
    w:  (ksize, K, Cout) bf16             per-dh weight slabs
    b:  (1, Cout) f32
    returns (th * w_out, Cout) f32
    """
    kdim = xh.shape[-1]
    acc = None
    for dh in range(ksize):
        p = xh[dh:dh + th].reshape(th * w_out, kdim)
        d = jnp.dot(p, w[dh], preferred_element_type=jnp.float32)
        acc = d if acc is None else acc + d
    return acc + b


def _accumulate_stats(stats_ref, yf, *, t, row0, w_out, valid_h):
    """Masked per-channel [sum, sum_sq] accumulated into a resident (1, 2, C) block.

    Rows beyond the valid image (row padding introduced for tiling) are excluded.
    """
    pidx = jax.lax.broadcasted_iota(jnp.int32, (yf.shape[0], 1), 0)
    ym = jnp.where(pidx < (valid_h - row0) * w_out, yf, 0.0)
    contrib = jnp.concatenate([jnp.sum(ym, axis=0, keepdims=True),
                               jnp.sum(ym * ym, axis=0, keepdims=True)], axis=0)  # (2, C)

    @pl.when(t == 0)
    def _():
        stats_ref[...] = jnp.zeros_like(stats_ref)

    stats_ref[...] += contrib[None]


def _conv_stage1_kernel(x_ref, w_ref, b_ref, y_ref, stats_ref,
                        *, ksize, th, w_out, valid_h):
    """Stage 1: input is already horizontally im2col'ed (lane dim = ksize*Cin), so this
    kernel only does per-dh row slices + matmuls, then GroupNorm pass-1 stats."""
    t = pl.program_id(1)
    row0 = pl.multiple_of(t * th, 8) if th % 8 == 0 else t * th
    xh = x_ref[0, pl.ds(row0, th + ksize - 1), :, :]                  # (th+halo, W, k*Cin)
    y = _per_dh_conv(xh, w_ref[...], b_ref[...], ksize=ksize, th=th, w_out=w_out)
    yb = y.astype(y_ref.dtype)
    # Stats on the bf16-rounded values (what stage 2 actually normalizes).
    _accumulate_stats(stats_ref, yb.astype(jnp.float32), t=t, row0=row0,
                      w_out=w_out, valid_h=valid_h)
    y_ref[0] = yb.reshape(th, w_out, yb.shape[-1])


def _gn_conv_gn_stats_kernel(x_ref, scale_ref, shift_ref, w_ref, b_ref, y_ref, stats_ref,
                             *, ksize, th, w_out, valid_h, slope_in):
    """Fused: previous-GN apply + LeakyReLU -> one k-wide dw expansion -> k per-dh MXU
    matmuls (f32 accum) -> raw conv tile + per-channel stats for the next GroupNorm."""
    t = pl.program_id(1)
    row0 = pl.multiple_of(t * th, 8) if th % 8 == 0 else t * th
    xin = x_ref[0, pl.ds(row0, th + ksize - 1), :, :].astype(jnp.float32)
    xn = xin * scale_ref[...] + shift_ref[...]
    xn = jnp.where(xn >= 0, xn, slope_in * xn).astype(jnp.bfloat16)
    # Horizontal (dw) expansion once per grid step; per-dh row slices feed the MXU.
    xh = jnp.concatenate([xn[:, dw:dw + w_out, :] for dw in range(ksize)], axis=-1)
    y = _per_dh_conv(xh, w_ref[...], b_ref[...], ksize=ksize, th=th, w_out=w_out)
    yb = y.astype(y_ref.dtype)
    _accumulate_stats(stats_ref, yb.astype(jnp.float32), t=t, row0=row0,
                      w_out=w_out, valid_h=valid_h)
    y_ref[0] = yb.reshape(th, w_out, yb.shape[-1])


def _gn_conv_tanh_kernel(x_ref, scale_ref, shift_ref, w_ref, b_ref, o_ref,
                         *, ksize, th, w_out, slope_in):
    """Fused: previous-GN apply + LeakyReLU -> dw expansion -> per-dh matmuls -> tanh."""
    t = pl.program_id(1)
    row0 = pl.multiple_of(t * th, 8) if th % 8 == 0 else t * th
    xin = x_ref[0, pl.ds(row0, th + ksize - 1), :, :].astype(jnp.float32)
    xn = xin * scale_ref[...] + shift_ref[...]
    xn = jnp.where(xn >= 0, xn, slope_in * xn).astype(jnp.bfloat16)
    xh = jnp.concatenate([xn[:, dw:dw + w_out, :] for dw in range(ksize)], axis=-1)
    y = _per_dh_conv(xh, w_ref[...], b_ref[...], ksize=ksize, th=th, w_out=w_out)
    # TODO(synk): cout=3 makes this a 3/128-lane masked store; emitting an NCHW
    # (1, cout, th, W) block directly needs a minor-dim transpose/reshape that current
    # Mosaic relayout support does not guarantee -- revisit when lane-splitting reshapes
    # are safe, and drop the wrapper-side transpose with it.
    o_ref[0] = jnp.tanh(y).reshape(th, w_out, y.shape[-1]).astype(o_ref.dtype)


# ------------------------- pallas_call wrappers -----------------------------

def conv_stage1(x, w, b, *, ksize, th, steps, w_out, valid_h, vmem_limit):
    n, hx, wx, kc = x.shape
    kk, kdim, cout = w.shape
    assert kk == ksize and kdim == kc and wx == w_out
    assert steps * th + ksize - 1 <= hx          # last tile's halo stays in-bounds

    kern = functools.partial(_conv_stage1_kernel, ksize=ksize, th=th, w_out=w_out,
                             valid_h=valid_h)
    p_total = n * steps * th * w_out
    cost = pl.CostEstimate(
        flops=int(2 * p_total * ksize * kdim * cout), transcendentals=0,
        bytes_accessed=int(x.size * 2 + w.size * 2 + p_total * cout * 2 + n * 2 * cout * 4))
    return pl.pallas_call(
        kern,
        out_shape=(jax.ShapeDtypeStruct((n, steps * th, w_out, cout), jnp.bfloat16),
                   jax.ShapeDtypeStruct((n, 2, cout), jnp.float32)),
        grid=(n, steps),
        in_specs=[
            # TODO(synk): per-sample resident map (double-buffered by default). At large
            # H*W switch to memory_space=pl.ANY + manual (th+halo)-row slab DMA (P4)
            # and/or pl.Buffered(1) so VMEM stops scaling with H.
            pl.BlockSpec((1, hx, wx, kc), lambda i, j: (i, 0, 0, 0)),
            pl.BlockSpec((ksize, kdim, cout), lambda i, j: (0, 0, 0)),
            pl.BlockSpec((1, cout), lambda i, j: (0, 0)),
        ],
        out_specs=(
            pl.BlockSpec((1, th, w_out, cout), lambda i, j: (i, j, 0, 0)),
            pl.BlockSpec((1, 2, cout), lambda i, j: (i, 0, 0)),   # resident accumulator
        ),
        compiler_params=pltpu.CompilerParams(
            dimension_semantics=("parallel", "arbitrary"),
            vmem_limit_bytes=vmem_limit),
        cost_estimate=cost,
    )(x, w, b)


def conv_gn_stats(x, scale, shift, w, b, *, ksize, th, steps, w_out, valid_h, slope_in,
                  vmem_limit):
    n, hx, wx, cin = x.shape
    kk, kdim, cout = w.shape
    assert kk == ksize and kdim == ksize * cin
    assert steps * th + ksize - 1 <= hx

    kern = functools.partial(_gn_conv_gn_stats_kernel, ksize=ksize, th=th, w_out=w_out,
                             valid_h=valid_h, slope_in=slope_in)
    p_total = n * steps * th * w_out
    cost = pl.CostEstimate(
        flops=int(2 * p_total * ksize * kdim * cout), transcendentals=0,
        bytes_accessed=int(x.size * 2 + w.size * 2 + p_total * cout * 2 + n * 2 * cout * 4))
    return pl.pallas_call(
        kern,
        out_shape=(jax.ShapeDtypeStruct((n, steps * th, w_out, cout), jnp.bfloat16),
                   jax.ShapeDtypeStruct((n, 2, cout), jnp.float32)),
        grid=(n, steps),
        in_specs=[
            pl.BlockSpec((1, hx, wx, cin), lambda i, j: (i, 0, 0, 0)),
            pl.BlockSpec((1, 1, cin), lambda i, j: (i, 0, 0)),
            pl.BlockSpec((1, 1, cin), lambda i, j: (i, 0, 0)),
            pl.BlockSpec((ksize, kdim, cout), lambda i, j: (0, 0, 0)),
            pl.BlockSpec((1, cout), lambda i, j: (0, 0)),
        ],
        out_specs=(
            pl.BlockSpec((1, th, w_out, cout), lambda i, j: (i, j, 0, 0)),
            pl.BlockSpec((1, 2, cout), lambda i, j: (i, 0, 0)),
        ),
        # TODO(synk): on v7x (2 TCs) a batch of 1 idles a core here because the row axis
        # is "arbitrary"; split it into 2 parallel halves emitting partial stats.
        compiler_params=pltpu.CompilerParams(
            dimension_semantics=("parallel", "arbitrary"),
            vmem_limit_bytes=vmem_limit),
        cost_estimate=cost,
    )(x, scale, shift, w, b)


def conv_tanh(x, scale, shift, w, b, *, ksize, th, steps, w_out, slope_in, vmem_limit):
    n, hx, wx, cin = x.shape
    kk, kdim, cout = w.shape
    assert kk == ksize and kdim == ksize * cin
    assert steps * th + ksize - 1 <= hx

    kern = functools.partial(_gn_conv_tanh_kernel, ksize=ksize, th=th, w_out=w_out,
                             slope_in=slope_in)
    p_total = n * steps * th * w_out
    cost = pl.CostEstimate(
        flops=int(2 * p_total * ksize * kdim * cout),
        transcendentals=int(p_total * cout),
        bytes_accessed=int(x.size * 2 + w.size * 2 + p_total * cout * 4))
    return pl.pallas_call(
        kern,
        out_shape=jax.ShapeDtypeStruct((n, steps * th, w_out, cout), jnp.float32),
        grid=(n, steps),
        in_specs=[
            pl.BlockSpec((1, hx, wx, cin), lambda i, j: (i, 0, 0, 0)),
            pl.BlockSpec((1, 1, cin), lambda i, j: (i, 0, 0)),
            pl.BlockSpec((1, 1, cin), lambda i, j: (i, 0, 0)),
            pl.BlockSpec((ksize, kdim, cout), lambda i, j: (0, 0, 0)),
            pl.BlockSpec((1, cout), lambda i, j: (0, 0)),
        ],
        out_specs=pl.BlockSpec((1, th, w_out, cout), lambda i, j: (i, j, 0, 0)),
        compiler_params=pltpu.CompilerParams(
            dimension_semantics=("parallel", "parallel"),
            vmem_limit_bytes=vmem_limit),
        cost_estimate=cost,
    )(x, scale, shift, w, b)


# ---------------------- VMEM budgeting & row tiling --------------------------

def _rup(x, m):
    return -(-x // m) * m


def _vmem_budget():
    """(vmem_limit_bytes for the compiler, per-step working-set budget for tile sizing)."""
    try:
        cap = int(pltpu.get_tpu_info().vmem_capacity_bytes)
    except Exception:
        cap = 128 << 20
    if cap <= (64 << 20):
        # v7x: 64 MiB / TensorCore -- leave headroom for Mosaic scratch and semaphores
        # instead of requesting 100% of physical VMEM.
        return 52 << 20, 40 << 20
    # v5e / v6e: 128 MiB -- use most of it (the previous hard 64 MiB cap wasted half).
    return 100 << 20, 84 << 20


def _stage_vmem_bytes(th, *, need, wx, in_lanes, ksize, kdim, cout, out_itemsize):
    """Rough (8,128)-padded VMEM working set for one grid step of a stage."""
    halo = ksize - 1
    hx = need + halo + 64                 # resident rows incl. upstream padding slack
    rows = th + halo
    wq = _rup(wx, 8)
    b = 2 * hx * wq * _rup(in_lanes, 128) * 2             # resident input map (x2 buffers)
    b += 2 * ksize * _rup(kdim, 8) * _rup(cout, 128) * 2  # resident weights (x2 buffers)
    b += 2 * th * wq * _rup(cout, 128) * out_itemsize     # output block (x2 buffers)
    b += rows * wq * _rup(in_lanes, 128) * 8               # slab: bf16 load + f32 GN + bf16
    b += 2 * rows * wq * _rup(kdim, 128) * 2               # dw-expanded slab (+ copy slack)
    b += _rup(th * wx, 8) * _rup(kdim, 128) * 2            # per-dh patch matrix
    b += 3 * _rup(th * wx, 8) * _rup(cout, 128) * 4        # f32 accumulator / dot / stats
    return b


def _choose_rows(need, *, budget, wx, in_lanes, ksize, kdim, cout, out_itemsize):
    """Pick (rows per grid step, steps, padded rows) from the real working set."""
    est = functools.partial(_stage_vmem_bytes, need=need, wx=wx, in_lanes=in_lanes,
                            ksize=ksize, kdim=kdim, cout=cout, out_itemsize=out_itemsize)
    if est(need) <= budget:
        return need, 1, need                              # whole image in one step
    th = min(256, _rup(need, 8))
    while th > 8 and est(th) > budget:
        th -= 8
    th = max(th, 8)
    steps = -(-need // th)
    th = max(8, _rup(-(-need // steps), 8))               # minimize padded rows downstream
    steps = -(-need // th)
    return th, steps, th * steps


# ------------------------------- JAX glue -----------------------------------

def _finalize_gn(stats, gamma, beta, *, count, num_groups, eps=1e-5):
    """stats (N, 2, C) per-channel [sum, sum_sq] -> per-channel (scale, shift), (N, 1, C).

    Biased variance via E[x^2] - E[x]^2 in f32 (matches torch.nn.GroupNorm).
    TODO(synk): switch to mean-subtracted moment accumulation if spatial sizes grow
    enough for cancellation to matter.
    """
    n, _, c = stats.shape
    gsz = c // num_groups
    s = stats[:, 0, :].reshape(n, num_groups, gsz).sum(axis=2)
    ss = stats[:, 1, :].reshape(n, num_groups, gsz).sum(axis=2)
    mean = s / count
    var = ss / count - mean * mean
    inv = jax.lax.rsqrt(var + eps)
    mean_c = jnp.repeat(mean, gsz, axis=1)
    inv_c = jnp.repeat(inv, gsz, axis=1)
    scale = gamma[None, :] * inv_c
    shift = beta[None, :] - mean_c * scale
    return scale[:, None, :].astype(jnp.float32), shift[:, None, :].astype(jnp.float32)


def init_params(key, in_channels, out_channels):
    c2 = 2 * in_channels
    ks = jax.random.split(key, 14)
    rn = lambda k, s, sc=0.1: sc * jax.random.normal(k, s, dtype=jnp.float32)
    return {
        'w1': rn(ks[0], (1, 1, c2, 16)), 'b1': rn(ks[1], (16,)),
        'w3': rn(ks[2], (3, 3, c2, 16)), 'b3': rn(ks[3], (16,)),
        'w5': rn(ks[4], (5, 5, c2, 16)), 'b5': rn(ks[5], (16,)),
        'g1': 1.0 + rn(ks[6], (48,)), 'bt1': rn(ks[7], (48,)),
        'w2': rn(ks[8], (3, 3, 48, 64)), 'b2': rn(ks[9], (64,)),
        'g2': 1.0 + rn(ks[10], (64,)), 'bt2': rn(ks[11], (64,)),
        'wo': rn(ks[12], (3, 3, 64, out_channels)), 'bo': rn(ks[13], (out_channels,)),
    }


def noise_estimator_forward(params, image_noise, reference_image):
    """image_noise / reference_image: NCHW float32 (as in the PyTorch module)."""
    # TODO(synk): fold this concat/transpose/pad/cast prep into the stage-1 kernel to
    # drop the extra XLA passes over the (small, 8-channel) input.
    x = jnp.concatenate([image_noise, reference_image], axis=1)       # (N, 2Cin, H, W)
    x = jnp.transpose(x, (0, 2, 3, 1)).astype(jnp.float32)            # NHWC
    n, h, w, c2 = x.shape
    h2, w2 = h - 2, w - 2
    h3, w3 = h - 4, w - 4
    g1, g2 = find_group_number(48), find_group_number(64)
    cout = params['wo'].shape[-1]
    vmem_limit, budget = _vmem_budget()

    # Row tiling per stage (later stages first): each earlier stage allocates enough rows
    # that the later stage's last halo read stays inside its allocation (asserted in the
    # pallas_call wrappers).
    th3, t3, h3p = _choose_rows(h3, budget=budget, wx=w2, in_lanes=64, ksize=3,
                                kdim=192, cout=cout, out_itemsize=4)
    th2, t2, h2p = _choose_rows(max(h2, h3p + 2), budget=budget, wx=w, in_lanes=48,
                                ksize=3, kdim=144, cout=64, out_itemsize=2)
    th1, t1, h1p = _choose_rows(max(h, h2p + 2), budget=budget, wx=w, in_lanes=5 * c2,
                                ksize=5, kdim=5 * c2, cout=48, out_itemsize=2)

    # ---- stage 1: conv1x1 / conv3x3(p=1) / conv5x5(p=2) fused into one 5x5 conv (1x1
    # and 3x3 weights zero-embedded in the 5x5 window) + GroupNorm(12, 48) stats.
    # Horizontal (dw) im2col happens once here on the tiny 8-channel input, so the
    # resident map is 40 lanes wide and the kernel does no dw slicing / lane concat.
    xpad = jnp.pad(x, ((0, 0), (2, 2 + (h1p - h)), (2, 2), (0, 0)))
    xh = jnp.concatenate([xpad[:, :, dw:dw + w, :] for dw in range(5)],
                         axis=-1).astype(jnp.bfloat16)                # (N, h1p+4, W, 40)

    w_comb = jnp.zeros((5, 5, c2, 48), jnp.float32)
    w_comb = w_comb.at[2, 2, :, 0:16].set(params['w1'][0, 0])
    w_comb = w_comb.at[1:4, 1:4, :, 16:32].set(params['w3'])
    w_comb = w_comb.at[:, :, :, 32:48].set(params['w5'])
    w1c = w_comb.reshape(5, 5 * c2, 48).astype(jnp.bfloat16)
    b1c = jnp.concatenate([params['b1'], params['b3'], params['b5']]).reshape(1, 48)

    y1, stats1 = conv_stage1(xh, w1c, b1c, ksize=5, th=th1, steps=t1, w_out=w,
                             valid_h=h, vmem_limit=vmem_limit)
    scale1, shift1 = _finalize_gn(stats1, params['g1'], params['bt1'],
                                  count=h * w * (48 // g1), num_groups=g1)

    # ---- stage 2: GN1-apply + LeakyReLU + conv2 (3x3 VALID) + GroupNorm(16, 64) stats.
    y2, stats2 = conv_gn_stats(y1, scale1, shift1,
                               params['w2'].reshape(3, 3 * 48, 64).astype(jnp.bfloat16),
                               params['b2'].reshape(1, 64),
                               ksize=3, th=th2, steps=t2, w_out=w2, valid_h=h2,
                               slope_in=0.01, vmem_limit=vmem_limit)
    scale2, shift2 = _finalize_gn(stats2, params['g2'], params['bt2'],
                                  count=h2 * w2 * (64 // g2), num_groups=g2)

    # ---- stage 3: GN2-apply + LeakyReLU + conv3 (3x3 VALID) + tanh.
    y3 = conv_tanh(y2, scale2, shift2,
                   params['wo'].reshape(3, 3 * 64, cout).astype(jnp.bfloat16),
                   params['bo'].reshape(1, cout),
                   ksize=3, th=th3, steps=t3, w_out=w3, slope_in=0.01,
                   vmem_limit=vmem_limit)
    if h3p > h3:
        y3 = y3[:, :h3]                                               # drop row padding
    return jnp.transpose(y3, (0, 3, 1, 2))                            # back to NCHW


# ----------------------- pure-JAX reference (check) -------------------------

def _ref_group_norm(x, num_groups, gamma, beta, eps=1e-5):
    n, h, w, c = x.shape
    gsz = c // num_groups
    xg = x.reshape(n, h, w, num_groups, gsz)
    mean = jnp.mean(xg, axis=(1, 2, 4), keepdims=True)
    var = jnp.mean((xg - mean) ** 2, axis=(1, 2, 4), keepdims=True)
    xn = (xg - mean) / jnp.sqrt(var + eps)
    return xn.reshape(n, h, w, c) * gamma + beta


def _ref_forward(params, image_noise, reference_image):
    dn = ('NHWC', 'HWIO', 'NHWC')

    def conv(x, w, b, pad):   # same precision policy as the kernels: bf16 in, f32 accum
        y = jax.lax.conv_general_dilated(
            x.astype(jnp.bfloat16), w.astype(jnp.bfloat16), (1, 1), pad,
            dimension_numbers=dn, preferred_element_type=jnp.float32)
        return y + b

    lrelu = lambda v: jnp.where(v >= 0, v, 0.01 * v)
    x = jnp.concatenate([image_noise, reference_image], axis=1)
    x = jnp.transpose(x, (0, 2, 3, 1))
    x1 = conv(x, params['w1'], params['b1'], 'VALID')
    x2 = conv(x, params['w3'], params['b3'], [(1, 1), (1, 1)])
    x3 = conv(x, params['w5'], params['b5'], [(2, 2), (2, 2)])
    y = lrelu(_ref_group_norm(jnp.concatenate([x1, x2, x3], axis=-1),
                              find_group_number(48), params['g1'], params['bt1']))
    y = lrelu(_ref_group_norm(conv(y, params['w2'], params['b2'], 'VALID'),
                              find_group_number(64), params['g2'], params['bt2']))
    y = jnp.tanh(conv(y, params['wo'], params['bo'], 'VALID'))
    return jnp.transpose(y, (0, 3, 1, 2))


if __name__ == "__main__":
    key = jax.random.PRNGKey(0)
    in_channels, out_channels = 4, 3
    n, h, w = 2, 16, 16
    k_noise, k_ref, k_par = jax.random.split(key, 3)
    image_noise = jax.random.normal(k_noise, (n, in_channels, h, w), jnp.float32)
    reference_image = jax.random.normal(k_ref, (n, in_channels, h, w), jnp.float32)
    params = init_params(k_par, in_channels, out_channels)

    fwd = jax.jit(noise_estimator_forward)
    out = jax.block_until_ready(fwd(params, image_noise, reference_image))
    assert out.shape == (n, out_channels, h - 4, w - 4), out.shape

    ref = jax.block_until_ready(_ref_forward(params, image_noise, reference_image))
    out_np, ref_np = np.asarray(out), np.asarray(ref)
    np.testing.assert_allclose(out_np, ref_np, atol=1e-1, rtol=0)   # bf16 MXU inputs
    assert float(np.abs(out_np - ref_np).mean()) < 2e-2

    print("KERNEL_OK")
</pallas_src>

<mosaic_0001>
module attributes {stable_mosaic.version = 11 : i64} {
  func.func @_conv_stage1_kernel(%arg0: i32, %arg1: i32, %arg2: memref<1x20x16x40xbf16, #tpu.memory_space<vmem>>, %arg3: memref<5x40x48xbf16, #tpu.memory_space<vmem>>, %arg4: memref<1x48xf32, #tpu.memory_space<vmem>>, %arg5: memref<1x16x16x48xbf16, #tpu.memory_space<vmem>>, %arg6: memref<1x2x48xf32, #tpu.memory_space<vmem>>) attributes {dimension_semantics = [#tpu.dimension_semantics<parallel>, #tpu.dimension_semantics<arbitrary>], iteration_bounds = array<i64: 2, 1>, scalar_prefetch = 0 : i64, scratch_operands = 0 : i64, tpu.core_type = #tpu.core_type<tc>, window_params = [{transform_indices = @transform_0, window_bounds = array<i64: 1, 20, 16, 40>}, {pipeline_mode = #tpu.pipeline_mode<synchronous>, transform_indices = @transform_1, window_bounds = array<i64: 5, 40, 48>}, {pipeline_mode = #tpu.pipeline_mode<synchronous>, transform_indices = @transform_2, window_bounds = array<i64: 1, 48>}, {transform_indices = @transform_3, window_bounds = array<i64: 1, 16, 16, 48>}, {transform_indices = @transform_4, window_bounds = array<i64: 1, 2, 48>}]} {
    %c16_i32 = arith.constant 16 : i32
    %0 = arith.muli %arg1, %c16_i32 : i32
    %1 = tpu.assume_multiple %0, 8 : i32
    %c0 = arith.constant 0 : index
    %2 = arith.index_cast %1 : i32 to index
    %c0_0 = arith.constant 0 : index
    %c0_1 = arith.constant 0 : index
    %3 = vector.load %arg2[%c0, %2, %c0_0, %c0_1] : memref<1x20x16x40xbf16, #tpu.memory_space<vmem>>, vector<1x20x16x40xbf16>
    %4 = vector.shape_cast %3 : vector<1x20x16x40xbf16> to vector<20x16x40xbf16>
    %c0_2 = arith.constant 0 : index
    %c0_3 = arith.constant 0 : index
    %c0_4 = arith.constant 0 : index
    %5 = vector.load %arg3[%c0_2, %c0_3, %c0_4] : memref<5x40x48xbf16, #tpu.memory_space<vmem>>, vector<5x40x48xbf16>
    %c0_5 = arith.constant 0 : index
    %c0_6 = arith.constant 0 : index
    %6 = vector.load %arg4[%c0_5, %c0_6] : memref<1x48xf32, #tpu.memory_space<vmem>>, vector<1x48xf32>
    %7 = vector.extract_strided_slice %4 {offsets = [0, 0, 0], sizes = [16, 16, 40], strides = [1, 1, 1]} : vector<20x16x40xbf16> to vector<16x16x40xbf16>
    %8 = vector.shape_cast %7 : vector<16x16x40xbf16> to vector<256x40xbf16>
    %9 = vector.extract_strided_slice %5 {offsets = [0, 0, 0], sizes = [1, 40, 48], strides = [1, 1, 1]} : vector<5x40x48xbf16> to vector<1x40x48xbf16>
    %10 = vector.shape_cast %9 : vector<1x40x48xbf16> to vector<40x48xbf16>
    %cst = arith.constant dense<0.000000e+00> : vector<256x48xf32>
    %11 = tpu.matmul %8, %10, %cst {dimension_numbers = #tpu.dot_dimension_numbers<[1], [0], [0], [1], [0, 0, 1, 1], [], []>} : vector<256x40xbf16>, vector<40x48xbf16>, vector<256x48xf32> -> vector<256x48xf32>
    %12 = vector.extract_strided_slice %4 {offsets = [1, 0, 0], sizes = [16, 16, 40], strides = [1, 1, 1]} : vector<20x16x40xbf16> to vector<16x16x40xbf16>
    %13 = vector.shape_cast %12 : vector<16x16x40xbf16> to vector<256x40xbf16>
    %14 = vector.extract_strided_slice %5 {offsets = [1, 0, 0], sizes = [1, 40, 48], strides = [1, 1, 1]} : vector<5x40x48xbf16> to vector<1x40x48xbf16>
    %15 = vector.shape_cast %14 : vector<1x40x48xbf16> to vector<40x48xbf16>
    %cst_7 = arith.constant dense<0.000000e+00> : vector<256x48xf32>
    %16 = tpu.matmul %13, %15, %cst_7 {dimension_numbers = #tpu.dot_dimension_numbers<[1], [0], [0], [1], [0, 0, 1, 1], [], []>} : vector<256x40xbf16>, vector<40x48xbf16>, vector<256x48xf32> -> vector<256x48xf32>
    %17 = arith.addf %11, %16 : vector<256x48xf32>
    %18 = vector.extract_strided_slice %4 {offsets = [2, 0, 0], sizes = [16, 16, 40], strides = [1, 1, 1]} : vector<20x16x40xbf16> to vector<16x16x40xbf16>
    %19 = vector.shape_cast %18 : vector<16x16x40xbf16> to vector<256x40xbf16>
    %20 = vector.extract_strided_slice %5 {offsets = [2, 0, 0], sizes = [1, 40, 48], strides = [1, 1, 1]} : vector<5x40x48xbf16> to vector<1x40x48xbf16>
    %21 = vector.shape_cast %20 : vector<1x40x48xbf16> to vector<40x48xbf16>
    %cst_8 = arith.constant dense<0.000000e+00> : vector<256x48xf32>
    %22 = tpu.matmul %19, %21, %cst_8 {dimension_numbers = #tpu.dot_dimension_numbers<[1], [0], [0], [1], [0, 0, 1, 1], [], []>} : vector<256x40xbf16>, vector<40x48xbf16>, vector<256x48xf32> -> vector<256x48xf32>
    %23 = arith.addf %17, %22 : vector<256x48xf32>
    %24 = vector.extract_strided_slice %4 {offsets = [3, 0, 0], sizes = [16, 16, 40], strides = [1, 1, 1]} : vector<20x16x40xbf16> to vector<16x16x40xbf16>
    %25 = vector.shape_cast %24 : vector<16x16x40xbf16> to vector<256x40xbf16>
    %26 = vector.extract_strided_slice %5 {offsets = [3, 0, 0], sizes = [1, 40, 48], strides = [1, 1, 1]} : vector<5x40x48xbf16> to vector<1x40x48xbf16>
    %27 = vector.shape_cast %26 : vector<1x40x48xbf16> to vector<40x48xbf16>
    %cst_9 = arith.constant dense<0.000000e+00> : vector<256x48xf32>
    %28 = tpu.matmul %25, %27, %cst_9 {dimension_numbers = #tpu.dot_dimension_numbers<[1], [0], [0], [1], [0, 0, 1, 1], [], []>} : vector<256x40xbf16>, vector<40x48xbf16>, vector<256x48xf32> -> vector<256x48xf32>
    %29 = arith.addf %23, %28 : vector<256x48xf32>
    %30 = vector.extract_strided_slice %4 {offsets = [4, 0, 0], sizes = [16, 16, 40], strides = [1, 1, 1]} : vector<20x16x40xbf16> to vector<16x16x40xbf16>
    %31 = vector.shape_cast %30 : vector<16x16x40xbf16> to vector<256x40xbf16>
    %32 = vector.extract_strided_slice %5 {offsets = [4, 0, 0], sizes = [1, 40, 48], strides = [1, 1, 1]} : vector<5x40x48xbf16> to vector<1x40x48xbf16>
    %33 = vector.shape_cast %32 : vector<1x40x48xbf16> to vector<40x48xbf16>
    %cst_10 = arith.constant dense<0.000000e+00> : vector<256x48xf32>
    %34 = tpu.matmul %31, %33, %cst_10 {dimension_numbers = #tpu.dot_dimension_numbers<[1], [0], [0], [1], [0, 0, 1, 1], [], []>} : vector<256x40xbf16>, vector<40x48xbf16>, vector<256x48xf32> -> vector<256x48xf32>
    %35 = arith.addf %29, %34 : vector<256x48xf32>
    %36 = vector.broadcast %6 : vector<1x48xf32> to vector<256x48xf32>
    %37 = arith.addf %35, %36 : vector<256x48xf32>
    %38 = arith.truncf %37 : vector<256x48xf32> to vector<256x48xbf16>
    %39 = arith.extf %38 : vector<256x48xbf16> to vector<256x48xf32>
    %40 = tpu.iota {dimensions = array<i32: 0>} : vector<256x1xi32>
    %c16_i32_11 = arith.constant 16 : i32
    %41 = arith.subi %c16_i32_11, %1 : i32
    %c16_i32_12 = arith.constant 16 : i32
    %42 = arith.muli %41, %c16_i32_12 : i32
    %43 = vector.broadcast %42 : i32 to vector<256x1xi32>
    %44 = arith.cmpi slt, %40, %43 : vector<256x1xi32>
    %cst_13 = arith.constant 0.000000e+00 : f32
    %45 = vector.shape_cast %44 : vector<256x1xi1> to vector<256x1xi1>
    %46 = vector.broadcast %45 : vector<256x1xi1> to vector<256x48xi1>
    %47 = vector.broadcast %cst_13 : f32 to vector<256x48xf32>
    %48 = arith.select %46, %39, %47 : vector<256x48xi1>, vector<256x48xf32>
    %cst_14 = arith.constant dense<0.000000e+00> : vector<48xf32>
    %49 = vector.multi_reduction <add>, %48, %cst_14 [0] : vector<256x48xf32> to vector<48xf32>
    %50 = vector.shape_cast %49 : vector<48xf32> to vector<1x48xf32>
    %51 = arith.mulf %48, %48 : vector<256x48xf32>
    %cst_15 = arith.constant dense<0.000000e+00> : vector<48xf32>
    %52 = vector.multi_reduction <add>, %51, %cst_15 [0] : vector<256x48xf32> to vector<48xf32>
    %53 = vector.shape_cast %52 : vector<48xf32> to vector<1x48xf32>
    %54 = tpu.concatenate %50, %53 in 0 : vector<1x48xf32>, vector<1x48xf32> -> vector<2x48xf32>
    %c0_i32 = arith.constant 0 : i32
    %55 = arith.cmpi eq, %arg1, %c0_i32 : i32
    %56 = arith.extui %55 : i1 to i32
    %c0_i32_16 = arith.constant 0 : i32
    %57 = arith.cmpi ne, %56, %c0_i32_16 : i32
    scf.if %57 {
      %cst_27 = arith.constant 0.000000e+00 : f32
      %66 = vector.broadcast %cst_27 : f32 to vector<1x2x48xf32>
      %c0_28 = arith.constant 0 : index
      %c0_29 = arith.constant 0 : index
      %c0_30 = arith.constant 0 : index
      %67 = vector.load %arg6[%c0_28, %c0_29, %c0_30] : memref<1x2x48xf32, #tpu.memory_space<vmem>>, vector<1x2x48xf32>
      tpu.vector_store %arg6[%c0_28, %c0_29, %c0_30], %66 {strides = array<i32>} : memref<1x2x48xf32, #tpu.memory_space<vmem>>, vector<1x2x48xf32>,
    } else {
    }
    %c0_17 = arith.constant 0 : index
    %c0_18 = arith.constant 0 : index
    %c0_19 = arith.constant 0 : index
    %58 = vector.load %arg6[%c0_17, %c0_18, %c0_19] : memref<1x2x48xf32, #tpu.memory_space<vmem>>, vector<1x2x48xf32>
    %59 = vector.shape_cast %54 : vector<2x48xf32> to vector<1x2x48xf32>
    %60 = arith.addf %58, %59 : vector<1x2x48xf32>
    %c0_20 = arith.constant 0 : index
    %c0_21 = arith.constant 0 : index
    %c0_22 = arith.constant 0 : index
    %61 = vector.load %arg6[%c0_20, %c0_21, %c0_22] : memref<1x2x48xf32, #tpu.memory_space<vmem>>, vector<1x2x48xf32>
    tpu.vector_store %arg6[%c0_20, %c0_21, %c0_22], %60 {strides = array<i32>} : memref<1x2x48xf32, #tpu.memory_space<vmem>>, vector<1x2x48xf32>,
    %62 = vector.shape_cast %38 : vector<256x48xbf16> to vector<16x16x48xbf16>
    %c0_23 = arith.constant 0 : index
    %c0_24 = arith.constant 0 : index
    %c0_25 = arith.constant 0 : index
    %c0_26 = arith.constant 0 : index
    %63 = vector.load %arg5[%c0_23, %c0_24, %c0_25, %c0_26] : memref<1x16x16x48xbf16, #tpu.memory_space<vmem>>, vector<1x16x16x48xbf16>
    %64 = vector.shape_cast %63 : vector<1x16x16x48xbf16> to vector<16x16x48xbf16>
    %65 = vector.shape_cast %62 : vector<16x16x48xbf16> to vector<1x16x16x48xbf16>
    tpu.vector_store %arg5[%c0_23, %c0_24, %c0_25, %c0_26], %65 {strides = array<i32>} : memref<1x16x16x48xbf16, #tpu.memory_space<vmem>>, vector<1x16x16x48xbf16>,
    return
  }
  func.func @transform_0(%arg0: i32, %arg1: i32) -> (i32, i32, i32, i32) {
    %c0_i32 = arith.constant 0 : i32
    %c0_i32_0 = arith.constant 0 : i32
    %c0_i32_1 = arith.constant 0 : i32
    %c0_i32_2 = arith.constant 0 : i32
    return %arg0, %c0_i32, %c0_i32_0, %c0_i32_1 : i32, i32, i32, i32
  }
  func.func @transform_1(%arg0: i32, %arg1: i32) -> (i32, i32, i32) {
    %c0_i32 = arith.constant 0 : i32
    %c0_i32_0 = arith.constant 0 : i32
    %c0_i32_1 = arith.constant 0 : i32
    %c0_i32_2 = arith.constant 0 : i32
    return %c0_i32, %c0_i32_0, %c0_i32_1 : i32, i32, i32
  }
  func.func @transform_2(%arg0: i32, %arg1: i32) -> (i32, i32) {
    %c0_i32 = arith.constant 0 : i32
    %c0_i32_0 = arith.constant 0 : i32
    %c0_i32_1 = arith.constant 0 : i32
    return %c0_i32, %c0_i32_0 : i32, i32
  }
  func.func @transform_3(%arg0: i32, %arg1: i32) -> (i32, i32, i32, i32) {
    %c0_i32 = arith.constant 0 : i32
    %c0_i32_0 = arith.constant 0 : i32
    %c0_i32_1 = arith.constant 0 : i32
    return %arg0, %arg1, %c0_i32, %c0_i32_0 : i32, i32, i32, i32
  }
  func.func @transform_4(%arg0: i32, %arg1: i32) -> (i32, i32, i32) {
    %c0_i32 = arith.constant 0 : i32
    %c0_i32_0 = arith.constant 0 : i32
    %c0_i32_1 = arith.constant 0 : i32
    return %arg0, %c0_i32, %c0_i32_0 : i32, i32, i32
  }
}

module attributes {stable_mosaic.version = 11 : i64} {
  func.func @_gn_conv_gn_stats_kernel(%arg0: i32, %arg1: i32, %arg2: memref<1x16x16x48xbf16, #tpu.memory_space<vmem>>, %arg3: memref<1x1x48xf32, #tpu.memory_space<vmem>>, %arg4: memref<1x1x48xf32, #tpu.memory_space<vmem>>, %arg5: memref<3x144x64xbf16, #tpu.memory_space<vmem>>, %arg6: memref<1x64xf32, #tpu.memory_space<vmem>>, %arg7: memref<1x14x14x64xbf16, #tpu.memory_space<vmem>>, %arg8: memref<1x2x64xf32, #tpu.memory_space<vmem>>) attributes {dimension_semantics = [#tpu.dimension_semantics<parallel>, #tpu.dimension_semantics<arbitrary>], iteration_bounds = array<i64: 2, 1>, scalar_prefetch = 0 : i64, scratch_operands = 0 : i64, tpu.core_type = #tpu.core_type<tc>, window_params = [{transform_indices = @transform_0, window_bounds = array<i64: 1, 16, 16, 48>}, {transform_indices = @transform_1, window_bounds = array<i64: 1, 1, 48>}, {transform_indices = @transform_2, window_bounds = array<i64: 1, 1, 48>}, {pipeline_mode = #tpu.pipeline_mode<synchronous>, transform_indices = @transform_3, window_bounds = array<i64: 3, 144, 64>}, {pipeline_mode = #tpu.pipeline_mode<synchronous>, transform_indices = @transform_4, window_bounds = array<i64: 1, 64>}, {transform_indices = @transform_5, window_bounds = array<i64: 1, 14, 14, 64>}, {transform_indices = @transform_6, window_bounds = array<i64: 1, 2, 64>}]} {
    %c14_i32 = arith.constant 14 : i32
    %0 = arith.muli %arg1, %c14_i32 : i32
    %c0 = arith.constant 0 : index
    %1 = arith.index_cast %0 : i32 to index
    %c0_0 = arith.constant 0 : index
    %c0_1 = arith.constant 0 : index
    %2 = vector.load %arg2[%c0, %1, %c0_0, %c0_1] : memref<1x16x16x48xbf16, #tpu.memory_space<vmem>>, vector<1x16x16x48xbf16>
    %3 = vector.shape_cast %2 : vector<1x16x16x48xbf16> to vector<16x16x48xbf16>
    %4 = arith.extf %3 : vector<16x16x48xbf16> to vector<16x16x48xf32>
    %c0_2 = arith.constant 0 : index
    %c0_3 = arith.constant 0 : index
    %c0_4 = arith.constant 0 : index
    %5 = vector.load %arg3[%c0_2, %c0_3, %c0_4] : memref<1x1x48xf32, #tpu.memory_space<vmem>>, vector<1x1x48xf32>
    %6 = vector.broadcast %5 : vector<1x1x48xf32> to vector<16x16x48xf32>
    %7 = arith.mulf %4, %6 : vector<16x16x48xf32>
    %c0_5 = arith.constant 0 : index
    %c0_6 = arith.constant 0 : index
    %c0_7 = arith.constant 0 : index
    %8 = vector.load %arg4[%c0_5, %c0_6, %c0_7] : memref<1x1x48xf32, #tpu.memory_space<vmem>>, vector<1x1x48xf32>
    %9 = vector.broadcast %8 : vector<1x1x48xf32> to vector<16x16x48xf32>
    %10 = arith.addf %7, %9 : vector<16x16x48xf32>
    %cst = arith.constant 0.000000e+00 : f32
    %11 = vector.broadcast %cst : f32 to vector<16x16x48xf32>
    %12 = arith.cmpf oge, %10, %11 : vector<16x16x48xf32>
    %cst_8 = arith.constant 0.00999999977 : f32
    %13 = vector.broadcast %cst_8 : f32 to vector<16x16x48xf32>
    %14 = arith.mulf %13, %10 : vector<16x16x48xf32>
    %15 = arith.select %12, %10, %14 : vector<16x16x48xi1>, vector<16x16x48xf32>
    %16 = arith.truncf %15 : vector<16x16x48xf32> to vector<16x16x48xbf16>
    %17 = vector.extract_strided_slice %16 {offsets = [0, 0, 0], sizes = [16, 14, 48], strides = [1, 1, 1]} : vector<16x16x48xbf16> to vector<16x14x48xbf16>
    %18 = vector.extract_strided_slice %16 {offsets = [0, 1, 0], sizes = [16, 14, 48], strides = [1, 1, 1]} : vector<16x16x48xbf16> to vector<16x14x48xbf16>
    %19 = vector.extract_strided_slice %16 {offsets = [0, 2, 0], sizes = [16, 14, 48], strides = [1, 1, 1]} : vector<16x16x48xbf16> to vector<16x14x48xbf16>
    %20 = tpu.concatenate %17, %18, %19 in 2 : vector<16x14x48xbf16>, vector<16x14x48xbf16>, vector<16x14x48xbf16> -> vector<16x14x144xbf16>
    %c0_9 = arith.constant 0 : index
    %c0_10 = arith.constant 0 : index
    %c0_11 = arith.constant 0 : index
    %21 = vector.load %arg5[%c0_9, %c0_10, %c0_11] : memref<3x144x64xbf16, #tpu.memory_space<vmem>>, vector<3x144x64xbf16>
    %c0_12 = arith.constant 0 : index
    %c0_13 = arith.constant 0 : index
    %22 = vector.load %arg6[%c0_12, %c0_13] : memref<1x64xf32, #tpu.memory_space<vmem>>, vector<1x64xf32>
    %23 = vector.extract_strided_slice %20 {offsets = [0, 0, 0], sizes = [14, 14, 144], strides = [1, 1, 1]} : vector<16x14x144xbf16> to vector<14x14x144xbf16>
    %24 = vector.shape_cast %23 : vector<14x14x144xbf16> to vector<196x144xbf16>
    %25 = vector.extract_strided_slice %21 {offsets = [0, 0, 0], sizes = [1, 144, 64], strides = [1, 1, 1]} : vector<3x144x64xbf16> to vector<1x144x64xbf16>
    %26 = vector.shape_cast %25 : vector<1x144x64xbf16> to vector<144x64xbf16>
    %cst_14 = arith.constant dense<0.000000e+00> : vector<196x64xf32>
    %27 = tpu.matmul %24, %26, %cst_14 {dimension_numbers = #tpu.dot_dimension_numbers<[1], [0], [0], [1], [0, 0, 1, 1], [], []>} : vector<196x144xbf16>, vector<144x64xbf16>, vector<196x64xf32> -> vector<196x64xf32>
    %28 = vector.extract_strided_slice %20 {offsets = [1, 0, 0], sizes = [14, 14, 144], strides = [1, 1, 1]} : vector<16x14x144xbf16> to vector<14x14x144xbf16>
    %29 = vector.shape_cast %28 : vector<14x14x144xbf16> to vector<196x144xbf16>
    %30 = vector.extract_strided_slice %21 {offsets = [1, 0, 0], sizes = [1, 144, 64], strides = [1, 1, 1]} : vector<3x144x64xbf16> to vector<1x144x64xbf16>
    %31 = vector.shape_cast %30 : vector<1x144x64xbf16> to vector<144x64xbf16>
    %cst_15 = arith.constant dense<0.000000e+00> : vector<196x64xf32>
    %32 = tpu.matmul %29, %31, %cst_15 {dimension_numbers = #tpu.dot_dimension_numbers<[1], [0], [0], [1], [0, 0, 1, 1], [], []>} : vector<196x144xbf16>, vector<144x64xbf16>, vector<196x64xf32> -> vector<196x64xf32>
    %33 = arith.addf %27, %32 : vector<196x64xf32>
    %34 = vector.extract_strided_slice %20 {offsets = [2, 0, 0], sizes = [14, 14, 144], strides = [1, 1, 1]} : vector<16x14x144xbf16> to vector<14x14x144xbf16>
    %35 = vector.shape_cast %34 : vector<14x14x144xbf16> to vector<196x144xbf16>
    %36 = vector.extract_strided_slice %21 {offsets = [2, 0, 0], sizes = [1, 144, 64], strides = [1, 1, 1]} : vector<3x144x64xbf16> to vector<1x144x64xbf16>
    %37 = vector.shape_cast %36 : vector<1x144x64xbf16> to vector<144x64xbf16>
    %cst_16 = arith.constant dense<0.000000e+00> : vector<196x64xf32>
    %38 = tpu.matmul %35, %37, %cst_16 {dimension_numbers = #tpu.dot_dimension_numbers<[1], [0], [0], [1], [0, 0, 1, 1], [], []>} : vector<196x144xbf16>, vector<144x64xbf16>, vector<196x64xf32> -> vector<196x64xf32>
    %39 = arith.addf %33, %38 : vector<196x64xf32>
    %40 = vector.broadcast %22 : vector<1x64xf32> to vector<196x64xf32>
    %41 = arith.addf %39, %40 : vector<196x64xf32>
    %42 = arith.truncf %41 : vector<196x64xf32> to vector<196x64xbf16>
    %43 = arith.extf %42 : vector<196x64xbf16> to vector<196x64xf32>
    %44 = tpu.iota {dimensions = array<i32: 0>} : vector<196x1xi32>
    %c14_i32_17 = arith.constant 14 : i32
    %45 = arith.subi %c14_i32_17, %0 : i32
    %c14_i32_18 = arith.constant 14 : i32
    %46 = arith.muli %45, %c14_i32_18 : i32
    %47 = vector.broadcast %46 : i32 to vector<196x1xi32>
    %48 = arith.cmpi slt, %44, %47 : vector<196x1xi32>
    %cst_19 = arith.constant 0.000000e+00 : f32
    %49 = vector.shape_cast %48 : vector<196x1xi1> to vector<196x1xi1>
    %50 = vector.broadcast %49 : vector<196x1xi1> to vector<196x64xi1>
    %51 = vector.broadcast %cst_19 : f32 to vector<196x64xf32>
    %52 = arith.select %50, %43, %51 : vector<196x64xi1>, vector<196x64xf32>
    %cst_20 = arith.constant dense<0.000000e+00> : vector<64xf32>
    %53 = vector.multi_reduction <add>, %52, %cst_20 [0] : vector<196x64xf32> to vector<64xf32>
    %54 = vector.shape_cast %53 : vector<64xf32> to vector<1x64xf32>
    %55 = arith.mulf %52, %52 : vector<196x64xf32>
    %cst_21 = arith.constant dense<0.000000e+00> : vector<64xf32>
    %56 = vector.multi_reduction <add>, %55, %cst_21 [0] : vector<196x64xf32> to vector<64xf32>
    %57 = vector.shape_cast %56 : vector<64xf32> to vector<1x64xf32>
    %58 = tpu.concatenate %54, %57 in 0 : vector<1x64xf32>, vector<1x64xf32> -> vector<2x64xf32>
    %c0_i32 = arith.constant 0 : i32
    %59 = arith.cmpi eq, %arg1, %c0_i32 : i32
    %60 = arith.extui %59 : i1 to i32
    %c0_i32_22 = arith.constant 0 : i32
    %61 = arith.cmpi ne, %60, %c0_i32_22 : i32
    scf.if %61 {
      %cst_33 = arith.constant 0.000000e+00 : f32
      %70 = vector.broadcast %cst_33 : f32 to vector<1x2x64xf32>
      %c0_34 = arith.constant 0 : index
      %c0_35 = arith.constant 0 : index
      %c0_36 = arith.constant 0 : index
      %71 = vector.load %arg8[%c0_34, %c0_35, %c0_36] : memref<1x2x64xf32, #tpu.memory_space<vmem>>, vector<1x2x64xf32>
      tpu.vector_store %arg8[%c0_34, %c0_35, %c0_36], %70 {strides = array<i32>} : memref<1x2x64xf32, #tpu.memory_space<vmem>>, vector<1x2x64xf32>,
    } else {
    }
    %c0_23 = arith.constant 0 : index
    %c0_24 = arith.constant 0 : index
    %c0_25 = arith.constant 0 : index
    %62 = vector.load %arg8[%c0_23, %c0_24, %c0_25] : memref<1x2x64xf32, #tpu.memory_space<vmem>>, vector<1x2x64xf32>
    %63 = vector.shape_cast %58 : vector<2x64xf32> to vector<1x2x64xf32>
    %64 = arith.addf %62, %63 : vector<1x2x64xf32>
    %c0_26 = arith.constant 0 : index
    %c0_27 = arith.constant 0 : index
    %c0_28 = arith.constant 0 : index
    %65 = vector.load %arg8[%c0_26, %c0_27, %c0_28] : memref<1x2x64xf32, #tpu.memory_space<vmem>>, vector<1x2x64xf32>
    tpu.vector_store %arg8[%c0_26, %c0_27, %c0_28], %64 {strides = array<i32>} : memref<1x2x64xf32, #tpu.memory_space<vmem>>, vector<1x2x64xf32>,
    %66 = vector.shape_cast %42 : vector<196x64xbf16> to vector<14x14x64xbf16>
    %c0_29 = arith.constant 0 : index
    %c0_30 = arith.constant 0 : index
    %c0_31 = arith.constant 0 : index
    %c0_32 = arith.constant 0 : index
    %67 = vector.load %arg7[%c0_29, %c0_30, %c0_31, %c0_32] : memref<1x14x14x64xbf16, #tpu.memory_space<vmem>>, vector<1x14x14x64xbf16>
    %68 = vector.shape_cast %67 : vector<1x14x14x64xbf16> to vector<14x14x64xbf16>
    %69 = vector.shape_cast %66 : vector<14x14x64xbf16> to vector<1x14x14x64xbf16>
    tpu.vector_store %arg7[%c0_29, %c0_30, %c0_31, %c0_32], %69 {strides = array<i32>} : memref<1x14x14x64xbf16, #tpu.memory_space<vmem>>, vector<1x14x14x64xbf16>,
    return
  }
  func.func @transform_0(%arg0: i32, %arg1: i32) -> (i32, i32, i32, i32) {
    %c0_i32 = arith.constant 0 : i32
    %c0_i32_0 = arith.constant 0 : i32
    %c0_i32_1 = arith.constant 0 : i32
    %c0_i32_2 = arith.constant 0 : i32
    return %arg0, %c0_i32, %c0_i32_0, %c0_i32_1 : i32, i32, i32, i32
  }
  func.func @transform_1(%arg0: i32, %arg1: i32) -> (i32, i32, i32) {
    %c0_i32 = arith.constant 0 : i32
    %c0_i32_0 = arith.constant 0 : i32
    %c0_i32_1 = arith.constant 0 : i32
    return %arg0, %c0_i32, %c0_i32_0 : i32, i32, i32
  }
  func.func @transform_2(%arg0: i32, %arg1: i32) -> (i32, i32, i32) {
    %c0_i32 = arith.constant 0 : i32
    %c0_i32_0 = arith.constant 0 : i32
    %c0_i32_1 = arith.constant 0 : i32
    return %arg0, %c0_i32, %c0_i32_0 : i32, i32, i32
  }
  func.func @transform_3(%arg0: i32, %arg1: i32) -> (i32, i32, i32) {
    %c0_i32 = arith.constant 0 : i32
    %c0_i32_0 = arith.constant 0 : i32
    %c0_i32_1 = arith.constant 0 : i32
    %c0_i32_2 = arith.constant 0 : i32
    return %c0_i32, %c0_i32_0, %c0_i32_1 : i32, i32, i32
  }
  func.func @transform_4(%arg0: i32, %arg1: i32) -> (i32, i32) {
    %c0_i32 = arith.constant 0 : i32
    %c0_i32_0 = arith.constant 0 : i32
    %c0_i32_1 = arith.constant 0 : i32
    return %c0_i32, %c0_i32_0 : i32, i32
  }
  func.func @transform_5(%arg0: i32, %arg1: i32) -> (i32, i32, i32, i32) {
    %c0_i32 = arith.constant 0 : i32
    %c0_i32_0 = arith.constant 0 : i32
    %c0_i32_1 = arith.constant 0 : i32
    return %arg0, %arg1, %c0_i32, %c0_i32_0 : i32, i32, i32, i32
  }
  func.func @transform_6(%arg0: i32, %arg1: i32) -> (i32, i32, i32) {
    %c0_i32 = arith.constant 0 : i32
    %c0_i32_0 = arith.constant 0 : i32
    %c0_i32_1 = arith.constant 0 : i32
    return %arg0, %c0_i32, %c0_i32_0 : i32, i32, i32
  }
}

module attributes {stable_mosaic.version = 11 : i64} {
  func.func @_gn_conv_tanh_kernel(%arg0: i32, %arg1: i32, %arg2: memref<1x14x14x64xbf16, #tpu.memory_space<vmem>>, %arg3: memref<1x1x64xf32, #tpu.memory_space<vmem>>, %arg4: memref<1x1x64xf32, #tpu.memory_space<vmem>>, %arg5: memref<3x192x3xbf16, #tpu.memory_space<vmem>>, %arg6: memref<1x3xf32, #tpu.memory_space<vmem>>, %arg7: memref<1x12x12x3xf32, #tpu.memory_space<vmem>>) attributes {dimension_semantics = [#tpu.dimension_semantics<parallel>, #tpu.dimension_semantics<parallel>], iteration_bounds = array<i64: 2, 1>, scalar_prefetch = 0 : i64, scratch_operands = 0 : i64, tpu.core_type = #tpu.core_type<tc>, window_params = [{transform_indices = @transform_0, window_bounds = array<i64: 1, 14, 14, 64>}, {transform_indices = @transform_1, window_bounds = array<i64: 1, 1, 64>}, {transform_indices = @transform_2, window_bounds = array<i64: 1, 1, 64>}, {pipeline_mode = #tpu.pipeline_mode<synchronous>, transform_indices = @transform_3, window_bounds = array<i64: 3, 192, 3>}, {pipeline_mode = #tpu.pipeline_mode<synchronous>, transform_indices = @transform_4, window_bounds = array<i64: 1, 3>}, {transform_indices = @transform_5, window_bounds = array<i64: 1, 12, 12, 3>}]} {
    %c12_i32 = arith.constant 12 : i32
    %0 = arith.muli %arg1, %c12_i32 : i32
    %c0 = arith.constant 0 : index
    %1 = arith.index_cast %0 : i32 to index
    %c0_0 = arith.constant 0 : index
    %c0_1 = arith.constant 0 : index
    %2 = vector.load %arg2[%c0, %1, %c0_0, %c0_1] : memref<1x14x14x64xbf16, #tpu.memory_space<vmem>>, vector<1x14x14x64xbf16>
    %3 = vector.shape_cast %2 : vector<1x14x14x64xbf16> to vector<14x14x64xbf16>
    %4 = arith.extf %3 : vector<14x14x64xbf16> to vector<14x14x64xf32>
    %c0_2 = arith.constant 0 : index
    %c0_3 = arith.constant 0 : index
    %c0_4 = arith.constant 0 : index
    %5 = vector.load %arg3[%c0_2, %c0_3, %c0_4] : memref<1x1x64xf32, #tpu.memory_space<vmem>>, vector<1x1x64xf32>
    %6 = vector.broadcast %5 : vector<1x1x64xf32> to vector<14x14x64xf32>
    %7 = arith.mulf %4, %6 : vector<14x14x64xf32>
    %c0_5 = arith.constant 0 : index
    %c0_6 = arith.constant 0 : index
    %c0_7 = arith.constant 0 : index
    %8 = vector.load %arg4[%c0_5, %c0_6, %c0_7] : memref<1x1x64xf32, #tpu.memory_space<vmem>>, vector<1x1x64xf32>
    %9 = vector.broadcast %8 : vector<1x1x64xf32> to vector<14x14x64xf32>
    %10 = arith.addf %7, %9 : vector<14x14x64xf32>
    %cst = arith.constant 0.000000e+00 : f32
    %11 = vector.broadcast %cst : f32 to vector<14x14x64xf32>
    %12 = arith.cmpf oge, %10, %11 : vector<14x14x64xf32>
    %cst_8 = arith.constant 0.00999999977 : f32
    %13 = vector.broadcast %cst_8 : f32 to vector<14x14x64xf32>
    %14 = arith.mulf %13, %10 : vector<14x14x64xf32>
    %15 = arith.select %12, %10, %14 : vector<14x14x64xi1>, vector<14x14x64xf32>
    %16 = arith.truncf %15 : vector<14x14x64xf32> to vector<14x14x64xbf16>
    %17 = vector.extract_strided_slice %16 {offsets = [0, 0, 0], sizes = [14, 12, 64], strides = [1, 1, 1]} : vector<14x14x64xbf16> to vector<14x12x64xbf16>
    %18 = vector.extract_strided_slice %16 {offsets = [0, 1, 0], sizes = [14, 12, 64], strides = [1, 1, 1]} : vector<14x14x64xbf16> to vector<14x12x64xbf16>
    %19 = vector.extract_strided_slice %16 {offsets = [0, 2, 0], sizes = [14, 12, 64], strides = [1, 1, 1]} : vector<14x14x64xbf16> to vector<14x12x64xbf16>
    %20 = tpu.concatenate %17, %18, %19 in 2 : vector<14x12x64xbf16>, vector<14x12x64xbf16>, vector<14x12x64xbf16> -> vector<14x12x192xbf16>
    %c0_9 = arith.constant 0 : index
    %c0_10 = arith.constant 0 : index
    %c0_11 = arith.constant 0 : index
    %21 = vector.load %arg5[%c0_9, %c0_10, %c0_11] : memref<3x192x3xbf16, #tpu.memory_space<vmem>>, vector<3x192x3xbf16>
    %c0_12 = arith.constant 0 : index
    %c0_13 = arith.constant 0 : index
    %22 = vector.load %arg6[%c0_12, %c0_13] : memref<1x3xf32, #tpu.memory_space<vmem>>, vector<1x3xf32>
    %23 = vector.extract_strided_slice %20 {offsets = [0, 0, 0], sizes = [12, 12, 192], strides = [1, 1, 1]} : vector<14x12x192xbf16> to vector<12x12x192xbf16>
    %24 = vector.shape_cast %23 : vector<12x12x192xbf16> to vector<144x192xbf16>
    %25 = vector.extract_strided_slice %21 {offsets = [0, 0, 0], sizes = [1, 192, 3], strides = [1, 1, 1]} : vector<3x192x3xbf16> to vector<1x192x3xbf16>
    %26 = vector.shape_cast %25 : vector<1x192x3xbf16> to vector<192x3xbf16>
    %cst_14 = arith.constant dense<0.000000e+00> : vector<144x3xf32>
    %27 = tpu.matmul %24, %26, %cst_14 {dimension_numbers = #tpu.dot_dimension_numbers<[1], [0], [0], [1], [0, 0, 1, 1], [], []>} : vector<144x192xbf16>, vector<192x3xbf16>, vector<144x3xf32> -> vector<144x3xf32>
    %28 = vector.extract_strided_slice %20 {offsets = [1, 0, 0], sizes = [12, 12, 192], strides = [1, 1, 1]} : vector<14x12x192xbf16> to vector<12x12x192xbf16>
    %29 = vector.shape_cast %28 : vector<12x12x192xbf16> to vector<144x192xbf16>
    %30 = vector.extract_strided_slice %21 {offsets = [1, 0, 0], sizes = [1, 192, 3], strides = [1, 1, 1]} : vector<3x192x3xbf16> to vector<1x192x3xbf16>
    %31 = vector.shape_cast %30 : vector<1x192x3xbf16> to vector<192x3xbf16>
    %cst_15 = arith.constant dense<0.000000e+00> : vector<144x3xf32>
    %32 = tpu.matmul %29, %31, %cst_15 {dimension_numbers = #tpu.dot_dimension_numbers<[1], [0], [0], [1], [0, 0, 1, 1], [], []>} : vector<144x192xbf16>, vector<192x3xbf16>, vector<144x3xf32> -> vector<144x3xf32>
    %33 = arith.addf %27, %32 : vector<144x3xf32>
    %34 = vector.extract_strided_slice %20 {offsets = [2, 0, 0], sizes = [12, 12, 192], strides = [1, 1, 1]} : vector<14x12x192xbf16> to vector<12x12x192xbf16>
    %35 = vector.shape_cast %34 : vector<12x12x192xbf16> to vector<144x192xbf16>
    %36 = vector.extract_strided_slice %21 {offsets = [2, 0, 0], sizes = [1, 192, 3], strides = [1, 1, 1]} : vector<3x192x3xbf16> to vector<1x192x3xbf16>
    %37 = vector.shape_cast %36 : vector<1x192x3xbf16> to vector<192x3xbf16>
    %cst_16 = arith.constant dense<0.000000e+00> : vector<144x3xf32>
    %38 = tpu.matmul %35, %37, %cst_16 {dimension_numbers = #tpu.dot_dimension_numbers<[1], [0], [0], [1], [0, 0, 1, 1], [], []>} : vector<144x192xbf16>, vector<192x3xbf16>, vector<144x3xf32> -> vector<144x3xf32>
    %39 = arith.addf %33, %38 : vector<144x3xf32>
    %40 = vector.broadcast %22 : vector<1x3xf32> to vector<144x3xf32>
    %41 = arith.addf %39, %40 : vector<144x3xf32>
    %42 = math.tanh %41 : vector<144x3xf32>
    %43 = vector.shape_cast %42 : vector<144x3xf32> to vector<12x12x3xf32>
    %c0_17 = arith.constant 0 : index
    %c0_18 = arith.constant 0 : index
    %c0_19 = arith.constant 0 : index
    %c0_20 = arith.constant 0 : index
    %44 = vector.load %arg7[%c0_17, %c0_18, %c0_19, %c0_20] : memref<1x12x12x3xf32, #tpu.memory_space<vmem>>, vector<1x12x12x3xf32>
    %45 = vector.shape_cast %44 : vector<1x12x12x3xf32> to vector<12x12x3xf32>
    %46 = vector.shape_cast %43 : vector<12x12x3xf32> to vector<1x12x12x3xf32>
    tpu.vector_store %arg7[%c0_17, %c0_18, %c0_19, %c0_20], %46 {strides = array<i32>} : memref<1x12x12x3xf32, #tpu.memory_space<vmem>>, vector<1x12x12x3xf32>,
    return
  }
  func.func @transform_0(%arg0: i32, %arg1: i32) -> (i32, i32, i32, i32) {
    %c0_i32 = arith.constant 0 : i32
    %c0_i32_0 = arith.constant 0 : i32
    %c0_i32_1 = arith.constant 0 : i32
    %c0_i32_2 = arith.constant 0 : i32
    return %arg0, %c0_i32, %c0_i32_0, %c0_i32_1 : i32, i32, i32, i32
  }
  func.func @transform_1(%arg0: i32, %arg1: i32) -> (i32, i32, i32) {
    %c0_i32 = arith.constant 0 : i32
    %c0_i32_0 = arith.constant 0 : i32
    %c0_i32_1 = arith.constant 0 : i32
    return %arg0, %c0_i32, %c0_i32_0 : i32, i32, i32
  }
  func.func @transform_2(%arg0: i32, %arg1: i32) -> (i32, i32, i32) {
    %c0_i32 = arith.constant 0 : i32
    %c0_i32_0 = arith.constant 0 : i32
    %c0_i32_1 = arith.constant 0 : i32
    return %arg0, %c0_i32, %c0_i32_0 : i32, i32, i32
  }
  func.func @transform_3(%arg0: i32, %arg1: i32) -> (i32, i32, i32) {
    %c0_i32 = arith.constant 0 : i32
    %c0_i32_0 = arith.constant 0 : i32
    %c0_i32_1 = arith.constant 0 : i32
    %c0_i32_2 = arith.constant 0 : i32
    return %c0_i32, %c0_i32_0, %c0_i32_1 : i32, i32, i32
  }
  func.func @transform_4(%arg0: i32, %arg1: i32) -> (i32, i32) {
    %c0_i32 = arith.constant 0 : i32
    %c0_i32_0 = arith.constant 0 : i32
    %c0_i32_1 = arith.constant 0 : i32
    return %c0_i32, %c0_i32_0 : i32, i32
  }
  func.func @transform_5(%arg0: i32, %arg1: i32) -> (i32, i32, i32, i32) {
    %c0_i32 = arith.constant 0 : i32
    %c0_i32_0 = arith.constant 0 : i32
    %c0_i32_1 = arith.constant 0 : i32
    return %arg0, %arg1, %c0_i32, %c0_i32_0 : i32, i32, i32, i32
  }
}

</mosaic_0001>

<llo_original>
// kernel: squeeze.6
$region0: #{squeeze.6}
  %s0 = inlined_call_operand.vmem [shape: f32[2,48], index: 0, kind: input, shape index: {}]
  %s1 = inlined_call_operand.vmem [shape: f32[2,12,4], index: 1, kind: output, shape index: {}]
  $region1: #{squeeze.6} parent=0
    #allocation0 [shape = 'u8[4096]{0}', space=vmem, size = 0x1000, scoped, tag = 'scoped mem for input reshape']
    %s3 = sshll.u32 1, 2
    %s4 = ssub.s32 %s3, 1
    %v5 = vld [vmem:[%s0] sm:%s4]
    %6 = vst [vmem:[#allocation0] sm:%s4] %v5
    %v7 = vld [vmem:[#allocation0] sm:$0x3]
    %vm8 = vcmask 31744
    %9 = vst.msk [vmem:[%s1] ss:$16 sm:$0x3] %vm8, %v7
    %v10 = vld [vmem:[#allocation0] sm:$0x3]
    %11 = vrot.lane.b32.xlu0 %v10, 124
    %v12 = vpop.permute.xlu0 %11
    %vm13 = vcmask 31744
    %s14 = scalar_lea.vmem %s1, 1
    %15 = vst.msk [vmem:[%s14] ss:$16 sm:$0x3] %vm13, %v12
    %v16 = vld [vmem:[#allocation0] sm:$0x3]
    %17 = vrot.lane.b32.xlu0 %v16, 120
    %v18 = vpop.permute.xlu0 %17
    %vm19 = vcmask 31744
    %s20 = scalar_lea.vmem %s1, 2
    %21 = vst.msk [vmem:[%s20] ss:$16 sm:$0x3] %vm19, %v18
    %v22 = vld [vmem:[#allocation0] sm:$0x3]
    %23 = vrot.lane.b32.xlu0 %v22, 116
    %v24 = vpop.permute.xlu0 %23
    %vm25 = vcmask 31744
    %s26 = scalar_lea.vmem %s1, 3
    %27 = vst.msk [vmem:[%s26] ss:$16 sm:$0x3] %vm25, %v24
    %v28 = vld [vmem:[#allocation0] sm:$0x3]
    %29 = vrot.lane.b32.xlu0 %v28, 112
    %v30 = vpop.permute.xlu0 %29
    %vm31 = vcmask 31744
    %s32 = scalar_lea.vmem %s1, 4
    %33 = vst.msk [vmem:[%s32] ss:$16 sm:$0x3] %vm31, %v30
    %v34 = vld [vmem:[#allocation0] sm:$0x3]
    %35 = vrot.lane.b32.xlu0 %v34, 108
    %v36 = vpop.permute.xlu0 %35
    %vm37 = vcmask 31744
    %s38 = scalar_lea.vmem %s1, 5
    %39 = vst.msk [vmem:[%s38] ss:$16 sm:$0x3] %vm37, %v36
    %v40 = vld [vmem:[#allocation0] sm:$0x3]
    %41 = vrot.lane.b32.xlu0 %v40, 104
    %v42 = vpop.permute.xlu0 %41
    %vm43 = vcmask 31744
    %s44 = scalar_lea.vmem %s1, 6
    %45 = vst.msk [vmem:[%s44] ss:$16 sm:$0x3] %vm43, %v42
    %v46 = vld [vmem:[#allocation0] sm:$0x3]
    %47 = vrot.lane.b32.xlu0 %v46, 100
    %v48 = vpop.permute.xlu0 %47
    %vm49 = vcmask 31744
    %s50 = scalar_lea.vmem %s1, 7
    %51 = vst.msk [vmem:[%s50] ss:$16 sm:$0x3] %vm49, %v48
    %v52 = vld [vmem:[#allocation0] sm:$0x3]
    %53 = vrot.lane.b32.xlu0 %v52, 96
    %v54 = vpop.permute.xlu0 %53
    %vm55 = vcmask 31744
    %s56 = scalar_lea.vmem %s1, 8
    %57 = vst.msk [vmem:[%s56] ss:$16 sm:$0x3] %vm55, %v54
    %v58 = vld [vmem:[#allocation0] sm:$0x3]
    %59 = vrot.lane.b32.xlu0 %v58, 92
    %v60 = vpop.permute.xlu0 %59
    %vm61 = vcmask 31744
    %s62 = scalar_lea.vmem %s1, 9
    %63 = vst.msk [vmem:[%s62] ss:$16 sm:$0x3] %vm61, %v60
    %v64 = vld [vmem:[#allocation0] sm:$0x3]
    %65 = vrot.lane.b32.xlu0 %v64, 88
    %v66 = vpop.permute.xlu0 %65
    %vm67 = vcmask 31744
    %s68 = scalar_lea.vmem %s1, 10
    %69 = vst.msk [vmem:[%s68] ss:$16 sm:$0x3] %vm67, %v66
    %v70 = vld [vmem:[#allocation0] sm:$0x3]
    %71 = vrot.lane.b32.xlu0 %v70, 84
    %v72 = vpop.permute.xlu0 %71
    %vm73 = vcmask 31744
    %s74 = scalar_lea.vmem %s1, 11
    %75 = vst.msk [vmem:[%s74] ss:$16 sm:$0x3] %vm73, %v72

// kernel: squeeze.8
$region0: #{squeeze.8}
  %s0 = inlined_call_operand.vmem [shape: f32[2,64], index: 0, kind: input, shape index: {}]
  %s1 = inlined_call_operand.vmem [shape: f32[2,16,4], index: 1, kind: output, shape index: {}]
  $region1: #{squeeze.8} parent=0
    #allocation0 [shape = 'u8[4096]{0}', space=vmem, size = 0x1000, scoped, tag = 'scoped mem for input reshape']
    %s3 = sshll.u32 1, 2
    %s4 = ssub.s32 %s3, 1
    %v5 = vld [vmem:[%s0] sm:%s4]
    %6 = vst [vmem:[#allocation0] sm:%s4] %v5
    %v7 = vld [vmem:[#allocation0] sm:$0x3]
    %vm8 = vcmask 31744
    %9 = vst.msk [vmem:[%s1] ss:$16 sm:$0x3] %vm8, %v7
    %v10 = vld [vmem:[#allocation0] sm:$0x3]
    %11 = vrot.lane.b32.xlu0 %v10, 124
    %v12 = vpop.permute.xlu0 %11
    %vm13 = vcmask 31744
    %s14 = scalar_lea.vmem %s1, 1
    %15 = vst.msk [vmem:[%s14] ss:$16 sm:$0x3] %vm13, %v12
    %v16 = vld [vmem:[#allocation0] sm:$0x3]
    %17 = vrot.lane.b32.xlu0 %v16, 120
    %v18 = vpop.permute.xlu0 %17
    %vm19 = vcmask 31744
    %s20 = scalar_lea.vmem %s1, 2
    %21 = vst.msk [vmem:[%s20] ss:$16 sm:$0x3] %vm19, %v18
    %v22 = vld [vmem:[#allocation0] sm:$0x3]
    %23 = vrot.lane.b32.xlu0 %v22, 116
    %v24 = vpop.permute.xlu0 %23
    %vm25 = vcmask 31744
    %s26 = scalar_lea.vmem %s1, 3
    %27 = vst.msk [vmem:[%s26] ss:$16 sm:$0x3] %vm25, %v24
    %v28 = vld [vmem:[#allocation0] sm:$0x3]
    %29 = vrot.lane.b32.xlu0 %v28, 112
    %v30 = vpop.permute.xlu0 %29
    %vm31 = vcmask 31744
    %s32 = scalar_lea.vmem %s1, 4
    %33 = vst.msk [vmem:[%s32] ss:$16 sm:$0x3] %vm31, %v30
    %v34 = vld [vmem:[#allocation0] sm:$0x3]
    %35 = vrot.lane.b32.xlu0 %v34, 108
    %v36 = vpop.permute.xlu0 %35
    %vm37 = vcmask 31744
    %s38 = scalar_lea.vmem %s1, 5
    %39 = vst.msk [vmem:[%s38] ss:$16 sm:$0x3] %vm37, %v36
    %v40 = vld [vmem:[#allocation0] sm:$0x3]
    %41 = vrot.lane.b32.xlu0 %v40, 104
    %v42 = vpop.permute.xlu0 %41
    %vm43 = vcmask 31744
    %s44 = scalar_lea.vmem %s1, 6
    %45 = vst.msk [vmem:[%s44] ss:$16 sm:$0x3] %vm43, %v42
    %v46 = vld [vmem:[#allocation0] sm:$0x3]
    %47 = vrot.lane.b32.xlu0 %v46, 100
    %v48 = vpop.permute.xlu0 %47
    %vm49 = vcmask 31744
    %s50 = scalar_lea.vmem %s1, 7
    %51 = vst.msk [vmem:[%s50] ss:$16 sm:$0x3] %vm49, %v48
    %v52 = vld [vmem:[#allocation0] sm:$0x3]
    %53 = vrot.lane.b32.xlu0 %v52, 96
    %v54 = vpop.permute.xlu0 %53
    %vm55 = vcmask 31744
    %s56 = scalar_lea.vmem %s1, 8
    %57 = vst.msk [vmem:[%s56] ss:$16 sm:$0x3] %vm55, %v54
    %v58 = vld [vmem:[#allocation0] sm:$0x3]
    %59 = vrot.lane.b32.xlu0 %v58, 92
    %v60 = vpop.permute.xlu0 %59
    %vm61 = vcmask 31744
    %s62 = scalar_lea.vmem %s1, 9
    %63 = vst.msk [vmem:[%s62] ss:$16 sm:$0x3] %vm61, %v60
    %v64 = vld [vmem:[#allocation0] sm:$0x3]
    %65 = vrot.lane.b32.xlu0 %v64, 88
    %v66 = vpop.permute.xlu0 %65
    %vm67 = vcmask 31744
    %s68 = scalar_lea.vmem %s1, 10
    %69 = vst.msk [vmem:[%s68] ss:$16 sm:$0x3] %vm67, %v66
    %v70 = vld [vmem:[#allocation0] sm:$0x3]
    %71 = vrot.lane.b32.xlu0 %v70, 84
    %v72 = vpop.permute.xlu0 %71
    %vm73 = vcmask 31744
    %s74 = scalar_lea.vmem %s1, 11
    %75 = vst.msk [vmem:[%s74] ss:$16 sm:$0x3] %vm73, %v72
    %v76 = vld [vmem:[#allocation0] sm:$0x3]
    %77 = vrot.lane.b32.xlu0 %v76, 80
    %v78 = vpop.permute.xlu0 %77
    %vm79 = vcmask 31744
    %s80 = scalar_lea.vmem %s1, 12
    %81 = vst.msk [vmem:[%s80] ss:$16 sm:$0x3] %vm79, %v78
    %v82 = vld [vmem:[#allocation0] sm:$0x3]
    %83 = vrot.lane.b32.xlu0 %v82, 76
    %v84 = vpop.permute.xlu0 %83
    %vm85 = vcmask 31744
    %s86 = scalar_lea.vmem %s1, 13
    %87 = vst.msk [vmem:[%s86] ss:$16 sm:$0x3] %vm85, %v84
    %v88 = vld [vmem:[#allocation0] sm:$0x3]
    %89 = vrot.lane.b32.xlu0 %v88, 72
    %v90 = vpop.permute.xlu0 %89
    %vm91 = vcmask 31744
    %s92 = scalar_lea.vmem %s1, 14
    %93 = vst.msk [vmem:[%s92] ss:$16 sm:$0x3] %vm91, %v90
    %v94 = vld [vmem:[#allocation0] sm:$0x3]
    %95 = vrot.lane.b32.xlu0 %v94, 68
    %v96 = vpop.permute.xlu0 %95
    %vm97 = vcmask 31744
    %s98 = scalar_lea.vmem %s1, 15
    %99 = vst.msk [vmem:[%s98] ss:$16 sm:$0x3] %vm97, %v96

// kernel: noise_estimator_forward.3
$region0: #{noise_estimator_forward.3}
  #allocation0 [shape = 'u32[]', space=smem, size = 0x4, offset = 0x4, fixed_abs, tag = 'smem constant byte address 0x4 - core index']
  #allocation1 [shape = 'u32[144,128]{1,0:T(1,128)}', space=vmem, size = 0x12000, scoped, tag = 'internal scratch']
  %s0 = inlined_call_operand.vmem [shape: bf16[2,20,16,40], index: 0, kind: input, shape index: {}]
  %s1 = inlined_call_operand.vmem [shape: bf16[5,40,48], index: 1, kind: input, shape index: {}]
  %s2 = inlined_call_operand.vmem [shape: f32[1,48], index: 2, kind: input, shape index: {}]
  %s3 = inlined_call_operand.vmem [shape: bf16[2,16,16,48], index: 3, kind: output, shape index: {0}]
  %s4 = inlined_call_operand.vmem [shape: f32[2,2,48], index: 4, kind: output, shape index: {1}]
  %5 = xla_tuple %s3, %s4
  %s6 = sld [smem:[#allocation0]]
  $region57: #{noise_estimator_forward.3} parent=0
    _
  %s8 = ssub.s32 1, %s6
  %s9 = scalar_select 0, %s8, %s6
  loop: start=0, step=1, limit=4
  $region2: #{noise_estimator_forward.3} parent=0 // loop_pre_header
    _
  $region3: #{noise_estimator_forward.3} parent=0 // loop_header
    %s11 = sphi 0, %s15
    %p12 = scmp.ge.s32.totalorder %s11, 4
    %s18 = sphi 0, %s30
    %s19 = sphi 0, %s26
    %s20 = sphi 0, %s18
    %s21 = sphi 0, %s19
    %s22 = sphi 0, %s20
    %s23 = sphi 0, %s21
    %s33 = sphi 0, %s35
    %s36 = sphi 0, %s33
    %s37 = sphi 0, %s36
    %s53 = sphi 0, %s37
    %s57 = sphi 0, %s57
    %s59 = sphi 0, %s57
    %s60 = sphi 0, %s59
    %s74 = sphi 0, %s60
    %s78 = sphi 0, %s78
    %s80 = sphi 0, %s78
    %s81 = sphi 0, %s80
    %s95 = sphi 0, %s81
    %s103 = sphi 0, %s105
    %s106 = sphi 0, %s103
    %s107 = sphi 0, %s106
    %s123 = sphi 0, %s107
    %s129 = sphi 0, %s131
    %s132 = sphi 0, %s129
    %s133 = sphi 0, %s132
    %s149 = sphi 0, %s133
  $region4: #{noise_estimator_forward.3} parent=0 // loop_header_branch
    %14 = sbr.rel (%p12) target = $region8
  $region5: #{noise_estimator_forward.3} parent=0 // loop_body
    %s16 = ssub.s32 %s11, 1
    %s17 = ssub.s32 %s11, 2
    %s24 = sadd.s32 1, %s19
    %p25 = scmp.ge.s32.totalorder %s24, 1
    %s26 = scalar_select %p25, 0, %s24
    %s27 = sadd.s32 1, %s18
    %s28 = scalar_select %p25, %s27, %s18
    %p29 = scmp.ge.s32.totalorder %s28, 2
    %s30 = scalar_select %p29, 0, %s28
    %s31 = ssub.s32 %s18, %s30
    %p32 = scmp.eq.s32.totalorder %s31, 0
    %s34 = sadd.s32 %s33, 1
    %s35 = scalar_select %p32, %s33, %s34
    %p38 = pneg %p32
    %p39 = scmp.eq.s32.totalorder %s11, 1
    %p40 = por %p38, %p39
    %p41 = scmp.ne.s32.totalorder %s33, %s36
    %p42 = scmp.eq.s32.totalorder %s11, 0
    %p43 = por %p41, %p42
    %p44 = scmp.ne.s32.totalorder %s33, %s36
    %p45 = scmp.eq.s32.totalorder %s16, 1
    %p46 = por %p44, %p45
    %p47 = scmp.ne.s32.totalorder %s36, %s37
    %p48 = scmp.eq.s32.totalorder %s16, 0
    %p49 = por %p47, %p48
    %p50 = scmp.ne.s32.totalorder %s36, %s37
    %p51 = scmp.eq.s32.totalorder %s17, 1
    %p52 = por %p50, %p51
    %p54 = scmp.ne.s32.totalorder %s37, %s53
    %p55 = scmp.eq.s32.totalorder %s17, 0
    %p56 = por %p54, %p55
    %s58 = sadd.s32 %s57, 1
    %p61 = scmp.eq.s32.totalorder %s11, 1
    %p62 = scmp.ne.s32.totalorder %s57, %s59
    %p63 = scmp.eq.s32.totalorder %s11, 0
    %p64 = por %p62, %p63
    %p65 = scmp.ne.s32.totalorder %s57, %s59
    %p66 = scmp.eq.s32.totalorder %s16, 1
    %p67 = por %p65, %p66
    %p68 = scmp.ne.s32.totalorder %s59, %s60
    %p69 = scmp.eq.s32.totalorder %s16, 0
    %p70 = por %p68, %p69
    %p71 = scmp.ne.s32.totalorder %s59, %s60
    %p72 = scmp.eq.s32.totalorder %s17, 1
    %p73 = por %p71, %p72
    %p75 = scmp.ne.s32.totalorder %s60, %s74
    %p76 = scmp.eq.s32.totalorder %s17, 0
    %p77 = por %p75, %p76
    %s79 = sadd.s32 %s78, 1
    %p82 = scmp.eq.s32.totalorder %s11, 1
    %p83 = scmp.ne.s32.totalorder %s78, %s80
    %p84 = scmp.eq.s32.totalorder %s11, 0
    %p85 = por %p83, %p84
    %p86 = scmp.ne.s32.totalorder %s78, %s80
    %p87 = scmp.eq.s32.totalorder %s16, 1
    %p88 = por %p86, %p87
    %p89 = scmp.ne.s32.totalorder %s80, %s81
    %p90 = scmp.eq.s32.totalorder %s16, 0
    %p91 = por %p89, %p90
    %p92 = scmp.ne.s32.totalorder %s80, %s81
    %p93 = scmp.eq.s32.totalorder %s17, 1
    %p94 = por %p92, %p93
    %p96 = scmp.ne.s32.totalorder %s81, %s95
    %p97 = scmp.eq.s32.totalorder %s17, 0
    %p98 = por %p96, %p97
    %s99 = ssub.s32 %s18, %s30
    %s100 = ssub.s32 %s19, %s26
    %s101 = sor.u32 %s99, %s100
    %p102 = scmp.eq.s32.totalorder %s101, 0
    %s104 = sadd.s32 %s103, 1
    %s105 = scalar_select %p102, %s103, %s104
    %p108 = pneg %p102
    %p109 = scmp.eq.s32.totalorder %s11, 1
    %p110 = por %p108, %p109
    %p111 = scmp.ne.s32.totalorder %s103, %s106
    %p112 = scmp.eq.s32.totalorder %s11, 0
    %p113 = por %p111, %p112
    %p114 = scmp.ne.s32.totalorder %s103, %s106
    %p115 = scmp.eq.s32.totalorder %s16, 1
    %p116 = por %p114, %p115
    %p117 = scmp.ne.s32.totalorder %s106, %s107
    %p118 = scmp.eq.s32.totalorder %s16, 0
    %p119 = por %p117, %p118
    %p120 = scmp.ne.s32.totalorder %s106, %s107
    %p121 = scmp.eq.s32.totalorder %s17, 1
    %p122 = por %p120, %p121
    %p124 = scmp.ne.s32.totalorder %s107, %s123
    %p125 = scmp.eq.s32.totalorder %s17, 0
    %p126 = por %p124, %p125
    %s127 = ssub.s32 %s18, %s30
    %p128 = scmp.eq.s32.totalorder %s127, 0
    %s130 = sadd.s32 %s129, 1
    %s131 = scalar_select %p128, %s129, %s130
    %p134 = pneg %p128
    %p135 = scmp.eq.s32.totalorder %s11, 1
    %p136 = por %p134, %p135
    %p137 = scmp.ne.s32.totalorder %s129, %s132
    %p138 = scmp.eq.s32.totalorder %s11, 0
    %p139 = por %p137, %p138
    %p140 = scmp.ne.s32.totalorder %s129, %s132
    %p141 = scmp.eq.s32.totalorder %s16, 1
    %p142 = por %p140, %p141
    %p143 = scmp.ne.s32.totalorder %s132, %s133
    %p144 = scmp.eq.s32.totalorder %s16, 0
    %p145 = por %p143, %p144
    %p146 = scmp.ne.s32.totalorder %s132, %s133
    %p147 = scmp.eq.s32.totalorder %s17, 1
    %p148 = por %p146, %p147
    %p150 = scmp.ne.s32.totalorder %s133, %s149
    %p151 = scmp.eq.s32.totalorder %s17, 0
    %p152 = por %p150, %p151
    %p153 = scmp.le.s32.totalorder 1, %s11
    %p154 = scmp.lt.s32.totalorder %s11, 3
    %p155 = pnand %p153, %p154
    %p156 = pneg %p155
    // Predicated region
    $region9: #{noise_estimator_forward.3} parent=5 // pred_check
      _
    $region10: #{noise_estimator_forward.3} parent=5 // pred_check_branch
      %158 = sbr.rel (%p155) target = $region12
    $region11: #{noise_estimator_forward.3} parent=5 // pred_region
      %s159 = ssub.s32 %s11, 1
      // Predicated region
      $region13: #{noise_estimator_forward.3} parent=11 // pred_check
        %p160 = pneg %p70
      $region14: #{noise_estimator_forward.3} parent=11 // pred_check_branch
        %162 = sbr.rel (%p160) target = $region16
      $region15: #{noise_estimator_forward.3} parent=11 // pred_region
        _
      $region16: #{noise_estimator_forward.3} parent=11 // pred_fallthru
        _
      // Predicated region
      $region17: #{noise_estimator_forward.3} parent=11 // pred_check
        %p163 = pneg %p91
      $region18: #{noise_estimator_forward.3} parent=11 // pred_check_branch
        %165 = sbr.rel (%p163) target = $region20
      $region19: #{noise_estimator_forward.3} parent=11 // pred_region
        _
      $region20: #{noise_estimator_forward.3} parent=11 // pred_fallthru
        _
    $region12: #{noise_estimator_forward.3} parent=5 // pred_fallthru
      _
    %p166 = scmp.lt.s32.totalorder %s11, 2
    // Predicated region
    $region21: #{noise_estimator_forward.3} parent=5 // pred_check
      %p167 = pneg %p166
    $region22: #{noise_estimator_forward.3} parent=5 // pred_check_branch
      %169 = sbr.rel (%p167) target = $region24
    $region23: #{noise_estimator_forward.3} parent=5 // pred_region
      // Predicated region
      $region25: #{noise_estimator_forward.3} parent=23 // pred_check
        %p170 = pneg %p43
      $region26: #{noise_estimator_forward.3} parent=23 // pred_check_branch
        %172 = sbr.rel (%p170) target = $region28
      $region27: #{noise_estimator_forward.3} parent=23 // pred_region
        %p173 = scmp.lt.s32.totalorder %s18, 1
        %s174 = scalar_select %p173, %s18, 1
        %s175 = smul.addr %s174, 40
        %s176 = smul.addr %s175, 4
        %s177 = scalar_lea.vmem %s0, %s176
      $region28: #{noise_estimator_forward.3} parent=23 // pred_fallthru
        _
    $region24: #{noise_estimator_forward.3} parent=5 // pred_fallthru
      _
    %p178 = scmp.le.s32.totalorder 1, %s11
    %p179 = scmp.lt.s32.totalorder %s11, 3
    %p180 = pnand %p178, %p179
    %p181 = pneg %p180
    // Predicated region
    $region29: #{noise_estimator_forward.3} parent=5 // pred_check
      _
    $region30: #{noise_estimator_forward.3} parent=5 // pred_check_branch
      %183 = sbr.rel (%p180) target = $region32
    $region31: #{noise_estimator_forward.3} parent=5 // pred_region
      %s184 = ssub.s32 %s11, 1
      %p185 = scmp.lt.s32.totalorder %s20, 1
      %s186 = scalar_select %p185, %s20, 1
      %s187 = smul.addr %s186, 40
      %s188 = smul.addr %s187, 4
      %s189 = scalar_lea.vmem %s0, %s188
      %p190 = pneg %p49
      %p191 = pneg %p46
      %p192 = pneg %p70
      %p193 = pneg %p67
      %p194 = pneg %p91
      %p195 = pneg %p88
      %p196 = pneg %p119
      %p197 = pneg %p116
      %s198 = smul.u32 16, %s21
      %p199 = scmp.lt.s32.totalorder %s20, 1
      %s200 = scalar_select %p199, %s20, 1
      %p201 = scmp.lt.s32.totalorder %s198, 15
      %s202 = scalar_select %p201, %s198, 15
      %s203 = smul.addr %s202, 2
      %s204 = smul.addr %s200, 32
      %s205 = sadd.s32 %s203, %s204
      %s206 = smul.addr %s205, 4
      %s207 = scalar_lea.vmem %s3, %s206
      %p208 = pneg %p145
      %p209 = pneg %p142
      %p210 = scmp.lt.s32.totalorder %s20, 1
      %s211 = scalar_select %p210, %s20, 1
      %s212 = smul.addr %s211, 2
      %s213 = scalar_lea.vmem %s4, %s212
      %p214 = scmp.lt.s32.totalorder %s20, 1
      %s215 = scalar_select %p214, %s20, 1
      %s216 = smul.addr %s215, 40
      %s217 = smul.addr %s216, 4
      %s218 = scalar_lea.vmem %s0, %s217
      %s219 = smul.u32 16, %s21
      %p220 = scmp.lt.s32.totalorder %s20, 1
      %s221 = scalar_select %p220, %s20, 1
      %p222 = scmp.lt.s32.totalorder %s219, 15
      %s223 = scalar_select %p222, %s219, 15
      %s224 = smul.addr %s223, 2
      %s225 = smul.addr %s221, 32
      %s226 = sadd.s32 %s224, %s225
      %s227 = smul.addr %s226, 4
      %s228 = scalar_lea.vmem %s3, %s227
      %s229 = smul.u32 16, %s21
      %p230 = scmp.lt.s32.totalorder %s20, 1
      %s231 = scalar_select %p230, %s20, 1
      %s232 = smul.addr %s231, 2
      %s233 = scalar_lea.vmem %s4, %s232
      %s235 = smul.u32 %s21, 16
      %s236 = smul.u32 %s235, 2
      %s237 = smul.addr %s236, 4
      %s238 = scalar_lea.vmem %s218, %s237
      %v239 = vld [vmem:[%s238] sm:$0xf]
      %v240 = vld [vmem:[%s238 + $0x4] sm:$0xf]
      %v241 = vld [vmem:[%s238 + $0x8] sm:$0xf]
      %v242 = vld [vmem:[%s238 + $0xc] sm:$0xf]
      %v243 = vld [vmem:[%s238 + $0x10] sm:$0xf]
      %v244 = vld [vmem:[%s238 + $0x14] sm:$0xf]
      %v245 = vld [vmem:[%s238 + $0x18] sm:$0xf]
      %v246 = vld [vmem:[%s238 + $0x1c] sm:$0xf]
      %v247 = vld [vmem:[%s238 + $0x20] sm:$0xf]
      %v248 = vld [vmem:[%s238 + $0x24] sm:$0xf]
      %v249 = vld [vmem:[%s238 + $0x28] sm:$0xf]
      %v250 = vld [vmem:[%s238 + $0x2c] sm:$0xf]
      %v251 = vld [vmem:[%s238 + $0x30] sm:$0xf]
      %v252 = vld [vmem:[%s238 + $0x34] sm:$0xf]
      %v253 = vld [vmem:[%s238 + $0x38] sm:$0xf]
      %v254 = vld [vmem:[%s238 + $0x3c] sm:$0xf]
      %v255 = vld [vmem:[%s238 + $0x40] sm:$0xf]
      %v256 = vld [vmem:[%s238 + $0x44] sm:$0xf]
      %v257 = vld [vmem:[%s238 + $0x48] sm:$0xf]
      %v258 = vld [vmem:[%s238 + $0x4c] sm:$0xf]
      %v259 = vld [vmem:[%s238 + $0x50] sm:$0xf]
      %v260 = vld [vmem:[%s238 + $0x54] sm:$0xf]
      %v261 = vld [vmem:[%s238 + $0x58] sm:$0xf]
      %v262 = vld [vmem:[%s238 + $0x5c] sm:$0xf]
      %v263 = vld [vmem:[%s238 + $0x60] sm:$0xf]
      %v264 = vld [vmem:[%s238 + $0x64] sm:$0xf]
      %v265 = vld [vmem:[%s238 + $0x68] sm:$0xf]
      %v266 = vld [vmem:[%s238 + $0x6c] sm:$0xf]
      %v267 = vld [vmem:[%s238 + $0x70] sm:$0xf]
      %v268 = vld [vmem:[%s238 + $0x74] sm:$0xf]
      %v269 = vld [vmem:[%s238 + $0x78] sm:$0xf]
      %v270 = vld [vmem:[%s238 + $0x7c] sm:$0xf]
      %v271 = vld [vmem:[%s238 + $0x80] sm:$0xf]
      %v272 = vld [vmem:[%s238 + $0x84] sm:$0xf]
      %v273 = vld [vmem:[%s238 + $0x88] sm:$0xf]
      %v274 = vld [vmem:[%s238 + $0x8c] sm:$0xf]
      %v275 = vld [vmem:[%s238 + $0x90] sm:$0xf]
      %v276 = vld [vmem:[%s238 + $0x94] sm:$0xf]
      %v277 = vld [vmem:[%s238 + $0x98] sm:$0xf]
      %v278 = vld [vmem:[%s238 + $0x9c] sm:$0xf]
      %v279 = vld [vmem:[%s1] sm:$0xf]
      %v280 = vld [vmem:[%s1 + $0x4] sm:$0xf]
      %v281 = vld [vmem:[%s1 + $0x8] sm:$0xf]
      %v282 = vld [vmem:[%s1 + $0xc] sm:$0xf]
      %v283 = vld [vmem:[%s1 + $0x10] sm:$0xf]
      %v284 = vld [vmem:[%s1 + $0x14] sm:$0xf]
      %v285 = vld [vmem:[%s1 + $0x18] sm:$0xf]
      %v286 = vld [vmem:[%s1 + $0x1c] sm:$0xf]
      %v287 = vld [vmem:[%s1 + $0x20] sm:$0xf]
      %v288 = vld [vmem:[%s1 + $0x24] sm:$0xf]
      %v289 = vld [vmem:[%s1 + $0x28] sm:$0xf]
      %v290 = vld [vmem:[%s1 + $0x2c] sm:$0xf]
      %v291 = vld [vmem:[%s1 + $0x30] sm:$0xf]
      %v292 = vld [vmem:[%s1 + $0x34] sm:$0xf]
      %v293 = vld [vmem:[%s1 + $0x38] sm:$0xf]
      %v294 = vld [vmem:[%s1 + $0x3c] sm:$0xf]
      %v295 = vld [vmem:[%s1 + $0x40] sm:$0xf]
      %v296 = vld [vmem:[%s1 + $0x44] sm:$0xf]
      %v297 = vld [vmem:[%s1 + $0x48] sm:$0xf]
      %v298 = vld [vmem:[%s1 + $0x4c] sm:$0xf]
      %v299 = vld [vmem:[%s1 + $0x50] sm:$0xf]
      %v300 = vld [vmem:[%s1 + $0x54] sm:$0xf]
      %v301 = vld [vmem:[%s1 + $0x58] sm:$0xf]
      %v302 = vld [vmem:[%s1 + $0x5c] sm:$0xf]
      %v303 = vld [vmem:[%s1 + $0x60] sm:$0xf]
      %v304 = vld [vmem:[%s2] sm:$0x1]
      %v337 = vunpack.c.l.b16 %v241
      %v338 = vunpack.c.l.b16 %v242
      %v339 = vunpack.c.l.b16 %v243
      %v340 = vunpack.c.l.b16 %v244
      %v341 = vunpack.c.l.b16 %v245
      %v342 = vunpack.c.l.b16 %v246
      %v343 = vunpack.c.l.b16 %v247
      %v344 = vunpack.c.l.b16 %v248
      %v345 = vunpack.c.l.b16 %v249
      %v346 = vunpack.c.l.b16 %v250
      %v347 = vunpack.c.l.b16 %v251
      %v348 = vunpack.c.l.b16 %v252
      %v349 = vunpack.c.l.b16 %v253
      %v350 = vunpack.c.l.b16 %v254
      %v351 = vunpack.c.l.b16 %v255
      %v352 = vunpack.c.l.b16 %v256
      %v353 = vunpack.c.l.b16 %v257
      %v354 = vunpack.c.l.b16 %v258
      %v355 = vunpack.c.l.b16 %v259
      %v356 = vunpack.c.l.b16 %v260
      %v357 = vunpack.c.l.b16 %v261
      %v358 = vunpack.c.l.b16 %v262
      %v359 = vunpack.c.l.b16 %v263
      %v360 = vunpack.c.l.b16 %v264
      %v361 = vunpack.c.l.b16 %v265
      %v362 = vunpack.c.l.b16 %v266
      %v363 = vunpack.c.l.b16 %v267
      %v364 = vunpack.c.l.b16 %v268
      %v365 = vunpack.c.l.b16 %v269
      %v366 = vunpack.c.l.b16 %v270
      %v367 = vunpack.c.l.b16 %v271
      %v368 = vunpack.c.l.b16 %v272
      %v369 = vpack.c.b16 %v338, %v337
      %v370 = vpack.c.b16 %v340, %v339
      %v371 = vpack.c.b16 %v342, %v341
      %v372 = vpack.c.b16 %v344, %v343
      %v373 = vpack.c.b16 %v346, %v345
      %v374 = vpack.c.b16 %v348, %v347
      %v375 = vpack.c.b16 %v350, %v349
      %v376 = vpack.c.b16 %v352, %v351
      %v377 = vpack.c.b16 %v354, %v353
      %v378 = vpack.c.b16 %v356, %v355
      %v379 = vpack.c.b16 %v358, %v357
      %v380 = vpack.c.b16 %v360, %v359
      %v381 = vpack.c.b16 %v362, %v361
      %v382 = vpack.c.b16 %v364, %v363
      %v383 = vpack.c.b16 %v366, %v365
      %v384 = vpack.c.b16 %v368, %v367
      %v390 = vunpack.c.l.b16 %v284
      %v391 = vunpack.c.l.b16 %v285
      %v392 = vunpack.c.l.b16 %v286
      %v393 = vunpack.c.l.b16 %v287
      %v394 = vunpack.c.l.b16 %v288
      %v395 = vpack.c.b16 %v391, %v390
      %v396 = vpack.c.b16 %v393, %v392
      %v397 = vpack.c.b16 %v394, %v394
      %vm400 = vcmask 326656
      %v402 = vsel %vm400, %v369, 0
      %v405 = vsel %vm400, %v370, 0
      %v408 = vsel %vm400, %v371, 0
      %v411 = vsel %vm400, %v372, 0
      %v414 = vsel %vm400, %v373, 0
      %v417 = vsel %vm400, %v374, 0
      %v420 = vsel %vm400, %v375, 0
      %v423 = vsel %vm400, %v376, 0
      %v426 = vsel %vm400, %v377, 0
      %v429 = vsel %vm400, %v378, 0
      %v432 = vsel %vm400, %v379, 0
      %v435 = vsel %vm400, %v380, 0
      %v438 = vsel %vm400, %v381, 0
      %v441 = vsel %vm400, %v382, 0
      %v444 = vsel %vm400, %v383, 0
      %v447 = vsel %vm400, %v384, 0
      %vm449 = vcmask 1043456
      %v451 = vsel %vm449, %v397, 0
      %453 = vmatprep.subr.bf16.mxu0 0
      %454 = vmatpush1.bf16.msra.mxu0 0
      %455 = vmatprep.subr.bf16.mxu0 0
      %456 = vmatpush1.bf16.msra.mxu0 0
      %457 = vmatprep.subr.bf16.mxu0 0
      %458 = vmatpush1.bf16.msra.mxu0 0
      %459 = vmatprep.subr.bf16.mxu0 0
      %460 = vmatpush1.bf16.msra.mxu0 0
      %461 = vmatprep.subr.bf16.mxu0 0
      %462 = vmatpush1.bf16.msra.mxu0 0
      %463 = vmatprep.subr.bf16.mxu0 0
      %464 = vmatpush1.bf16.msra.mxu0 %v451
      %465 = vmatprep.subr.bf16.mxu0 0
      %466 = vmatpush1.bf16.msra.mxu0 %v396
      %467 = vmatprep.subr.bf16.mxu0 0
      %468 = vmatpush1.bf16.msra.mxu0 %v395
      %469 = vmatprep.subr.bf16.mxu0 0
      %470 = vmatpush2.bf16.msra.mxu0 0
      %471 = vmatprep.subr.bf16.mxu0 0
      %472 = vmatpush2.bf16.msra.mxu0 0
      %473 = vmatprep.subr.bf16.mxu0 0
      %474 = vmatpush2.bf16.msra.mxu0 0
      %475 = vmatprep.subr.bf16.mxu0 0
      %476 = vmatpush2.bf16.msra.mxu0 0
      %477 = vmatprep.subr.bf16.mxu0 0
      %478 = vmatpush2.bf16.msra.mxu0 0
      %479 = vmatprep.subr.bf16.mxu0 0
      %480 = vmatpush2.bf16.msra.mxu0 0
      %481 = vmatprep.subr.bf16.mxu0 0
      %482 = vmatpush2.bf16.msra.mxu0 0
      %483 = vmatprep.subr.bf16.mxu0 0
      %484 = vmatpush2.bf16.msra.mxu0 0
      %485 = vmatprep.mubr.bf16.mxu0 0
      %486 = vmatmul.mubr.bf16.gmra.mxu0 %v402
      %v487 = vpop.f32.mrf.mxu0
      %v488 = vadd.f32 0.0, %v487
      %v489 = vpop.f32.mrf.mxu0
      %v490 = vpop.f32.mrf.mxu0
      %v491 = vadd.f32 0.0, %v490
      %v492 = vpop.f32.mrf.mxu0
      %493 = vmatprep.mubr.bf16.mxu0 0
      %494 = vmatmul.mubr.bf16.gmra.mxu0 %v405
      %v495 = vpop.f32.mrf.mxu0
      %v496 = vadd.f32 0.0, %v495
      %v497 = vpop.f32.mrf.mxu0
      %v498 = vpop.f32.mrf.mxu0
      %v499 = vadd.f32 0.0, %v498
      %v500 = vpop.f32.mrf.mxu0
      %501 = vmatprep.mubr.bf16.mxu0 0
      %502 = vmatmul.mubr.bf16.gmra.mxu0 %v408
      %v503 = vpop.f32.mrf.mxu0
      %v504 = vadd.f32 0.0, %v503
      %v505 = vpop.f32.mrf.mxu0
      %v506 = vpop.f32.mrf.mxu0
      %v507 = vadd.f32 0.0, %v506
      %v508 = vpop.f32.mrf.mxu0
      %509 = vmatprep.mubr.bf16.mxu0 0
      %510 = vmatmul.mubr.bf16.gmra.mxu0 %v411
      %v511 = vpop.f32.mrf.mxu0
      %v512 = vadd.f32 0.0, %v511
      %v513 = vpop.f32.mrf.mxu0
      %v514 = vpop.f32.mrf.mxu0
      %v515 = vadd.f32 0.0, %v514
      %v516 = vpop.f32.mrf.mxu0
      %517 = vmatprep.mubr.bf16.mxu0 0
      %518 = vmatmul.mubr.bf16.gmra.mxu0 %v414
      %v519 = vpop.f32.mrf.mxu0
      %v520 = vadd.f32 0.0, %v519
      %v521 = vpop.f32.mrf.mxu0
      %v522 = vpop.f32.mrf.mxu0
      %v523 = vadd.f32 0.0, %v522
      %v524 = vpop.f32.mrf.mxu0
      %525 = vmatprep.mubr.bf16.mxu0 0
      %526 = vmatmul.mubr.bf16.gmra.mxu0 %v417
      %v527 = vpop.f32.mrf.mxu0
      %v528 = vadd.f32 0.0, %v527
      %v529 = vpop.f32.mrf.mxu0
      %v530 = vpop.f32.mrf.mxu0
      %v531 = vadd.f32 0.0, %v530
      %v532 = vpop.f32.mrf.mxu0
      %533 = vmatprep.mubr.bf16.mxu0 0
      %534 = vmatmul.mubr.bf16.gmra.mxu0 %v420
      %v535 = vpop.f32.mrf.mxu0
      %v536 = vadd.f32 0.0, %v535
      %v537 = vpop.f32.mrf.mxu0
      %v538 = vpop.f32.mrf.mxu0
      %v539 = vadd.f32 0.0, %v538
      %v540 = vpop.f32.mrf.mxu0
      %541 = vmatprep.mubr.bf16.mxu0 0
      %542 = vmatmul.mubr.bf16.gmra.mxu0 %v423
      %v543 = vpop.f32.mrf.mxu0
      %v544 = vadd.f32 0.0, %v543
      %v545 = vpop.f32.mrf.mxu0
      %v546 = vpop.f32.mrf.mxu0
      %v547 = vadd.f32 0.0, %v546
      %v548 = vpop.f32.mrf.mxu0
      %549 = vmatprep.mubr.bf16.mxu0 0
      %550 = vmatmul.mubr.bf16.gmra.mxu0 %v426
      %v551 = vpop.f32.mrf.mxu0
      %v552 = vadd.f32 0.0, %v551
      %v553 = vpop.f32.mrf.mxu0
      %v554 = vpop.f32.mrf.mxu0
      %v555 = vadd.f32 0.0, %v554
      %v556 = vpop.f32.mrf.mxu0
      %557 = vmatprep.mubr.bf16.mxu0 0
      %558 = vmatmul.mubr.bf16.gmra.mxu0 %v429
      %v559 = vpop.f32.mrf.mxu0
      %v560 = vadd.f32 0.0, %v559
      %v561 = vpop.f32.mrf.mxu0
      %v562 = vpop.f32.mrf.mxu0
      %v563 = vadd.f32 0.0, %v562
      %v564 = vpop.f32.mrf.mxu0
      %565 = vmatprep.mubr.bf16.mxu0 0
      %566 = vmatmul.mubr.bf16.gmra.mxu0 %v432
      %v567 = vpop.f32.mrf.mxu0
      %v568 = vadd.f32 0.0, %v567
      %v569 = vpop.f32.mrf.mxu0
      %v570 = vpop.f32.mrf.mxu0
      %v571 = vadd.f32 0.0, %v570
      %v572 = vpop.f32.mrf.mxu0
      %573 = vmatprep.mubr.bf16.mxu0 0
      %574 = vmatmul.mubr.bf16.gmra.mxu0 %v435
      %v575 = vpop.f32.mrf.mxu0
      %v576 = vadd.f32 0.0, %v575
      %v577 = vpop.f32.mrf.mxu0
      %v578 = vpop.f32.mrf.mxu0
      %v579 = vadd.f32 0.0, %v578
      %v580 = vpop.f32.mrf.mxu0
      %581 = vmatprep.mubr.bf16.mxu0 0
      %582 = vmatmul.mubr.bf16.gmra.mxu0 %v438
      %v583 = vpop.f32.mrf.mxu0
      %v584 = vadd.f32 0.0, %v583
      %v585 = vpop.f32.mrf.mxu0
      %v586 = vpop.f32.mrf.mxu0
      %v587 = vadd.f32 0.0, %v586
      %v588 = vpop.f32.mrf.mxu0
      %589 = vmatprep.mubr.bf16.mxu0 0
      %590 = vmatmul.mubr.bf16.gmra.mxu0 %v441
      %v591 = vpop.f32.mrf.mxu0
      %v592 = vadd.f32 0.0, %v591
      %v593 = vpop.f32.mrf.mxu0
      %v594 = vpop.f32.mrf.mxu0
      %v595 = vadd.f32 0.0, %v594
      %v596 = vpop.f32.mrf.mxu0
      %597 = vmatprep.mubr.bf16.mxu0 0
      %598 = vmatmul.mubr.bf16.gmra.mxu0 %v444
      %v599 = vpop.f32.mrf.mxu0
      %v600 = vadd.f32 0.0, %v599
      %v601 = vpop.f32.mrf.mxu0
      %v602 = vpop.f32.mrf.mxu0
      %v603 = vadd.f32 0.0, %v602
      %v604 = vpop.f32.mrf.mxu0
      %605 = vmatprep.mubr.bf16.mxu0 0
      %606 = vmatmul.mubr.bf16.gmra.mxu0 %v447
      %v607 = vpop.f32.mrf.mxu0
      %v608 = vadd.f32 0.0, %v607
      %v609 = vpop.f32.mrf.mxu0
      %v610 = vpop.f32.mrf.mxu0
      %v611 = vadd.f32 0.0, %v610
      %v612 = vpop.f32.mrf.mxu0
      %613 = vdwg.mxu0
      %v616 = vunpack.c.l.b16 %v239
      %v617 = vunpack.c.l.b16 %v240
      %v618 = vpack.c.b16 %v617, %v616
      %v624 = vunpack.c.l.b16 %v279
      %v625 = vunpack.c.l.b16 %v280
      %v626 = vunpack.c.l.b16 %v281
      %v627 = vunpack.c.l.b16 %v282
      %v628 = vunpack.c.l.b16 %v283
      %v629 = vpack.c.b16 %v625, %v624
      %v630 = vpack.c.b16 %v627, %v626
      %v631 = vpack.c.b16 %v628, %v628
      %v635 = vsel %vm400, %v618, 0
      %v638 = vsel %vm449, %v631, 0
      %640 = vmatprep.subr.bf16.mxu0 0
      %641 = vmatpush1.bf16.msra.mxu0 0
      %642 = vmatprep.subr.bf16.mxu0 0
      %643 = vmatpush1.bf16.msra.mxu0 0
      %644 = vmatprep.subr.bf16.mxu0 0
      %645 = vmatpush1.bf16.msra.mxu0 0
      %646 = vmatprep.subr.bf16.mxu0 0
      %647 = vmatpush1.bf16.msra.mxu0 0
      %648 = vmatprep.subr.bf16.mxu0 0
      %649 = vmatpush1.bf16.msra.mxu0 0
      %650 = vmatprep.subr.bf16.mxu0 0
      %651 = vmatpush1.bf16.msra.mxu0 %v638
      %652 = vmatprep.subr.bf16.mxu0 0
      %653 = vmatpush1.bf16.msra.mxu0 %v630
      %654 = vmatprep.subr.bf16.mxu0 0
      %655 = vmatpush1.bf16.msra.mxu0 %v629
      %656 = vmatprep.subr.bf16.mxu0 0
      %657 = vmatpush2.bf16.msra.mxu0 0
      %658 = vmatprep.subr.bf16.mxu0 0
      %659 = vmatpush2.bf16.msra.mxu0 0
      %660 = vmatprep.subr.bf16.mxu0 0
      %661 = vmatpush2.bf16.msra.mxu0 0
      %662 = vmatprep.subr.bf16.mxu0 0
      %663 = vmatpush2.bf16.msra.mxu0 0
      %664 = vmatprep.subr.bf16.mxu0 0
      %665 = vmatpush2.bf16.msra.mxu0 0
      %666 = vmatprep.subr.bf16.mxu0 0
      %667 = vmatpush2.bf16.msra.mxu0 0
      %668 = vmatprep.subr.bf16.mxu0 0
      %669 = vmatpush2.bf16.msra.mxu0 0
      %670 = vmatprep.subr.bf16.mxu0 0
      %671 = vmatpush2.bf16.msra.mxu0 0
      %672 = vmatprep.mubr.bf16.mxu0 0
      %673 = vmatmul.mubr.bf16.gmra.mxu0 %v635
      %v674 = vpop.f32.mrf.mxu0
      %v675 = vadd.f32 %v488, %v674
      %v676 = vpop.f32.mrf.mxu0
      %v677 = vpop.f32.mrf.mxu0
      %v678 = vadd.f32 %v491, %v677
      %v679 = vpop.f32.mrf.mxu0
      %680 = vmatprep.mubr.bf16.mxu0 0
      %681 = vmatmul.mubr.bf16.gmra.mxu0 %v402
      %v682 = vpop.f32.mrf.mxu0
      %v683 = vadd.f32 %v496, %v682
      %v684 = vpop.f32.mrf.mxu0
      %v685 = vpop.f32.mrf.mxu0
      %v686 = vadd.f32 %v499, %v685
      %v687 = vpop.f32.mrf.mxu0
      %688 = vmatprep.mubr.bf16.mxu0 0
      %689 = vmatmul.mubr.bf16.gmra.mxu0 %v405
      %v690 = vpop.f32.mrf.mxu0
      %v691 = vadd.f32 %v504, %v690
      %v692 = vpop.f32.mrf.mxu0
      %v693 = vpop.f32.mrf.mxu0
      %v694 = vadd.f32 %v507, %v693
      %v695 = vpop.f32.mrf.mxu0
      %696 = vmatprep.mubr.bf16.mxu0 0
      %697 = vmatmul.mubr.bf16.gmra.mxu0 %v408
      %v698 = vpop.f32.mrf.mxu0
      %v699 = vadd.f32 %v512, %v698
      %v700 = vpop.f32.mrf.mxu0
      %v701 = vpop.f32.mrf.mxu0
      %v702 = vadd.f32 %v515, %v701
      %v703 = vpop.f32.mrf.mxu0
      %704 = vmatprep.mubr.bf16.mxu0 0
      %705 = vmatmul.mubr.bf16.gmra.mxu0 %v411
      %v706 = vpop.f32.mrf.mxu0
      %v707 = vadd.f32 %v520, %v706
      %v708 = vpop.f32.mrf.mxu0
      %v709 = vpop.f32.mrf.mxu0
      %v710 = vadd.f32 %v523, %v709
      %v711 = vpop.f32.mrf.mxu0
      %712 = vmatprep.mubr.bf16.mxu0 0
      %713 = vmatmul.mubr.bf16.gmra.mxu0 %v414
      %v714 = vpop.f32.mrf.mxu0
      %v715 = vadd.f32 %v528, %v714
      %v716 = vpop.f32.mrf.mxu0
      %v717 = vpop.f32.mrf.mxu0
      %v718 = vadd.f32 %v531, %v717
      %v719 = vpop.f32.mrf.mxu0
      %720 = vmatprep.mubr.bf16.mxu0 0
      %721 = vmatmul.mubr.bf16.gmra.mxu0 %v417
      %v722 = vpop.f32.mrf.mxu0
      %v723 = vadd.f32 %v536, %v722
      %v724 = vpop.f32.mrf.mxu0
      %v725 = vpop.f32.mrf.mxu0
      %v726 = vadd.f32 %v539, %v725
      %v727 = vpop.f32.mrf.mxu0
      %728 = vmatprep.mubr.bf16.mxu0 0
      %729 = vmatmul.mubr.bf16.gmra.mxu0 %v420
      %v730 = vpop.f32.mrf.mxu0
      %v731 = vadd.f32 %v544, %v730
      %v732 = vpop.f32.mrf.mxu0
      %v733 = vpop.f32.mrf.mxu0
      %v734 = vadd.f32 %v547, %v733
      %v735 = vpop.f32.mrf.mxu0
      %736 = vmatprep.mubr.bf16.mxu0 0
      %737 = vmatmul.mubr.bf16.gmra.mxu0 %v423
      %v738 = vpop.f32.mrf.mxu0
      %v739 = vadd.f32 %v552, %v738
      %v740 = vpop.f32.mrf.mxu0
      %v741 = vpop.f32.mrf.mxu0
      %v742 = vadd.f32 %v555, %v741
      %v743 = vpop.f32.mrf.mxu0
      %744 = vmatprep.mubr.bf16.mxu0 0
      %745 = vmatmul.mubr.bf16.gmra.mxu0 %v426
      %v746 = vpop.f32.mrf.mxu0
      %v747 = vadd.f32 %v560, %v746
      %v748 = vpop.f32.mrf.mxu0
      %v749 = vpop.f32.mrf.mxu0
      %v750 = vadd.f32 %v563, %v749
      %v751 = vpop.f32.mrf.mxu0
      %752 = vmatprep.mubr.bf16.mxu0 0
      %753 = vmatmul.mubr.bf16.gmra.mxu0 %v429
      %v754 = vpop.f32.mrf.mxu0
      %v755 = vadd.f32 %v568, %v754
      %v756 = vpop.f32.mrf.mxu0
      %v757 = vpop.f32.mrf.mxu0
      %v758 = vadd.f32 %v571, %v757
      %v759 = vpop.f32.mrf.mxu0
      %760 = vmatprep.mubr.bf16.mxu0 0
      %761 = vmatmul.mubr.bf16.gmra.mxu0 %v432
      %v762 = vpop.f32.mrf.mxu0
      %v763 = vadd.f32 %v576, %v762
      %v764 = vpop.f32.mrf.mxu0
      %v765 = vpop.f32.mrf.mxu0
      %v766 = vadd.f32 %v579, %v765
      %v767 = vpop.f32.mrf.mxu0
      %768 = vmatprep.mubr.bf16.mxu0 0
      %769 = vmatmul.mubr.bf16.gmra.mxu0 %v435
      %v770 = vpop.f32.mrf.mxu0
      %v771 = vadd.f32 %v584, %v770
      %v772 = vpop.f32.mrf.mxu0
      %v773 = vpop.f32.mrf.mxu0
      %v774 = vadd.f32 %v587, %v773
      %v775 = vpop.f32.mrf.mxu0
      %776 = vmatprep.mubr.bf16.mxu0 0
      %777 = vmatmul.mubr.bf16.gmra.mxu0 %v438
      %v778 = vpop.f32.mrf.mxu0
      %v779 = vadd.f32 %v592, %v778
      %v780 = vpop.f32.mrf.mxu0
      %v781 = vpop.f32.mrf.mxu0
      %v782 = vadd.f32 %v595, %v781
      %v783 = vpop.f32.mrf.mxu0
      %784 = vmatprep.mubr.bf16.mxu0 0
      %785 = vmatmul.mubr.bf16.gmra.mxu0 %v441
      %v786 = vpop.f32.mrf.mxu0
      %v787 = vadd.f32 %v600, %v786
      %v788 = vpop.f32.mrf.mxu0
      %v789 = vpop.f32.mrf.mxu0
      %v790 = vadd.f32 %v603, %v789
      %v791 = vpop.f32.mrf.mxu0
      %792 = vmatprep.mubr.bf16.mxu0 0
      %793 = vmatmul.mubr.bf16.gmra.mxu0 %v444
      %v794 = vpop.f32.mrf.mxu0
      %v795 = vadd.f32 %v608, %v794
      %v796 = vpop.f32.mrf.mxu0
      %v797 = vpop.f32.mrf.mxu0
      %v798 = vadd.f32 %v611, %v797
      %v799 = vpop.f32.mrf.mxu0
      %800 = vdwg.mxu0
      %v803 = vunpack.c.l.b16 %v273
      %v804 = vunpack.c.l.b16 %v274
      %v805 = vpack.c.b16 %v804, %v803
      %v811 = vunpack.c.l.b16 %v289
      %v812 = vunpack.c.l.b16 %v290
      %v813 = vunpack.c.l.b16 %v291
      %v814 = vunpack.c.l.b16 %v292
      %v815 = vunpack.c.l.b16 %v293
      %v816 = vpack.c.b16 %v812, %v811
      %v817 = vpack.c.b16 %v814, %v813
      %v818 = vpack.c.b16 %v815, %v815
      %v822 = vsel %vm400, %v805, 0
      %v825 = vsel %vm449, %v818, 0
      %827 = vmatprep.subr.bf16.mxu0 0
      %828 = vmatpush1.bf16.msra.mxu0 0
      %829 = vmatprep.subr.bf16.mxu0 0
      %830 = vmatpush1.bf16.msra.mxu0 0
      %831 = vmatprep.subr.bf16.mxu0 0
      %832 = vmatpush1.bf16.msra.mxu0 0
      %833 = vmatprep.subr.bf16.mxu0 0
      %834 = vmatpush1.bf16.msra.mxu0 0
      %835 = vmatprep.subr.bf16.mxu0 0
      %836 = vmatpush1.bf16.msra.mxu0 0
      %837 = vmatprep.subr.bf16.mxu0 0
      %838 = vmatpush1.bf16.msra.mxu0 %v825
      %839 = vmatprep.subr.bf16.mxu0 0
      %840 = vmatpush1.bf16.msra.mxu0 %v817
      %841 = vmatprep.subr.bf16.mxu0 0
      %842 = vmatpush1.bf16.msra.mxu0 %v816
      %843 = vmatprep.subr.bf16.mxu0 0
      %844 = vmatpush2.bf16.msra.mxu0 0
      %845 = vmatprep.subr.bf16.mxu0 0
      %846 = vmatpush2.bf16.msra.mxu0 0
      %847 = vmatprep.subr.bf16.mxu0 0
      %848 = vmatpush2.bf16.msra.mxu0 0
      %849 = vmatprep.subr.bf16.mxu0 0
      %850 = vmatpush2.bf16.msra.mxu0 0
      %851 = vmatprep.subr.bf16.mxu0 0
      %852 = vmatpush2.bf16.msra.mxu0 0
      %853 = vmatprep.subr.bf16.mxu0 0
      %854 = vmatpush2.bf16.msra.mxu0 0
      %855 = vmatprep.subr.bf16.mxu0 0
      %856 = vmatpush2.bf16.msra.mxu0 0
      %857 = vmatprep.subr.bf16.mxu0 0
      %858 = vmatpush2.bf16.msra.mxu0 0
      %859 = vmatprep.mubr.bf16.mxu0 0
      %860 = vmatmul.mubr.bf16.gmra.mxu0 %v405
      %v861 = vpop.f32.mrf.mxu0
      %v862 = vadd.f32 0.0, %v861
      %v863 = vpop.f32.mrf.mxu0
      %v864 = vpop.f32.mrf.mxu0
      %v865 = vadd.f32 0.0, %v864
      %v866 = vpop.f32.mrf.mxu0
      %867 = vmatprep.mubr.bf16.mxu0 0
      %868 = vmatmul.mubr.bf16.gmra.mxu0 %v408
      %v869 = vpop.f32.mrf.mxu0
      %v870 = vadd.f32 0.0, %v869
      %v871 = vpop.f32.mrf.mxu0
      %v872 = vpop.f32.mrf.mxu0
      %v873 = vadd.f32 0.0, %v872
      %v874 = vpop.f32.mrf.mxu0
      %875 = vmatprep.mubr.bf16.mxu0 0
      %876 = vmatmul.mubr.bf16.gmra.mxu0 %v411
      %v877 = vpop.f32.mrf.mxu0
      %v878 = vadd.f32 0.0, %v877
      %v879 = vpop.f32.mrf.mxu0
      %v880 = vpop.f32.mrf.mxu0
      %v881 = vadd.f32 0.0, %v880
      %v882 = vpop.f32.mrf.mxu0
      %883 = vmatprep.mubr.bf16.mxu0 0
      %884 = vmatmul.mubr.bf16.gmra.mxu0 %v414
      %v885 = vpop.f32.mrf.mxu0
      %v886 = vadd.f32 0.0, %v885
      %v887 = vpop.f32.mrf.mxu0
      %v888 = vpop.f32.mrf.mxu0
      %v889 = vadd.f32 0.0, %v888
      %v890 = vpop.f32.mrf.mxu0
      %891 = vmatprep.mubr.bf16.mxu0 0
      %892 = vmatmul.mubr.bf16.gmra.mxu0 %v417
      %v893 = vpop.f32.mrf.mxu0
      %v894 = vadd.f32 0.0, %v893
      %v895 = vpop.f32.mrf.mxu0
      %v896 = vpop.f32.mrf.mxu0
      %v897 = vadd.f32 0.0, %v896
      %v898 = vpop.f32.mrf.mxu0
      %899 = vmatprep.mubr.bf16.mxu0 0
      %900 = vmatmul.mubr.bf16.gmra.mxu0 %v420
      %v901 = vpop.f32.mrf.mxu0
      %v902 = vadd.f32 0.0, %v901
      %v903 = vpop.f32.mrf.mxu0
      %v904 = vpop.f32.mrf.mxu0
      %v905 = vadd.f32 0.0, %v904
      %v906 = vpop.f32.mrf.mxu0
      %907 = vmatprep.mubr.bf16.mxu0 0
      %908 = vmatmul.mubr.bf16.gmra.mxu0 %v423
      %v909 = vpop.f32.mrf.mxu0
      %v910 = vadd.f32 0.0, %v909
      %v911 = vpop.f32.mrf.mxu0
      %v912 = vpop.f32.mrf.mxu0
      %v913 = vadd.f32 0.0, %v912
      %v914 = vpop.f32.mrf.mxu0
      %915 = vmatprep.mubr.bf16.mxu0 0
      %916 = vmatmul.mubr.bf16.gmra.mxu0 %v426
      %v917 = vpop.f32.mrf.mxu0
      %v918 = vadd.f32 0.0, %v917
      %v919 = vpop.f32.mrf.mxu0
      %v920 = vpop.f32.mrf.mxu0
      %v921 = vadd.f32 0.0, %v920
      %v922 = vpop.f32.mrf.mxu0
      %923 = vmatprep.mubr.bf16.mxu0 0
      %924 = vmatmul.mubr.bf16.gmra.mxu0 %v429
      %v925 = vpop.f32.mrf.mxu0
      %v926 = vadd.f32 0.0, %v925
      %v927 = vpop.f32.mrf.mxu0
      %v928 = vpop.f32.mrf.mxu0
      %v929 = vadd.f32 0.0, %v928
      %v930 = vpop.f32.mrf.mxu0
      %931 = vmatprep.mubr.bf16.mxu0 0
      %932 = vmatmul.mubr.bf16.gmra.mxu0 %v432
      %v933 = vpop.f32.mrf.mxu0
      %v934 = vadd.f32 0.0, %v933
      %v935 = vpop.f32.mrf.mxu0
      %v936 = vpop.f32.mrf.mxu0
      %v937 = vadd.f32 0.0, %v936
      %v938 = vpop.f32.mrf.mxu0
      %939 = vmatprep.mubr.bf16.mxu0 0
      %940 = vmatmul.mubr.bf16.gmra.mxu0 %v435
      %v941 = vpop.f32.mrf.mxu0
      %v942 = vadd.f32 0.0, %v941
      %v943 = vpop.f32.mrf.mxu0
      %v944 = vpop.f32.mrf.mxu0
      %v945 = vadd.f32 0.0, %v944
      %v946 = vpop.f32.mrf.mxu0
      %947 = vmatprep.mubr.bf16.mxu0 0
      %948 = vmatmul.mubr.bf16.gmra.mxu0 %v438
      %v949 = vpop.f32.mrf.mxu0
      %v950 = vadd.f32 0.0, %v949
      %v951 = vpop.f32.mrf.mxu0
      %v952 = vpop.f32.mrf.mxu0
      %v953 = vadd.f32 0.0, %v952
      %v954 = vpop.f32.mrf.mxu0
      %955 = vmatprep.mubr.bf16.mxu0 0
      %956 = vmatmul.mubr.bf16.gmra.mxu0 %v441
      %v957 = vpop.f32.mrf.mxu0
      %v958 = vadd.f32 0.0, %v957
      %v959 = vpop.f32.mrf.mxu0
      %v960 = vpop.f32.mrf.mxu0
      %v961 = vadd.f32 0.0, %v960
      %v962 = vpop.f32.mrf.mxu0
      %963 = vmatprep.mubr.bf16.mxu0 0
      %964 = vmatmul.mubr.bf16.gmra.mxu0 %v444
      %v965 = vpop.f32.mrf.mxu0
      %v966 = vadd.f32 0.0, %v965
      %v967 = vpop.f32.mrf.mxu0
      %v968 = vpop.f32.mrf.mxu0
      %v969 = vadd.f32 0.0, %v968
      %v970 = vpop.f32.mrf.mxu0
      %971 = vmatprep.mubr.bf16.mxu0 0
      %972 = vmatmul.mubr.bf16.gmra.mxu0 %v447
      %v973 = vpop.f32.mrf.mxu0
      %v974 = vadd.f32 0.0, %v973
      %v975 = vpop.f32.mrf.mxu0
      %v976 = vpop.f32.mrf.mxu0
      %v977 = vadd.f32 0.0, %v976
      %v978 = vpop.f32.mrf.mxu0
      %979 = vmatprep.mubr.bf16.mxu0 0
      %980 = vmatmul.mubr.bf16.gmra.mxu0 %v822
      %v981 = vpop.f32.mrf.mxu0
      %v982 = vadd.f32 0.0, %v981
      %v983 = vpop.f32.mrf.mxu0
      %v984 = vpop.f32.mrf.mxu0
      %v985 = vadd.f32 0.0, %v984
      %v986 = vpop.f32.mrf.mxu0
      %987 = vdwg.mxu0
      %v988 = vadd.f32 %v675, %v862
      %v989 = vadd.f32 %v678, %v865
      %v990 = vadd.f32 %v683, %v870
      %v991 = vadd.f32 %v686, %v873
      %v992 = vadd.f32 %v691, %v878
      %v993 = vadd.f32 %v694, %v881
      %v994 = vadd.f32 %v699, %v886
      %v995 = vadd.f32 %v702, %v889
      %v996 = vadd.f32 %v707, %v894
      %v997 = vadd.f32 %v710, %v897
      %v998 = vadd.f32 %v715, %v902
      %v999 = vadd.f32 %v718, %v905
      %v1000 = vadd.f32 %v723, %v910
      %v1001 = vadd.f32 %v726, %v913
      %v1002 = vadd.f32 %v731, %v918
      %v1003 = vadd.f32 %v734, %v921
      %v1004 = vadd.f32 %v739, %v926
      %v1005 = vadd.f32 %v742, %v929
      %v1006 = vadd.f32 %v747, %v934
      %v1007 = vadd.f32 %v750, %v937
      %v1008 = vadd.f32 %v755, %v942
      %v1009 = vadd.f32 %v758, %v945
      %v1010 = vadd.f32 %v763, %v950
      %v1011 = vadd.f32 %v766, %v953
      %v1012 = vadd.f32 %v771, %v958
      %v1013 = vadd.f32 %v774, %v961
      %v1014 = vadd.f32 %v779, %v966
      %v1015 = vadd.f32 %v782, %v969
      %v1016 = vadd.f32 %v787, %v974
      %v1017 = vadd.f32 %v790, %v977
      %v1018 = vadd.f32 %v795, %v982
      %v1019 = vadd.f32 %v798, %v985
      %v1022 = vunpack.c.l.b16 %v275
      %v1023 = vunpack.c.l.b16 %v276
      %v1024 = vpack.c.b16 %v1023, %v1022
      %v1030 = vunpack.c.l.b16 %v294
      %v1031 = vunpack.c.l.b16 %v295
      %v1032 = vunpack.c.l.b16 %v296
      %v1033 = vunpack.c.l.b16 %v297
      %v1034 = vunpack.c.l.b16 %v298
      %v1035 = vpack.c.b16 %v1031, %v1030
      %v1036 = vpack.c.b16 %v1033, %v1032
      %v1037 = vpack.c.b16 %v1034, %v1034
      %v1041 = vsel %vm400, %v1024, 0
      %v1044 = vsel %vm449, %v1037, 0
      %1046 = vmatprep.subr.bf16.mxu0 0
      %1047 = vmatpush1.bf16.msra.mxu0 0
      %1048 = vmatprep.subr.bf16.mxu0 0
      %1049 = vmatpush1.bf16.msra.mxu0 0
      %1050 = vmatprep.subr.bf16.mxu0 0
      %1051 = vmatpush1.bf16.msra.mxu0 0
      %1052 = vmatprep.subr.bf16.mxu0 0
      %1053 = vmatpush1.bf16.msra.mxu0 0
      %1054 = vmatprep.subr.bf16.mxu0 0
      %1055 = vmatpush1.bf16.msra.mxu0 0
      %1056 = vmatprep.subr.bf16.mxu0 0
      %1057 = vmatpush1.bf16.msra.mxu0 %v1044
      %1058 = vmatprep.subr.bf16.mxu0 0
      %1059 = vmatpush1.bf16.msra.mxu0 %v1036
      %1060 = vmatprep.subr.bf16.mxu0 0
      %1061 = vmatpush1.bf16.msra.mxu0 %v1035
      %1062 = vmatprep.subr.bf16.mxu0 0
      %1063 = vmatpush2.bf16.msra.mxu0 0
      %1064 = vmatprep.subr.bf16.mxu0 0
      %1065 = vmatpush2.bf16.msra.mxu0 0
      %1066 = vmatprep.subr.bf16.mxu0 0
      %1067 = vmatpush2.bf16.msra.mxu0 0
      %1068 = vmatprep.subr.bf16.mxu0 0
      %1069 = vmatpush2.bf16.msra.mxu0 0
      %1070 = vmatprep.subr.bf16.mxu0 0
      %1071 = vmatpush2.bf16.msra.mxu0 0
      %1072 = vmatprep.subr.bf16.mxu0 0
      %1073 = vmatpush2.bf16.msra.mxu0 0
      %1074 = vmatprep.subr.bf16.mxu0 0
      %1075 = vmatpush2.bf16.msra.mxu0 0
      %1076 = vmatprep.subr.bf16.mxu0 0
      %1077 = vmatpush2.bf16.msra.mxu0 0
      %1078 = vmatprep.mubr.bf16.mxu0 0
      %1079 = vmatmul.mubr.bf16.gmra.mxu0 %v408
      %v1080 = vpop.f32.mrf.mxu0
      %v1081 = vadd.f32 0.0, %v1080
      %v1082 = vpop.f32.mrf.mxu0
      %v1083 = vpop.f32.mrf.mxu0
      %v1084 = vadd.f32 0.0, %v1083
      %v1085 = vpop.f32.mrf.mxu0
      %1086 = vmatprep.mubr.bf16.mxu0 0
      %1087 = vmatmul.mubr.bf16.gmra.mxu0 %v411
      %v1088 = vpop.f32.mrf.mxu0
      %v1089 = vadd.f32 0.0, %v1088
      %v1090 = vpop.f32.mrf.mxu0
      %v1091 = vpop.f32.mrf.mxu0
      %v1092 = vadd.f32 0.0, %v1091
      %v1093 = vpop.f32.mrf.mxu0
      %1094 = vmatprep.mubr.bf16.mxu0 0
      %1095 = vmatmul.mubr.bf16.gmra.mxu0 %v414
      %v1096 = vpop.f32.mrf.mxu0
      %v1097 = vadd.f32 0.0, %v1096
      %v1098 = vpop.f32.mrf.mxu0
      %v1099 = vpop.f32.mrf.mxu0
      %v1100 = vadd.f32 0.0, %v1099
      %v1101 = vpop.f32.mrf.mxu0
      %1102 = vmatprep.mubr.bf16.mxu0 0
      %1103 = vmatmul.mubr.bf16.gmra.mxu0 %v417
      %v1104 = vpop.f32.mrf.mxu0
      %v1105 = vadd.f32 0.0, %v1104
      %v1106 = vpop.f32.mrf.mxu0
      %v1107 = vpop.f32.mrf.mxu0
      %v1108 = vadd.f32 0.0, %v1107
      %v1109 = vpop.f32.mrf.mxu0
      %1110 = vmatprep.mubr.bf16.mxu0 0
      %1111 = vmatmul.mubr.bf16.gmra.mxu0 %v420
      %v1112 = vpop.f32.mrf.mxu0
      %v1113 = vadd.f32 0.0, %v1112
      %v1114 = vpop.f32.mrf.mxu0
      %v1115 = vpop.f32.mrf.mxu0
      %v1116 = vadd.f32 0.0, %v1115
      %v1117 = vpop.f32.mrf.mxu0
      %1118 = vmatprep.mubr.bf16.mxu0 0
      %1119 = vmatmul.mubr.bf16.gmra.mxu0 %v423
      %v1120 = vpop.f32.mrf.mxu0
      %v1121 = vadd.f32 0.0, %v1120
      %v1122 = vpop.f32.mrf.mxu0
      %v1123 = vpop.f32.mrf.mxu0
      %v1124 = vadd.f32 0.0, %v1123
      %v1125 = vpop.f32.mrf.mxu0
      %1126 = vmatprep.mubr.bf16.mxu0 0
      %1127 = vmatmul.mubr.bf16.gmra.mxu0 %v426
      %v1128 = vpop.f32.mrf.mxu0
      %v1129 = vadd.f32 0.0, %v1128
      %v1130 = vpop.f32.mrf.mxu0
      %v1131 = vpop.f32.mrf.mxu0
      %v1132 = vadd.f32 0.0, %v1131
      %v1133 = vpop.f32.mrf.mxu0
      %1134 = vmatprep.mubr.bf16.mxu0 0
      %1135 = vmatmul.mubr.bf16.gmra.mxu0 %v429
      %v1136 = vpop.f32.mrf.mxu0
      %v1137 = vadd.f32 0.0, %v1136
      %v1138 = vpop.f32.mrf.mxu0
      %v1139 = vpop.f32.mrf.mxu0
      %v1140 = vadd.f32 0.0, %v1139
      %v1141 = vpop.f32.mrf.mxu0
      %1142 = vmatprep.mubr.bf16.mxu0 0
      %1143 = vmatmul.mubr.bf16.gmra.mxu0 %v432
      %v1144 = vpop.f32.mrf.mxu0
      %v1145 = vadd.f32 0.0, %v1144
      %v1146 = vpop.f32.mrf.mxu0
      %v1147 = vpop.f32.mrf.mxu0
      %v1148 = vadd.f32 0.0, %v1147
      %v1149 = vpop.f32.mrf.mxu0
      %1150 = vmatprep.mubr.bf16.mxu0 0
      %1151 = vmatmul.mubr.bf16.gmra.mxu0 %v435
      %v1152 = vpop.f32.mrf.mxu0
      %v1153 = vadd.f32 0.0, %v1152
      %v1154 = vpop.f32.mrf.mxu0
      %v1155 = vpop.f32.mrf.mxu0
      %v1156 = vadd.f32 0.0, %v1155
      %v1157 = vpop.f32.mrf.mxu0
      %1158 = vmatprep.mubr.bf16.mxu0 0
      %1159 = vmatmul.mubr.bf16.gmra.mxu0 %v438
      %v1160 = vpop.f32.mrf.mxu0
      %v1161 = vadd.f32 0.0, %v1160
      %v1162 = vpop.f32.mrf.mxu0
      %v1163 = vpop.f32.mrf.mxu0
      %v1164 = vadd.f32 0.0, %v1163
      %v1165 = vpop.f32.mrf.mxu0
      %1166 = vmatprep.mubr.bf16.mxu0 0
      %1167 = vmatmul.mubr.bf16.gmra.mxu0 %v441
      %v1168 = vpop.f32.mrf.mxu0
      %v1169 = vadd.f32 0.0, %v1168
      %v1170 = vpop.f32.mrf.mxu0
      %v1171 = vpop.f32.mrf.mxu0
      %v1172 = vadd.f32 0.0, %v1171
      %v1173 = vpop.f32.mrf.mxu0
      %1174 = vmatprep.mubr.bf16.mxu0 0
      %1175 = vmatmul.mubr.bf16.gmra.mxu0 %v444
      %v1176 = vpop.f32.mrf.mxu0
      %v1177 = vadd.f32 0.0, %v1176
      %v1178 = vpop.f32.mrf.mxu0
      %v1179 = vpop.f32.mrf.mxu0
      %v1180 = vadd.f32 0.0, %v1179
      %v1181 = vpop.f32.mrf.mxu0
      %1182 = vmatprep.mubr.bf16.mxu0 0
      %1183 = vmatmul.mubr.bf16.gmra.mxu0 %v447
      %v1184 = vpop.f32.mrf.mxu0
      %v1185 = vadd.f32 0.0, %v1184
      %v1186 = vpop.f32.mrf.mxu0
      %v1187 = vpop.f32.mrf.mxu0
      %v1188 = vadd.f32 0.0, %v1187
      %v1189 = vpop.f32.mrf.mxu0
      %1190 = vmatprep.mubr.bf16.mxu0 0
      %1191 = vmatmul.mubr.bf16.gmra.mxu0 %v822
      %v1192 = vpop.f32.mrf.mxu0
      %v1193 = vadd.f32 0.0, %v1192
      %v1194 = vpop.f32.mrf.mxu0
      %v1195 = vpop.f32.mrf.mxu0
      %v1196 = vadd.f32 0.0, %v1195
      %v1197 = vpop.f32.mrf.mxu0
      %1198 = vmatprep.mubr.bf16.mxu0 0
      %1199 = vmatmul.mubr.bf16.gmra.mxu0 %v1041
      %v1200 = vpop.f32.mrf.mxu0
      %v1201 = vadd.f32 0.0, %v1200
      %v1202 = vpop.f32.mrf.mxu0
      %v1203 = vpop.f32.mrf.mxu0
      %v1204 = vadd.f32 0.0, %v1203
      %v1205 = vpop.f32.mrf.mxu0
      %1206 = vdwg.mxu0
      %v1207 = vadd.f32 %v988, %v1081
      %v1208 = vadd.f32 %v989, %v1084
      %v1209 = vadd.f32 %v990, %v1089
      %v1210 = vadd.f32 %v991, %v1092
      %v1211 = vadd.f32 %v992, %v1097
      %v1212 = vadd.f32 %v993, %v1100
      %v1213 = vadd.f32 %v994, %v1105
      %v1214 = vadd.f32 %v995, %v1108
      %v1215 = vadd.f32 %v996, %v1113
      %v1216 = vadd.f32 %v997, %v1116
      %v1217 = vadd.f32 %v998, %v1121
      %v1218 = vadd.f32 %v999, %v1124
      %v1219 = vadd.f32 %v1000, %v1129
      %v1220 = vadd.f32 %v1001, %v1132
      %v1221 = vadd.f32 %v1002, %v1137
      %v1222 = vadd.f32 %v1003, %v1140
      %v1223 = vadd.f32 %v1004, %v1145
      %v1224 = vadd.f32 %v1005, %v1148
      %v1225 = vadd.f32 %v1006, %v1153
      %v1226 = vadd.f32 %v1007, %v1156
      %v1227 = vadd.f32 %v1008, %v1161
      %v1228 = vadd.f32 %v1009, %v1164
      %v1229 = vadd.f32 %v1010, %v1169
      %v1230 = vadd.f32 %v1011, %v1172
      %v1231 = vadd.f32 %v1012, %v1177
      %v1232 = vadd.f32 %v1013, %v1180
      %v1233 = vadd.f32 %v1014, %v1185
      %v1234 = vadd.f32 %v1015, %v1188
      %v1235 = vadd.f32 %v1016, %v1193
      %v1236 = vadd.f32 %v1017, %v1196
      %v1237 = vadd.f32 %v1018, %v1201
      %v1238 = vadd.f32 %v1019, %v1204
      %v1241 = vunpack.c.l.b16 %v277
      %v1242 = vunpack.c.l.b16 %v278
      %v1243 = vpack.c.b16 %v1242, %v1241
      %v1249 = vunpack.c.l.b16 %v299
      %v1250 = vunpack.c.l.b16 %v300
      %v1251 = vunpack.c.l.b16 %v301
      %v1252 = vunpack.c.l.b16 %v302
      %v1253 = vunpack.c.l.b16 %v303
      %v1254 = vpack.c.b16 %v1250, %v1249
      %v1255 = vpack.c.b16 %v1252, %v1251
      %v1256 = vpack.c.b16 %v1253, %v1253
      %v1260 = vsel %vm400, %v1243, 0
      %v1263 = vsel %vm449, %v1256, 0
      %1265 = vmatprep.subr.bf16.mxu0 0
      %1266 = vmatpush1.bf16.msra.mxu0 0
      %1267 = vmatprep.subr.bf16.mxu0 0
      %1268 = vmatpush1.bf16.msra.mxu0 0
      %1269 = vmatprep.subr.bf16.mxu0 0
      %1270 = vmatpush1.bf16.msra.mxu0 0
      %1271 = vmatprep.subr.bf16.mxu0 0
      %1272 = vmatpush1.bf16.msra.mxu0 0
      %1273 = vmatprep.subr.bf16.mxu0 0
      %1274 = vmatpush1.bf16.msra.mxu0 0
      %1275 = vmatprep.subr.bf16.mxu0 0
      %1276 = vmatpush1.bf16.msra.mxu0 %v1263
      %1277 = vmatprep.subr.bf16.mxu0 0
      %1278 = vmatpush1.bf16.msra.mxu0 %v1255
      %1279 = vmatprep.subr.bf16.mxu0 0
      %1280 = vmatpush1.bf16.msra.mxu0 %v1254
      %1281 = vmatprep.subr.bf16.mxu0 0
      %1282 = vmatpush2.bf16.msra.mxu0 0
      %1283 = vmatprep.subr.bf16.mxu0 0
      %1284 = vmatpush2.bf16.msra.mxu0 0
      %1285 = vmatprep.subr.bf16.mxu0 0
      %1286 = vmatpush2.bf16.msra.mxu0 0
      %1287 = vmatprep.subr.bf16.mxu0 0
      %1288 = vmatpush2.bf16.msra.mxu0 0
      %1289 = vmatprep.subr.bf16.mxu0 0
      %1290 = vmatpush2.bf16.msra.mxu0 0
      %1291 = vmatprep.subr.bf16.mxu0 0
      %1292 = vmatpush2.bf16.msra.mxu0 0
      %1293 = vmatprep.subr.bf16.mxu0 0
      %1294 = vmatpush2.bf16.msra.mxu0 0
      %1295 = vmatprep.subr.bf16.mxu0 0
      %1296 = vmatpush2.bf16.msra.mxu0 0
      %1297 = vmatprep.mubr.bf16.mxu0 0
      %1298 = vmatmul.mubr.bf16.gmra.mxu0 %v411
      %v1299 = vpop.f32.mrf.mxu0
      %v1300 = vadd.f32 0.0, %v1299
      %v1301 = vpop.f32.mrf.mxu0
      %v1302 = vpop.f32.mrf.mxu0
      %v1303 = vadd.f32 0.0, %v1302
      %v1304 = vpop.f32.mrf.mxu0
      %1305 = vmatprep.mubr.bf16.mxu0 0
      %1306 = vmatmul.mubr.bf16.gmra.mxu0 %v414
      %v1307 = vpop.f32.mrf.mxu0
      %v1308 = vadd.f32 0.0, %v1307
      %v1309 = vpop.f32.mrf.mxu0
      %v1310 = vpop.f32.mrf.mxu0
      %v1311 = vadd.f32 0.0, %v1310
      %v1312 = vpop.f32.mrf.mxu0
      %1313 = vmatprep.mubr.bf16.mxu0 0
      %1314 = vmatmul.mubr.bf16.gmra.mxu0 %v417
      %v1315 = vpop.f32.mrf.mxu0
      %v1316 = vadd.f32 0.0, %v1315
      %v1317 = vpop.f32.mrf.mxu0
      %v1318 = vpop.f32.mrf.mxu0
      %v1319 = vadd.f32 0.0, %v1318
      %v1320 = vpop.f32.mrf.mxu0
      %1321 = vmatprep.mubr.bf16.mxu0 0
      %1322 = vmatmul.mubr.bf16.gmra.mxu0 %v420
      %v1323 = vpop.f32.mrf.mxu0
      %v1324 = vadd.f32 0.0, %v1323
      %v1325 = vpop.f32.mrf.mxu0
      %v1326 = vpop.f32.mrf.mxu0
      %v1327 = vadd.f32 0.0, %v1326
      %v1328 = vpop.f32.mrf.mxu0
      %1329 = vmatprep.mubr.bf16.mxu0 0
      %1330 = vmatmul.mubr.bf16.gmra.mxu0 %v423
      %v1331 = vpop.f32.mrf.mxu0
      %v1332 = vadd.f32 0.0, %v1331
      %v1333 = vpop.f32.mrf.mxu0
      %v1334 = vpop.f32.mrf.mxu0
      %v1335 = vadd.f32 0.0, %v1334
      %v1336 = vpop.f32.mrf.mxu0
      %1337 = vmatprep.mubr.bf16.mxu0 0
      %1338 = vmatmul.mubr.bf16.gmra.mxu0 %v426
      %v1339 = vpop.f32.mrf.mxu0
      %v1340 = vadd.f32 0.0, %v1339
      %v1341 = vpop.f32.mrf.mxu0
      %v1342 = vpop.f32.mrf.mxu0
      %v1343 = vadd.f32 0.0, %v1342
      %v1344 = vpop.f32.mrf.mxu0
      %1345 = vmatprep.mubr.bf16.mxu0 0
      %1346 = vmatmul.mubr.bf16.gmra.mxu0 %v429
      %v1347 = vpop.f32.mrf.mxu0
      %v1348 = vadd.f32 0.0, %v1347
      %v1349 = vpop.f32.mrf.mxu0
      %v1350 = vpop.f32.mrf.mxu0
      %v1351 = vadd.f32 0.0, %v1350
      %v1352 = vpop.f32.mrf.mxu0
      %1353 = vmatprep.mubr.bf16.mxu0 0
      %1354 = vmatmul.mubr.bf16.gmra.mxu0 %v432
      %v1355 = vpop.f32.mrf.mxu0
      %v1356 = vadd.f32 0.0, %v1355
      %v1357 = vpop.f32.mrf.mxu0
      %v1358 = vpop.f32.mrf.mxu0
      %v1359 = vadd.f32 0.0, %v1358
      %v1360 = vpop.f32.mrf.mxu0
      %1361 = vmatprep.mubr.bf16.mxu0 0
      %1362 = vmatmul.mubr.bf16.gmra.mxu0 %v435
      %v1363 = vpop.f32.mrf.mxu0
      %v1364 = vadd.f32 0.0, %v1363
      %v1365 = vpop.f32.mrf.mxu0
      %v1366 = vpop.f32.mrf.mxu0
      %v1367 = vadd.f32 0.0, %v1366
      %v1368 = vpop.f32.mrf.mxu0
      %1369 = vmatprep.mubr.bf16.mxu0 0
      %1370 = vmatmul.mubr.bf16.gmra.mxu0 %v438
      %v1371 = vpop.f32.mrf.mxu0
      %v1372 = vadd.f32 0.0, %v1371
      %v1373 = vpop.f32.mrf.mxu0
      %v1374 = vpop.f32.mrf.mxu0
      %v1375 = vadd.f32 0.0, %v1374
      %v1376 = vpop.f32.mrf.mxu0
      %1377 = vmatprep.mubr.bf16.mxu0 0
      %1378 = vmatmul.mubr.bf16.gmra.mxu0 %v441
      %v1379 = vpop.f32.mrf.mxu0
      %v1380 = vadd.f32 0.0, %v1379
      %v1381 = vpop.f32.mrf.mxu0
      %v1382 = vpop.f32.mrf.mxu0
      %v1383 = vadd.f32 0.0, %v1382
      %v1384 = vpop.f32.mrf.mxu0
      %1385 = vmatprep.mubr.bf16.mxu0 0
      %1386 = vmatmul.mubr.bf16.gmra.mxu0 %v444
      %v1387 = vpop.f32.mrf.mxu0
      %v1388 = vadd.f32 0.0, %v1387
      %v1389 = vpop.f32.mrf.mxu0
      %v1390 = vpop.f32.mrf.mxu0
      %v1391 = vadd.f32 0.0, %v1390
      %v1392 = vpop.f32.mrf.mxu0
      %1393 = vmatprep.mubr.bf16.mxu0 0
      %1394 = vmatmul.mubr.bf16.gmra.mxu0 %v447
      %v1395 = vpop.f32.mrf.mxu0
      %v1396 = vadd.f32 0.0, %v1395
      %v1397 = vpop.f32.mrf.mxu0
      %v1398 = vpop.f32.mrf.mxu0
      %v1399 = vadd.f32 0.0, %v1398
      %v1400 = vpop.f32.mrf.mxu0
      %1401 = vmatprep.mubr.bf16.mxu0 0
      %1402 = vmatmul.mubr.bf16.gmra.mxu0 %v822
      %v1403 = vpop.f32.mrf.mxu0
      %v1404 = vadd.f32 0.0, %v1403
      %v1405 = vpop.f32.mrf.mxu0
      %v1406 = vpop.f32.mrf.mxu0
      %v1407 = vadd.f32 0.0, %v1406
      %v1408 = vpop.f32.mrf.mxu0
      %1409 = vmatprep.mubr.bf16.mxu0 0
      %1410 = vmatmul.mubr.bf16.gmra.mxu0 %v1041
      %v1411 = vpop.f32.mrf.mxu0
      %v1412 = vadd.f32 0.0, %v1411
      %v1413 = vpop.f32.mrf.mxu0
      %v1414 = vpop.f32.mrf.mxu0
      %v1415 = vadd.f32 0.0, %v1414
      %v1416 = vpop.f32.mrf.mxu0
      %1417 = vmatprep.mubr.bf16.mxu0 0
      %1418 = vmatmul.mubr.bf16.gmra.mxu0 %v1260
      %v1419 = vpop.f32.mrf.mxu0
      %v1420 = vadd.f32 0.0, %v1419
      %v1421 = vpop.f32.mrf.mxu0
      %v1422 = vpop.f32.mrf.mxu0
      %v1423 = vadd.f32 0.0, %v1422
      %v1424 = vpop.f32.mrf.mxu0
      %1425 = vdwg.mxu0
      %v1426 = vadd.f32 %v1207, %v1300
      %v1427 = vadd.f32 %v1208, %v1303
      %v1428 = vadd.f32 %v1209, %v1308
      %v1429 = vadd.f32 %v1210, %v1311
      %v1430 = vadd.f32 %v1211, %v1316
      %v1431 = vadd.f32 %v1212, %v1319
      %v1432 = vadd.f32 %v1213, %v1324
      %v1433 = vadd.f32 %v1214, %v1327
      %v1434 = vadd.f32 %v1215, %v1332
      %v1435 = vadd.f32 %v1216, %v1335
      %v1436 = vadd.f32 %v1217, %v1340
      %v1437 = vadd.f32 %v1218, %v1343
      %v1438 = vadd.f32 %v1219, %v1348
      %v1439 = vadd.f32 %v1220, %v1351
      %v1440 = vadd.f32 %v1221, %v1356
      %v1441 = vadd.f32 %v1222, %v1359
      %v1442 = vadd.f32 %v1223, %v1364
      %v1443 = vadd.f32 %v1224, %v1367
      %v1444 = vadd.f32 %v1225, %v1372
      %v1445 = vadd.f32 %v1226, %v1375
      %v1446 = vadd.f32 %v1227, %v1380
      %v1447 = vadd.f32 %v1228, %v1383
      %v1448 = vadd.f32 %v1229, %v1388
      %v1449 = vadd.f32 %v1230, %v1391
      %v1450 = vadd.f32 %v1231, %v1396
      %v1451 = vadd.f32 %v1232, %v1399
      %v1452 = vadd.f32 %v1233, %v1404
      %v1453 = vadd.f32 %v1234, %v1407
      %v1454 = vadd.f32 %v1235, %v1412
      %v1455 = vadd.f32 %v1236, %v1415
      %v1456 = vadd.f32 %v1237, %v1420
      %v1457 = vadd.f32 %v1238, %v1423
      %v1459 = vlaneseq
      %v1460 = vshrl.u32 %v1459, 7
      %v1461 = vsub.s32 0, %v1460
      %v1462 = vrot.slane %v304, %v1461
      %v1464 = vadd.f32 %v1426, %v1462
      %v1465 = vadd.f32 %v1427, %v1462
      %v1466 = vadd.f32 %v1428, %v1462
      %v1467 = vadd.f32 %v1429, %v1462
      %v1468 = vadd.f32 %v1430, %v1462
      %v1469 = vadd.f32 %v1431, %v1462
      %v1470 = vadd.f32 %v1432, %v1462
      %v1471 = vadd.f32 %v1433, %v1462
      %v1472 = vadd.f32 %v1434, %v1462
      %v1473 = vadd.f32 %v1435, %v1462
      %v1474 = vadd.f32 %v1436, %v1462
      %v1475 = vadd.f32 %v1437, %v1462
      %v1476 = vadd.f32 %v1438, %v1462
      %v1477 = vadd.f32 %v1439, %v1462
      %v1478 = vadd.f32 %v1440, %v1462
      %v1479 = vadd.f32 %v1441, %v1462
      %v1480 = vadd.f32 %v1442, %v1462
      %v1481 = vadd.f32 %v1443, %v1462
      %v1482 = vadd.f32 %v1444, %v1462
      %v1483 = vadd.f32 %v1445, %v1462
      %v1484 = vadd.f32 %v1446, %v1462
      %v1485 = vadd.f32 %v1447, %v1462
      %v1486 = vadd.f32 %v1448, %v1462
      %v1487 = vadd.f32 %v1449, %v1462
      %v1488 = vadd.f32 %v1450, %v1462
      %v1489 = vadd.f32 %v1451, %v1462
      %v1490 = vadd.f32 %v1452, %v1462
      %v1491 = vadd.f32 %v1453, %v1462
      %v1492 = vadd.f32 %v1454, %v1462
      %v1493 = vadd.f32 %v1455, %v1462
      %v1494 = vadd.f32 %v1456, %v1462
      %v1495 = vadd.f32 %v1457, %v1462
      %v1496 = vpack.c.bf16 %v1465, %v1464
      %v1497 = vpack.c.bf16 %v1467, %v1466
      %v1498 = vpack.c.bf16 %v1469, %v1468
      %v1499 = vpack.c.bf16 %v1471, %v1470
      %v1500 = vpack.c.bf16 %v1473, %v1472
      %v1501 = vpack.c.bf16 %v1475, %v1474
      %v1502 = vpack.c.bf16 %v1477, %v1476
      %v1503 = vpack.c.bf16 %v1479, %v1478
      %v1504 = vpack.c.bf16 %v1481, %v1480
      %v1505 = vpack.c.bf16 %v1483, %v1482
      %v1506 = vpack.c.bf16 %v1485, %v1484
      %v1507 = vpack.c.bf16 %v1487, %v1486
      %v1508 = vpack.c.bf16 %v1489, %v1488
      %v1509 = vpack.c.bf16 %v1491, %v1490
      %v1510 = vpack.c.bf16 %v1493, %v1492
      %v1511 = vpack.c.bf16 %v1495, %v1494
      %v1512 = vunpack.c.l.bf16 %v1496
      %v1513 = vunpack.c.h.bf16 %v1496
      %v1514 = vunpack.c.l.bf16 %v1497
      %v1515 = vunpack.c.h.bf16 %v1497
      %v1516 = vunpack.c.l.bf16 %v1498
      %v1517 = vunpack.c.h.bf16 %v1498
      %v1518 = vunpack.c.l.bf16 %v1499
      %v1519 = vunpack.c.h.bf16 %v1499
      %v1520 = vunpack.c.l.bf16 %v1500
      %v1521 = vunpack.c.h.bf16 %v1500
      %v1522 = vunpack.c.l.bf16 %v1501
      %v1523 = vunpack.c.h.bf16 %v1501
      %v1524 = vunpack.c.l.bf16 %v1502
      %v1525 = vunpack.c.h.bf16 %v1502
      %v1526 = vunpack.c.l.bf16 %v1503
      %v1527 = vunpack.c.h.bf16 %v1503
      %v1528 = vunpack.c.l.bf16 %v1504
      %v1529 = vunpack.c.h.bf16 %v1504
      %v1530 = vunpack.c.l.bf16 %v1505
      %v1531 = vunpack.c.h.bf16 %v1505
      %v1532 = vunpack.c.l.bf16 %v1506
      %v1533 = vunpack.c.h.bf16 %v1506
      %v1534 = vunpack.c.l.bf16 %v1507
      %v1535 = vunpack.c.h.bf16 %v1507
      %v1536 = vunpack.c.l.bf16 %v1508
      %v1537 = vunpack.c.h.bf16 %v1508
      %v1538 = vunpack.c.l.bf16 %v1509
      %v1539 = vunpack.c.h.bf16 %v1509
      %v1540 = vunpack.c.l.bf16 %v1510
      %v1541 = vunpack.c.h.bf16 %v1510
      %v1542 = vunpack.c.l.bf16 %v1511
      %v1543 = vunpack.c.h.bf16 %v1511
      %v1544 = vlaneseq
      %v1545 = vshrl.u32 %v1544, 7
      %v1546 = vadd.s32 %v1545, 8
      %v1547 = vadd.s32 %v1545, 16
      %v1548 = vadd.s32 %v1545, 24
      %v1549 = vadd.s32 %v1545, 32
      %v1550 = vadd.s32 %v1545, 40
      %v1551 = vadd.s32 %v1545, 48
      %v1552 = vadd.s32 %v1545, 56
      %v1553 = vadd.s32 %v1545, 64
      %v1554 = vadd.s32 %v1545, 72
      %v1555 = vadd.s32 %v1545, 80
      %v1556 = vadd.s32 %v1545, 88
      %v1557 = vadd.s32 %v1545, 96
      %v1558 = vadd.s32 %v1545, 104
      %v1559 = vadd.s32 %v1545, 112
      %v1560 = vadd.s32 %v1545, 120
      %v1561 = vadd.s32 %v1545, 128
      %v1562 = vadd.s32 %v1545, 136
      %v1563 = vadd.s32 %v1545, 144
      %v1564 = vadd.s32 %v1545, 152
      %v1565 = vadd.s32 %v1545, 160
      %v1566 = vadd.s32 %v1545, 168
      %v1567 = vadd.s32 %v1545, 176
      %v1568 = vadd.s32 %v1545, 184
      %v1569 = vadd.s32 %v1545, 192
      %v1570 = vadd.s32 %v1545, 200
      %v1571 = vadd.s32 %v1545, 208
      %v1572 = vadd.s32 %v1545, 216
      %v1573 = vadd.s32 %v1545, 224
      %v1574 = vadd.s32 %v1545, 232
      %v1575 = vadd.s32 %v1545, 240
      %v1576 = vadd.s32 %v1545, 248
      %s1577 = ssub.s32 16, %s235
      %s1578 = smul.u32 %s1577, 16
      %v1579 = vstv %s1578
      %vm1580 = vcmp.lt.s32.totalorder %v1545, %v1579
      %vm1581 = vcmp.lt.s32.totalorder %v1546, %v1579
      %vm1582 = vcmp.lt.s32.totalorder %v1547, %v1579
      %vm1583 = vcmp.lt.s32.totalorder %v1548, %v1579
      %vm1584 = vcmp.lt.s32.totalorder %v1549, %v1579
      %vm1585 = vcmp.lt.s32.totalorder %v1550, %v1579
      %vm1586 = vcmp.lt.s32.totalorder %v1551, %v1579
      %vm1587 = vcmp.lt.s32.totalorder %v1552, %v1579
      %vm1588 = vcmp.lt.s32.totalorder %v1553, %v1579
      %vm1589 = vcmp.lt.s32.totalorder %v1554, %v1579
      %vm1590 = vcmp.lt.s32.totalorder %v1555, %v1579
      %vm1591 = vcmp.lt.s32.totalorder %v1556, %v1579
      %vm1592 = vcmp.lt.s32.totalorder %v1557, %v1579
      %vm1593 = vcmp.lt.s32.totalorder %v1558, %v1579
      %vm1594 = vcmp.lt.s32.totalorder %v1559, %v1579
      %vm1595 = vcmp.lt.s32.totalorder %v1560, %v1579
      %vm1596 = vcmp.lt.s32.totalorder %v1561, %v1579
      %vm1597 = vcmp.lt.s32.totalorder %v1562, %v1579
      %vm1598 = vcmp.lt.s32.totalorder %v1563, %v1579
      %vm1599 = vcmp.lt.s32.totalorder %v1564, %v1579
      %vm1600 = vcmp.lt.s32.totalorder %v1565, %v1579
      %vm1601 = vcmp.lt.s32.totalorder %v1566, %v1579
      %vm1602 = vcmp.lt.s32.totalorder %v1567, %v1579
      %vm1603 = vcmp.lt.s32.totalorder %v1568, %v1579
      %vm1604 = vcmp.lt.s32.totalorder %v1569, %v1579
      %vm1605 = vcmp.lt.s32.totalorder %v1570, %v1579
      %vm1606 = vcmp.lt.s32.totalorder %v1571, %v1579
      %vm1607 = vcmp.lt.s32.totalorder %v1572, %v1579
      %vm1608 = vcmp.lt.s32.totalorder %v1573, %v1579
      %vm1609 = vcmp.lt.s32.totalorder %v1574, %v1579
      %vm1610 = vcmp.lt.s32.totalorder %v1575, %v1579
      %vm1611 = vcmp.lt.s32.totalorder %v1576, %v1579
      %v1612 = vsel %vm1580, 1, 0
      %v1613 = vsel %vm1581, 1, 0
      %v1614 = vsel %vm1582, 1, 0
      %v1615 = vsel %vm1583, 1, 0
      %v1616 = vsel %vm1584, 1, 0
      %v1617 = vsel %vm1585, 1, 0
      %v1618 = vsel %vm1586, 1, 0
      %v1619 = vsel %vm1587, 1, 0
      %v1620 = vsel %vm1588, 1, 0
      %v1621 = vsel %vm1589, 1, 0
      %v1622 = vsel %vm1590, 1, 0
      %v1623 = vsel %vm1591, 1, 0
      %v1624 = vsel %vm1592, 1, 0
      %v1625 = vsel %vm1593, 1, 0
      %v1626 = vsel %vm1594, 1, 0
      %v1627 = vsel %vm1595, 1, 0
      %v1628 = vsel %vm1596, 1, 0
      %v1629 = vsel %vm1597, 1, 0
      %v1630 = vsel %vm1598, 1, 0
      %v1631 = vsel %vm1599, 1, 0
      %v1632 = vsel %vm1600, 1, 0
      %v1633 = vsel %vm1601, 1, 0
      %v1634 = vsel %vm1602, 1, 0
      %v1635 = vsel %vm1603, 1, 0
      %v1636 = vsel %vm1604, 1, 0
      %v1637 = vsel %vm1605, 1, 0
      %v1638 = vsel %vm1606, 1, 0
      %v1639 = vsel %vm1607, 1, 0
      %v1640 = vsel %vm1608, 1, 0
      %v1641 = vsel %vm1609, 1, 0
      %v1642 = vsel %vm1610, 1, 0
      %v1643 = vsel %vm1611, 1, 0
      %vm1644 = vcmp.eq.s32.totalorder %v1612, 1
      %vm1645 = vcmp.eq.s32.totalorder %v1613, 1
      %vm1646 = vcmp.eq.s32.totalorder %v1614, 1
      %vm1647 = vcmp.eq.s32.totalorder %v1615, 1
      %vm1648 = vcmp.eq.s32.totalorder %v1616, 1
      %vm1649 = vcmp.eq.s32.totalorder %v1617, 1
      %vm1650 = vcmp.eq.s32.totalorder %v1618, 1
      %vm1651 = vcmp.eq.s32.totalorder %v1619, 1
      %vm1652 = vcmp.eq.s32.totalorder %v1620, 1
      %vm1653 = vcmp.eq.s32.totalorder %v1621, 1
      %vm1654 = vcmp.eq.s32.totalorder %v1622, 1
      %vm1655 = vcmp.eq.s32.totalorder %v1623, 1
      %vm1656 = vcmp.eq.s32.totalorder %v1624, 1
      %vm1657 = vcmp.eq.s32.totalorder %v1625, 1
      %vm1658 = vcmp.eq.s32.totalorder %v1626, 1
      %vm1659 = vcmp.eq.s32.totalorder %v1627, 1
      %vm1660 = vcmp.eq.s32.totalorder %v1628, 1
      %vm1661 = vcmp.eq.s32.totalorder %v1629, 1
      %vm1662 = vcmp.eq.s32.totalorder %v1630, 1
      %vm1663 = vcmp.eq.s32.totalorder %v1631, 1
      %vm1664 = vcmp.eq.s32.totalorder %v1632, 1
      %vm1665 = vcmp.eq.s32.totalorder %v1633, 1
      %vm1666 = vcmp.eq.s32.totalorder %v1634, 1
      %vm1667 = vcmp.eq.s32.totalorder %v1635, 1
      %vm1668 = vcmp.eq.s32.totalorder %v1636, 1
      %vm1669 = vcmp.eq.s32.totalorder %v1637, 1
      %vm1670 = vcmp.eq.s32.totalorder %v1638, 1
      %vm1671 = vcmp.eq.s32.totalorder %v1639, 1
      %vm1672 = vcmp.eq.s32.totalorder %v1640, 1
      %vm1673 = vcmp.eq.s32.totalorder %v1641, 1
      %vm1674 = vcmp.eq.s32.totalorder %v1642, 1
      %vm1675 = vcmp.eq.s32.totalorder %v1643, 1
      %v1676 = vsel %vm1644, %v1512, 0.0
      %v1677 = vsel %vm1645, %v1513, 0.0
      %v1678 = vsel %vm1646, %v1514, 0.0
      %v1679 = vsel %vm1647, %v1515, 0.0
      %v1680 = vsel %vm1648, %v1516, 0.0
      %v1681 = vsel %vm1649, %v1517, 0.0
      %v1682 = vsel %vm1650, %v1518, 0.0
      %v1683 = vsel %vm1651, %v1519, 0.0
      %v1684 = vsel %vm1652, %v1520, 0.0
      %v1685 = vsel %vm1653, %v1521, 0.0
      %v1686 = vsel %vm1654, %v1522, 0.0
      %v1687 = vsel %vm1655, %v1523, 0.0
      %v1688 = vsel %vm1656, %v1524, 0.0
      %v1689 = vsel %vm1657, %v1525, 0.0
      %v1690 = vsel %vm1658, %v1526, 0.0
      %v1691 = vsel %vm1659, %v1527, 0.0
      %v1692 = vsel %vm1660, %v1528, 0.0
      %v1693 = vsel %vm1661, %v1529, 0.0
      %v1694 = vsel %vm1662, %v1530, 0.0
      %v1695 = vsel %vm1663, %v1531, 0.0
      %v1696 = vsel %vm1664, %v1532, 0.0
      %v1697 = vsel %vm1665, %v1533, 0.0
      %v1698 = vsel %vm1666, %v1534, 0.0
      %v1699 = vsel %vm1667, %v1535, 0.0
      %v1700 = vsel %vm1668, %v1536, 0.0
      %v1701 = vsel %vm1669, %v1537, 0.0
      %v1702 = vsel %vm1670, %v1538, 0.0
      %v1703 = vsel %vm1671, %v1539, 0.0
      %v1704 = vsel %vm1672, %v1540, 0.0
      %v1705 = vsel %vm1673, %v1541, 0.0
      %v1706 = vsel %vm1674, %v1542, 0.0
      %v1707 = vsel %vm1675, %v1543, 0.0
      %vm1708 = vcmask 392192
      %v1709 = vsel %vm1708, %v1676, 0.0
      %v1710 = vsel %vm1708, %v1677, 0.0
      %v1711 = vadd.f32 %v1709, %v1710
      %v1712 = vsel %vm1708, %v1678, 0.0
      %v1713 = vadd.f32 %v1711, %v1712
      %v1714 = vsel %vm1708, %v1679, 0.0
      %v1715 = vadd.f32 %v1713, %v1714
      %v1716 = vsel %vm1708, %v1680, 0.0
      %v1717 = vadd.f32 %v1715, %v1716
      %v1718 = vsel %vm1708, %v1681, 0.0
      %v1719 = vadd.f32 %v1717, %v1718
      %v1720 = vsel %vm1708, %v1682, 0.0
      %v1721 = vadd.f32 %v1719, %v1720
      %v1722 = vsel %vm1708, %v1683, 0.0
      %v1723 = vadd.f32 %v1721, %v1722
      %v1724 = vsel %vm1708, %v1684, 0.0
      %v1725 = vadd.f32 %v1723, %v1724
      %v1726 = vsel %vm1708, %v1685, 0.0
      %v1727 = vadd.f32 %v1725, %v1726
      %v1728 = vsel %vm1708, %v1686, 0.0
      %v1729 = vadd.f32 %v1727, %v1728
      %v1730 = vsel %vm1708, %v1687, 0.0
      %v1731 = vadd.f32 %v1729, %v1730
      %v1732 = vsel %vm1708, %v1688, 0.0
      %v1733 = vadd.f32 %v1731, %v1732
      %v1734 = vsel %vm1708, %v1689, 0.0
      %v1735 = vadd.f32 %v1733, %v1734
      %v1736 = vsel %vm1708, %v1690, 0.0
      %v1737 = vadd.f32 %v1735, %v1736
      %v1738 = vsel %vm1708, %v1691, 0.0
      %v1739 = vadd.f32 %v1737, %v1738
      %v1740 = vsel %vm1708, %v1692, 0.0
      %v1741 = vadd.f32 %v1739, %v1740
      %v1742 = vsel %vm1708, %v1693, 0.0
      %v1743 = vadd.f32 %v1741, %v1742
      %v1744 = vsel %vm1708, %v1694, 0.0
      %v1745 = vadd.f32 %v1743, %v1744
      %v1746 = vsel %vm1708, %v1695, 0.0
      %v1747 = vadd.f32 %v1745, %v1746
      %v1748 = vsel %vm1708, %v1696, 0.0
      %v1749 = vadd.f32 %v1747, %v1748
      %v1750 = vsel %vm1708, %v1697, 0.0
      %v1751 = vadd.f32 %v1749, %v1750
      %v1752 = vsel %vm1708, %v1698, 0.0
      %v1753 = vadd.f32 %v1751, %v1752
      %v1754 = vsel %vm1708, %v1699, 0.0
      %v1755 = vadd.f32 %v1753, %v1754
      %v1756 = vsel %vm1708, %v1700, 0.0
      %v1757 = vadd.f32 %v1755, %v1756
      %v1758 = vsel %vm1708, %v1701, 0.0
      %v1759 = vadd.f32 %v1757, %v1758
      %v1760 = vsel %vm1708, %v1702, 0.0
      %v1761 = vadd.f32 %v1759, %v1760
      %v1762 = vsel %vm1708, %v1703, 0.0
      %v1763 = vadd.f32 %v1761, %v1762
      %v1764 = vsel %vm1708, %v1704, 0.0
      %v1765 = vadd.f32 %v1763, %v1764
      %v1766 = vsel %vm1708, %v1705, 0.0
      %v1767 = vadd.f32 %v1765, %v1766
      %v1768 = vsel %vm1708, %v1706, 0.0
      %v1769 = vadd.f32 %v1767, %v1768
      %v1770 = vsel %vm1708, %v1707, 0.0
      %v1771 = vadd.f32 %v1769, %v1770
      %v1772 = vrot.slane %v1771, 4
      %v1773 = vadd.f32 %v1771, %v1772
      %v1774 = vrot.slane %v1773, 2
      %v1775 = vadd.f32 %v1773, %v1774
      %v1776 = vrot.slane %v1775, 1
      %v1777 = vadd.f32 %v1775, %v1776
      %v1778 = vmul.f32 %v1676, %v1676
      %v1779 = vmul.f32 %v1677, %v1677
      %v1780 = vmul.f32 %v1678, %v1678
      %v1781 = vmul.f32 %v1679, %v1679
      %v1782 = vmul.f32 %v1680, %v1680
      %v1783 = vmul.f32 %v1681, %v1681
      %v1784 = vmul.f32 %v1682, %v1682
      %v1785 = vmul.f32 %v1683, %v1683
      %v1786 = vmul.f32 %v1684, %v1684
      %v1787 = vmul.f32 %v1685, %v1685
      %v1788 = vmul.f32 %v1686, %v1686
      %v1789 = vmul.f32 %v1687, %v1687
      %v1790 = vmul.f32 %v1688, %v1688
      %v1791 = vmul.f32 %v1689, %v1689
      %v1792 = vmul.f32 %v1690, %v1690
      %v1793 = vmul.f32 %v1691, %v1691
      %v1794 = vmul.f32 %v1692, %v1692
      %v1795 = vmul.f32 %v1693, %v1693
      %v1796 = vmul.f32 %v1694, %v1694
      %v1797 = vmul.f32 %v1695, %v1695
      %v1798 = vmul.f32 %v1696, %v1696
      %v1799 = vmul.f32 %v1697, %v1697
      %v1800 = vmul.f32 %v1698, %v1698
      %v1801 = vmul.f32 %v1699, %v1699
      %v1802 = vmul.f32 %v1700, %v1700
      %v1803 = vmul.f32 %v1701, %v1701
      %v1804 = vmul.f32 %v1702, %v1702
      %v1805 = vmul.f32 %v1703, %v1703
      %v1806 = vmul.f32 %v1704, %v1704
      %v1807 = vmul.f32 %v1705, %v1705
      %v1808 = vmul.f32 %v1706, %v1706
      %v1809 = vmul.f32 %v1707, %v1707
      %v1810 = vsel %vm1708, %v1778, 0.0
      %v1811 = vsel %vm1708, %v1779, 0.0
      %v1812 = vadd.f32 %v1810, %v1811
      %v1813 = vsel %vm1708, %v1780, 0.0
      %v1814 = vadd.f32 %v1812, %v1813
      %v1815 = vsel %vm1708, %v1781, 0.0
      %v1816 = vadd.f32 %v1814, %v1815
      %v1817 = vsel %vm1708, %v1782, 0.0
      %v1818 = vadd.f32 %v1816, %v1817
      %v1819 = vsel %vm1708, %v1783, 0.0
      %v1820 = vadd.f32 %v1818, %v1819
      %v1821 = vsel %vm1708, %v1784, 0.0
      %v1822 = vadd.f32 %v1820, %v1821
      %v1823 = vsel %vm1708, %v1785, 0.0
      %v1824 = vadd.f32 %v1822, %v1823
      %v1825 = vsel %vm1708, %v1786, 0.0
      %v1826 = vadd.f32 %v1824, %v1825
      %v1827 = vsel %vm1708, %v1787, 0.0
      %v1828 = vadd.f32 %v1826, %v1827
      %v1829 = vsel %vm1708, %v1788, 0.0
      %v1830 = vadd.f32 %v1828, %v1829
      %v1831 = vsel %vm1708, %v1789, 0.0
      %v1832 = vadd.f32 %v1830, %v1831
      %v1833 = vsel %vm1708, %v1790, 0.0
      %v1834 = vadd.f32 %v1832, %v1833
      %v1835 = vsel %vm1708, %v1791, 0.0
      %v1836 = vadd.f32 %v1834, %v1835
      %v1837 = vsel %vm1708, %v1792, 0.0
      %v1838 = vadd.f32 %v1836, %v1837
      %v1839 = vsel %vm1708, %v1793, 0.0
      %v1840 = vadd.f32 %v1838, %v1839
      %v1841 = vsel %vm1708, %v1794, 0.0
      %v1842 = vadd.f32 %v1840, %v1841
      %v1843 = vsel %vm1708, %v1795, 0.0
      %v1844 = vadd.f32 %v1842, %v1843
      %v1845 = vsel %vm1708, %v1796, 0.0
      %v1846 = vadd.f32 %v1844, %v1845
      %v1847 = vsel %vm1708, %v1797, 0.0
      %v1848 = vadd.f32 %v1846, %v1847
      %v1849 = vsel %vm1708, %v1798, 0.0
      %v1850 = vadd.f32 %v1848, %v1849
      %v1851 = vsel %vm1708, %v1799, 0.0
      %v1852 = vadd.f32 %v1850, %v1851
      %v1853 = vsel %vm1708, %v1800, 0.0
      %v1854 = vadd.f32 %v1852, %v1853
      %v1855 = vsel %vm1708, %v1801, 0.0
      %v1856 = vadd.f32 %v1854, %v1855
      %v1857 = vsel %vm1708, %v1802, 0.0
      %v1858 = vadd.f32 %v1856, %v1857
      %v1859 = vsel %vm1708, %v1803, 0.0
      %v1860 = vadd.f32 %v1858, %v1859
      %v1861 = vsel %vm1708, %v1804, 0.0
      %v1862 = vadd.f32 %v1860, %v1861
      %v1863 = vsel %vm1708, %v1805, 0.0
      %v1864 = vadd.f32 %v1862, %v1863
      %v1865 = vsel %vm1708, %v1806, 0.0
      %v1866 = vadd.f32 %v1864, %v1865
      %v1867 = vsel %vm1708, %v1807, 0.0
      %v1868 = vadd.f32 %v1866, %v1867
      %v1869 = vsel %vm1708, %v1808, 0.0
      %v1870 = vadd.f32 %v1868, %v1869
      %v1871 = vsel %vm1708, %v1809, 0.0
      %v1872 = vadd.f32 %v1870, %v1871
      %v1873 = vrot.slane %v1872, 4
      %v1874 = vadd.f32 %v1872, %v1873
      %v1875 = vrot.slane %v1874, 2
      %v1876 = vadd.f32 %v1874, %v1875
      %v1877 = vrot.slane %v1876, 1
      %v1878 = vadd.f32 %v1876, %v1877
      %vm1879 = vcmask 1040384
      %v1880 = vsel %vm1879, %v1777, %v1878
      %p1881 = scmp.eq.s32.totalorder %s21, 0
      // Predicated region
      $region33: #{noise_estimator_forward.3} parent=31 // pred_check
        %p1882 = pneg %p1881
      $region34: #{noise_estimator_forward.3} parent=31 // pred_check_branch
        %1884 = sbr.rel (%p1882) target = $region36
      $region35: #{noise_estimator_forward.3} parent=31 // pred_region
        %vm1885 = vcmask 386048
        %1886 = vst.msk [vmem:[%s233] sm:$0x3] %vm1885, 0.0
      $region36: #{noise_estimator_forward.3} parent=31 // pred_fallthru
        _
      %v1887 = vld [vmem:[%s233] sm:$0x3]
      %v1888 = vadd.f32 %v1887, %v1880
      %vm1889 = vcmask 386048
      %1890 = vst.msk [vmem:[%s233] sm:$0x3] %vm1889, %v1888
      %v1907 = vunpack.c.l.b16 %v1496
      %v1908 = vunpack.c.h.b16 %v1496
      %v1909 = vunpack.c.l.b16 %v1497
      %v1910 = vunpack.c.h.b16 %v1497
      %v1911 = vunpack.c.l.b16 %v1498
      %v1912 = vunpack.c.h.b16 %v1498
      %v1913 = vunpack.c.l.b16 %v1499
      %v1914 = vunpack.c.h.b16 %v1499
      %v1915 = vunpack.c.l.b16 %v1500
      %v1916 = vunpack.c.h.b16 %v1500
      %v1917 = vunpack.c.l.b16 %v1501
      %v1918 = vunpack.c.h.b16 %v1501
      %v1919 = vunpack.c.l.b16 %v1502
      %v1920 = vunpack.c.h.b16 %v1502
      %v1921 = vunpack.c.l.b16 %v1503
      %v1922 = vunpack.c.h.b16 %v1503
      %v1923 = vunpack.c.l.b16 %v1504
      %v1924 = vunpack.c.h.b16 %v1504
      %v1925 = vunpack.c.l.b16 %v1505
      %v1926 = vunpack.c.h.b16 %v1505
      %v1927 = vunpack.c.l.b16 %v1506
      %v1928 = vunpack.c.h.b16 %v1506
      %v1929 = vunpack.c.l.b16 %v1507
      %v1930 = vunpack.c.h.b16 %v1507
      %v1931 = vunpack.c.l.b16 %v1508
      %v1932 = vunpack.c.h.b16 %v1508
      %v1933 = vunpack.c.l.b16 %v1509
      %v1934 = vunpack.c.h.b16 %v1509
      %v1935 = vunpack.c.l.b16 %v1510
      %v1936 = vunpack.c.h.b16 %v1510
      %v1937 = vunpack.c.l.b16 %v1511
      %v1938 = vunpack.c.h.b16 %v1511
      %v1939 = vpack.c.b16 %v1907, %v1907
      %v1940 = vpack.c.b16 %v1908, %v1908
      %v1941 = vpack.c.b16 %v1909, %v1909
      %v1942 = vpack.c.b16 %v1910, %v1910
      %v1943 = vpack.c.b16 %v1911, %v1911
      %v1944 = vpack.c.b16 %v1912, %v1912
      %v1945 = vpack.c.b16 %v1913, %v1913
      %v1946 = vpack.c.b16 %v1914, %v1914
      %v1947 = vpack.c.b16 %v1915, %v1915
      %v1948 = vpack.c.b16 %v1916, %v1916
      %v1949 = vpack.c.b16 %v1917, %v1917
      %v1950 = vpack.c.b16 %v1918, %v1918
      %v1951 = vpack.c.b16 %v1919, %v1919
      %v1952 = vpack.c.b16 %v1920, %v1920
      %v1953 = vpack.c.b16 %v1921, %v1921
      %v1954 = vpack.c.b16 %v1922, %v1922
      %v1955 = vpack.c.b16 %v1923, %v1923
      %v1956 = vpack.c.b16 %v1924, %v1924
      %v1957 = vpack.c.b16 %v1925, %v1925
      %v1958 = vpack.c.b16 %v1926, %v1926
      %v1959 = vpack.c.b16 %v1927, %v1927
      %v1960 = vpack.c.b16 %v1928, %v1928
      %v1961 = vpack.c.b16 %v1929, %v1929
      %v1962 = vpack.c.b16 %v1930, %v1930
      %v1963 = vpack.c.b16 %v1931, %v1931
      %v1964 = vpack.c.b16 %v1932, %v1932
      %v1965 = vpack.c.b16 %v1933, %v1933
      %v1966 = vpack.c.b16 %v1934, %v1934
      %v1967 = vpack.c.b16 %v1935, %v1935
      %v1968 = vpack.c.b16 %v1936, %v1936
      %v1969 = vpack.c.b16 %v1937, %v1937
      %v1970 = vpack.c.b16 %v1938, %v1938
      %vm2003 = vcmask 388096
      %2004 = vst.msk [vmem:[%s228] sm:$0xf] %vm2003, %v1939
      %2005 = vst.msk [vmem:[%s228 + $0x4] sm:$0xf] %vm2003, %v1940
      %2006 = vst.msk [vmem:[%s228 + $0x8] sm:$0xf] %vm2003, %v1941
      %2007 = vst.msk [vmem:[%s228 + $0xc] sm:$0xf] %vm2003, %v1942
      %2008 = vst.msk [vmem:[%s228 + $0x10] sm:$0xf] %vm2003, %v1943
      %2009 = vst.msk [vmem:[%s228 + $0x14] sm:$0xf] %vm2003, %v1944
      %2010 = vst.msk [vmem:[%s228 + $0x18] sm:$0xf] %vm2003, %v1945
      %2011 = vst.msk [vmem:[%s228 + $0x1c] sm:$0xf] %vm2003, %v1946
      %2012 = vst.msk [vmem:[%s228 + $0x20] sm:$0xf] %vm2003, %v1947
      %2013 = vst.msk [vmem:[%s228 + $0x24] sm:$0xf] %vm2003, %v1948
      %2014 = vst.msk [vmem:[%s228 + $0x28] sm:$0xf] %vm2003, %v1949
      %2015 = vst.msk [vmem:[%s228 + $0x2c] sm:$0xf] %vm2003, %v1950
      %2016 = vst.msk [vmem:[%s228 + $0x30] sm:$0xf] %vm2003, %v1951
      %2017 = vst.msk [vmem:[%s228 + $0x34] sm:$0xf] %vm2003, %v1952
      %2018 = vst.msk [vmem:[%s228 + $0x38] sm:$0xf] %vm2003, %v1953
      %2019 = vst.msk [vmem:[%s228 + $0x3c] sm:$0xf] %vm2003, %v1954
      %2020 = vst.msk [vmem:[%s228 + $0x40] sm:$0xf] %vm2003, %v1955
      %2021 = vst.msk [vmem:[%s228 + $0x44] sm:$0xf] %vm2003, %v1956
      %2022 = vst.msk [vmem:[%s228 + $0x48] sm:$0xf] %vm2003, %v1957
      %2023 = vst.msk [vmem:[%s228 + $0x4c] sm:$0xf] %vm2003, %v1958
      %2024 = vst.msk [vmem:[%s228 + $0x50] sm:$0xf] %vm2003, %v1959
      %2025 = vst.msk [vmem:[%s228 + $0x54] sm:$0xf] %vm2003, %v1960
      %2026 = vst.msk [vmem:[%s228 + $0x58] sm:$0xf] %vm2003, %v1961
      %2027 = vst.msk [vmem:[%s228 + $0x5c] sm:$0xf] %vm2003, %v1962
      %2028 = vst.msk [vmem:[%s228 + $0x60] sm:$0xf] %vm2003, %v1963
      %2029 = vst.msk [vmem:[%s228 + $0x64] sm:$0xf] %vm2003, %v1964
      %2030 = vst.msk [vmem:[%s228 + $0x68] sm:$0xf] %vm2003, %v1965
      %2031 = vst.msk [vmem:[%s228 + $0x6c] sm:$0xf] %vm2003, %v1966
      %2032 = vst.msk [vmem:[%s228 + $0x70] sm:$0xf] %vm2003, %v1967
      %2033 = vst.msk [vmem:[%s228 + $0x74] sm:$0xf] %vm2003, %v1968
      %2034 = vst.msk [vmem:[%s228 + $0x78] sm:$0xf] %vm2003, %v1969
      %2035 = vst.msk [vmem:[%s228 + $0x7c] sm:$0xf] %vm2003, %v1970
      %s2036 = smul.u32 16, %s21
      %p2037 = scmp.lt.s32.totalorder %s20, 1
      %s2038 = scalar_select %p2037, %s20, 1
      %p2039 = scmp.lt.s32.totalorder %s2036, 15
      %s2040 = scalar_select %p2039, %s2036, 15
      %s2041 = smul.addr %s2040, 2
      %s2042 = smul.addr %s2038, 32
      %s2043 = sadd.s32 %s2041, %s2042
      %s2044 = smul.addr %s2043, 4
      %s2045 = scalar_lea.vmem %s3, %s2044
      %p2046 = scmp.lt.s32.totalorder %s20, 1
      %s2047 = scalar_select %p2046, %s20, 1
      %s2048 = smul.addr %s2047, 2
      %s2049 = scalar_lea.vmem %s4, %s2048
      // Predicated region
      $region37: #{noise_estimator_forward.3} parent=31 // pred_check
        %p2050 = pneg %p116
      $region38: #{noise_estimator_forward.3} parent=31 // pred_check_branch
        %2052 = sbr.rel (%p2050) target = $region40
      $region39: #{noise_estimator_forward.3} parent=31 // pred_region
        %s2053 = smul.u32 16, %s21
      $region40: #{noise_estimator_forward.3} parent=31 // pred_fallthru
        _
      // Predicated region
      $region41: #{noise_estimator_forward.3} parent=31 // pred_check
        %p2054 = pneg %p142
      $region42: #{noise_estimator_forward.3} parent=31 // pred_check_branch
        %2056 = sbr.rel (%p2054) target = $region44
      $region43: #{noise_estimator_forward.3} parent=31 // pred_region
        _
      $region44: #{noise_estimator_forward.3} parent=31 // pred_fallthru
        _
    $region32: #{noise_estimator_forward.3} parent=5 // pred_fallthru
      _
    %p2057 = scmp.le.s32.totalorder 2, %s11
    // Predicated region
    $region45: #{noise_estimator_forward.3} parent=5 // pred_check
      %p2058 = pneg %p2057
    $region46: #{noise_estimator_forward.3} parent=5 // pred_check_branch
      %2060 = sbr.rel (%p2058) target = $region48
    $region47: #{noise_estimator_forward.3} parent=5 // pred_region
      %s2061 = ssub.s32 %s11, 2
      // Predicated region
      $region49: #{noise_estimator_forward.3} parent=47 // pred_check
        %p2062 = pneg %p122
      $region50: #{noise_estimator_forward.3} parent=47 // pred_check_branch
        %2064 = sbr.rel (%p2062) target = $region52
      $region51: #{noise_estimator_forward.3} parent=47 // pred_region
        %s2065 = smul.u32 16, %s23
        %p2066 = scmp.lt.s32.totalorder %s22, 1
        %s2067 = scalar_select %p2066, %s22, 1
        %p2068 = scmp.lt.s32.totalorder %s2065, 15
        %s2069 = scalar_select %p2068, %s2065, 15
        %s2070 = smul.addr %s2069, 2
        %s2071 = smul.addr %s2067, 32
        %s2072 = sadd.s32 %s2070, %s2071
        %s2073 = smul.addr %s2072, 4
        %s2074 = scalar_lea.vmem %s3, %s2073
      $region52: #{noise_estimator_forward.3} parent=47 // pred_fallthru
        _
      // Predicated region
      $region53: #{noise_estimator_forward.3} parent=47 // pred_check
        %p2075 = pneg %p148
      $region54: #{noise_estimator_forward.3} parent=47 // pred_check_branch
        %2077 = sbr.rel (%p2075) target = $region56
      $region55: #{noise_estimator_forward.3} parent=47 // pred_region
        %p2078 = scmp.lt.s32.totalorder %s22, 1
        %s2079 = scalar_select %p2078, %s22, 1
        %s2080 = smul.addr %s2079, 2
        %s2081 = scalar_lea.vmem %s4, %s2080
      $region56: #{noise_estimator_forward.3} parent=47 // pred_fallthru
        _
    $region48: #{noise_estimator_forward.3} parent=5 // pred_fallthru
      _
  $region6: #{noise_estimator_forward.3} parent=0 // loop_footer
    %s15 = sadd.s32 1, %s11
  $region7: #{noise_estimator_forward.3} parent=0 // loop_footer_branch
    %10 = sbr.rel target = $region3
  $region8: #{noise_estimator_forward.3} parent=0 // loop_exit
    _

// kernel: noise_estimator_forward.5
$region0: #{noise_estimator_forward.5}
  #allocation0 [shape = 'u32[]', space=smem, size = 0x4, offset = 0x4, fixed_abs, tag = 'smem constant byte address 0x4 - core index']
  #allocation1 [shape = 'u32[144,128]{1,0:T(1,128)}', space=vmem, size = 0x12000, scoped, tag = 'internal scratch']
  %s0 = inlined_call_operand.vmem [shape: bf16[2,14,14,64], index: 0, kind: input, shape index: {}]
  %s1 = inlined_call_operand.vmem [shape: f32[2,1,64], index: 1, kind: input, shape index: {}]
  %s2 = inlined_call_operand.vmem [shape: f32[2,1,64], index: 2, kind: input, shape index: {}]
  %s3 = inlined_call_operand.vmem [shape: bf16[3,192,3], index: 3, kind: input, shape index: {}]
  %s4 = inlined_call_operand.vmem [shape: f32[1,3], index: 4, kind: input, shape index: {}]
  %s5 = inlined_call_operand.vmem [shape: f32[2,12,12,3], index: 5, kind: output, shape index: {}]
  %s6 = sld [smem:[#allocation0]]
  $region53: #{noise_estimator_forward.5} parent=0
    _
  %s8 = ssub.s32 1, %s6
  %s9 = scalar_select 0, %s8, %s6
  loop: start=0, step=1, limit=4
  $region2: #{noise_estimator_forward.5} parent=0 // loop_pre_header
    _
  $region3: #{noise_estimator_forward.5} parent=0 // loop_header
    %s11 = sphi 0, %s15
    %p12 = scmp.ge.s32.totalorder %s11, 4
    %s18 = sphi 0, %s30
    %s19 = sphi 0, %s26
    %s20 = sphi 0, %s18
    %s21 = sphi 0, %s19
    %s22 = sphi 0, %s20
    %s23 = sphi 0, %s21
    %s33 = sphi 0, %s35
    %s36 = sphi 0, %s33
    %s37 = sphi 0, %s36
    %s53 = sphi 0, %s37
    %s59 = sphi 0, %s61
    %s62 = sphi 0, %s59
    %s63 = sphi 0, %s62
    %s79 = sphi 0, %s63
    %s85 = sphi 0, %s87
    %s88 = sphi 0, %s85
    %s89 = sphi 0, %s88
    %s105 = sphi 0, %s89
    %s109 = sphi 0, %s109
    %s111 = sphi 0, %s109
    %s112 = sphi 0, %s111
    %s126 = sphi 0, %s112
    %s130 = sphi 0, %s130
    %s132 = sphi 0, %s130
    %s133 = sphi 0, %s132
    %s147 = sphi 0, %s133
    %s155 = sphi 0, %s157
    %s158 = sphi 0, %s155
    %s159 = sphi 0, %s158
    %s175 = sphi 0, %s159
  $region4: #{noise_estimator_forward.5} parent=0 // loop_header_branch
    %14 = sbr.rel (%p12) target = $region8
  $region5: #{noise_estimator_forward.5} parent=0 // loop_body
    %s16 = ssub.s32 %s11, 1
    %s17 = ssub.s32 %s11, 2
    %s24 = sadd.s32 1, %s19
    %p25 = scmp.ge.s32.totalorder %s24, 1
    %s26 = scalar_select %p25, 0, %s24
    %s27 = sadd.s32 1, %s18
    %s28 = scalar_select %p25, %s27, %s18
    %p29 = scmp.ge.s32.totalorder %s28, 2
    %s30 = scalar_select %p29, 0, %s28
    %s31 = ssub.s32 %s18, %s30
    %p32 = scmp.eq.s32.totalorder %s31, 0
    %s34 = sadd.s32 %s33, 1
    %s35 = scalar_select %p32, %s33, %s34
    %p38 = pneg %p32
    %p39 = scmp.eq.s32.totalorder %s11, 1
    %p40 = por %p38, %p39
    %p41 = scmp.ne.s32.totalorder %s33, %s36
    %p42 = scmp.eq.s32.totalorder %s11, 0
    %p43 = por %p41, %p42
    %p44 = scmp.ne.s32.totalorder %s33, %s36
    %p45 = scmp.eq.s32.totalorder %s16, 1
    %p46 = por %p44, %p45
    %p47 = scmp.ne.s32.totalorder %s36, %s37
    %p48 = scmp.eq.s32.totalorder %s16, 0
    %p49 = por %p47, %p48
    %p50 = scmp.ne.s32.totalorder %s36, %s37
    %p51 = scmp.eq.s32.totalorder %s17, 1
    %p52 = por %p50, %p51
    %p54 = scmp.ne.s32.totalorder %s37, %s53
    %p55 = scmp.eq.s32.totalorder %s17, 0
    %p56 = por %p54, %p55
    %s57 = ssub.s32 %s18, %s30
    %p58 = scmp.eq.s32.totalorder %s57, 0
    %s60 = sadd.s32 %s59, 1
    %s61 = scalar_select %p58, %s59, %s60
    %p64 = pneg %p58
    %p65 = scmp.eq.s32.totalorder %s11, 1
    %p66 = por %p64, %p65
    %p67 = scmp.ne.s32.totalorder %s59, %s62
    %p68 = scmp.eq.s32.totalorder %s11, 0
    %p69 = por %p67, %p68
    %p70 = scmp.ne.s32.totalorder %s59, %s62
    %p71 = scmp.eq.s32.totalorder %s16, 1
    %p72 = por %p70, %p71
    %p73 = scmp.ne.s32.totalorder %s62, %s63
    %p74 = scmp.eq.s32.totalorder %s16, 0
    %p75 = por %p73, %p74
    %p76 = scmp.ne.s32.totalorder %s62, %s63
    %p77 = scmp.eq.s32.totalorder %s17, 1
    %p78 = por %p76, %p77
    %p80 = scmp.ne.s32.totalorder %s63, %s79
    %p81 = scmp.eq.s32.totalorder %s17, 0
    %p82 = por %p80, %p81
    %s83 = ssub.s32 %s18, %s30
    %p84 = scmp.eq.s32.totalorder %s83, 0
    %s86 = sadd.s32 %s85, 1
    %s87 = scalar_select %p84, %s85, %s86
    %p90 = pneg %p84
    %p91 = scmp.eq.s32.totalorder %s11, 1
    %p92 = por %p90, %p91
    %p93 = scmp.ne.s32.totalorder %s85, %s88
    %p94 = scmp.eq.s32.totalorder %s11, 0
    %p95 = por %p93, %p94
    %p96 = scmp.ne.s32.totalorder %s85, %s88
    %p97 = scmp.eq.s32.totalorder %s16, 1
    %p98 = por %p96, %p97
    %p99 = scmp.ne.s32.totalorder %s88, %s89
    %p100 = scmp.eq.s32.totalorder %s16, 0
    %p101 = por %p99, %p100
    %p102 = scmp.ne.s32.totalorder %s88, %s89
    %p103 = scmp.eq.s32.totalorder %s17, 1
    %p104 = por %p102, %p103
    %p106 = scmp.ne.s32.totalorder %s89, %s105
    %p107 = scmp.eq.s32.totalorder %s17, 0
    %p108 = por %p106, %p107
    %s110 = sadd.s32 %s109, 1
    %p113 = scmp.eq.s32.totalorder %s11, 1
    %p114 = scmp.ne.s32.totalorder %s109, %s111
    %p115 = scmp.eq.s32.totalorder %s11, 0
    %p116 = por %p114, %p115
    %p117 = scmp.ne.s32.totalorder %s109, %s111
    %p118 = scmp.eq.s32.totalorder %s16, 1
    %p119 = por %p117, %p118
    %p120 = scmp.ne.s32.totalorder %s111, %s112
    %p121 = scmp.eq.s32.totalorder %s16, 0
    %p122 = por %p120, %p121
    %p123 = scmp.ne.s32.totalorder %s111, %s112
    %p124 = scmp.eq.s32.totalorder %s17, 1
    %p125 = por %p123, %p124
    %p127 = scmp.ne.s32.totalorder %s112, %s126
    %p128 = scmp.eq.s32.totalorder %s17, 0
    %p129 = por %p127, %p128
    %s131 = sadd.s32 %s130, 1
    %p134 = scmp.eq.s32.totalorder %s11, 1
    %p135 = scmp.ne.s32.totalorder %s130, %s132
    %p136 = scmp.eq.s32.totalorder %s11, 0
    %p137 = por %p135, %p136
    %p138 = scmp.ne.s32.totalorder %s130, %s132
    %p139 = scmp.eq.s32.totalorder %s16, 1
    %p140 = por %p138, %p139
    %p141 = scmp.ne.s32.totalorder %s132, %s133
    %p142 = scmp.eq.s32.totalorder %s16, 0
    %p143 = por %p141, %p142
    %p144 = scmp.ne.s32.totalorder %s132, %s133
    %p145 = scmp.eq.s32.totalorder %s17, 1
    %p146 = por %p144, %p145
    %p148 = scmp.ne.s32.totalorder %s133, %s147
    %p149 = scmp.eq.s32.totalorder %s17, 0
    %p150 = por %p148, %p149
    %s151 = ssub.s32 %s18, %s30
    %s152 = ssub.s32 %s19, %s26
    %s153 = sor.u32 %s151, %s152
    %p154 = scmp.eq.s32.totalorder %s153, 0
    %s156 = sadd.s32 %s155, 1
    %s157 = scalar_select %p154, %s155, %s156
    %p160 = pneg %p154
    %p161 = scmp.eq.s32.totalorder %s11, 1
    %p162 = por %p160, %p161
    %p163 = scmp.ne.s32.totalorder %s155, %s158
    %p164 = scmp.eq.s32.totalorder %s11, 0
    %p165 = por %p163, %p164
    %p166 = scmp.ne.s32.totalorder %s155, %s158
    %p167 = scmp.eq.s32.totalorder %s16, 1
    %p168 = por %p166, %p167
    %p169 = scmp.ne.s32.totalorder %s158, %s159
    %p170 = scmp.eq.s32.totalorder %s16, 0
    %p171 = por %p169, %p170
    %p172 = scmp.ne.s32.totalorder %s158, %s159
    %p173 = scmp.eq.s32.totalorder %s17, 1
    %p174 = por %p172, %p173
    %p176 = scmp.ne.s32.totalorder %s159, %s175
    %p177 = scmp.eq.s32.totalorder %s17, 0
    %p178 = por %p176, %p177
    %p179 = scmp.le.s32.totalorder 1, %s11
    %p180 = scmp.lt.s32.totalorder %s11, 3
    %p181 = pnand %p179, %p180
    %p182 = pneg %p181
    // Predicated region
    $region9: #{noise_estimator_forward.5} parent=5 // pred_check
      _
    $region10: #{noise_estimator_forward.5} parent=5 // pred_check_branch
      %184 = sbr.rel (%p181) target = $region12
    $region11: #{noise_estimator_forward.5} parent=5 // pred_region
      %s185 = ssub.s32 %s11, 1
      // Predicated region
      $region13: #{noise_estimator_forward.5} parent=11 // pred_check
        %p186 = pneg %p122
      $region14: #{noise_estimator_forward.5} parent=11 // pred_check_branch
        %188 = sbr.rel (%p186) target = $region16
      $region15: #{noise_estimator_forward.5} parent=11 // pred_region
        _
      $region16: #{noise_estimator_forward.5} parent=11 // pred_fallthru
        _
      // Predicated region
      $region17: #{noise_estimator_forward.5} parent=11 // pred_check
        %p189 = pneg %p143
      $region18: #{noise_estimator_forward.5} parent=11 // pred_check_branch
        %191 = sbr.rel (%p189) target = $region20
      $region19: #{noise_estimator_forward.5} parent=11 // pred_region
        _
      $region20: #{noise_estimator_forward.5} parent=11 // pred_fallthru
        _
    $region12: #{noise_estimator_forward.5} parent=5 // pred_fallthru
      _
    %p192 = scmp.lt.s32.totalorder %s11, 2
    // Predicated region
    $region21: #{noise_estimator_forward.5} parent=5 // pred_check
      %p193 = pneg %p192
    $region22: #{noise_estimator_forward.5} parent=5 // pred_check_branch
      %195 = sbr.rel (%p193) target = $region24
    $region23: #{noise_estimator_forward.5} parent=5 // pred_region
      // Predicated region
      $region25: #{noise_estimator_forward.5} parent=23 // pred_check
        %p196 = pneg %p43
      $region26: #{noise_estimator_forward.5} parent=23 // pred_check_branch
        %198 = sbr.rel (%p196) target = $region28
      $region27: #{noise_estimator_forward.5} parent=23 // pred_region
        %p199 = scmp.lt.s32.totalorder %s18, 1
        %s200 = scalar_select %p199, %s18, 1
        %s201 = smul.addr %s200, 28
        %s202 = smul.addr %s201, 4
        %s203 = scalar_lea.vmem %s0, %s202
      $region28: #{noise_estimator_forward.5} parent=23 // pred_fallthru
        _
      // Predicated region
      $region29: #{noise_estimator_forward.5} parent=23 // pred_check
        %p204 = pneg %p69
      $region30: #{noise_estimator_forward.5} parent=23 // pred_check_branch
        %206 = sbr.rel (%p204) target = $region32
      $region31: #{noise_estimator_forward.5} parent=23 // pred_region
        %p207 = scmp.lt.s32.totalorder %s18, 1
        %s208 = scalar_select %p207, %s18, 1
        %s209 = scalar_lea.vmem %s1, %s208
      $region32: #{noise_estimator_forward.5} parent=23 // pred_fallthru
        _
      // Predicated region
      $region33: #{noise_estimator_forward.5} parent=23 // pred_check
        %p210 = pneg %p95
      $region34: #{noise_estimator_forward.5} parent=23 // pred_check_branch
        %212 = sbr.rel (%p210) target = $region36
      $region35: #{noise_estimator_forward.5} parent=23 // pred_region
        %p213 = scmp.lt.s32.totalorder %s18, 1
        %s214 = scalar_select %p213, %s18, 1
        %s215 = scalar_lea.vmem %s2, %s214
      $region36: #{noise_estimator_forward.5} parent=23 // pred_fallthru
        _
    $region24: #{noise_estimator_forward.5} parent=5 // pred_fallthru
      _
    %p216 = scmp.le.s32.totalorder 1, %s11
    %p217 = scmp.lt.s32.totalorder %s11, 3
    %p218 = pnand %p216, %p217
    %p219 = pneg %p218
    // Predicated region
    $region37: #{noise_estimator_forward.5} parent=5 // pred_check
      _
    $region38: #{noise_estimator_forward.5} parent=5 // pred_check_branch
      %221 = sbr.rel (%p218) target = $region40
    $region39: #{noise_estimator_forward.5} parent=5 // pred_region
      %s222 = ssub.s32 %s11, 1
      %p223 = scmp.lt.s32.totalorder %s20, 1
      %s224 = scalar_select %p223, %s20, 1
      %s225 = smul.addr %s224, 28
      %s226 = smul.addr %s225, 4
      %s227 = scalar_lea.vmem %s0, %s226
      %p228 = pneg %p49
      %p229 = pneg %p46
      %p230 = scmp.lt.s32.totalorder %s20, 1
      %s231 = scalar_select %p230, %s20, 1
      %s232 = scalar_lea.vmem %s1, %s231
      %p233 = pneg %p75
      %p234 = pneg %p72
      %p235 = scmp.lt.s32.totalorder %s20, 1
      %s236 = scalar_select %p235, %s20, 1
      %s237 = scalar_lea.vmem %s2, %s236
      %p238 = pneg %p101
      %p239 = pneg %p98
      %p240 = pneg %p122
      %p241 = pneg %p119
      %p242 = pneg %p143
      %p243 = pneg %p140
      %p244 = pneg %p171
      %p245 = pneg %p168
      %s246 = smul.u32 12, %s21
      %p247 = scmp.lt.s32.totalorder %s20, 1
      %s248 = scalar_select %p247, %s20, 1
      %p249 = scmp.lt.s32.totalorder %s246, 11
      %s250 = scalar_select %p249, %s246, 11
      %s251 = smul.addr %s250, 2
      %s252 = smul.addr %s248, 24
      %s253 = sadd.s32 %s251, %s252
      %s254 = smul.addr %s253, 8
      %s255 = scalar_lea.vmem %s5, %s254
      %p256 = scmp.lt.s32.totalorder %s20, 1
      %s257 = scalar_select %p256, %s20, 1
      %s258 = smul.addr %s257, 28
      %s259 = smul.addr %s258, 4
      %s260 = scalar_lea.vmem %s0, %s259
      %p261 = scmp.lt.s32.totalorder %s20, 1
      %s262 = scalar_select %p261, %s20, 1
      %s263 = scalar_lea.vmem %s1, %s262
      %p264 = scmp.lt.s32.totalorder %s20, 1
      %s265 = scalar_select %p264, %s20, 1
      %s266 = scalar_lea.vmem %s2, %s265
      %s267 = smul.u32 12, %s21
      %p268 = scmp.lt.s32.totalorder %s20, 1
      %s269 = scalar_select %p268, %s20, 1
      %p270 = scmp.lt.s32.totalorder %s267, 11
      %s271 = scalar_select %p270, %s267, 11
      %s272 = smul.addr %s271, 2
      %s273 = smul.addr %s269, 24
      %s274 = sadd.s32 %s272, %s273
      %s275 = smul.addr %s274, 8
      %s276 = scalar_lea.vmem %s5, %s275
      %s277 = smul.u32 12, %s21
      %s279 = smul.u32 %s21, 12
      %s280 = smul.u32 %s279, 2
      %s281 = smul.addr %s280, 4
      %s282 = scalar_lea.vmem %s260, %s281
      %v283 = vld [vmem:[%s282] sm:$0xf]
      %v284 = vld [vmem:[%s282 + $0x4] sm:$0x7]
      %v285 = vld [vmem:[%s282 + $0x8] sm:$0xf]
      %v286 = vld [vmem:[%s282 + $0xc] sm:$0x7]
      %v287 = vld [vmem:[%s282 + $0x10] sm:$0xf]
      %v288 = vld [vmem:[%s282 + $0x14] sm:$0x7]
      %v289 = vld [vmem:[%s282 + $0x18] sm:$0xf]
      %v290 = vld [vmem:[%s282 + $0x1c] sm:$0x7]
      %v291 = vld [vmem:[%s282 + $0x20] sm:$0xf]
      %v292 = vld [vmem:[%s282 + $0x24] sm:$0x7]
      %v293 = vld [vmem:[%s282 + $0x28] sm:$0xf]
      %v294 = vld [vmem:[%s282 + $0x2c] sm:$0x7]
      %v295 = vld [vmem:[%s282 + $0x30] sm:$0xf]
      %v296 = vld [vmem:[%s282 + $0x34] sm:$0x7]
      %v297 = vld [vmem:[%s282 + $0x38] sm:$0xf]
      %v298 = vld [vmem:[%s282 + $0x3c] sm:$0x7]
      %v299 = vld [vmem:[%s282 + $0x40] sm:$0xf]
      %v300 = vld [vmem:[%s282 + $0x44] sm:$0x7]
      %v301 = vld [vmem:[%s282 + $0x48] sm:$0xf]
      %v302 = vld [vmem:[%s282 + $0x4c] sm:$0x7]
      %v303 = vld [vmem:[%s282 + $0x50] sm:$0xf]
      %v304 = vld [vmem:[%s282 + $0x54] sm:$0x7]
      %v305 = vld [vmem:[%s282 + $0x58] sm:$0xf]
      %v306 = vld [vmem:[%s282 + $0x5c] sm:$0x7]
      %v307 = vld [vmem:[%s282 + $0x60] sm:$0xf]
      %v308 = vld [vmem:[%s282 + $0x64] sm:$0x7]
      %v309 = vld [vmem:[%s282 + $0x68] sm:$0xf]
      %v310 = vld [vmem:[%s282 + $0x6c] sm:$0x7]
      %v311 = vunpack.c.l.bf16 %v283
      %v312 = vunpack.c.l.bf16 %v284
      %v313 = vunpack.c.l.bf16 %v285
      %v314 = vunpack.c.l.bf16 %v286
      %v315 = vunpack.c.l.bf16 %v287
      %v316 = vunpack.c.l.bf16 %v288
      %v317 = vunpack.c.l.bf16 %v289
      %v318 = vunpack.c.l.bf16 %v290
      %v319 = vunpack.c.l.bf16 %v291
      %v320 = vunpack.c.l.bf16 %v292
      %v321 = vunpack.c.l.bf16 %v293
      %v322 = vunpack.c.l.bf16 %v294
      %v323 = vunpack.c.l.bf16 %v295
      %v324 = vunpack.c.l.bf16 %v296
      %v325 = vunpack.c.l.bf16 %v297
      %v326 = vunpack.c.l.bf16 %v298
      %v327 = vunpack.c.l.bf16 %v299
      %v328 = vunpack.c.l.bf16 %v300
      %v329 = vunpack.c.l.bf16 %v301
      %v330 = vunpack.c.l.bf16 %v302
      %v331 = vunpack.c.l.bf16 %v303
      %v332 = vunpack.c.l.bf16 %v304
      %v333 = vunpack.c.l.bf16 %v305
      %v334 = vunpack.c.l.bf16 %v306
      %v335 = vunpack.c.l.bf16 %v307
      %v336 = vunpack.c.l.bf16 %v308
      %v337 = vunpack.c.l.bf16 %v309
      %v338 = vunpack.c.l.bf16 %v310
      %v339 = vld [vmem:[%s263] sm:$0x1]
      %v341 = vlaneseq
      %v342 = vshrl.u32 %v341, 7
      %v343 = vsub.s32 0, %v342
      %v344 = vrot.slane %v339, %v343
      %v346 = vmul.f32 %v311, %v344
      %v347 = vmul.f32 %v312, %v344
      %v348 = vmul.f32 %v313, %v344
      %v349 = vmul.f32 %v314, %v344
      %v350 = vmul.f32 %v315, %v344
      %v351 = vmul.f32 %v316, %v344
      %v352 = vmul.f32 %v317, %v344
      %v353 = vmul.f32 %v318, %v344
      %v354 = vmul.f32 %v319, %v344
      %v355 = vmul.f32 %v320, %v344
      %v356 = vmul.f32 %v321, %v344
      %v357 = vmul.f32 %v322, %v344
      %v358 = vmul.f32 %v323, %v344
      %v359 = vmul.f32 %v324, %v344
      %v360 = vmul.f32 %v325, %v344
      %v361 = vmul.f32 %v326, %v344
      %v362 = vmul.f32 %v327, %v344
      %v363 = vmul.f32 %v328, %v344
      %v364 = vmul.f32 %v329, %v344
      %v365 = vmul.f32 %v330, %v344
      %v366 = vmul.f32 %v331, %v344
      %v367 = vmul.f32 %v332, %v344
      %v368 = vmul.f32 %v333, %v344
      %v369 = vmul.f32 %v334, %v344
      %v370 = vmul.f32 %v335, %v344
      %v371 = vmul.f32 %v336, %v344
      %v372 = vmul.f32 %v337, %v344
      %v373 = vmul.f32 %v338, %v344
      %v374 = vld [vmem:[%s266] sm:$0x1]
      %v376 = vlaneseq
      %v377 = vshrl.u32 %v376, 7
      %v378 = vsub.s32 0, %v377
      %v379 = vrot.slane %v374, %v378
      %v381 = vadd.f32 %v346, %v379
      %v382 = vadd.f32 %v347, %v379
      %v383 = vadd.f32 %v348, %v379
      %v384 = vadd.f32 %v349, %v379
      %v385 = vadd.f32 %v350, %v379
      %v386 = vadd.f32 %v351, %v379
      %v387 = vadd.f32 %v352, %v379
      %v388 = vadd.f32 %v353, %v379
      %v389 = vadd.f32 %v354, %v379
      %v390 = vadd.f32 %v355, %v379
      %v391 = vadd.f32 %v356, %v379
      %v392 = vadd.f32 %v357, %v379
      %v393 = vadd.f32 %v358, %v379
      %v394 = vadd.f32 %v359, %v379
      %v395 = vadd.f32 %v360, %v379
      %v396 = vadd.f32 %v361, %v379
      %v397 = vadd.f32 %v362, %v379
      %v398 = vadd.f32 %v363, %v379
      %v399 = vadd.f32 %v364, %v379
      %v400 = vadd.f32 %v365, %v379
      %v401 = vadd.f32 %v366, %v379
      %v402 = vadd.f32 %v367, %v379
      %v403 = vadd.f32 %v368, %v379
      %v404 = vadd.f32 %v369, %v379
      %v405 = vadd.f32 %v370, %v379
      %v406 = vadd.f32 %v371, %v379
      %v407 = vadd.f32 %v372, %v379
      %v408 = vadd.f32 %v373, %v379
      %vm409 = vcmp.ge.f32.partialorder %v381, 0.0
      %vm410 = vcmp.ge.f32.partialorder %v382, 0.0
      %vm411 = vcmp.ge.f32.partialorder %v383, 0.0
      %vm412 = vcmp.ge.f32.partialorder %v384, 0.0
      %vm413 = vcmp.ge.f32.partialorder %v385, 0.0
      %vm414 = vcmp.ge.f32.partialorder %v386, 0.0
      %vm415 = vcmp.ge.f32.partialorder %v387, 0.0
      %vm416 = vcmp.ge.f32.partialorder %v388, 0.0
      %vm417 = vcmp.ge.f32.partialorder %v389, 0.0
      %vm418 = vcmp.ge.f32.partialorder %v390, 0.0
      %vm419 = vcmp.ge.f32.partialorder %v391, 0.0
      %vm420 = vcmp.ge.f32.partialorder %v392, 0.0
      %vm421 = vcmp.ge.f32.partialorder %v393, 0.0
      %vm422 = vcmp.ge.f32.partialorder %v394, 0.0
      %vm423 = vcmp.ge.f32.partialorder %v395, 0.0
      %vm424 = vcmp.ge.f32.partialorder %v396, 0.0
      %vm425 = vcmp.ge.f32.partialorder %v397, 0.0
      %vm426 = vcmp.ge.f32.partialorder %v398, 0.0
      %vm427 = vcmp.ge.f32.partialorder %v399, 0.0
      %vm428 = vcmp.ge.f32.partialorder %v400, 0.0
      %vm429 = vcmp.ge.f32.partialorder %v401, 0.0
      %vm430 = vcmp.ge.f32.partialorder %v402, 0.0
      %vm431 = vcmp.ge.f32.partialorder %v403, 0.0
      %vm432 = vcmp.ge.f32.partialorder %v404, 0.0
      %vm433 = vcmp.ge.f32.partialorder %v405, 0.0
      %vm434 = vcmp.ge.f32.partialorder %v406, 0.0
      %vm435 = vcmp.ge.f32.partialorder %v407, 0.0
      %vm436 = vcmp.ge.f32.partialorder %v408, 0.0
      %v437 = vmul.f32 %v381, 0.01
      %v438 = vmul.f32 %v382, 0.01
      %v439 = vmul.f32 %v383, 0.01
      %v440 = vmul.f32 %v384, 0.01
      %v441 = vmul.f32 %v385, 0.01
      %v442 = vmul.f32 %v386, 0.01
      %v443 = vmul.f32 %v387, 0.01
      %v444 = vmul.f32 %v388, 0.01
      %v445 = vmul.f32 %v389, 0.01
      %v446 = vmul.f32 %v390, 0.01
      %v447 = vmul.f32 %v391, 0.01
      %v448 = vmul.f32 %v392, 0.01
      %v449 = vmul.f32 %v393, 0.01
      %v450 = vmul.f32 %v394, 0.01
      %v451 = vmul.f32 %v395, 0.01
      %v452 = vmul.f32 %v396, 0.01
      %v453 = vmul.f32 %v397, 0.01
      %v454 = vmul.f32 %v398, 0.01
      %v455 = vmul.f32 %v399, 0.01
      %v456 = vmul.f32 %v400, 0.01
      %v457 = vmul.f32 %v401, 0.01
      %v458 = vmul.f32 %v402, 0.01
      %v459 = vmul.f32 %v403, 0.01
      %v460 = vmul.f32 %v404, 0.01
      %v461 = vmul.f32 %v405, 0.01
      %v462 = vmul.f32 %v406, 0.01
      %v463 = vmul.f32 %v407, 0.01
      %v464 = vmul.f32 %v408, 0.01
      %v465 = vsel %vm409, %v381, %v437
      %v466 = vsel %vm410, %v382, %v438
      %v467 = vsel %vm411, %v383, %v439
      %v468 = vsel %vm412, %v384, %v440
      %v469 = vsel %vm413, %v385, %v441
      %v470 = vsel %vm414, %v386, %v442
      %v471 = vsel %vm415, %v387, %v443
      %v472 = vsel %vm416, %v388, %v444
      %v473 = vsel %vm417, %v389, %v445
      %v474 = vsel %vm418, %v390, %v446
      %v475 = vsel %vm419, %v391, %v447
      %v476 = vsel %vm420, %v392, %v448
      %v477 = vsel %vm421, %v393, %v449
      %v478 = vsel %vm422, %v394, %v450
      %v479 = vsel %vm423, %v395, %v451
      %v480 = vsel %vm424, %v396, %v452
      %v481 = vsel %vm425, %v397, %v453
      %v482 = vsel %vm426, %v398, %v454
      %v483 = vsel %vm427, %v399, %v455
      %v484 = vsel %vm428, %v400, %v456
      %v485 = vsel %vm429, %v401, %v457
      %v486 = vsel %vm430, %v402, %v458
      %v487 = vsel %vm431, %v403, %v459
      %v488 = vsel %vm432, %v404, %v460
      %v489 = vsel %vm433, %v405, %v461
      %v490 = vsel %vm434, %v406, %v462
      %v491 = vsel %vm435, %v407, %v463
      %v492 = vsel %vm436, %v408, %v464
      %v493 = vpack.c.bf16 %v466, %v465
      %v494 = vpack.c.bf16 %v468, %v467
      %v495 = vpack.c.bf16 %v470, %v469
      %v496 = vpack.c.bf16 %v472, %v471
      %v497 = vpack.c.bf16 %v474, %v473
      %v498 = vpack.c.bf16 %v476, %v475
      %v499 = vpack.c.bf16 %v478, %v477
      %v500 = vpack.c.bf16 %v480, %v479
      %v501 = vpack.c.bf16 %v482, %v481
      %v502 = vpack.c.bf16 %v484, %v483
      %v503 = vpack.c.bf16 %v486, %v485
      %v504 = vpack.c.bf16 %v488, %v487
      %v505 = vpack.c.bf16 %v490, %v489
      %v506 = vpack.c.bf16 %v492, %v491
      %v508 = vshrl.u32 %v493, 16
      %v510 = vshll.u32 %v493, 16
      %v512 = vrot.slane %v510, 1
      %v513 = vor.u32 %v508, %v512
      %v515 = vshrl.u32 %v494, 16
      %v517 = vshll.u32 %v494, 16
      %v519 = vrot.slane %v517, 1
      %v520 = vor.u32 %v515, %v519
      %v522 = vshrl.u32 %v495, 16
      %v524 = vshll.u32 %v495, 16
      %v526 = vrot.slane %v524, 1
      %v527 = vor.u32 %v522, %v526
      %v529 = vshrl.u32 %v496, 16
      %v531 = vshll.u32 %v496, 16
      %v533 = vrot.slane %v531, 1
      %v534 = vor.u32 %v529, %v533
      %v536 = vshrl.u32 %v497, 16
      %v538 = vshll.u32 %v497, 16
      %v540 = vrot.slane %v538, 1
      %v541 = vor.u32 %v536, %v540
      %v543 = vshrl.u32 %v498, 16
      %v545 = vshll.u32 %v498, 16
      %v547 = vrot.slane %v545, 1
      %v548 = vor.u32 %v543, %v547
      %v550 = vshrl.u32 %v499, 16
      %v552 = vshll.u32 %v499, 16
      %v554 = vrot.slane %v552, 1
      %v555 = vor.u32 %v550, %v554
      %v557 = vshrl.u32 %v500, 16
      %v559 = vshll.u32 %v500, 16
      %v561 = vrot.slane %v559, 1
      %v562 = vor.u32 %v557, %v561
      %v564 = vshrl.u32 %v501, 16
      %v566 = vshll.u32 %v501, 16
      %v568 = vrot.slane %v566, 1
      %v569 = vor.u32 %v564, %v568
      %v571 = vshrl.u32 %v502, 16
      %v573 = vshll.u32 %v502, 16
      %v575 = vrot.slane %v573, 1
      %v576 = vor.u32 %v571, %v575
      %v578 = vshrl.u32 %v503, 16
      %v580 = vshll.u32 %v503, 16
      %v582 = vrot.slane %v580, 1
      %v583 = vor.u32 %v578, %v582
      %v585 = vshrl.u32 %v504, 16
      %v587 = vshll.u32 %v504, 16
      %v589 = vrot.slane %v587, 1
      %v590 = vor.u32 %v585, %v589
      %v592 = vshrl.u32 %v505, 16
      %v594 = vshll.u32 %v505, 16
      %v596 = vrot.slane %v594, 1
      %v597 = vor.u32 %v592, %v596
      %v599 = vshrl.u32 %v506, 16
      %v601 = vshll.u32 %v506, 16
      %v603 = vrot.slane %v601, 1
      %v604 = vor.u32 %v599, %v603
      %605 = vrot.lane.b32.xlu0 %v513, 64
      %v606 = vpop.permute.xlu0 %605
      %607 = vrot.lane.b32.xlu0 %v520, 64
      %v608 = vpop.permute.xlu0 %607
      %609 = vrot.lane.b32.xlu0 %v527, 64
      %v610 = vpop.permute.xlu0 %609
      %611 = vrot.lane.b32.xlu0 %v534, 64
      %v612 = vpop.permute.xlu0 %611
      %613 = vrot.lane.b32.xlu0 %v541, 64
      %v614 = vpop.permute.xlu0 %613
      %615 = vrot.lane.b32.xlu0 %v548, 64
      %v616 = vpop.permute.xlu0 %615
      %617 = vrot.lane.b32.xlu0 %v555, 64
      %v618 = vpop.permute.xlu0 %617
      %619 = vrot.lane.b32.xlu0 %v562, 64
      %v620 = vpop.permute.xlu0 %619
      %621 = vrot.lane.b32.xlu0 %v569, 64
      %v622 = vpop.permute.xlu0 %621
      %623 = vrot.lane.b32.xlu0 %v576, 64
      %v624 = vpop.permute.xlu0 %623
      %625 = vrot.lane.b32.xlu0 %v583, 64
      %v626 = vpop.permute.xlu0 %625
      %627 = vrot.lane.b32.xlu0 %v590, 64
      %v628 = vpop.permute.xlu0 %627
      %629 = vrot.lane.b32.xlu0 %v597, 64
      %v630 = vpop.permute.xlu0 %629
      %631 = vrot.lane.b32.xlu0 %v604, 64
      %v632 = vpop.permute.xlu0 %631
      %v647 = vrot.slane %v493, 1
      %v648 = vrot.slane %v494, 1
      %v649 = vrot.slane %v495, 1
      %v650 = vrot.slane %v496, 1
      %v651 = vrot.slane %v497, 1
      %v652 = vrot.slane %v498, 1
      %v653 = vrot.slane %v499, 1
      %v654 = vrot.slane %v500, 1
      %v655 = vrot.slane %v501, 1
      %v656 = vrot.slane %v502, 1
      %v657 = vrot.slane %v503, 1
      %v658 = vrot.slane %v504, 1
      %v659 = vrot.slane %v505, 1
      %v660 = vrot.slane %v506, 1
      %vm661 = vcmask 523264
      %v663 = vsel %vm661, %v493, %v606
      %v665 = vsel %vm661, %v494, %v608
      %v667 = vsel %vm661, %v495, %v610
      %v669 = vsel %vm661, %v496, %v612
      %v671 = vsel %vm661, %v497, %v614
      %v673 = vsel %vm661, %v498, %v616
      %v675 = vsel %vm661, %v499, %v618
      %v677 = vsel %vm661, %v500, %v620
      %v679 = vsel %vm661, %v501, %v622
      %v681 = vsel %vm661, %v502, %v624
      %v683 = vsel %vm661, %v503, %v626
      %v685 = vsel %vm661, %v504, %v628
      %v687 = vsel %vm661, %v505, %v630
      %v689 = vsel %vm661, %v506, %v632
      %v690 = vld [vmem:[%s3] sm:$0xf]
      %v691 = vld [vmem:[%s3 + $0x4] sm:$0xf]
      %v692 = vld [vmem:[%s3 + $0x8] sm:$0xf]
      %v693 = vld [vmem:[%s3 + $0xc] sm:$0xf]
      %v694 = vld [vmem:[%s3 + $0x10] sm:$0xf]
      %v695 = vld [vmem:[%s3 + $0x14] sm:$0xf]
      %v696 = vld [vmem:[%s3 + $0x18] sm:$0xf]
      %v697 = vld [vmem:[%s3 + $0x1c] sm:$0xf]
      %v698 = vld [vmem:[%s3 + $0x20] sm:$0xf]
      %v699 = vld [vmem:[%s3 + $0x24] sm:$0xf]
      %v700 = vld [vmem:[%s3 + $0x28] sm:$0xf]
      %v701 = vld [vmem:[%s3 + $0x2c] sm:$0xf]
      %v702 = vld [vmem:[%s3 + $0x30] sm:$0xf]
      %v703 = vld [vmem:[%s3 + $0x34] sm:$0xf]
      %v704 = vld [vmem:[%s3 + $0x38] sm:$0xf]
      %v705 = vld [vmem:[%s3 + $0x3c] sm:$0xf]
      %v706 = vld [vmem:[%s3 + $0x40] sm:$0xf]
      %v707 = vld [vmem:[%s3 + $0x44] sm:$0xf]
      %v708 = vld [vmem:[%s3 + $0x48] sm:$0xf]
      %v709 = vld [vmem:[%s3 + $0x4c] sm:$0xf]
      %v710 = vld [vmem:[%s3 + $0x50] sm:$0xf]
      %v711 = vld [vmem:[%s3 + $0x54] sm:$0xf]
      %v712 = vld [vmem:[%s3 + $0x58] sm:$0xf]
      %v713 = vld [vmem:[%s3 + $0x5c] sm:$0xf]
      %v714 = vld [vmem:[%s3 + $0x60] sm:$0xf]
      %v715 = vld [vmem:[%s3 + $0x64] sm:$0xf]
      %v716 = vld [vmem:[%s3 + $0x68] sm:$0xf]
      %v717 = vld [vmem:[%s3 + $0x6c] sm:$0xf]
      %v718 = vld [vmem:[%s3 + $0x70] sm:$0xf]
      %v719 = vld [vmem:[%s3 + $0x74] sm:$0xf]
      %v720 = vld [vmem:[%s3 + $0x78] sm:$0xf]
      %v721 = vld [vmem:[%s3 + $0x7c] sm:$0xf]
      %v722 = vld [vmem:[%s3 + $0x80] sm:$0xf]
      %v723 = vld [vmem:[%s3 + $0x84] sm:$0xf]
      %v724 = vld [vmem:[%s3 + $0x88] sm:$0xf]
      %v725 = vld [vmem:[%s3 + $0x8c] sm:$0xf]
      %v726 = vld [vmem:[%s3 + $0x90] sm:$0xf]
      %v727 = vld [vmem:[%s3 + $0x94] sm:$0xf]
      %v728 = vld [vmem:[%s3 + $0x98] sm:$0xf]
      %v729 = vld [vmem:[%s3 + $0x9c] sm:$0xf]
      %v730 = vld [vmem:[%s3 + $0xa0] sm:$0xf]
      %v731 = vld [vmem:[%s3 + $0xa4] sm:$0xf]
      %v732 = vld [vmem:[%s3 + $0xa8] sm:$0xf]
      %v733 = vld [vmem:[%s3 + $0xac] sm:$0xf]
      %v734 = vld [vmem:[%s3 + $0xb0] sm:$0xf]
      %v735 = vld [vmem:[%s3 + $0xb4] sm:$0xf]
      %v736 = vld [vmem:[%s3 + $0xb8] sm:$0xf]
      %v737 = vld [vmem:[%s3 + $0xbc] sm:$0xf]
      %v738 = vld [vmem:[%s3 + $0xc0] sm:$0xf]
      %v739 = vld [vmem:[%s3 + $0xc4] sm:$0xf]
      %v740 = vld [vmem:[%s3 + $0xc8] sm:$0xf]
      %v741 = vld [vmem:[%s3 + $0xcc] sm:$0xf]
      %v742 = vld [vmem:[%s3 + $0xd0] sm:$0xf]
      %v743 = vld [vmem:[%s3 + $0xd4] sm:$0xf]
      %v744 = vld [vmem:[%s3 + $0xd8] sm:$0xf]
      %v745 = vld [vmem:[%s3 + $0xdc] sm:$0xf]
      %v746 = vld [vmem:[%s3 + $0xe0] sm:$0xf]
      %v747 = vld [vmem:[%s3 + $0xe4] sm:$0xf]
      %v748 = vld [vmem:[%s3 + $0xe8] sm:$0xf]
      %v749 = vld [vmem:[%s3 + $0xec] sm:$0xf]
      %v750 = vld [vmem:[%s3 + $0xf0] sm:$0xf]
      %v751 = vld [vmem:[%s3 + $0xf4] sm:$0xf]
      %v752 = vld [vmem:[%s3 + $0xf8] sm:$0xf]
      %v753 = vld [vmem:[%s3 + $0xfc] sm:$0xf]
      %v754 = vld [vmem:[%s3 + $0x100] sm:$0xf]
      %v755 = vld [vmem:[%s3 + $0x104] sm:$0xf]
      %v756 = vld [vmem:[%s3 + $0x108] sm:$0xf]
      %v757 = vld [vmem:[%s3 + $0x10c] sm:$0xf]
      %v758 = vld [vmem:[%s3 + $0x110] sm:$0xf]
      %v759 = vld [vmem:[%s3 + $0x114] sm:$0xf]
      %v760 = vld [vmem:[%s3 + $0x118] sm:$0xf]
      %v761 = vld [vmem:[%s3 + $0x11c] sm:$0xf]
      %v762 = vld [vmem:[%s4] sm:$0x1]
      %v775 = vcombine.low %v663, %v647
      %v776 = vcombine.high %v663, %v647
      %v778 = vunpack.c.l.s4 1983009808
      %v779 = vunpack.c.0.s8 %v778
      %v780 = vlaneseq
      %v781 = vshrl.u32 %v780, 7
      %v782 = vsub.s32 %v779, %v781
      %v783 = vrot.slane %v775, %v782
      %v785 = vunpack.c.l.s4 1983009808
      %v786 = vunpack.c.0.s8 %v785
      %v787 = vlaneseq
      %v788 = vshrl.u32 %v787, 7
      %v789 = vsub.s32 %v786, %v788
      %v790 = vrot.slane %v776, %v789
      %v791 = vcombine.high %v783, %v783
      %v792 = vcombine.low %v665, %v648
      %v793 = vcombine.high %v665, %v648
      %v795 = vunpack.c.l.s4 1983009808
      %v796 = vunpack.c.0.s8 %v795
      %v797 = vlaneseq
      %v798 = vshrl.u32 %v797, 7
      %v799 = vsub.s32 %v796, %v798
      %v800 = vrot.slane %v792, %v799
      %v802 = vunpack.c.l.s4 1983009808
      %v803 = vunpack.c.0.s8 %v802
      %v804 = vlaneseq
      %v805 = vshrl.u32 %v804, 7
      %v806 = vsub.s32 %v803, %v805
      %v807 = vrot.slane %v793, %v806
      %v808 = vcombine.high %v800, %v800
      %v809 = vcombine.low %v667, %v649
      %v810 = vcombine.high %v667, %v649
      %v812 = vunpack.c.l.s4 1983009808
      %v813 = vunpack.c.0.s8 %v812
      %v814 = vlaneseq
      %v815 = vshrl.u32 %v814, 7
      %v816 = vsub.s32 %v813, %v815
      %v817 = vrot.slane %v809, %v816
      %v819 = vunpack.c.l.s4 1983009808
      %v820 = vunpack.c.0.s8 %v819
      %v821 = vlaneseq
      %v822 = vshrl.u32 %v821, 7
      %v823 = vsub.s32 %v820, %v822
      %v824 = vrot.slane %v810, %v823
      %v825 = vcombine.high %v817, %v817
      %v826 = vcombine.low %v669, %v650
      %v827 = vcombine.high %v669, %v650
      %v829 = vunpack.c.l.s4 1983009808
      %v830 = vunpack.c.0.s8 %v829
      %v831 = vlaneseq
      %v832 = vshrl.u32 %v831, 7
      %v833 = vsub.s32 %v830, %v832
      %v834 = vrot.slane %v826, %v833
      %v836 = vunpack.c.l.s4 1983009808
      %v837 = vunpack.c.0.s8 %v836
      %v838 = vlaneseq
      %v839 = vshrl.u32 %v838, 7
      %v840 = vsub.s32 %v837, %v839
      %v841 = vrot.slane %v827, %v840
      %v842 = vcombine.high %v834, %v834
      %v843 = vcombine.low %v671, %v651
      %v844 = vcombine.high %v671, %v651
      %v846 = vunpack.c.l.s4 1983009808
      %v847 = vunpack.c.0.s8 %v846
      %v848 = vlaneseq
      %v849 = vshrl.u32 %v848, 7
      %v850 = vsub.s32 %v847, %v849
      %v851 = vrot.slane %v843, %v850
      %v853 = vunpack.c.l.s4 1983009808
      %v854 = vunpack.c.0.s8 %v853
      %v855 = vlaneseq
      %v856 = vshrl.u32 %v855, 7
      %v857 = vsub.s32 %v854, %v856
      %v858 = vrot.slane %v844, %v857
      %v859 = vcombine.high %v851, %v851
      %v860 = vcombine.low %v673, %v652
      %v861 = vcombine.high %v673, %v652
      %v863 = vunpack.c.l.s4 1983009808
      %v864 = vunpack.c.0.s8 %v863
      %v865 = vlaneseq
      %v866 = vshrl.u32 %v865, 7
      %v867 = vsub.s32 %v864, %v866
      %v868 = vrot.slane %v860, %v867
      %v870 = vunpack.c.l.s4 1983009808
      %v871 = vunpack.c.0.s8 %v870
      %v872 = vlaneseq
      %v873 = vshrl.u32 %v872, 7
      %v874 = vsub.s32 %v871, %v873
      %v875 = vrot.slane %v861, %v874
      %v876 = vcombine.high %v868, %v868
      %v877 = vcombine.low %v675, %v653
      %v878 = vcombine.high %v675, %v653
      %v880 = vunpack.c.l.s4 1983009808
      %v881 = vunpack.c.0.s8 %v880
      %v882 = vlaneseq
      %v883 = vshrl.u32 %v882, 7
      %v884 = vsub.s32 %v881, %v883
      %v885 = vrot.slane %v877, %v884
      %v887 = vunpack.c.l.s4 1983009808
      %v888 = vunpack.c.0.s8 %v887
      %v889 = vlaneseq
      %v890 = vshrl.u32 %v889, 7
      %v891 = vsub.s32 %v888, %v890
      %v892 = vrot.slane %v878, %v891
      %v893 = vcombine.high %v885, %v885
      %v894 = vcombine.low %v677, %v654
      %v895 = vcombine.high %v677, %v654
      %v897 = vunpack.c.l.s4 1983009808
      %v898 = vunpack.c.0.s8 %v897
      %v899 = vlaneseq
      %v900 = vshrl.u32 %v899, 7
      %v901 = vsub.s32 %v898, %v900
      %v902 = vrot.slane %v894, %v901
      %v904 = vunpack.c.l.s4 1983009808
      %v905 = vunpack.c.0.s8 %v904
      %v906 = vlaneseq
      %v907 = vshrl.u32 %v906, 7
      %v908 = vsub.s32 %v905, %v907
      %v909 = vrot.slane %v895, %v908
      %v910 = vcombine.high %v902, %v902
      %v911 = vcombine.low %v679, %v655
      %v912 = vcombine.high %v679, %v655
      %v914 = vunpack.c.l.s4 1983009808
      %v915 = vunpack.c.0.s8 %v914
      %v916 = vlaneseq
      %v917 = vshrl.u32 %v916, 7
      %v918 = vsub.s32 %v915, %v917
      %v919 = vrot.slane %v911, %v918
      %v921 = vunpack.c.l.s4 1983009808
      %v922 = vunpack.c.0.s8 %v921
      %v923 = vlaneseq
      %v924 = vshrl.u32 %v923, 7
      %v925 = vsub.s32 %v922, %v924
      %v926 = vrot.slane %v912, %v925
      %v927 = vcombine.high %v919, %v919
      %v928 = vcombine.low %v681, %v656
      %v929 = vcombine.high %v681, %v656
      %v931 = vunpack.c.l.s4 1983009808
      %v932 = vunpack.c.0.s8 %v931
      %v933 = vlaneseq
      %v934 = vshrl.u32 %v933, 7
      %v935 = vsub.s32 %v932, %v934
      %v936 = vrot.slane %v928, %v935
      %v938 = vunpack.c.l.s4 1983009808
      %v939 = vunpack.c.0.s8 %v938
      %v940 = vlaneseq
      %v941 = vshrl.u32 %v940, 7
      %v942 = vsub.s32 %v939, %v941
      %v943 = vrot.slane %v929, %v942
      %v944 = vcombine.high %v936, %v936
      %v945 = vcombine.low %v683, %v657
      %v946 = vcombine.high %v683, %v657
      %v948 = vunpack.c.l.s4 1983009808
      %v949 = vunpack.c.0.s8 %v948
      %v950 = vlaneseq
      %v951 = vshrl.u32 %v950, 7
      %v952 = vsub.s32 %v949, %v951
      %v953 = vrot.slane %v945, %v952
      %v955 = vunpack.c.l.s4 1983009808
      %v956 = vunpack.c.0.s8 %v955
      %v957 = vlaneseq
      %v958 = vshrl.u32 %v957, 7
      %v959 = vsub.s32 %v956, %v958
      %v960 = vrot.slane %v946, %v959
      %v961 = vcombine.high %v953, %v953
      %v962 = vcombine.low %v685, %v658
      %v963 = vcombine.high %v685, %v658
      %v965 = vunpack.c.l.s4 1983009808
      %v966 = vunpack.c.0.s8 %v965
      %v967 = vlaneseq
      %v968 = vshrl.u32 %v967, 7
      %v969 = vsub.s32 %v966, %v968
      %v970 = vrot.slane %v962, %v969
      %v972 = vunpack.c.l.s4 1983009808
      %v973 = vunpack.c.0.s8 %v972
      %v974 = vlaneseq
      %v975 = vshrl.u32 %v974, 7
      %v976 = vsub.s32 %v973, %v975
      %v977 = vrot.slane %v963, %v976
      %v978 = vcombine.high %v970, %v970
      %v980 = vcombine.low %v687, %v659
      %v981 = vcombine.high %v687, %v659
      %v983 = vunpack.c.l.s4 1983009808
      %v984 = vunpack.c.0.s8 %v983
      %v985 = vlaneseq
      %v986 = vshrl.u32 %v985, 7
      %v987 = vsub.s32 %v984, %v986
      %v988 = vrot.slane %v980, %v987
      %v990 = vunpack.c.l.s4 1983009808
      %v991 = vunpack.c.0.s8 %v990
      %v992 = vlaneseq
      %v993 = vshrl.u32 %v992, 7
      %v994 = vsub.s32 %v991, %v993
      %v995 = vrot.slane %v981, %v994
      %v996 = vcombine.high %v988, %v988
      %v997 = vcombine.low %v800, %v808
      %v998 = vcombine.low %v807, %v817
      %v1000 = vunpack.c.l.s4 1983009808
      %v1001 = vunpack.c.0.s8 %v1000
      %v1002 = vlaneseq
      %v1003 = vshrl.u32 %v1002, 7
      %v1004 = vsub.s32 %v1001, %v1003
      %v1005 = vrot.slane %v997, %v1004
      %v1007 = vunpack.c.l.s4 1983009808
      %v1008 = vunpack.c.0.s8 %v1007
      %v1009 = vlaneseq
      %v1010 = vshrl.u32 %v1009, 7
      %v1011 = vsub.s32 %v1008, %v1010
      %v1012 = vrot.slane %v998, %v1011
      %v1013 = vcombine.low %v1005, %v1012
      %v1014 = vcombine.high %v1005, %v1012
      %v1015 = vcombine.low %v825, %v824
      %v1016 = vcombine.low %v834, %v842
      %v1018 = vunpack.c.l.s4 1983009808
      %v1019 = vunpack.c.0.s8 %v1018
      %v1020 = vlaneseq
      %v1021 = vshrl.u32 %v1020, 7
      %v1022 = vsub.s32 %v1019, %v1021
      %v1023 = vrot.slane %v1015, %v1022
      %v1025 = vunpack.c.l.s4 1983009808
      %v1026 = vunpack.c.0.s8 %v1025
      %v1027 = vlaneseq
      %v1028 = vshrl.u32 %v1027, 7
      %v1029 = vsub.s32 %v1026, %v1028
      %v1030 = vrot.slane %v1016, %v1029
      %v1031 = vcombine.low %v1023, %v1030
      %v1032 = vcombine.high %v1023, %v1030
      %v1033 = vcombine.low %v841, %v851
      %v1034 = vcombine.low %v859, %v858
      %v1036 = vunpack.c.l.s4 1983009808
      %v1037 = vunpack.c.0.s8 %v1036
      %v1038 = vlaneseq
      %v1039 = vshrl.u32 %v1038, 7
      %v1040 = vsub.s32 %v1037, %v1039
      %v1041 = vrot.slane %v1033, %v1040
      %v1043 = vunpack.c.l.s4 1983009808
      %v1044 = vunpack.c.0.s8 %v1043
      %v1045 = vlaneseq
      %v1046 = vshrl.u32 %v1045, 7
      %v1047 = vsub.s32 %v1044, %v1046
      %v1048 = vrot.slane %v1034, %v1047
      %v1049 = vcombine.low %v1041, %v1048
      %v1050 = vcombine.high %v1041, %v1048
      %v1051 = vcombine.low %v868, %v876
      %v1052 = vcombine.low %v875, %v885
      %v1054 = vunpack.c.l.s4 1983009808
      %v1055 = vunpack.c.0.s8 %v1054
      %v1056 = vlaneseq
      %v1057 = vshrl.u32 %v1056, 7
      %v1058 = vsub.s32 %v1055, %v1057
      %v1059 = vrot.slane %v1051, %v1058
      %v1061 = vunpack.c.l.s4 1983009808
      %v1062 = vunpack.c.0.s8 %v1061
      %v1063 = vlaneseq
      %v1064 = vshrl.u32 %v1063, 7
      %v1065 = vsub.s32 %v1062, %v1064
      %v1066 = vrot.slane %v1052, %v1065
      %v1067 = vcombine.low %v1059, %v1066
      %v1068 = vcombine.high %v1059, %v1066
      %v1069 = vcombine.low %v893, %v892
      %v1070 = vcombine.low %v902, %v910
      %v1072 = vunpack.c.l.s4 1983009808
      %v1073 = vunpack.c.0.s8 %v1072
      %v1074 = vlaneseq
      %v1075 = vshrl.u32 %v1074, 7
      %v1076 = vsub.s32 %v1073, %v1075
      %v1077 = vrot.slane %v1069, %v1076
      %v1079 = vunpack.c.l.s4 1983009808
      %v1080 = vunpack.c.0.s8 %v1079
      %v1081 = vlaneseq
      %v1082 = vshrl.u32 %v1081, 7
      %v1083 = vsub.s32 %v1080, %v1082
      %v1084 = vrot.slane %v1070, %v1083
      %v1085 = vcombine.low %v1077, %v1084
      %v1086 = vcombine.high %v1077, %v1084
      %v1087 = vcombine.low %v909, %v919
      %v1088 = vcombine.low %v927, %v926
      %v1090 = vunpack.c.l.s4 1983009808
      %v1091 = vunpack.c.0.s8 %v1090
      %v1092 = vlaneseq
      %v1093 = vshrl.u32 %v1092, 7
      %v1094 = vsub.s32 %v1091, %v1093
      %v1095 = vrot.slane %v1087, %v1094
      %v1097 = vunpack.c.l.s4 1983009808
      %v1098 = vunpack.c.0.s8 %v1097
      %v1099 = vlaneseq
      %v1100 = vshrl.u32 %v1099, 7
      %v1101 = vsub.s32 %v1098, %v1100
      %v1102 = vrot.slane %v1088, %v1101
      %v1103 = vcombine.low %v1095, %v1102
      %v1104 = vcombine.high %v1095, %v1102
      %v1105 = vcombine.low %v936, %v944
      %v1106 = vcombine.low %v943, %v953
      %v1108 = vunpack.c.l.s4 1983009808
      %v1109 = vunpack.c.0.s8 %v1108
      %v1110 = vlaneseq
      %v1111 = vshrl.u32 %v1110, 7
      %v1112 = vsub.s32 %v1109, %v1111
      %v1113 = vrot.slane %v1105, %v1112
      %v1115 = vunpack.c.l.s4 1983009808
      %v1116 = vunpack.c.0.s8 %v1115
      %v1117 = vlaneseq
      %v1118 = vshrl.u32 %v1117, 7
      %v1119 = vsub.s32 %v1116, %v1118
      %v1120 = vrot.slane %v1106, %v1119
      %v1121 = vcombine.low %v1113, %v1120
      %v1122 = vcombine.high %v1113, %v1120
      %v1123 = vcombine.low %v961, %v960
      %v1124 = vcombine.low %v970, %v978
      %v1126 = vunpack.c.l.s4 1983009808
      %v1127 = vunpack.c.0.s8 %v1126
      %v1128 = vlaneseq
      %v1129 = vshrl.u32 %v1128, 7
      %v1130 = vsub.s32 %v1127, %v1129
      %v1131 = vrot.slane %v1123, %v1130
      %v1133 = vunpack.c.l.s4 1983009808
      %v1134 = vunpack.c.0.s8 %v1133
      %v1135 = vlaneseq
      %v1136 = vshrl.u32 %v1135, 7
      %v1137 = vsub.s32 %v1134, %v1136
      %v1138 = vrot.slane %v1124, %v1137
      %v1139 = vcombine.low %v1131, %v1138
      %v1140 = vcombine.high %v1131, %v1138
      %v1141 = vcombine.low %v977, %v988
      %v1142 = vcombine.low %v996, %v995
      %v1144 = vunpack.c.l.s4 1983009808
      %v1145 = vunpack.c.0.s8 %v1144
      %v1146 = vlaneseq
      %v1147 = vshrl.u32 %v1146, 7
      %v1148 = vsub.s32 %v1145, %v1147
      %v1149 = vrot.slane %v1141, %v1148
      %v1151 = vunpack.c.l.s4 1983009808
      %v1152 = vunpack.c.0.s8 %v1151
      %v1153 = vlaneseq
      %v1154 = vshrl.u32 %v1153, 7
      %v1155 = vsub.s32 %v1152, %v1154
      %v1156 = vrot.slane %v1142, %v1155
      %v1157 = vcombine.low %v1149, %v1156
      %v1158 = vcombine.high %v1149, %v1156
      %v1192 = vunpack.c.l.b16 %v714
      %v1193 = vunpack.c.l.b16 %v715
      %v1194 = vunpack.c.l.b16 %v716
      %v1195 = vunpack.c.l.b16 %v717
      %v1196 = vunpack.c.l.b16 %v718
      %v1197 = vunpack.c.l.b16 %v719
      %v1198 = vunpack.c.l.b16 %v720
      %v1199 = vunpack.c.l.b16 %v721
      %v1200 = vunpack.c.l.b16 %v722
      %v1201 = vunpack.c.l.b16 %v723
      %v1202 = vunpack.c.l.b16 %v724
      %v1203 = vunpack.c.l.b16 %v725
      %v1204 = vunpack.c.l.b16 %v726
      %v1205 = vunpack.c.l.b16 %v727
      %v1206 = vunpack.c.l.b16 %v728
      %v1207 = vunpack.c.l.b16 %v729
      %v1208 = vunpack.c.l.b16 %v730
      %v1209 = vunpack.c.l.b16 %v731
      %v1210 = vunpack.c.l.b16 %v732
      %v1211 = vunpack.c.l.b16 %v733
      %v1212 = vunpack.c.l.b16 %v734
      %v1213 = vunpack.c.l.b16 %v735
      %v1214 = vunpack.c.l.b16 %v736
      %v1215 = vunpack.c.l.b16 %v737
      %v1216 = vpack.c.b16 %v1193, %v1192
      %v1217 = vpack.c.b16 %v1195, %v1194
      %v1218 = vpack.c.b16 %v1197, %v1196
      %v1219 = vpack.c.b16 %v1199, %v1198
      %v1220 = vpack.c.b16 %v1201, %v1200
      %v1221 = vpack.c.b16 %v1203, %v1202
      %v1222 = vpack.c.b16 %v1205, %v1204
      %v1223 = vpack.c.b16 %v1207, %v1206
      %v1224 = vpack.c.b16 %v1209, %v1208
      %v1225 = vpack.c.b16 %v1211, %v1210
      %v1226 = vpack.c.b16 %v1213, %v1212
      %v1227 = vpack.c.b16 %v1215, %v1214
      %v1241 = vsel %vm661, %v1014, 0
      %v1244 = vsel %vm661, %v1032, 0
      %v1247 = vsel %vm661, %v1050, 0
      %v1250 = vsel %vm661, %v1068, 0
      %v1253 = vsel %vm661, %v1086, 0
      %v1256 = vsel %vm661, %v1104, 0
      %v1259 = vsel %vm661, %v1122, 0
      %v1262 = vsel %vm661, %v1140, 0
      %v1265 = vsel %vm661, %v1158, 0
      %1267 = vmatprep.subr.bf16.mxu0 0
      %1268 = vmatpush1.bf16.msra.mxu0 %v1223
      %1269 = vmatprep.subr.bf16.mxu0 0
      %1270 = vmatpush1.bf16.msra.mxu0 %v1222
      %1271 = vmatprep.subr.bf16.mxu0 0
      %1272 = vmatpush1.bf16.msra.mxu0 %v1221
      %1273 = vmatprep.subr.bf16.mxu0 0
      %1274 = vmatpush1.bf16.msra.mxu0 %v1220
      %1275 = vmatprep.subr.bf16.mxu0 0
      %1276 = vmatpush1.bf16.msra.mxu0 %v1219
      %1277 = vmatprep.subr.bf16.mxu0 0
      %1278 = vmatpush1.bf16.msra.mxu0 %v1218
      %1279 = vmatprep.subr.bf16.mxu0 0
      %1280 = vmatpush1.bf16.msra.mxu0 %v1217
      %1281 = vmatprep.subr.bf16.mxu0 0
      %1282 = vmatpush1.bf16.msra.mxu0 %v1216
      %1283 = vmatprep.subr.bf16.mxu0 0
      %1284 = vmatpush2.bf16.msra.mxu0 0
      %1285 = vmatprep.subr.bf16.mxu0 0
      %1286 = vmatpush2.bf16.msra.mxu0 0
      %1287 = vmatprep.subr.bf16.mxu0 0
      %1288 = vmatpush2.bf16.msra.mxu0 0
      %1289 = vmatprep.subr.bf16.mxu0 0
      %1290 = vmatpush2.bf16.msra.mxu0 0
      %1291 = vmatprep.subr.bf16.mxu0 0
      %1292 = vmatpush2.bf16.msra.mxu0 %v1227
      %1293 = vmatprep.subr.bf16.mxu0 0
      %1294 = vmatpush2.bf16.msra.mxu0 %v1226
      %1295 = vmatprep.subr.bf16.mxu0 0
      %1296 = vmatpush2.bf16.msra.mxu0 %v1225
      %1297 = vmatprep.subr.bf16.mxu0 0
      %1298 = vmatpush2.bf16.msra.mxu0 %v1224
      %1299 = vmatprep.mubr.bf16.mxu0 %v1241
      %1300 = vmatmul.mubr.bf16.gmra.mxu0 %v1013
      %v1301 = vpop.f32.mrf.mxu0
      %v1302 = vadd.f32 0.0, %v1301
      %v1303 = vpop.f32.mrf.mxu0
      %v1304 = vpop.f32.mrf.mxu0
      %v1305 = vadd.f32 0.0, %v1304
      %v1306 = vpop.f32.mrf.mxu0
      %1307 = vmatprep.mubr.bf16.mxu0 %v1244
      %1308 = vmatmul.mubr.bf16.gmra.mxu0 %v1031
      %v1309 = vpop.f32.mrf.mxu0
      %v1310 = vadd.f32 0.0, %v1309
      %v1311 = vpop.f32.mrf.mxu0
      %v1312 = vpop.f32.mrf.mxu0
      %v1313 = vadd.f32 0.0, %v1312
      %v1314 = vpop.f32.mrf.mxu0
      %1315 = vmatprep.mubr.bf16.mxu0 %v1247
      %1316 = vmatmul.mubr.bf16.gmra.mxu0 %v1049
      %v1317 = vpop.f32.mrf.mxu0
      %v1318 = vadd.f32 0.0, %v1317
      %v1319 = vpop.f32.mrf.mxu0
      %v1320 = vpop.f32.mrf.mxu0
      %v1321 = vadd.f32 0.0, %v1320
      %v1322 = vpop.f32.mrf.mxu0
      %1323 = vmatprep.mubr.bf16.mxu0 %v1250
      %1324 = vmatmul.mubr.bf16.gmra.mxu0 %v1067
      %v1325 = vpop.f32.mrf.mxu0
      %v1326 = vadd.f32 0.0, %v1325
      %v1327 = vpop.f32.mrf.mxu0
      %v1328 = vpop.f32.mrf.mxu0
      %v1329 = vadd.f32 0.0, %v1328
      %v1330 = vpop.f32.mrf.mxu0
      %1331 = vmatprep.mubr.bf16.mxu0 %v1253
      %1332 = vmatmul.mubr.bf16.gmra.mxu0 %v1085
      %v1333 = vpop.f32.mrf.mxu0
      %v1334 = vadd.f32 0.0, %v1333
      %v1335 = vpop.f32.mrf.mxu0
      %v1336 = vpop.f32.mrf.mxu0
      %v1337 = vadd.f32 0.0, %v1336
      %v1338 = vpop.f32.mrf.mxu0
      %1339 = vmatprep.mubr.bf16.mxu0 %v1256
      %1340 = vmatmul.mubr.bf16.gmra.mxu0 %v1103
      %v1341 = vpop.f32.mrf.mxu0
      %v1342 = vadd.f32 0.0, %v1341
      %v1343 = vpop.f32.mrf.mxu0
      %v1344 = vpop.f32.mrf.mxu0
      %v1345 = vadd.f32 0.0, %v1344
      %v1346 = vpop.f32.mrf.mxu0
      %1347 = vmatprep.mubr.bf16.mxu0 %v1259
      %1348 = vmatmul.mubr.bf16.gmra.mxu0 %v1121
      %v1349 = vpop.f32.mrf.mxu0
      %v1350 = vadd.f32 0.0, %v1349
      %v1351 = vpop.f32.mrf.mxu0
      %v1352 = vpop.f32.mrf.mxu0
      %v1353 = vadd.f32 0.0, %v1352
      %v1354 = vpop.f32.mrf.mxu0
      %1355 = vmatprep.mubr.bf16.mxu0 %v1262
      %1356 = vmatmul.mubr.bf16.gmra.mxu0 %v1139
      %v1357 = vpop.f32.mrf.mxu0
      %v1358 = vadd.f32 0.0, %v1357
      %v1359 = vpop.f32.mrf.mxu0
      %v1360 = vpop.f32.mrf.mxu0
      %v1361 = vadd.f32 0.0, %v1360
      %v1362 = vpop.f32.mrf.mxu0
      %1363 = vmatprep.mubr.bf16.mxu0 %v1265
      %1364 = vmatmul.mubr.bf16.gmra.mxu0 %v1157
      %v1365 = vpop.f32.mrf.mxu0
      %v1366 = vadd.f32 0.0, %v1365
      %v1367 = vpop.f32.mrf.mxu0
      %v1368 = vpop.f32.mrf.mxu0
      %v1369 = vadd.f32 0.0, %v1368
      %v1370 = vpop.f32.mrf.mxu0
      %1371 = vdwg.mxu0
      %v1372 = vcombine.low %v783, %v791
      %v1373 = vcombine.low %v790, %v800
      %v1375 = vunpack.c.l.s4 1983009808
      %v1376 = vunpack.c.0.s8 %v1375
      %v1377 = vlaneseq
      %v1378 = vshrl.u32 %v1377, 7
      %v1379 = vsub.s32 %v1376, %v1378
      %v1380 = vrot.slane %v1372, %v1379
      %v1382 = vunpack.c.l.s4 1983009808
      %v1383 = vunpack.c.0.s8 %v1382
      %v1384 = vlaneseq
      %v1385 = vshrl.u32 %v1384, 7
      %v1386 = vsub.s32 %v1383, %v1385
      %v1387 = vrot.slane %v1373, %v1386
      %v1388 = vcombine.low %v1380, %v1387
      %v1389 = vcombine.high %v1380, %v1387
      %v1390 = vcombine.low %v808, %v807
      %v1391 = vcombine.low %v817, %v825
      %v1393 = vunpack.c.l.s4 1983009808
      %v1394 = vunpack.c.0.s8 %v1393
      %v1395 = vlaneseq
      %v1396 = vshrl.u32 %v1395, 7
      %v1397 = vsub.s32 %v1394, %v1396
      %v1398 = vrot.slane %v1390, %v1397
      %v1400 = vunpack.c.l.s4 1983009808
      %v1401 = vunpack.c.0.s8 %v1400
      %v1402 = vlaneseq
      %v1403 = vshrl.u32 %v1402, 7
      %v1404 = vsub.s32 %v1401, %v1403
      %v1405 = vrot.slane %v1391, %v1404
      %v1406 = vcombine.low %v1398, %v1405
      %v1407 = vcombine.high %v1398, %v1405
      %v1408 = vcombine.low %v824, %v834
      %v1409 = vcombine.low %v842, %v841
      %v1411 = vunpack.c.l.s4 1983009808
      %v1412 = vunpack.c.0.s8 %v1411
      %v1413 = vlaneseq
      %v1414 = vshrl.u32 %v1413, 7
      %v1415 = vsub.s32 %v1412, %v1414
      %v1416 = vrot.slane %v1408, %v1415
      %v1418 = vunpack.c.l.s4 1983009808
      %v1419 = vunpack.c.0.s8 %v1418
      %v1420 = vlaneseq
      %v1421 = vshrl.u32 %v1420, 7
      %v1422 = vsub.s32 %v1419, %v1421
      %v1423 = vrot.slane %v1409, %v1422
      %v1424 = vcombine.low %v1416, %v1423
      %v1425 = vcombine.high %v1416, %v1423
      %v1426 = vcombine.low %v851, %v859
      %v1427 = vcombine.low %v858, %v868
      %v1429 = vunpack.c.l.s4 1983009808
      %v1430 = vunpack.c.0.s8 %v1429
      %v1431 = vlaneseq
      %v1432 = vshrl.u32 %v1431, 7
      %v1433 = vsub.s32 %v1430, %v1432
      %v1434 = vrot.slane %v1426, %v1433
      %v1436 = vunpack.c.l.s4 1983009808
      %v1437 = vunpack.c.0.s8 %v1436
      %v1438 = vlaneseq
      %v1439 = vshrl.u32 %v1438, 7
      %v1440 = vsub.s32 %v1437, %v1439
      %v1441 = vrot.slane %v1427, %v1440
      %v1442 = vcombine.low %v1434, %v1441
      %v1443 = vcombine.high %v1434, %v1441
      %v1444 = vcombine.low %v876, %v875
      %v1445 = vcombine.low %v885, %v893
      %v1447 = vunpack.c.l.s4 1983009808
      %v1448 = vunpack.c.0.s8 %v1447
      %v1449 = vlaneseq
      %v1450 = vshrl.u32 %v1449, 7
      %v1451 = vsub.s32 %v1448, %v1450
      %v1452 = vrot.slane %v1444, %v1451
      %v1454 = vunpack.c.l.s4 1983009808
      %v1455 = vunpack.c.0.s8 %v1454
      %v1456 = vlaneseq
      %v1457 = vshrl.u32 %v1456, 7
      %v1458 = vsub.s32 %v1455, %v1457
      %v1459 = vrot.slane %v1445, %v1458
      %v1460 = vcombine.low %v1452, %v1459
      %v1461 = vcombine.high %v1452, %v1459
      %v1462 = vcombine.low %v892, %v902
      %v1463 = vcombine.low %v910, %v909
      %v1465 = vunpack.c.l.s4 1983009808
      %v1466 = vunpack.c.0.s8 %v1465
      %v1467 = vlaneseq
      %v1468 = vshrl.u32 %v1467, 7
      %v1469 = vsub.s32 %v1466, %v1468
      %v1470 = vrot.slane %v1462, %v1469
      %v1472 = vunpack.c.l.s4 1983009808
      %v1473 = vunpack.c.0.s8 %v1472
      %v1474 = vlaneseq
      %v1475 = vshrl.u32 %v1474, 7
      %v1476 = vsub.s32 %v1473, %v1475
      %v1477 = vrot.slane %v1463, %v1476
      %v1478 = vcombine.low %v1470, %v1477
      %v1479 = vcombine.high %v1470, %v1477
      %v1480 = vcombine.low %v919, %v927
      %v1481 = vcombine.low %v926, %v936
      %v1483 = vunpack.c.l.s4 1983009808
      %v1484 = vunpack.c.0.s8 %v1483
      %v1485 = vlaneseq
      %v1486 = vshrl.u32 %v1485, 7
      %v1487 = vsub.s32 %v1484, %v1486
      %v1488 = vrot.slane %v1480, %v1487
      %v1490 = vunpack.c.l.s4 1983009808
      %v1491 = vunpack.c.0.s8 %v1490
      %v1492 = vlaneseq
      %v1493 = vshrl.u32 %v1492, 7
      %v1494 = vsub.s32 %v1491, %v1493
      %v1495 = vrot.slane %v1481, %v1494
      %v1496 = vcombine.low %v1488, %v1495
      %v1497 = vcombine.high %v1488, %v1495
      %v1498 = vcombine.low %v944, %v943
      %v1499 = vcombine.low %v953, %v961
      %v1501 = vunpack.c.l.s4 1983009808
      %v1502 = vunpack.c.0.s8 %v1501
      %v1503 = vlaneseq
      %v1504 = vshrl.u32 %v1503, 7
      %v1505 = vsub.s32 %v1502, %v1504
      %v1506 = vrot.slane %v1498, %v1505
      %v1508 = vunpack.c.l.s4 1983009808
      %v1509 = vunpack.c.0.s8 %v1508
      %v1510 = vlaneseq
      %v1511 = vshrl.u32 %v1510, 7
      %v1512 = vsub.s32 %v1509, %v1511
      %v1513 = vrot.slane %v1499, %v1512
      %v1514 = vcombine.low %v1506, %v1513
      %v1515 = vcombine.high %v1506, %v1513
      %v1516 = vcombine.low %v960, %v970
      %v1517 = vcombine.low %v978, %v977
      %v1519 = vunpack.c.l.s4 1983009808
      %v1520 = vunpack.c.0.s8 %v1519
      %v1521 = vlaneseq
      %v1522 = vshrl.u32 %v1521, 7
      %v1523 = vsub.s32 %v1520, %v1522
      %v1524 = vrot.slane %v1516, %v1523
      %v1526 = vunpack.c.l.s4 1983009808
      %v1527 = vunpack.c.0.s8 %v1526
      %v1528 = vlaneseq
      %v1529 = vshrl.u32 %v1528, 7
      %v1530 = vsub.s32 %v1527, %v1529
      %v1531 = vrot.slane %v1517, %v1530
      %v1532 = vcombine.low %v1524, %v1531
      %v1533 = vcombine.high %v1524, %v1531
      %v1567 = vunpack.c.l.b16 %v690
      %v1568 = vunpack.c.l.b16 %v691
      %v1569 = vunpack.c.l.b16 %v692
      %v1570 = vunpack.c.l.b16 %v693
      %v1571 = vunpack.c.l.b16 %v694
      %v1572 = vunpack.c.l.b16 %v695
      %v1573 = vunpack.c.l.b16 %v696
      %v1574 = vunpack.c.l.b16 %v697
      %v1575 = vunpack.c.l.b16 %v698
      %v1576 = vunpack.c.l.b16 %v699
      %v1577 = vunpack.c.l.b16 %v700
      %v1578 = vunpack.c.l.b16 %v701
      %v1579 = vunpack.c.l.b16 %v702
      %v1580 = vunpack.c.l.b16 %v703
      %v1581 = vunpack.c.l.b16 %v704
      %v1582 = vunpack.c.l.b16 %v705
      %v1583 = vunpack.c.l.b16 %v706
      %v1584 = vunpack.c.l.b16 %v707
      %v1585 = vunpack.c.l.b16 %v708
      %v1586 = vunpack.c.l.b16 %v709
      %v1587 = vunpack.c.l.b16 %v710
      %v1588 = vunpack.c.l.b16 %v711
      %v1589 = vunpack.c.l.b16 %v712
      %v1590 = vunpack.c.l.b16 %v713
      %v1591 = vpack.c.b16 %v1568, %v1567
      %v1592 = vpack.c.b16 %v1570, %v1569
      %v1593 = vpack.c.b16 %v1572, %v1571
      %v1594 = vpack.c.b16 %v1574, %v1573
      %v1595 = vpack.c.b16 %v1576, %v1575
      %v1596 = vpack.c.b16 %v1578, %v1577
      %v1597 = vpack.c.b16 %v1580, %v1579
      %v1598 = vpack.c.b16 %v1582, %v1581
      %v1599 = vpack.c.b16 %v1584, %v1583
      %v1600 = vpack.c.b16 %v1586, %v1585
      %v1601 = vpack.c.b16 %v1588, %v1587
      %v1602 = vpack.c.b16 %v1590, %v1589
      %v1616 = vsel %vm661, %v1389, 0
      %v1619 = vsel %vm661, %v1407, 0
      %v1622 = vsel %vm661, %v1425, 0
      %v1625 = vsel %vm661, %v1443, 0
      %v1628 = vsel %vm661, %v1461, 0
      %v1631 = vsel %vm661, %v1479, 0
      %v1634 = vsel %vm661, %v1497, 0
      %v1637 = vsel %vm661, %v1515, 0
      %v1640 = vsel %vm661, %v1533, 0
      %1642 = vmatprep.subr.bf16.mxu0 0
      %1643 = vmatpush1.bf16.msra.mxu0 %v1598
      %1644 = vmatprep.subr.bf16.mxu0 0
      %1645 = vmatpush1.bf16.msra.mxu0 %v1597
      %1646 = vmatprep.subr.bf16.mxu0 0
      %1647 = vmatpush1.bf16.msra.mxu0 %v1596
      %1648 = vmatprep.subr.bf16.mxu0 0
      %1649 = vmatpush1.bf16.msra.mxu0 %v1595
      %1650 = vmatprep.subr.bf16.mxu0 0
      %1651 = vmatpush1.bf16.msra.mxu0 %v1594
      %1652 = vmatprep.subr.bf16.mxu0 0
      %1653 = vmatpush1.bf16.msra.mxu0 %v1593
      %1654 = vmatprep.subr.bf16.mxu0 0
      %1655 = vmatpush1.bf16.msra.mxu0 %v1592
      %1656 = vmatprep.subr.bf16.mxu0 0
      %1657 = vmatpush1.bf16.msra.mxu0 %v1591
      %1658 = vmatprep.subr.bf16.mxu0 0
      %1659 = vmatpush2.bf16.msra.mxu0 0
      %1660 = vmatprep.subr.bf16.mxu0 0
      %1661 = vmatpush2.bf16.msra.mxu0 0
      %1662 = vmatprep.subr.bf16.mxu0 0
      %1663 = vmatpush2.bf16.msra.mxu0 0
      %1664 = vmatprep.subr.bf16.mxu0 0
      %1665 = vmatpush2.bf16.msra.mxu0 0
      %1666 = vmatprep.subr.bf16.mxu0 0
      %1667 = vmatpush2.bf16.msra.mxu0 %v1602
      %1668 = vmatprep.subr.bf16.mxu0 0
      %1669 = vmatpush2.bf16.msra.mxu0 %v1601
      %1670 = vmatprep.subr.bf16.mxu0 0
      %1671 = vmatpush2.bf16.msra.mxu0 %v1600
      %1672 = vmatprep.subr.bf16.mxu0 0
      %1673 = vmatpush2.bf16.msra.mxu0 %v1599
      %1674 = vmatprep.mubr.bf16.mxu0 %v1616
      %1675 = vmatmul.mubr.bf16.gmra.mxu0 %v1388
      %v1676 = vpop.f32.mrf.mxu0
      %v1677 = vadd.f32 %v1302, %v1676
      %v1678 = vpop.f32.mrf.mxu0
      %v1679 = vpop.f32.mrf.mxu0
      %v1680 = vadd.f32 %v1305, %v1679
      %v1681 = vpop.f32.mrf.mxu0
      %1682 = vmatprep.mubr.bf16.mxu0 %v1619
      %1683 = vmatmul.mubr.bf16.gmra.mxu0 %v1406
      %v1684 = vpop.f32.mrf.mxu0
      %v1685 = vadd.f32 %v1310, %v1684
      %v1686 = vpop.f32.mrf.mxu0
      %v1687 = vpop.f32.mrf.mxu0
      %v1688 = vadd.f32 %v1313, %v1687
      %v1689 = vpop.f32.mrf.mxu0
      %1690 = vmatprep.mubr.bf16.mxu0 %v1622
      %1691 = vmatmul.mubr.bf16.gmra.mxu0 %v1424
      %v1692 = vpop.f32.mrf.mxu0
      %v1693 = vadd.f32 %v1318, %v1692
      %v1694 = vpop.f32.mrf.mxu0
      %v1695 = vpop.f32.mrf.mxu0
      %v1696 = vadd.f32 %v1321, %v1695
      %v1697 = vpop.f32.mrf.mxu0
      %1698 = vmatprep.mubr.bf16.mxu0 %v1625
      %1699 = vmatmul.mubr.bf16.gmra.mxu0 %v1442
      %v1700 = vpop.f32.mrf.mxu0
      %v1701 = vadd.f32 %v1326, %v1700
      %v1702 = vpop.f32.mrf.mxu0
      %v1703 = vpop.f32.mrf.mxu0
      %v1704 = vadd.f32 %v1329, %v1703
      %v1705 = vpop.f32.mrf.mxu0
      %1706 = vmatprep.mubr.bf16.mxu0 %v1628
      %1707 = vmatmul.mubr.bf16.gmra.mxu0 %v1460
      %v1708 = vpop.f32.mrf.mxu0
      %v1709 = vadd.f32 %v1334, %v1708
      %v1710 = vpop.f32.mrf.mxu0
      %v1711 = vpop.f32.mrf.mxu0
      %v1712 = vadd.f32 %v1337, %v1711
      %v1713 = vpop.f32.mrf.mxu0
      %1714 = vmatprep.mubr.bf16.mxu0 %v1631
      %1715 = vmatmul.mubr.bf16.gmra.mxu0 %v1478
      %v1716 = vpop.f32.mrf.mxu0
      %v1717 = vadd.f32 %v1342, %v1716
      %v1718 = vpop.f32.mrf.mxu0
      %v1719 = vpop.f32.mrf.mxu0
      %v1720 = vadd.f32 %v1345, %v1719
      %v1721 = vpop.f32.mrf.mxu0
      %1722 = vmatprep.mubr.bf16.mxu0 %v1634
      %1723 = vmatmul.mubr.bf16.gmra.mxu0 %v1496
      %v1724 = vpop.f32.mrf.mxu0
      %v1725 = vadd.f32 %v1350, %v1724
      %v1726 = vpop.f32.mrf.mxu0
      %v1727 = vpop.f32.mrf.mxu0
      %v1728 = vadd.f32 %v1353, %v1727
      %v1729 = vpop.f32.mrf.mxu0
      %1730 = vmatprep.mubr.bf16.mxu0 %v1637
      %1731 = vmatmul.mubr.bf16.gmra.mxu0 %v1514
      %v1732 = vpop.f32.mrf.mxu0
      %v1733 = vadd.f32 %v1358, %v1732
      %v1734 = vpop.f32.mrf.mxu0
      %v1735 = vpop.f32.mrf.mxu0
      %v1736 = vadd.f32 %v1361, %v1735
      %v1737 = vpop.f32.mrf.mxu0
      %1738 = vmatprep.mubr.bf16.mxu0 %v1640
      %1739 = vmatmul.mubr.bf16.gmra.mxu0 %v1532
      %v1740 = vpop.f32.mrf.mxu0
      %v1741 = vadd.f32 %v1366, %v1740
      %v1742 = vpop.f32.mrf.mxu0
      %v1743 = vpop.f32.mrf.mxu0
      %v1744 = vadd.f32 %v1369, %v1743
      %v1745 = vpop.f32.mrf.mxu0
      %1746 = vdwg.mxu0
      %v1748 = vcombine.low %v689, %v660
      %v1749 = vcombine.high %v689, %v660
      %v1751 = vunpack.c.l.s4 1983009808
      %v1752 = vunpack.c.0.s8 %v1751
      %v1753 = vlaneseq
      %v1754 = vshrl.u32 %v1753, 7
      %v1755 = vsub.s32 %v1752, %v1754
      %v1756 = vrot.slane %v1748, %v1755
      %v1758 = vunpack.c.l.s4 1983009808
      %v1759 = vunpack.c.0.s8 %v1758
      %v1760 = vlaneseq
      %v1761 = vshrl.u32 %v1760, 7
      %v1762 = vsub.s32 %v1759, %v1761
      %v1763 = vrot.slane %v1749, %v1762
      %v1764 = vcombine.high %v1756, %v1756
      %v1765 = vcombine.low %v1405, %v1416
      %v1766 = vcombine.high %v1405, %v1416
      %v1767 = vcombine.low %v1423, %v1434
      %v1768 = vcombine.high %v1423, %v1434
      %v1769 = vcombine.low %v1441, %v1452
      %v1770 = vcombine.high %v1441, %v1452
      %v1771 = vcombine.low %v1459, %v1470
      %v1772 = vcombine.high %v1459, %v1470
      %v1773 = vcombine.low %v1477, %v1488
      %v1774 = vcombine.high %v1477, %v1488
      %v1775 = vcombine.low %v1495, %v1506
      %v1776 = vcombine.high %v1495, %v1506
      %v1777 = vcombine.low %v1513, %v1524
      %v1778 = vcombine.high %v1513, %v1524
      %v1779 = vcombine.low %v988, %v996
      %v1781 = vunpack.c.l.s4 1983009808
      %v1782 = vunpack.c.0.s8 %v1781
      %v1783 = vlaneseq
      %v1784 = vshrl.u32 %v1783, 7
      %v1785 = vsub.s32 %v1782, %v1784
      %v1786 = vrot.slane %v1779, %v1785
      %v1787 = vcombine.low %v1531, %v1786
      %v1788 = vcombine.high %v1531, %v1786
      %v1789 = vcombine.low %v995, %v1756
      %v1790 = vcombine.low %v1764, %v1763
      %v1792 = vunpack.c.l.s4 1983009808
      %v1793 = vunpack.c.0.s8 %v1792
      %v1794 = vlaneseq
      %v1795 = vshrl.u32 %v1794, 7
      %v1796 = vsub.s32 %v1793, %v1795
      %v1797 = vrot.slane %v1789, %v1796
      %v1799 = vunpack.c.l.s4 1983009808
      %v1800 = vunpack.c.0.s8 %v1799
      %v1801 = vlaneseq
      %v1802 = vshrl.u32 %v1801, 7
      %v1803 = vsub.s32 %v1800, %v1802
      %v1804 = vrot.slane %v1790, %v1803
      %v1805 = vcombine.low %v1797, %v1804
      %v1806 = vcombine.high %v1797, %v1804
      %v1840 = vunpack.c.l.b16 %v738
      %v1841 = vunpack.c.l.b16 %v739
      %v1842 = vunpack.c.l.b16 %v740
      %v1843 = vunpack.c.l.b16 %v741
      %v1844 = vunpack.c.l.b16 %v742
      %v1845 = vunpack.c.l.b16 %v743
      %v1846 = vunpack.c.l.b16 %v744
      %v1847 = vunpack.c.l.b16 %v745
      %v1848 = vunpack.c.l.b16 %v746
      %v1849 = vunpack.c.l.b16 %v747
      %v1850 = vunpack.c.l.b16 %v748
      %v1851 = vunpack.c.l.b16 %v749
      %v1852 = vunpack.c.l.b16 %v750
      %v1853 = vunpack.c.l.b16 %v751
      %v1854 = vunpack.c.l.b16 %v752
      %v1855 = vunpack.c.l.b16 %v753
      %v1856 = vunpack.c.l.b16 %v754
      %v1857 = vunpack.c.l.b16 %v755
      %v1858 = vunpack.c.l.b16 %v756
      %v1859 = vunpack.c.l.b16 %v757
      %v1860 = vunpack.c.l.b16 %v758
      %v1861 = vunpack.c.l.b16 %v759
      %v1862 = vunpack.c.l.b16 %v760
      %v1863 = vunpack.c.l.b16 %v761
      %v1864 = vpack.c.b16 %v1841, %v1840
      %v1865 = vpack.c.b16 %v1843, %v1842
      %v1866 = vpack.c.b16 %v1845, %v1844
      %v1867 = vpack.c.b16 %v1847, %v1846
      %v1868 = vpack.c.b16 %v1849, %v1848
      %v1869 = vpack.c.b16 %v1851, %v1850
      %v1870 = vpack.c.b16 %v1853, %v1852
      %v1871 = vpack.c.b16 %v1855, %v1854
      %v1872 = vpack.c.b16 %v1857, %v1856
      %v1873 = vpack.c.b16 %v1859, %v1858
      %v1874 = vpack.c.b16 %v1861, %v1860
      %v1875 = vpack.c.b16 %v1863, %v1862
      %v1889 = vsel %vm661, %v1766, 0
      %v1892 = vsel %vm661, %v1768, 0
      %v1895 = vsel %vm661, %v1770, 0
      %v1898 = vsel %vm661, %v1772, 0
      %v1901 = vsel %vm661, %v1774, 0
      %v1904 = vsel %vm661, %v1776, 0
      %v1907 = vsel %vm661, %v1778, 0
      %v1910 = vsel %vm661, %v1788, 0
      %v1913 = vsel %vm661, %v1806, 0
      %1915 = vmatprep.subr.bf16.mxu0 0
      %1916 = vmatpush1.bf16.msra.mxu0 %v1871
      %1917 = vmatprep.subr.bf16.mxu0 0
      %1918 = vmatpush1.bf16.msra.mxu0 %v1870
      %1919 = vmatprep.subr.bf16.mxu0 0
      %1920 = vmatpush1.bf16.msra.mxu0 %v1869
      %1921 = vmatprep.subr.bf16.mxu0 0
      %1922 = vmatpush1.bf16.msra.mxu0 %v1868
      %1923 = vmatprep.subr.bf16.mxu0 0
      %1924 = vmatpush1.bf16.msra.mxu0 %v1867
      %1925 = vmatprep.subr.bf16.mxu0 0
      %1926 = vmatpush1.bf16.msra.mxu0 %v1866
      %1927 = vmatprep.subr.bf16.mxu0 0
      %1928 = vmatpush1.bf16.msra.mxu0 %v1865
      %1929 = vmatprep.subr.bf16.mxu0 0
      %1930 = vmatpush1.bf16.msra.mxu0 %v1864
      %1931 = vmatprep.subr.bf16.mxu0 0
      %1932 = vmatpush2.bf16.msra.mxu0 0
      %1933 = vmatprep.subr.bf16.mxu0 0
      %1934 = vmatpush2.bf16.msra.mxu0 0
      %1935 = vmatprep.subr.bf16.mxu0 0
      %1936 = vmatpush2.bf16.msra.mxu0 0
      %1937 = vmatprep.subr.bf16.mxu0 0
      %1938 = vmatpush2.bf16.msra.mxu0 0
      %1939 = vmatprep.subr.bf16.mxu0 0
      %1940 = vmatpush2.bf16.msra.mxu0 %v1875
      %1941 = vmatprep.subr.bf16.mxu0 0
      %1942 = vmatpush2.bf16.msra.mxu0 %v1874
      %1943 = vmatprep.subr.bf16.mxu0 0
      %1944 = vmatpush2.bf16.msra.mxu0 %v1873
      %1945 = vmatprep.subr.bf16.mxu0 0
      %1946 = vmatpush2.bf16.msra.mxu0 %v1872
      %1947 = vmatprep.mubr.bf16.mxu0 %v1889
      %1948 = vmatmul.mubr.bf16.gmra.mxu0 %v1765
      %v1949 = vpop.f32.mrf.mxu0
      %v1950 = vadd.f32 0.0, %v1949
      %v1951 = vpop.f32.mrf.mxu0
      %v1952 = vpop.f32.mrf.mxu0
      %v1953 = vadd.f32 0.0, %v1952
      %v1954 = vpop.f32.mrf.mxu0
      %1955 = vmatprep.mubr.bf16.mxu0 %v1892
      %1956 = vmatmul.mubr.bf16.gmra.mxu0 %v1767
      %v1957 = vpop.f32.mrf.mxu0
      %v1958 = vadd.f32 0.0, %v1957
      %v1959 = vpop.f32.mrf.mxu0
      %v1960 = vpop.f32.mrf.mxu0
      %v1961 = vadd.f32 0.0, %v1960
      %v1962 = vpop.f32.mrf.mxu0
      %1963 = vmatprep.mubr.bf16.mxu0 %v1895
      %1964 = vmatmul.mubr.bf16.gmra.mxu0 %v1769
      %v1965 = vpop.f32.mrf.mxu0
      %v1966 = vadd.f32 0.0, %v1965
      %v1967 = vpop.f32.mrf.mxu0
      %v1968 = vpop.f32.mrf.mxu0
      %v1969 = vadd.f32 0.0, %v1968
      %v1970 = vpop.f32.mrf.mxu0
      %1971 = vmatprep.mubr.bf16.mxu0 %v1898
      %1972 = vmatmul.mubr.bf16.gmra.mxu0 %v1771
      %v1973 = vpop.f32.mrf.mxu0
      %v1974 = vadd.f32 0.0, %v1973
      %v1975 = vpop.f32.mrf.mxu0
      %v1976 = vpop.f32.mrf.mxu0
      %v1977 = vadd.f32 0.0, %v1976
      %v1978 = vpop.f32.mrf.mxu0
      %1979 = vmatprep.mubr.bf16.mxu0 %v1901
      %1980 = vmatmul.mubr.bf16.gmra.mxu0 %v1773
      %v1981 = vpop.f32.mrf.mxu0
      %v1982 = vadd.f32 0.0, %v1981
      %v1983 = vpop.f32.mrf.mxu0
      %v1984 = vpop.f32.mrf.mxu0
      %v1985 = vadd.f32 0.0, %v1984
      %v1986 = vpop.f32.mrf.mxu0
      %1987 = vmatprep.mubr.bf16.mxu0 %v1904
      %1988 = vmatmul.mubr.bf16.gmra.mxu0 %v1775
      %v1989 = vpop.f32.mrf.mxu0
      %v1990 = vadd.f32 0.0, %v1989
      %v1991 = vpop.f32.mrf.mxu0
      %v1992 = vpop.f32.mrf.mxu0
      %v1993 = vadd.f32 0.0, %v1992
      %v1994 = vpop.f32.mrf.mxu0
      %1995 = vmatprep.mubr.bf16.mxu0 %v1907
      %1996 = vmatmul.mubr.bf16.gmra.mxu0 %v1777
      %v1997 = vpop.f32.mrf.mxu0
      %v1998 = vadd.f32 0.0, %v1997
      %v1999 = vpop.f32.mrf.mxu0
      %v2000 = vpop.f32.mrf.mxu0
      %v2001 = vadd.f32 0.0, %v2000
      %v2002 = vpop.f32.mrf.mxu0
      %2003 = vmatprep.mubr.bf16.mxu0 %v1910
      %2004 = vmatmul.mubr.bf16.gmra.mxu0 %v1787
      %v2005 = vpop.f32.mrf.mxu0
      %v2006 = vadd.f32 0.0, %v2005
      %v2007 = vpop.f32.mrf.mxu0
      %v2008 = vpop.f32.mrf.mxu0
      %v2009 = vadd.f32 0.0, %v2008
      %v2010 = vpop.f32.mrf.mxu0
      %2011 = vmatprep.mubr.bf16.mxu0 %v1913
      %2012 = vmatmul.mubr.bf16.gmra.mxu0 %v1805
      %v2013 = vpop.f32.mrf.mxu0
      %v2014 = vadd.f32 0.0, %v2013
      %v2015 = vpop.f32.mrf.mxu0
      %v2016 = vpop.f32.mrf.mxu0
      %v2017 = vadd.f32 0.0, %v2016
      %v2018 = vpop.f32.mrf.mxu0
      %2019 = vdwg.mxu0
      %v2020 = vadd.f32 %v1677, %v1950
      %v2021 = vadd.f32 %v1680, %v1953
      %v2022 = vadd.f32 %v1685, %v1958
      %v2023 = vadd.f32 %v1688, %v1961
      %v2024 = vadd.f32 %v1693, %v1966
      %v2025 = vadd.f32 %v1696, %v1969
      %v2026 = vadd.f32 %v1701, %v1974
      %v2027 = vadd.f32 %v1704, %v1977
      %v2028 = vadd.f32 %v1709, %v1982
      %v2029 = vadd.f32 %v1712, %v1985
      %v2030 = vadd.f32 %v1717, %v1990
      %v2031 = vadd.f32 %v1720, %v1993
      %v2032 = vadd.f32 %v1725, %v1998
      %v2033 = vadd.f32 %v1728, %v2001
      %v2034 = vadd.f32 %v1733, %v2006
      %v2035 = vadd.f32 %v1736, %v2009
      %v2036 = vadd.f32 %v1741, %v2014
      %v2037 = vadd.f32 %v1744, %v2017
      %v2039 = vlaneseq
      %v2040 = vshrl.u32 %v2039, 7
      %v2041 = vsub.s32 0, %v2040
      %v2042 = vrot.slane %v762, %v2041
      %v2044 = vadd.f32 %v2020, %v2042
      %v2045 = vadd.f32 %v2021, %v2042
      %v2046 = vadd.f32 %v2022, %v2042
      %v2047 = vadd.f32 %v2023, %v2042
      %v2048 = vadd.f32 %v2024, %v2042
      %v2049 = vadd.f32 %v2025, %v2042
      %v2050 = vadd.f32 %v2026, %v2042
      %v2051 = vadd.f32 %v2027, %v2042
      %v2052 = vadd.f32 %v2028, %v2042
      %v2053 = vadd.f32 %v2029, %v2042
      %v2054 = vadd.f32 %v2030, %v2042
      %v2055 = vadd.f32 %v2031, %v2042
      %v2056 = vadd.f32 %v2032, %v2042
      %v2057 = vadd.f32 %v2033, %v2042
      %v2058 = vadd.f32 %v2034, %v2042
      %v2059 = vadd.f32 %v2035, %v2042
      %v2060 = vadd.f32 %v2036, %v2042
      %v2061 = vadd.f32 %v2037, %v2042
      %v2062 = vtanh.pop %v2044
      %v2063 = vtanh.pop %v2045
      %v2064 = vtanh.pop %v2046
      %v2065 = vtanh.pop %v2047
      %v2066 = vtanh.pop %v2048
      %v2067 = vtanh.pop %v2049
      %v2068 = vtanh.pop %v2050
      %v2069 = vtanh.pop %v2051
      %v2070 = vtanh.pop %v2052
      %v2071 = vtanh.pop %v2053
      %v2072 = vtanh.pop %v2054
      %v2073 = vtanh.pop %v2055
      %v2074 = vtanh.pop %v2056
      %v2075 = vtanh.pop %v2057
      %v2076 = vtanh.pop %v2058
      %v2077 = vtanh.pop %v2059
      %v2078 = vtanh.pop %v2060
      %v2079 = vtanh.pop %v2061
      %v2098 = vcombine.high %v2062, %v2062
      %v2099 = vcombine.high %v2063, %v2063
      %v2100 = vcombine.high %v2064, %v2064
      %v2101 = vcombine.high %v2065, %v2065
      %v2102 = vcombine.high %v2066, %v2066
      %v2103 = vcombine.high %v2067, %v2067
      %v2104 = vcombine.high %v2068, %v2068
      %v2105 = vcombine.high %v2069, %v2069
      %v2106 = vcombine.high %v2070, %v2070
      %v2107 = vcombine.high %v2071, %v2071
      %v2108 = vcombine.high %v2072, %v2072
      %v2109 = vcombine.high %v2073, %v2073
      %v2110 = vcombine.high %v2074, %v2074
      %v2111 = vcombine.high %v2075, %v2075
      %v2112 = vcombine.high %v2076, %v2076
      %v2113 = vcombine.high %v2077, %v2077
      %v2114 = vcombine.high %v2078, %v2078
      %v2115 = vcombine.high %v2079, %v2079
      %v2122 = vcombine.low %v2062, %v2098
      %v2123 = vcombine.low %v2099, %v2064
      %v2124 = vcombine.low %v2065, %v2101
      %v2125 = vcombine.low %v2102, %v2067
      %v2126 = vcombine.low %v2068, %v2104
      %v2127 = vcombine.low %v2105, %v2070
      %v2128 = vcombine.low %v2071, %v2107
      %v2129 = vcombine.low %v2108, %v2073
      %v2130 = vcombine.low %v2074, %v2110
      %v2131 = vcombine.low %v2111, %v2076
      %v2132 = vcombine.low %v2077, %v2113
      %v2133 = vcombine.low %v2114, %v2079
      %vm2146 = vcmask 23552
      %2147 = vst.msk [vmem:[%s276] sm:$0xff] %vm2146, %v2122
      %vm2148 = vcmask 19456
      %2149 = vst.msk [vmem:[%s276 + $0x8] sm:$0xf] %vm2148, %v2063
      %2150 = vst.msk [vmem:[%s276 + $0x10] sm:$0xff] %vm2146, %v2123
      %2151 = vst.msk [vmem:[%s276 + $0x18] sm:$0xf] %vm2148, %v2100
      %2152 = vst.msk [vmem:[%s276 + $0x20] sm:$0xff] %vm2146, %v2124
      %2153 = vst.msk [vmem:[%s276 + $0x28] sm:$0xf] %vm2148, %v2066
      %2154 = vst.msk [vmem:[%s276 + $0x30] sm:$0xff] %vm2146, %v2125
      %2155 = vst.msk [vmem:[%s276 + $0x38] sm:$0xf] %vm2148, %v2103
      %2156 = vst.msk [vmem:[%s276 + $0x40] sm:$0xff] %vm2146, %v2126
      %2157 = vst.msk [vmem:[%s276 + $0x48] sm:$0xf] %vm2148, %v2069
      %2158 = vst.msk [vmem:[%s276 + $0x50] sm:$0xff] %vm2146, %v2127
      %2159 = vst.msk [vmem:[%s276 + $0x58] sm:$0xf] %vm2148, %v2106
      %2160 = vst.msk [vmem:[%s276 + $0x60] sm:$0xff] %vm2146, %v2128
      %2161 = vst.msk [vmem:[%s276 + $0x68] sm:$0xf] %vm2148, %v2072
      %2162 = vst.msk [vmem:[%s276 + $0x70] sm:$0xff] %vm2146, %v2129
      %2163 = vst.msk [vmem:[%s276 + $0x78] sm:$0xf] %vm2148, %v2109
      %2164 = vst.msk [vmem:[%s276 + $0x80] sm:$0xff] %vm2146, %v2130
      %2165 = vst.msk [vmem:[%s276 + $0x88] sm:$0xf] %vm2148, %v2075
      %2166 = vst.msk [vmem:[%s276 + $0x90] sm:$0xff] %vm2146, %v2131
      %2167 = vst.msk [vmem:[%s276 + $0x98] sm:$0xf] %vm2148, %v2112
      %2168 = vst.msk [vmem:[%s276 + $0xa0] sm:$0xff] %vm2146, %v2132
      %2169 = vst.msk [vmem:[%s276 + $0xa8] sm:$0xf] %vm2148, %v2078
      %2170 = vst.msk [vmem:[%s276 + $0xb0] sm:$0xff] %vm2146, %v2133
      %2171 = vst.msk [vmem:[%s276 + $0xb8] sm:$0xf] %vm2148, %v2115
      %s2172 = smul.u32 12, %s21
      %p2173 = scmp.lt.s32.totalorder %s20, 1
      %s2174 = scalar_select %p2173, %s20, 1
      %p2175 = scmp.lt.s32.totalorder %s2172, 11
      %s2176 = scalar_select %p2175, %s2172, 11
      %s2177 = smul.addr %s2176, 2
      %s2178 = smul.addr %s2174, 24
      %s2179 = sadd.s32 %s2177, %s2178
      %s2180 = smul.addr %s2179, 8
      %s2181 = scalar_lea.vmem %s5, %s2180
      // Predicated region
      $region41: #{noise_estimator_forward.5} parent=39 // pred_check
        %p2182 = pneg %p168
      $region42: #{noise_estimator_forward.5} parent=39 // pred_check_branch
        %2184 = sbr.rel (%p2182) target = $region44
      $region43: #{noise_estimator_forward.5} parent=39 // pred_region
        %s2185 = smul.u32 12, %s21
      $region44: #{noise_estimator_forward.5} parent=39 // pred_fallthru
        _
    $region40: #{noise_estimator_forward.5} parent=5 // pred_fallthru
      _
    %p2186 = scmp.le.s32.totalorder 2, %s11
    // Predicated region
    $region45: #{noise_estimator_forward.5} parent=5 // pred_check
      %p2187 = pneg %p2186
    $region46: #{noise_estimator_forward.5} parent=5 // pred_check_branch
      %2189 = sbr.rel (%p2187) target = $region48
    $region47: #{noise_estimator_forward.5} parent=5 // pred_region
      %s2190 = ssub.s32 %s11, 2
      // Predicated region
      $region49: #{noise_estimator_forward.5} parent=47 // pred_check
        %p2191 = pneg %p174
      $region50: #{noise_estimator_forward.5} parent=47 // pred_check_branch
        %2193 = sbr.rel (%p2191) target = $region52
      $region51: #{noise_estimator_forward.5} parent=47 // pred_region
        %s2194 = smul.u32 12, %s23
        %p2195 = scmp.lt.s32.totalorder %s22, 1
        %s2196 = scalar_select %p2195, %s22, 1
        %p2197 = scmp.lt.s32.totalorder %s2194, 11
        %s2198 = scalar_select %p2197, %s2194, 11
        %s2199 = smul.addr %s2198, 2
        %s2200 = smul.addr %s2196, 24
        %s2201 = sadd.s32 %s2199, %s2200
        %s2202 = smul.addr %s2201, 8
        %s2203 = scalar_lea.vmem %s5, %s2202
      $region52: #{noise_estimator_forward.5} parent=47 // pred_fallthru
        _
    $region48: #{noise_estimator_forward.5} parent=5 // pred_fallthru
      _
  $region6: #{noise_estimator_forward.5} parent=0 // loop_footer
    %s15 = sadd.s32 1, %s11
  $region7: #{noise_estimator_forward.5} parent=0 // loop_footer_branch
    %10 = sbr.rel target = $region3
  $region8: #{noise_estimator_forward.5} parent=0 // loop_exit
    _

// kernel: noise_estimator_forward.4
$region0: #{noise_estimator_forward.4}
  #allocation0 [shape = 'u32[]', space=smem, size = 0x4, offset = 0x4, fixed_abs, tag = 'smem constant byte address 0x4 - core index']
  #allocation1 [shape = 'u32[144,128]{1,0:T(1,128)}', space=vmem, size = 0x12000, scoped, tag = 'internal scratch']
  %s0 = inlined_call_operand.vmem [shape: bf16[2,16,16,48], index: 0, kind: input, shape index: {}]
  %s1 = inlined_call_operand.vmem [shape: f32[2,1,48], index: 1, kind: input, shape index: {}]
  %s2 = inlined_call_operand.vmem [shape: f32[2,1,48], index: 2, kind: input, shape index: {}]
  %s3 = inlined_call_operand.vmem [shape: bf16[3,144,64], index: 3, kind: input, shape index: {}]
  %s4 = inlined_call_operand.vmem [shape: f32[1,64], index: 4, kind: input, shape index: {}]
  %s5 = inlined_call_operand.vmem [shape: bf16[2,14,14,64], index: 5, kind: output, shape index: {0}]
  %s6 = inlined_call_operand.vmem [shape: f32[2,2,64], index: 6, kind: output, shape index: {1}]
  %7 = xla_tuple %s5, %s6
  %s8 = sld [smem:[#allocation0]]
  $region65: #{noise_estimator_forward.4} parent=0
    _
  %s10 = ssub.s32 1, %s8
  %s11 = scalar_select 0, %s10, %s8
  loop: start=0, step=1, limit=4
  $region2: #{noise_estimator_forward.4} parent=0 // loop_pre_header
    _
  $region3: #{noise_estimator_forward.4} parent=0 // loop_header
    %s13 = sphi 0, %s17
    %p14 = scmp.ge.s32.totalorder %s13, 4
    %s20 = sphi 0, %s32
    %s21 = sphi 0, %s28
    %s22 = sphi 0, %s20
    %s23 = sphi 0, %s21
    %s24 = sphi 0, %s22
    %s25 = sphi 0, %s23
    %s35 = sphi 0, %s37
    %s38 = sphi 0, %s35
    %s39 = sphi 0, %s38
    %s55 = sphi 0, %s39
    %s61 = sphi 0, %s63
    %s64 = sphi 0, %s61
    %s65 = sphi 0, %s64
    %s81 = sphi 0, %s65
    %s87 = sphi 0, %s89
    %s90 = sphi 0, %s87
    %s91 = sphi 0, %s90
    %s107 = sphi 0, %s91
    %s111 = sphi 0, %s111
    %s113 = sphi 0, %s111
    %s114 = sphi 0, %s113
    %s128 = sphi 0, %s114
    %s132 = sphi 0, %s132
    %s134 = sphi 0, %s132
    %s135 = sphi 0, %s134
    %s149 = sphi 0, %s135
    %s157 = sphi 0, %s159
    %s160 = sphi 0, %s157
    %s161 = sphi 0, %s160
    %s177 = sphi 0, %s161
    %s183 = sphi 0, %s185
    %s186 = sphi 0, %s183
    %s187 = sphi 0, %s186
    %s203 = sphi 0, %s187
  $region4: #{noise_estimator_forward.4} parent=0 // loop_header_branch
    %16 = sbr.rel (%p14) target = $region8
  $region5: #{noise_estimator_forward.4} parent=0 // loop_body
    %s18 = ssub.s32 %s13, 1
    %s19 = ssub.s32 %s13, 2
    %s26 = sadd.s32 1, %s21
    %p27 = scmp.ge.s32.totalorder %s26, 1
    %s28 = scalar_select %p27, 0, %s26
    %s29 = sadd.s32 1, %s20
    %s30 = scalar_select %p27, %s29, %s20
    %p31 = scmp.ge.s32.totalorder %s30, 2
    %s32 = scalar_select %p31, 0, %s30
    %s33 = ssub.s32 %s20, %s32
    %p34 = scmp.eq.s32.totalorder %s33, 0
    %s36 = sadd.s32 %s35, 1
    %s37 = scalar_select %p34, %s35, %s36
    %p40 = pneg %p34
    %p41 = scmp.eq.s32.totalorder %s13, 1
    %p42 = por %p40, %p41
    %p43 = scmp.ne.s32.totalorder %s35, %s38
    %p44 = scmp.eq.s32.totalorder %s13, 0
    %p45 = por %p43, %p44
    %p46 = scmp.ne.s32.totalorder %s35, %s38
    %p47 = scmp.eq.s32.totalorder %s18, 1
    %p48 = por %p46, %p47
    %p49 = scmp.ne.s32.totalorder %s38, %s39
    %p50 = scmp.eq.s32.totalorder %s18, 0
    %p51 = por %p49, %p50
    %p52 = scmp.ne.s32.totalorder %s38, %s39
    %p53 = scmp.eq.s32.totalorder %s19, 1
    %p54 = por %p52, %p53
    %p56 = scmp.ne.s32.totalorder %s39, %s55
    %p57 = scmp.eq.s32.totalorder %s19, 0
    %p58 = por %p56, %p57
    %s59 = ssub.s32 %s20, %s32
    %p60 = scmp.eq.s32.totalorder %s59, 0
    %s62 = sadd.s32 %s61, 1
    %s63 = scalar_select %p60, %s61, %s62
    %p66 = pneg %p60
    %p67 = scmp.eq.s32.totalorder %s13, 1
    %p68 = por %p66, %p67
    %p69 = scmp.ne.s32.totalorder %s61, %s64
    %p70 = scmp.eq.s32.totalorder %s13, 0
    %p71 = por %p69, %p70
    %p72 = scmp.ne.s32.totalorder %s61, %s64
    %p73 = scmp.eq.s32.totalorder %s18, 1
    %p74 = por %p72, %p73
    %p75 = scmp.ne.s32.totalorder %s64, %s65
    %p76 = scmp.eq.s32.totalorder %s18, 0
    %p77 = por %p75, %p76
    %p78 = scmp.ne.s32.totalorder %s64, %s65
    %p79 = scmp.eq.s32.totalorder %s19, 1
    %p80 = por %p78, %p79
    %p82 = scmp.ne.s32.totalorder %s65, %s81
    %p83 = scmp.eq.s32.totalorder %s19, 0
    %p84 = por %p82, %p83
    %s85 = ssub.s32 %s20, %s32
    %p86 = scmp.eq.s32.totalorder %s85, 0
    %s88 = sadd.s32 %s87, 1
    %s89 = scalar_select %p86, %s87, %s88
    %p92 = pneg %p86
    %p93 = scmp.eq.s32.totalorder %s13, 1
    %p94 = por %p92, %p93
    %p95 = scmp.ne.s32.totalorder %s87, %s90
    %p96 = scmp.eq.s32.totalorder %s13, 0
    %p97 = por %p95, %p96
    %p98 = scmp.ne.s32.totalorder %s87, %s90
    %p99 = scmp.eq.s32.totalorder %s18, 1
    %p100 = por %p98, %p99
    %p101 = scmp.ne.s32.totalorder %s90, %s91
    %p102 = scmp.eq.s32.totalorder %s18, 0
    %p103 = por %p101, %p102
    %p104 = scmp.ne.s32.totalorder %s90, %s91
    %p105 = scmp.eq.s32.totalorder %s19, 1
    %p106 = por %p104, %p105
    %p108 = scmp.ne.s32.totalorder %s91, %s107
    %p109 = scmp.eq.s32.totalorder %s19, 0
    %p110 = por %p108, %p109
    %s112 = sadd.s32 %s111, 1
    %p115 = scmp.eq.s32.totalorder %s13, 1
    %p116 = scmp.ne.s32.totalorder %s111, %s113
    %p117 = scmp.eq.s32.totalorder %s13, 0
    %p118 = por %p116, %p117
    %p119 = scmp.ne.s32.totalorder %s111, %s113
    %p120 = scmp.eq.s32.totalorder %s18, 1
    %p121 = por %p119, %p120
    %p122 = scmp.ne.s32.totalorder %s113, %s114
    %p123 = scmp.eq.s32.totalorder %s18, 0
    %p124 = por %p122, %p123
    %p125 = scmp.ne.s32.totalorder %s113, %s114
    %p126 = scmp.eq.s32.totalorder %s19, 1
    %p127 = por %p125, %p126
    %p129 = scmp.ne.s32.totalorder %s114, %s128
    %p130 = scmp.eq.s32.totalorder %s19, 0
    %p131 = por %p129, %p130
    %s133 = sadd.s32 %s132, 1
    %p136 = scmp.eq.s32.totalorder %s13, 1
    %p137 = scmp.ne.s32.totalorder %s132, %s134
    %p138 = scmp.eq.s32.totalorder %s13, 0
    %p139 = por %p137, %p138
    %p140 = scmp.ne.s32.totalorder %s132, %s134
    %p141 = scmp.eq.s32.totalorder %s18, 1
    %p142 = por %p140, %p141
    %p143 = scmp.ne.s32.totalorder %s134, %s135
    %p144 = scmp.eq.s32.totalorder %s18, 0
    %p145 = por %p143, %p144
    %p146 = scmp.ne.s32.totalorder %s134, %s135
    %p147 = scmp.eq.s32.totalorder %s19, 1
    %p148 = por %p146, %p147
    %p150 = scmp.ne.s32.totalorder %s135, %s149
    %p151 = scmp.eq.s32.totalorder %s19, 0
    %p152 = por %p150, %p151
    %s153 = ssub.s32 %s20, %s32
    %s154 = ssub.s32 %s21, %s28
    %s155 = sor.u32 %s153, %s154
    %p156 = scmp.eq.s32.totalorder %s155, 0
    %s158 = sadd.s32 %s157, 1
    %s159 = scalar_select %p156, %s157, %s158
    %p162 = pneg %p156
    %p163 = scmp.eq.s32.totalorder %s13, 1
    %p164 = por %p162, %p163
    %p165 = scmp.ne.s32.totalorder %s157, %s160
    %p166 = scmp.eq.s32.totalorder %s13, 0
    %p167 = por %p165, %p166
    %p168 = scmp.ne.s32.totalorder %s157, %s160
    %p169 = scmp.eq.s32.totalorder %s18, 1
    %p170 = por %p168, %p169
    %p171 = scmp.ne.s32.totalorder %s160, %s161
    %p172 = scmp.eq.s32.totalorder %s18, 0
    %p173 = por %p171, %p172
    %p174 = scmp.ne.s32.totalorder %s160, %s161
    %p175 = scmp.eq.s32.totalorder %s19, 1
    %p176 = por %p174, %p175
    %p178 = scmp.ne.s32.totalorder %s161, %s177
    %p179 = scmp.eq.s32.totalorder %s19, 0
    %p180 = por %p178, %p179
    %s181 = ssub.s32 %s20, %s32
    %p182 = scmp.eq.s32.totalorder %s181, 0
    %s184 = sadd.s32 %s183, 1
    %s185 = scalar_select %p182, %s183, %s184
    %p188 = pneg %p182
    %p189 = scmp.eq.s32.totalorder %s13, 1
    %p190 = por %p188, %p189
    %p191 = scmp.ne.s32.totalorder %s183, %s186
    %p192 = scmp.eq.s32.totalorder %s13, 0
    %p193 = por %p191, %p192
    %p194 = scmp.ne.s32.totalorder %s183, %s186
    %p195 = scmp.eq.s32.totalorder %s18, 1
    %p196 = por %p194, %p195
    %p197 = scmp.ne.s32.totalorder %s186, %s187
    %p198 = scmp.eq.s32.totalorder %s18, 0
    %p199 = por %p197, %p198
    %p200 = scmp.ne.s32.totalorder %s186, %s187
    %p201 = scmp.eq.s32.totalorder %s19, 1
    %p202 = por %p200, %p201
    %p204 = scmp.ne.s32.totalorder %s187, %s203
    %p205 = scmp.eq.s32.totalorder %s19, 0
    %p206 = por %p204, %p205
    %p207 = scmp.le.s32.totalorder 1, %s13
    %p208 = scmp.lt.s32.totalorder %s13, 3
    %p209 = pnand %p207, %p208
    %p210 = pneg %p209
    // Predicated region
    $region9: #{noise_estimator_forward.4} parent=5 // pred_check
      _
    $region10: #{noise_estimator_forward.4} parent=5 // pred_check_branch
      %212 = sbr.rel (%p209) target = $region12
    $region11: #{noise_estimator_forward.4} parent=5 // pred_region
      %s213 = ssub.s32 %s13, 1
      // Predicated region
      $region13: #{noise_estimator_forward.4} parent=11 // pred_check
        %p214 = pneg %p124
      $region14: #{noise_estimator_forward.4} parent=11 // pred_check_branch
        %216 = sbr.rel (%p214) target = $region16
      $region15: #{noise_estimator_forward.4} parent=11 // pred_region
        _
      $region16: #{noise_estimator_forward.4} parent=11 // pred_fallthru
        _
      // Predicated region
      $region17: #{noise_estimator_forward.4} parent=11 // pred_check
        %p217 = pneg %p145
      $region18: #{noise_estimator_forward.4} parent=11 // pred_check_branch
        %219 = sbr.rel (%p217) target = $region20
      $region19: #{noise_estimator_forward.4} parent=11 // pred_region
        _
      $region20: #{noise_estimator_forward.4} parent=11 // pred_fallthru
        _
    $region12: #{noise_estimator_forward.4} parent=5 // pred_fallthru
      _
    %p220 = scmp.lt.s32.totalorder %s13, 2
    // Predicated region
    $region21: #{noise_estimator_forward.4} parent=5 // pred_check
      %p221 = pneg %p220
    $region22: #{noise_estimator_forward.4} parent=5 // pred_check_branch
      %223 = sbr.rel (%p221) target = $region24
    $region23: #{noise_estimator_forward.4} parent=5 // pred_region
      // Predicated region
      $region25: #{noise_estimator_forward.4} parent=23 // pred_check
        %p224 = pneg %p45
      $region26: #{noise_estimator_forward.4} parent=23 // pred_check_branch
        %226 = sbr.rel (%p224) target = $region28
      $region27: #{noise_estimator_forward.4} parent=23 // pred_region
        %p227 = scmp.lt.s32.totalorder %s20, 1
        %s228 = scalar_select %p227, %s20, 1
        %s229 = smul.addr %s228, 32
        %s230 = smul.addr %s229, 4
        %s231 = scalar_lea.vmem %s0, %s230
      $region28: #{noise_estimator_forward.4} parent=23 // pred_fallthru
        _
      // Predicated region
      $region29: #{noise_estimator_forward.4} parent=23 // pred_check
        %p232 = pneg %p71
      $region30: #{noise_estimator_forward.4} parent=23 // pred_check_branch
        %234 = sbr.rel (%p232) target = $region32
      $region31: #{noise_estimator_forward.4} parent=23 // pred_region
        %p235 = scmp.lt.s32.totalorder %s20, 1
        %s236 = scalar_select %p235, %s20, 1
        %s237 = scalar_lea.vmem %s1, %s236
      $region32: #{noise_estimator_forward.4} parent=23 // pred_fallthru
        _
      // Predicated region
      $region33: #{noise_estimator_forward.4} parent=23 // pred_check
        %p238 = pneg %p97
      $region34: #{noise_estimator_forward.4} parent=23 // pred_check_branch
        %240 = sbr.rel (%p238) target = $region36
      $region35: #{noise_estimator_forward.4} parent=23 // pred_region
        %p241 = scmp.lt.s32.totalorder %s20, 1
        %s242 = scalar_select %p241, %s20, 1
        %s243 = scalar_lea.vmem %s2, %s242
      $region36: #{noise_estimator_forward.4} parent=23 // pred_fallthru
        _
    $region24: #{noise_estimator_forward.4} parent=5 // pred_fallthru
      _
    %p244 = scmp.le.s32.totalorder 1, %s13
    %p245 = scmp.lt.s32.totalorder %s13, 3
    %p246 = pnand %p244, %p245
    %p247 = pneg %p246
    // Predicated region
    $region37: #{noise_estimator_forward.4} parent=5 // pred_check
      _
    $region38: #{noise_estimator_forward.4} parent=5 // pred_check_branch
      %249 = sbr.rel (%p246) target = $region40
    $region39: #{noise_estimator_forward.4} parent=5 // pred_region
      %s250 = ssub.s32 %s13, 1
      %p251 = scmp.lt.s32.totalorder %s22, 1
      %s252 = scalar_select %p251, %s22, 1
      %s253 = smul.addr %s252, 32
      %s254 = smul.addr %s253, 4
      %s255 = scalar_lea.vmem %s0, %s254
      %p256 = pneg %p51
      %p257 = pneg %p48
      %p258 = scmp.lt.s32.totalorder %s22, 1
      %s259 = scalar_select %p258, %s22, 1
      %s260 = scalar_lea.vmem %s1, %s259
      %p261 = pneg %p77
      %p262 = pneg %p74
      %p263 = scmp.lt.s32.totalorder %s22, 1
      %s264 = scalar_select %p263, %s22, 1
      %s265 = scalar_lea.vmem %s2, %s264
      %p266 = pneg %p103
      %p267 = pneg %p100
      %p268 = pneg %p124
      %p269 = pneg %p121
      %p270 = pneg %p145
      %p271 = pneg %p142
      %p272 = pneg %p173
      %p273 = pneg %p170
      %s274 = smul.u32 14, %s23
      %p275 = scmp.lt.s32.totalorder %s22, 1
      %s276 = scalar_select %p275, %s22, 1
      %p277 = scmp.lt.s32.totalorder %s274, 13
      %s278 = scalar_select %p277, %s274, 13
      %s279 = smul.addr %s278, 2
      %s280 = smul.addr %s276, 28
      %s281 = sadd.s32 %s279, %s280
      %s282 = smul.addr %s281, 4
      %s283 = scalar_lea.vmem %s5, %s282
      %p284 = pneg %p199
      %p285 = pneg %p196
      %p286 = scmp.lt.s32.totalorder %s22, 1
      %s287 = scalar_select %p286, %s22, 1
      %s288 = smul.addr %s287, 2
      %s289 = scalar_lea.vmem %s6, %s288
      %p290 = scmp.lt.s32.totalorder %s22, 1
      %s291 = scalar_select %p290, %s22, 1
      %s292 = smul.addr %s291, 32
      %s293 = smul.addr %s292, 4
      %s294 = scalar_lea.vmem %s0, %s293
      %p295 = scmp.lt.s32.totalorder %s22, 1
      %s296 = scalar_select %p295, %s22, 1
      %s297 = scalar_lea.vmem %s1, %s296
      %p298 = scmp.lt.s32.totalorder %s22, 1
      %s299 = scalar_select %p298, %s22, 1
      %s300 = scalar_lea.vmem %s2, %s299
      %s301 = smul.u32 14, %s23
      %p302 = scmp.lt.s32.totalorder %s22, 1
      %s303 = scalar_select %p302, %s22, 1
      %p304 = scmp.lt.s32.totalorder %s301, 13
      %s305 = scalar_select %p304, %s301, 13
      %s306 = smul.addr %s305, 2
      %s307 = smul.addr %s303, 28
      %s308 = sadd.s32 %s306, %s307
      %s309 = smul.addr %s308, 4
      %s310 = scalar_lea.vmem %s5, %s309
      %s311 = smul.u32 14, %s23
      %p312 = scmp.lt.s32.totalorder %s22, 1
      %s313 = scalar_select %p312, %s22, 1
      %s314 = smul.addr %s313, 2
      %s315 = scalar_lea.vmem %s6, %s314
      %s317 = smul.u32 %s23, 14
      %s318 = smul.u32 %s317, 2
      %s319 = smul.addr %s318, 4
      %s320 = scalar_lea.vmem %s294, %s319
      %v321 = vld [vmem:[%s320] sm:$0xf]
      %v322 = vld [vmem:[%s320 + $0x4] sm:$0xf]
      %v323 = vld [vmem:[%s320 + $0x8] sm:$0xf]
      %v324 = vld [vmem:[%s320 + $0xc] sm:$0xf]
      %v325 = vld [vmem:[%s320 + $0x10] sm:$0xf]
      %v326 = vld [vmem:[%s320 + $0x14] sm:$0xf]
      %v327 = vld [vmem:[%s320 + $0x18] sm:$0xf]
      %v328 = vld [vmem:[%s320 + $0x1c] sm:$0xf]
      %v329 = vld [vmem:[%s320 + $0x20] sm:$0xf]
      %v330 = vld [vmem:[%s320 + $0x24] sm:$0xf]
      %v331 = vld [vmem:[%s320 + $0x28] sm:$0xf]
      %v332 = vld [vmem:[%s320 + $0x2c] sm:$0xf]
      %v333 = vld [vmem:[%s320 + $0x30] sm:$0xf]
      %v334 = vld [vmem:[%s320 + $0x34] sm:$0xf]
      %v335 = vld [vmem:[%s320 + $0x38] sm:$0xf]
      %v336 = vld [vmem:[%s320 + $0x3c] sm:$0xf]
      %v337 = vld [vmem:[%s320 + $0x40] sm:$0xf]
      %v338 = vld [vmem:[%s320 + $0x44] sm:$0xf]
      %v339 = vld [vmem:[%s320 + $0x48] sm:$0xf]
      %v340 = vld [vmem:[%s320 + $0x4c] sm:$0xf]
      %v341 = vld [vmem:[%s320 + $0x50] sm:$0xf]
      %v342 = vld [vmem:[%s320 + $0x54] sm:$0xf]
      %v343 = vld [vmem:[%s320 + $0x58] sm:$0xf]
      %v344 = vld [vmem:[%s320 + $0x5c] sm:$0xf]
      %v345 = vld [vmem:[%s320 + $0x60] sm:$0xf]
      %v346 = vld [vmem:[%s320 + $0x64] sm:$0xf]
      %v347 = vld [vmem:[%s320 + $0x68] sm:$0xf]
      %v348 = vld [vmem:[%s320 + $0x6c] sm:$0xf]
      %v349 = vld [vmem:[%s320 + $0x70] sm:$0xf]
      %v350 = vld [vmem:[%s320 + $0x74] sm:$0xf]
      %v351 = vld [vmem:[%s320 + $0x78] sm:$0xf]
      %v352 = vld [vmem:[%s320 + $0x7c] sm:$0xf]
      %v353 = vunpack.c.l.bf16 %v321
      %v354 = vunpack.c.l.bf16 %v322
      %v355 = vunpack.c.l.bf16 %v323
      %v356 = vunpack.c.l.bf16 %v324
      %v357 = vunpack.c.l.bf16 %v325
      %v358 = vunpack.c.l.bf16 %v326
      %v359 = vunpack.c.l.bf16 %v327
      %v360 = vunpack.c.l.bf16 %v328
      %v361 = vunpack.c.l.bf16 %v329
      %v362 = vunpack.c.l.bf16 %v330
      %v363 = vunpack.c.l.bf16 %v331
      %v364 = vunpack.c.l.bf16 %v332
      %v365 = vunpack.c.l.bf16 %v333
      %v366 = vunpack.c.l.bf16 %v334
      %v367 = vunpack.c.l.bf16 %v335
      %v368 = vunpack.c.l.bf16 %v336
      %v369 = vunpack.c.l.bf16 %v337
      %v370 = vunpack.c.l.bf16 %v338
      %v371 = vunpack.c.l.bf16 %v339
      %v372 = vunpack.c.l.bf16 %v340
      %v373 = vunpack.c.l.bf16 %v341
      %v374 = vunpack.c.l.bf16 %v342
      %v375 = vunpack.c.l.bf16 %v343
      %v376 = vunpack.c.l.bf16 %v344
      %v377 = vunpack.c.l.bf16 %v345
      %v378 = vunpack.c.l.bf16 %v346
      %v379 = vunpack.c.l.bf16 %v347
      %v380 = vunpack.c.l.bf16 %v348
      %v381 = vunpack.c.l.bf16 %v349
      %v382 = vunpack.c.l.bf16 %v350
      %v383 = vunpack.c.l.bf16 %v351
      %v384 = vunpack.c.l.bf16 %v352
      %v385 = vld [vmem:[%s297] sm:$0x1]
      %v387 = vlaneseq
      %v388 = vshrl.u32 %v387, 7
      %v389 = vsub.s32 0, %v388
      %v390 = vrot.slane %v385, %v389
      %v392 = vmul.f32 %v353, %v390
      %v393 = vmul.f32 %v354, %v390
      %v394 = vmul.f32 %v355, %v390
      %v395 = vmul.f32 %v356, %v390
      %v396 = vmul.f32 %v357, %v390
      %v397 = vmul.f32 %v358, %v390
      %v398 = vmul.f32 %v359, %v390
      %v399 = vmul.f32 %v360, %v390
      %v400 = vmul.f32 %v361, %v390
      %v401 = vmul.f32 %v362, %v390
      %v402 = vmul.f32 %v363, %v390
      %v403 = vmul.f32 %v364, %v390
      %v404 = vmul.f32 %v365, %v390
      %v405 = vmul.f32 %v366, %v390
      %v406 = vmul.f32 %v367, %v390
      %v407 = vmul.f32 %v368, %v390
      %v408 = vmul.f32 %v369, %v390
      %v409 = vmul.f32 %v370, %v390
      %v410 = vmul.f32 %v371, %v390
      %v411 = vmul.f32 %v372, %v390
      %v412 = vmul.f32 %v373, %v390
      %v413 = vmul.f32 %v374, %v390
      %v414 = vmul.f32 %v375, %v390
      %v415 = vmul.f32 %v376, %v390
      %v416 = vmul.f32 %v377, %v390
      %v417 = vmul.f32 %v378, %v390
      %v418 = vmul.f32 %v379, %v390
      %v419 = vmul.f32 %v380, %v390
      %v420 = vmul.f32 %v381, %v390
      %v421 = vmul.f32 %v382, %v390
      %v422 = vmul.f32 %v383, %v390
      %v423 = vmul.f32 %v384, %v390
      %v424 = vld [vmem:[%s300] sm:$0x1]
      %v426 = vlaneseq
      %v427 = vshrl.u32 %v426, 7
      %v428 = vsub.s32 0, %v427
      %v429 = vrot.slane %v424, %v428
      %v431 = vadd.f32 %v392, %v429
      %v432 = vadd.f32 %v393, %v429
      %v433 = vadd.f32 %v394, %v429
      %v434 = vadd.f32 %v395, %v429
      %v435 = vadd.f32 %v396, %v429
      %v436 = vadd.f32 %v397, %v429
      %v437 = vadd.f32 %v398, %v429
      %v438 = vadd.f32 %v399, %v429
      %v439 = vadd.f32 %v400, %v429
      %v440 = vadd.f32 %v401, %v429
      %v441 = vadd.f32 %v402, %v429
      %v442 = vadd.f32 %v403, %v429
      %v443 = vadd.f32 %v404, %v429
      %v444 = vadd.f32 %v405, %v429
      %v445 = vadd.f32 %v406, %v429
      %v446 = vadd.f32 %v407, %v429
      %v447 = vadd.f32 %v408, %v429
      %v448 = vadd.f32 %v409, %v429
      %v449 = vadd.f32 %v410, %v429
      %v450 = vadd.f32 %v411, %v429
      %v451 = vadd.f32 %v412, %v429
      %v452 = vadd.f32 %v413, %v429
      %v453 = vadd.f32 %v414, %v429
      %v454 = vadd.f32 %v415, %v429
      %v455 = vadd.f32 %v416, %v429
      %v456 = vadd.f32 %v417, %v429
      %v457 = vadd.f32 %v418, %v429
      %v458 = vadd.f32 %v419, %v429
      %v459 = vadd.f32 %v420, %v429
      %v460 = vadd.f32 %v421, %v429
      %v461 = vadd.f32 %v422, %v429
      %v462 = vadd.f32 %v423, %v429
      %vm463 = vcmp.ge.f32.partialorder %v431, 0.0
      %vm464 = vcmp.ge.f32.partialorder %v432, 0.0
      %vm465 = vcmp.ge.f32.partialorder %v433, 0.0
      %vm466 = vcmp.ge.f32.partialorder %v434, 0.0
      %vm467 = vcmp.ge.f32.partialorder %v435, 0.0
      %vm468 = vcmp.ge.f32.partialorder %v436, 0.0
      %vm469 = vcmp.ge.f32.partialorder %v437, 0.0
      %vm470 = vcmp.ge.f32.partialorder %v438, 0.0
      %vm471 = vcmp.ge.f32.partialorder %v439, 0.0
      %vm472 = vcmp.ge.f32.partialorder %v440, 0.0
      %vm473 = vcmp.ge.f32.partialorder %v441, 0.0
      %vm474 = vcmp.ge.f32.partialorder %v442, 0.0
      %vm475 = vcmp.ge.f32.partialorder %v443, 0.0
      %vm476 = vcmp.ge.f32.partialorder %v444, 0.0
      %vm477 = vcmp.ge.f32.partialorder %v445, 0.0
      %vm478 = vcmp.ge.f32.partialorder %v446, 0.0
      %vm479 = vcmp.ge.f32.partialorder %v447, 0.0
      %vm480 = vcmp.ge.f32.partialorder %v448, 0.0
      %vm481 = vcmp.ge.f32.partialorder %v449, 0.0
      %vm482 = vcmp.ge.f32.partialorder %v450, 0.0
      %vm483 = vcmp.ge.f32.partialorder %v451, 0.0
      %vm484 = vcmp.ge.f32.partialorder %v452, 0.0
      %vm485 = vcmp.ge.f32.partialorder %v453, 0.0
      %vm486 = vcmp.ge.f32.partialorder %v454, 0.0
      %vm487 = vcmp.ge.f32.partialorder %v455, 0.0
      %vm488 = vcmp.ge.f32.partialorder %v456, 0.0
      %vm489 = vcmp.ge.f32.partialorder %v457, 0.0
      %vm490 = vcmp.ge.f32.partialorder %v458, 0.0
      %vm491 = vcmp.ge.f32.partialorder %v459, 0.0
      %vm492 = vcmp.ge.f32.partialorder %v460, 0.0
      %vm493 = vcmp.ge.f32.partialorder %v461, 0.0
      %vm494 = vcmp.ge.f32.partialorder %v462, 0.0
      %v495 = vmul.f32 %v431, 0.01
      %v496 = vmul.f32 %v432, 0.01
      %v497 = vmul.f32 %v433, 0.01
      %v498 = vmul.f32 %v434, 0.01
      %v499 = vmul.f32 %v435, 0.01
      %v500 = vmul.f32 %v436, 0.01
      %v501 = vmul.f32 %v437, 0.01
      %v502 = vmul.f32 %v438, 0.01
      %v503 = vmul.f32 %v439, 0.01
      %v504 = vmul.f32 %v440, 0.01
      %v505 = vmul.f32 %v441, 0.01
      %v506 = vmul.f32 %v442, 0.01
      %v507 = vmul.f32 %v443, 0.01
      %v508 = vmul.f32 %v444, 0.01
      %v509 = vmul.f32 %v445, 0.01
      %v510 = vmul.f32 %v446, 0.01
      %v511 = vmul.f32 %v447, 0.01
      %v512 = vmul.f32 %v448, 0.01
      %v513 = vmul.f32 %v449, 0.01
      %v514 = vmul.f32 %v450, 0.01
      %v515 = vmul.f32 %v451, 0.01
      %v516 = vmul.f32 %v452, 0.01
      %v517 = vmul.f32 %v453, 0.01
      %v518 = vmul.f32 %v454, 0.01
      %v519 = vmul.f32 %v455, 0.01
      %v520 = vmul.f32 %v456, 0.01
      %v521 = vmul.f32 %v457, 0.01
      %v522 = vmul.f32 %v458, 0.01
      %v523 = vmul.f32 %v459, 0.01
      %v524 = vmul.f32 %v460, 0.01
      %v525 = vmul.f32 %v461, 0.01
      %v526 = vmul.f32 %v462, 0.01
      %v527 = vsel %vm463, %v431, %v495
      %v528 = vsel %vm464, %v432, %v496
      %v529 = vsel %vm465, %v433, %v497
      %v530 = vsel %vm466, %v434, %v498
      %v531 = vsel %vm467, %v435, %v499
      %v532 = vsel %vm468, %v436, %v500
      %v533 = vsel %vm469, %v437, %v501
      %v534 = vsel %vm470, %v438, %v502
      %v535 = vsel %vm471, %v439, %v503
      %v536 = vsel %vm472, %v440, %v504
      %v537 = vsel %vm473, %v441, %v505
      %v538 = vsel %vm474, %v442, %v506
      %v539 = vsel %vm475, %v443, %v507
      %v540 = vsel %vm476, %v444, %v508
      %v541 = vsel %vm477, %v445, %v509
      %v542 = vsel %vm478, %v446, %v510
      %v543 = vsel %vm479, %v447, %v511
      %v544 = vsel %vm480, %v448, %v512
      %v545 = vsel %vm481, %v449, %v513
      %v546 = vsel %vm482, %v450, %v514
      %v547 = vsel %vm483, %v451, %v515
      %v548 = vsel %vm484, %v452, %v516
      %v549 = vsel %vm485, %v453, %v517
      %v550 = vsel %vm486, %v454, %v518
      %v551 = vsel %vm487, %v455, %v519
      %v552 = vsel %vm488, %v456, %v520
      %v553 = vsel %vm489, %v457, %v521
      %v554 = vsel %vm490, %v458, %v522
      %v555 = vsel %vm491, %v459, %v523
      %v556 = vsel %vm492, %v460, %v524
      %v557 = vsel %vm493, %v461, %v525
      %v558 = vsel %vm494, %v462, %v526
      %v559 = vpack.c.bf16 %v528, %v527
      %v560 = vpack.c.bf16 %v530, %v529
      %v561 = vpack.c.bf16 %v532, %v531
      %v562 = vpack.c.bf16 %v534, %v533
      %v563 = vpack.c.bf16 %v536, %v535
      %v564 = vpack.c.bf16 %v538, %v537
      %v565 = vpack.c.bf16 %v540, %v539
      %v566 = vpack.c.bf16 %v542, %v541
      %v567 = vpack.c.bf16 %v544, %v543
      %v568 = vpack.c.bf16 %v546, %v545
      %v569 = vpack.c.bf16 %v548, %v547
      %v570 = vpack.c.bf16 %v550, %v549
      %v571 = vpack.c.bf16 %v552, %v551
      %v572 = vpack.c.bf16 %v554, %v553
      %v573 = vpack.c.bf16 %v556, %v555
      %v574 = vpack.c.bf16 %v558, %v557
      %v576 = vshrl.u32 %v559, 16
      %v578 = vshll.u32 %v559, 16
      %v580 = vrot.slane %v578, 1
      %v581 = vor.u32 %v576, %v580
      %v583 = vshrl.u32 %v560, 16
      %v585 = vshll.u32 %v560, 16
      %v587 = vrot.slane %v585, 1
      %v588 = vor.u32 %v583, %v587
      %v590 = vshrl.u32 %v561, 16
      %v592 = vshll.u32 %v561, 16
      %v594 = vrot.slane %v592, 1
      %v595 = vor.u32 %v590, %v594
      %v597 = vshrl.u32 %v562, 16
      %v599 = vshll.u32 %v562, 16
      %v601 = vrot.slane %v599, 1
      %v602 = vor.u32 %v597, %v601
      %v604 = vshrl.u32 %v563, 16
      %v606 = vshll.u32 %v563, 16
      %v608 = vrot.slane %v606, 1
      %v609 = vor.u32 %v604, %v608
      %v611 = vshrl.u32 %v564, 16
      %v613 = vshll.u32 %v564, 16
      %v615 = vrot.slane %v613, 1
      %v616 = vor.u32 %v611, %v615
      %v618 = vshrl.u32 %v565, 16
      %v620 = vshll.u32 %v565, 16
      %v622 = vrot.slane %v620, 1
      %v623 = vor.u32 %v618, %v622
      %v625 = vshrl.u32 %v566, 16
      %v627 = vshll.u32 %v566, 16
      %v629 = vrot.slane %v627, 1
      %v630 = vor.u32 %v625, %v629
      %v632 = vshrl.u32 %v567, 16
      %v634 = vshll.u32 %v567, 16
      %v636 = vrot.slane %v634, 1
      %v637 = vor.u32 %v632, %v636
      %v639 = vshrl.u32 %v568, 16
      %v641 = vshll.u32 %v568, 16
      %v643 = vrot.slane %v641, 1
      %v644 = vor.u32 %v639, %v643
      %v646 = vshrl.u32 %v569, 16
      %v648 = vshll.u32 %v569, 16
      %v650 = vrot.slane %v648, 1
      %v651 = vor.u32 %v646, %v650
      %v653 = vshrl.u32 %v570, 16
      %v655 = vshll.u32 %v570, 16
      %v657 = vrot.slane %v655, 1
      %v658 = vor.u32 %v653, %v657
      %v660 = vshrl.u32 %v571, 16
      %v662 = vshll.u32 %v571, 16
      %v664 = vrot.slane %v662, 1
      %v665 = vor.u32 %v660, %v664
      %v667 = vshrl.u32 %v572, 16
      %v669 = vshll.u32 %v572, 16
      %v671 = vrot.slane %v669, 1
      %v672 = vor.u32 %v667, %v671
      %v674 = vshrl.u32 %v573, 16
      %v676 = vshll.u32 %v573, 16
      %v678 = vrot.slane %v676, 1
      %v679 = vor.u32 %v674, %v678
      %v681 = vshrl.u32 %v574, 16
      %v683 = vshll.u32 %v574, 16
      %v685 = vrot.slane %v683, 1
      %v686 = vor.u32 %v681, %v685
      %687 = vrot.lane.b32.xlu0 %v581, 48
      %v688 = vpop.permute.xlu0 %687
      %689 = vrot.lane.b32.xlu0 %v588, 48
      %v690 = vpop.permute.xlu0 %689
      %691 = vrot.lane.b32.xlu0 %v595, 48
      %v692 = vpop.permute.xlu0 %691
      %693 = vrot.lane.b32.xlu0 %v602, 48
      %v694 = vpop.permute.xlu0 %693
      %695 = vrot.lane.b32.xlu0 %v609, 48
      %v696 = vpop.permute.xlu0 %695
      %697 = vrot.lane.b32.xlu0 %v616, 48
      %v698 = vpop.permute.xlu0 %697
      %699 = vrot.lane.b32.xlu0 %v623, 48
      %v700 = vpop.permute.xlu0 %699
      %701 = vrot.lane.b32.xlu0 %v630, 48
      %v702 = vpop.permute.xlu0 %701
      %703 = vrot.lane.b32.xlu0 %v637, 48
      %v704 = vpop.permute.xlu0 %703
      %705 = vrot.lane.b32.xlu0 %v644, 48
      %v706 = vpop.permute.xlu0 %705
      %707 = vrot.lane.b32.xlu0 %v651, 48
      %v708 = vpop.permute.xlu0 %707
      %709 = vrot.lane.b32.xlu0 %v658, 48
      %v710 = vpop.permute.xlu0 %709
      %711 = vrot.lane.b32.xlu0 %v665, 48
      %v712 = vpop.permute.xlu0 %711
      %713 = vrot.lane.b32.xlu0 %v672, 48
      %v714 = vpop.permute.xlu0 %713
      %715 = vrot.lane.b32.xlu0 %v679, 48
      %v716 = vpop.permute.xlu0 %715
      %717 = vrot.lane.b32.xlu0 %v686, 48
      %v718 = vpop.permute.xlu0 %717
      %v735 = vrot.slane %v559, 1
      %v736 = vrot.slane %v560, 1
      %v737 = vrot.slane %v561, 1
      %v738 = vrot.slane %v562, 1
      %v739 = vrot.slane %v563, 1
      %v740 = vrot.slane %v564, 1
      %v741 = vrot.slane %v565, 1
      %v742 = vrot.slane %v566, 1
      %v743 = vrot.slane %v567, 1
      %v744 = vrot.slane %v568, 1
      %v745 = vrot.slane %v569, 1
      %v746 = vrot.slane %v570, 1
      %v747 = vrot.slane %v571, 1
      %v748 = vrot.slane %v572, 1
      %v749 = vrot.slane %v573, 1
      %v750 = vrot.slane %v574, 1
      %751 = vrot.lane.b32.xlu0 %v735, 96
      %v752 = vpop.permute.xlu0 %751
      %753 = vrot.lane.b32.xlu0 %v736, 96
      %v754 = vpop.permute.xlu0 %753
      %755 = vrot.lane.b32.xlu0 %v737, 96
      %v756 = vpop.permute.xlu0 %755
      %757 = vrot.lane.b32.xlu0 %v738, 96
      %v758 = vpop.permute.xlu0 %757
      %759 = vrot.lane.b32.xlu0 %v739, 96
      %v760 = vpop.permute.xlu0 %759
      %761 = vrot.lane.b32.xlu0 %v740, 96
      %v762 = vpop.permute.xlu0 %761
      %763 = vrot.lane.b32.xlu0 %v741, 96
      %v764 = vpop.permute.xlu0 %763
      %765 = vrot.lane.b32.xlu0 %v742, 96
      %v766 = vpop.permute.xlu0 %765
      %767 = vrot.lane.b32.xlu0 %v743, 96
      %v768 = vpop.permute.xlu0 %767
      %769 = vrot.lane.b32.xlu0 %v744, 96
      %v770 = vpop.permute.xlu0 %769
      %771 = vrot.lane.b32.xlu0 %v745, 96
      %v772 = vpop.permute.xlu0 %771
      %773 = vrot.lane.b32.xlu0 %v746, 96
      %v774 = vpop.permute.xlu0 %773
      %775 = vrot.lane.b32.xlu0 %v747, 96
      %v776 = vpop.permute.xlu0 %775
      %777 = vrot.lane.b32.xlu0 %v748, 96
      %v778 = vpop.permute.xlu0 %777
      %779 = vrot.lane.b32.xlu0 %v749, 96
      %v780 = vpop.permute.xlu0 %779
      %781 = vrot.lane.b32.xlu0 %v750, 96
      %v782 = vpop.permute.xlu0 %781
      %vm783 = vcmask 392192
      %v785 = vsel %vm783, %v559, %v688
      %v787 = vsel %vm783, %v560, %v690
      %v789 = vsel %vm783, %v561, %v692
      %v791 = vsel %vm783, %v562, %v694
      %v793 = vsel %vm783, %v563, %v696
      %v795 = vsel %vm783, %v564, %v698
      %v797 = vsel %vm783, %v565, %v700
      %v799 = vsel %vm783, %v566, %v702
      %v801 = vsel %vm783, %v567, %v704
      %v803 = vsel %vm783, %v568, %v706
      %v805 = vsel %vm783, %v569, %v708
      %v807 = vsel %vm783, %v570, %v710
      %v809 = vsel %vm783, %v571, %v712
      %v811 = vsel %vm783, %v572, %v714
      %v813 = vsel %vm783, %v573, %v716
      %v815 = vsel %vm783, %v574, %v718
      %vm816 = vcmask 785408
      %v818 = vsel %vm816, %v785, %v752
      %v820 = vsel %vm816, %v787, %v754
      %v822 = vsel %vm816, %v789, %v756
      %v824 = vsel %vm816, %v791, %v758
      %v826 = vsel %vm816, %v793, %v760
      %v828 = vsel %vm816, %v795, %v762
      %v830 = vsel %vm816, %v797, %v764
      %v832 = vsel %vm816, %v799, %v766
      %v834 = vsel %vm816, %v801, %v768
      %v836 = vsel %vm816, %v803, %v770
      %v838 = vsel %vm816, %v805, %v772
      %v840 = vsel %vm816, %v807, %v774
      %v842 = vsel %vm816, %v809, %v776
      %v844 = vsel %vm816, %v811, %v778
      %v846 = vsel %vm816, %v813, %v780
      %v848 = vsel %vm816, %v815, %v782
      %v849 = vld [vmem:[%s3] sm:$0xf]
      %v850 = vld [vmem:[%s3 + $0x4] sm:$0xf]
      %v851 = vld [vmem:[%s3 + $0x8] sm:$0xf]
      %v852 = vld [vmem:[%s3 + $0xc] sm:$0xf]
      %v853 = vld [vmem:[%s3 + $0x10] sm:$0xf]
      %v854 = vld [vmem:[%s3 + $0x14] sm:$0xf]
      %v855 = vld [vmem:[%s3 + $0x18] sm:$0xf]
      %v856 = vld [vmem:[%s3 + $0x1c] sm:$0xf]
      %v857 = vld [vmem:[%s3 + $0x20] sm:$0xf]
      %v858 = vld [vmem:[%s3 + $0x24] sm:$0xf]
      %v859 = vld [vmem:[%s3 + $0x28] sm:$0xf]
      %v860 = vld [vmem:[%s3 + $0x2c] sm:$0xf]
      %v861 = vld [vmem:[%s3 + $0x30] sm:$0xf]
      %v862 = vld [vmem:[%s3 + $0x34] sm:$0xf]
      %v863 = vld [vmem:[%s3 + $0x38] sm:$0xf]
      %v864 = vld [vmem:[%s3 + $0x3c] sm:$0xf]
      %v865 = vld [vmem:[%s3 + $0x40] sm:$0xf]
      %v866 = vld [vmem:[%s3 + $0x44] sm:$0xf]
      %v867 = vld [vmem:[%s3 + $0x48] sm:$0xf]
      %v868 = vld [vmem:[%s3 + $0x4c] sm:$0xf]
      %v869 = vld [vmem:[%s3 + $0x50] sm:$0xf]
      %v870 = vld [vmem:[%s3 + $0x54] sm:$0xf]
      %v871 = vld [vmem:[%s3 + $0x58] sm:$0xf]
      %v872 = vld [vmem:[%s3 + $0x5c] sm:$0xf]
      %v873 = vld [vmem:[%s3 + $0x60] sm:$0xf]
      %v874 = vld [vmem:[%s3 + $0x64] sm:$0xf]
      %v875 = vld [vmem:[%s3 + $0x68] sm:$0xf]
      %v876 = vld [vmem:[%s3 + $0x6c] sm:$0xf]
      %v877 = vld [vmem:[%s3 + $0x70] sm:$0xf]
      %v878 = vld [vmem:[%s3 + $0x74] sm:$0xf]
      %v879 = vld [vmem:[%s3 + $0x78] sm:$0xf]
      %v880 = vld [vmem:[%s3 + $0x7c] sm:$0xf]
      %v881 = vld [vmem:[%s3 + $0x80] sm:$0xf]
      %v882 = vld [vmem:[%s3 + $0x84] sm:$0xf]
      %v883 = vld [vmem:[%s3 + $0x88] sm:$0xf]
      %v884 = vld [vmem:[%s3 + $0x8c] sm:$0xf]
      %v885 = vld [vmem:[%s3 + $0x90] sm:$0xf]
      %v886 = vld [vmem:[%s3 + $0x94] sm:$0xf]
      %v887 = vld [vmem:[%s3 + $0x98] sm:$0xf]
      %v888 = vld [vmem:[%s3 + $0x9c] sm:$0xf]
      %v889 = vld [vmem:[%s3 + $0xa0] sm:$0xf]
      %v890 = vld [vmem:[%s3 + $0xa4] sm:$0xf]
      %v891 = vld [vmem:[%s3 + $0xa8] sm:$0xf]
      %v892 = vld [vmem:[%s3 + $0xac] sm:$0xf]
      %v893 = vld [vmem:[%s3 + $0xb0] sm:$0xf]
      %v894 = vld [vmem:[%s3 + $0xb4] sm:$0xf]
      %v895 = vld [vmem:[%s3 + $0xb8] sm:$0xf]
      %v896 = vld [vmem:[%s3 + $0xbc] sm:$0xf]
      %v897 = vld [vmem:[%s3 + $0xc0] sm:$0xf]
      %v898 = vld [vmem:[%s3 + $0xc4] sm:$0xf]
      %v899 = vld [vmem:[%s3 + $0xc8] sm:$0xf]
      %v900 = vld [vmem:[%s3 + $0xcc] sm:$0xf]
      %v901 = vld [vmem:[%s3 + $0xd0] sm:$0xf]
      %v902 = vld [vmem:[%s3 + $0xd4] sm:$0xf]
      %v903 = vld [vmem:[%s4] sm:$0x1]
      %v918 = vcombine.low %v818, %v752
      %v919 = vcombine.high %v818, %v752
      %v921 = vunpack.c.l.s4 1966171168
      %v922 = vunpack.c.0.s8 %v921
      %v923 = vlaneseq
      %v924 = vshrl.u32 %v923, 7
      %v925 = vsub.s32 %v922, %v924
      %v926 = vrot.slane %v918, %v925
      %v928 = vunpack.c.l.s4 1966171168
      %v929 = vunpack.c.0.s8 %v928
      %v930 = vlaneseq
      %v931 = vshrl.u32 %v930, 7
      %v932 = vsub.s32 %v929, %v931
      %v933 = vrot.slane %v919, %v932
      %v934 = vcombine.high %v926, %v926
      %v935 = vcombine.high %v933, %v933
      %v937 = vunpack.c.l.s4 1966171168
      %v938 = vunpack.c.0.s8 %v937
      %v939 = vlaneseq
      %v940 = vshrl.u32 %v939, 7
      %v941 = vsub.s32 %v938, %v940
      %v942 = vrot.slane %v926, %v941
      %v944 = vunpack.c.l.s4 1966171168
      %v945 = vunpack.c.0.s8 %v944
      %v946 = vlaneseq
      %v947 = vshrl.u32 %v946, 7
      %v948 = vsub.s32 %v945, %v947
      %v949 = vrot.slane %v933, %v948
      %v951 = vunpack.c.l.s4 1966171168
      %v952 = vunpack.c.0.s8 %v951
      %v953 = vlaneseq
      %v954 = vshrl.u32 %v953, 7
      %v955 = vsub.s32 %v952, %v954
      %v956 = vrot.slane %v934, %v955
      %v958 = vunpack.c.l.s4 1966171168
      %v959 = vunpack.c.0.s8 %v958
      %v960 = vlaneseq
      %v961 = vshrl.u32 %v960, 7
      %v962 = vsub.s32 %v959, %v961
      %v963 = vrot.slane %v935, %v962
      %v964 = vcombine.high %v942, %v942
      %v965 = vcombine.high %v949, %v949
      %v966 = vcombine.high %v956, %v956
      %v967 = vcombine.low %v820, %v754
      %v968 = vcombine.high %v820, %v754
      %v970 = vunpack.c.l.s4 1966171168
      %v971 = vunpack.c.0.s8 %v970
      %v972 = vlaneseq
      %v973 = vshrl.u32 %v972, 7
      %v974 = vsub.s32 %v971, %v973
      %v975 = vrot.slane %v967, %v974
      %v977 = vunpack.c.l.s4 1966171168
      %v978 = vunpack.c.0.s8 %v977
      %v979 = vlaneseq
      %v980 = vshrl.u32 %v979, 7
      %v981 = vsub.s32 %v978, %v980
      %v982 = vrot.slane %v968, %v981
      %v983 = vcombine.high %v975, %v975
      %v984 = vcombine.high %v982, %v982
      %v986 = vunpack.c.l.s4 1966171168
      %v987 = vunpack.c.0.s8 %v986
      %v988 = vlaneseq
      %v989 = vshrl.u32 %v988, 7
      %v990 = vsub.s32 %v987, %v989
      %v991 = vrot.slane %v975, %v990
      %v993 = vunpack.c.l.s4 1966171168
      %v994 = vunpack.c.0.s8 %v993
      %v995 = vlaneseq
      %v996 = vshrl.u32 %v995, 7
      %v997 = vsub.s32 %v994, %v996
      %v998 = vrot.slane %v982, %v997
      %v1000 = vunpack.c.l.s4 1966171168
      %v1001 = vunpack.c.0.s8 %v1000
      %v1002 = vlaneseq
      %v1003 = vshrl.u32 %v1002, 7
      %v1004 = vsub.s32 %v1001, %v1003
      %v1005 = vrot.slane %v983, %v1004
      %v1007 = vunpack.c.l.s4 1966171168
      %v1008 = vunpack.c.0.s8 %v1007
      %v1009 = vlaneseq
      %v1010 = vshrl.u32 %v1009, 7
      %v1011 = vsub.s32 %v1008, %v1010
      %v1012 = vrot.slane %v984, %v1011
      %v1013 = vcombine.high %v991, %v991
      %v1014 = vcombine.high %v998, %v998
      %v1015 = vcombine.high %v1005, %v1005
      %v1016 = vcombine.low %v822, %v756
      %v1017 = vcombine.high %v822, %v756
      %v1019 = vunpack.c.l.s4 1966171168
      %v1020 = vunpack.c.0.s8 %v1019
      %v1021 = vlaneseq
      %v1022 = vshrl.u32 %v1021, 7
      %v1023 = vsub.s32 %v1020, %v1022
      %v1024 = vrot.slane %v1016, %v1023
      %v1026 = vunpack.c.l.s4 1966171168
      %v1027 = vunpack.c.0.s8 %v1026
      %v1028 = vlaneseq
      %v1029 = vshrl.u32 %v1028, 7
      %v1030 = vsub.s32 %v1027, %v1029
      %v1031 = vrot.slane %v1017, %v1030
      %v1032 = vcombine.high %v1024, %v1024
      %v1033 = vcombine.high %v1031, %v1031
      %v1035 = vunpack.c.l.s4 1966171168
      %v1036 = vunpack.c.0.s8 %v1035
      %v1037 = vlaneseq
      %v1038 = vshrl.u32 %v1037, 7
      %v1039 = vsub.s32 %v1036, %v1038
      %v1040 = vrot.slane %v1024, %v1039
      %v1042 = vunpack.c.l.s4 1966171168
      %v1043 = vunpack.c.0.s8 %v1042
      %v1044 = vlaneseq
      %v1045 = vshrl.u32 %v1044, 7
      %v1046 = vsub.s32 %v1043, %v1045
      %v1047 = vrot.slane %v1031, %v1046
      %v1049 = vunpack.c.l.s4 1966171168
      %v1050 = vunpack.c.0.s8 %v1049
      %v1051 = vlaneseq
      %v1052 = vshrl.u32 %v1051, 7
      %v1053 = vsub.s32 %v1050, %v1052
      %v1054 = vrot.slane %v1032, %v1053
      %v1056 = vunpack.c.l.s4 1966171168
      %v1057 = vunpack.c.0.s8 %v1056
      %v1058 = vlaneseq
      %v1059 = vshrl.u32 %v1058, 7
      %v1060 = vsub.s32 %v1057, %v1059
      %v1061 = vrot.slane %v1033, %v1060
      %v1062 = vcombine.high %v1040, %v1040
      %v1063 = vcombine.high %v1047, %v1047
      %v1064 = vcombine.high %v1054, %v1054
      %v1065 = vcombine.low %v824, %v758
      %v1066 = vcombine.high %v824, %v758
      %v1068 = vunpack.c.l.s4 1966171168
      %v1069 = vunpack.c.0.s8 %v1068
      %v1070 = vlaneseq
      %v1071 = vshrl.u32 %v1070, 7
      %v1072 = vsub.s32 %v1069, %v1071
      %v1073 = vrot.slane %v1065, %v1072
      %v1075 = vunpack.c.l.s4 1966171168
      %v1076 = vunpack.c.0.s8 %v1075
      %v1077 = vlaneseq
      %v1078 = vshrl.u32 %v1077, 7
      %v1079 = vsub.s32 %v1076, %v1078
      %v1080 = vrot.slane %v1066, %v1079
      %v1081 = vcombine.high %v1073, %v1073
      %v1082 = vcombine.high %v1080, %v1080
      %v1084 = vunpack.c.l.s4 1966171168
      %v1085 = vunpack.c.0.s8 %v1084
      %v1086 = vlaneseq
      %v1087 = vshrl.u32 %v1086, 7
      %v1088 = vsub.s32 %v1085, %v1087
      %v1089 = vrot.slane %v1073, %v1088
      %v1091 = vunpack.c.l.s4 1966171168
      %v1092 = vunpack.c.0.s8 %v1091
      %v1093 = vlaneseq
      %v1094 = vshrl.u32 %v1093, 7
      %v1095 = vsub.s32 %v1092, %v1094
      %v1096 = vrot.slane %v1080, %v1095
      %v1098 = vunpack.c.l.s4 1966171168
      %v1099 = vunpack.c.0.s8 %v1098
      %v1100 = vlaneseq
      %v1101 = vshrl.u32 %v1100, 7
      %v1102 = vsub.s32 %v1099, %v1101
      %v1103 = vrot.slane %v1081, %v1102
      %v1105 = vunpack.c.l.s4 1966171168
      %v1106 = vunpack.c.0.s8 %v1105
      %v1107 = vlaneseq
      %v1108 = vshrl.u32 %v1107, 7
      %v1109 = vsub.s32 %v1106, %v1108
      %v1110 = vrot.slane %v1082, %v1109
      %v1111 = vcombine.high %v1089, %v1089
      %v1112 = vcombine.high %v1096, %v1096
      %v1113 = vcombine.high %v1103, %v1103
      %v1114 = vcombine.low %v826, %v760
      %v1115 = vcombine.high %v826, %v760
      %v1117 = vunpack.c.l.s4 1966171168
      %v1118 = vunpack.c.0.s8 %v1117
      %v1119 = vlaneseq
      %v1120 = vshrl.u32 %v1119, 7
      %v1121 = vsub.s32 %v1118, %v1120
      %v1122 = vrot.slane %v1114, %v1121
      %v1124 = vunpack.c.l.s4 1966171168
      %v1125 = vunpack.c.0.s8 %v1124
      %v1126 = vlaneseq
      %v1127 = vshrl.u32 %v1126, 7
      %v1128 = vsub.s32 %v1125, %v1127
      %v1129 = vrot.slane %v1115, %v1128
      %v1130 = vcombine.high %v1122, %v1122
      %v1131 = vcombine.high %v1129, %v1129
      %v1133 = vunpack.c.l.s4 1966171168
      %v1134 = vunpack.c.0.s8 %v1133
      %v1135 = vlaneseq
      %v1136 = vshrl.u32 %v1135, 7
      %v1137 = vsub.s32 %v1134, %v1136
      %v1138 = vrot.slane %v1122, %v1137
      %v1140 = vunpack.c.l.s4 1966171168
      %v1141 = vunpack.c.0.s8 %v1140
      %v1142 = vlaneseq
      %v1143 = vshrl.u32 %v1142, 7
      %v1144 = vsub.s32 %v1141, %v1143
      %v1145 = vrot.slane %v1129, %v1144
      %v1147 = vunpack.c.l.s4 1966171168
      %v1148 = vunpack.c.0.s8 %v1147
      %v1149 = vlaneseq
      %v1150 = vshrl.u32 %v1149, 7
      %v1151 = vsub.s32 %v1148, %v1150
      %v1152 = vrot.slane %v1130, %v1151
      %v1154 = vunpack.c.l.s4 1966171168
      %v1155 = vunpack.c.0.s8 %v1154
      %v1156 = vlaneseq
      %v1157 = vshrl.u32 %v1156, 7
      %v1158 = vsub.s32 %v1155, %v1157
      %v1159 = vrot.slane %v1131, %v1158
      %v1160 = vcombine.high %v1138, %v1138
      %v1161 = vcombine.high %v1145, %v1145
      %v1162 = vcombine.high %v1152, %v1152
      %v1163 = vcombine.low %v828, %v762
      %v1164 = vcombine.high %v828, %v762
      %v1166 = vunpack.c.l.s4 1966171168
      %v1167 = vunpack.c.0.s8 %v1166
      %v1168 = vlaneseq
      %v1169 = vshrl.u32 %v1168, 7
      %v1170 = vsub.s32 %v1167, %v1169
      %v1171 = vrot.slane %v1163, %v1170
      %v1173 = vunpack.c.l.s4 1966171168
      %v1174 = vunpack.c.0.s8 %v1173
      %v1175 = vlaneseq
      %v1176 = vshrl.u32 %v1175, 7
      %v1177 = vsub.s32 %v1174, %v1176
      %v1178 = vrot.slane %v1164, %v1177
      %v1179 = vcombine.high %v1171, %v1171
      %v1180 = vcombine.high %v1178, %v1178
      %v1182 = vunpack.c.l.s4 1966171168
      %v1183 = vunpack.c.0.s8 %v1182
      %v1184 = vlaneseq
      %v1185 = vshrl.u32 %v1184, 7
      %v1186 = vsub.s32 %v1183, %v1185
      %v1187 = vrot.slane %v1171, %v1186
      %v1189 = vunpack.c.l.s4 1966171168
      %v1190 = vunpack.c.0.s8 %v1189
      %v1191 = vlaneseq
      %v1192 = vshrl.u32 %v1191, 7
      %v1193 = vsub.s32 %v1190, %v1192
      %v1194 = vrot.slane %v1178, %v1193
      %v1196 = vunpack.c.l.s4 1966171168
      %v1197 = vunpack.c.0.s8 %v1196
      %v1198 = vlaneseq
      %v1199 = vshrl.u32 %v1198, 7
      %v1200 = vsub.s32 %v1197, %v1199
      %v1201 = vrot.slane %v1179, %v1200
      %v1203 = vunpack.c.l.s4 1966171168
      %v1204 = vunpack.c.0.s8 %v1203
      %v1205 = vlaneseq
      %v1206 = vshrl.u32 %v1205, 7
      %v1207 = vsub.s32 %v1204, %v1206
      %v1208 = vrot.slane %v1180, %v1207
      %v1209 = vcombine.high %v1187, %v1187
      %v1210 = vcombine.high %v1194, %v1194
      %v1211 = vcombine.high %v1201, %v1201
      %v1212 = vcombine.low %v830, %v764
      %v1213 = vcombine.high %v830, %v764
      %v1215 = vunpack.c.l.s4 1966171168
      %v1216 = vunpack.c.0.s8 %v1215
      %v1217 = vlaneseq
      %v1218 = vshrl.u32 %v1217, 7
      %v1219 = vsub.s32 %v1216, %v1218
      %v1220 = vrot.slane %v1212, %v1219
      %v1222 = vunpack.c.l.s4 1966171168
      %v1223 = vunpack.c.0.s8 %v1222
      %v1224 = vlaneseq
      %v1225 = vshrl.u32 %v1224, 7
      %v1226 = vsub.s32 %v1223, %v1225
      %v1227 = vrot.slane %v1213, %v1226
      %v1228 = vcombine.high %v1220, %v1220
      %v1229 = vcombine.high %v1227, %v1227
      %v1231 = vunpack.c.l.s4 1966171168
      %v1232 = vunpack.c.0.s8 %v1231
      %v1233 = vlaneseq
      %v1234 = vshrl.u32 %v1233, 7
      %v1235 = vsub.s32 %v1232, %v1234
      %v1236 = vrot.slane %v1220, %v1235
      %v1238 = vunpack.c.l.s4 1966171168
      %v1239 = vunpack.c.0.s8 %v1238
      %v1240 = vlaneseq
      %v1241 = vshrl.u32 %v1240, 7
      %v1242 = vsub.s32 %v1239, %v1241
      %v1243 = vrot.slane %v1227, %v1242
      %v1245 = vunpack.c.l.s4 1966171168
      %v1246 = vunpack.c.0.s8 %v1245
      %v1247 = vlaneseq
      %v1248 = vshrl.u32 %v1247, 7
      %v1249 = vsub.s32 %v1246, %v1248
      %v1250 = vrot.slane %v1228, %v1249
      %v1252 = vunpack.c.l.s4 1966171168
      %v1253 = vunpack.c.0.s8 %v1252
      %v1254 = vlaneseq
      %v1255 = vshrl.u32 %v1254, 7
      %v1256 = vsub.s32 %v1253, %v1255
      %v1257 = vrot.slane %v1229, %v1256
      %v1258 = vcombine.high %v1236, %v1236
      %v1259 = vcombine.high %v1243, %v1243
      %v1260 = vcombine.high %v1250, %v1250
      %v1261 = vcombine.low %v832, %v766
      %v1262 = vcombine.high %v832, %v766
      %v1264 = vunpack.c.l.s4 1966171168
      %v1265 = vunpack.c.0.s8 %v1264
      %v1266 = vlaneseq
      %v1267 = vshrl.u32 %v1266, 7
      %v1268 = vsub.s32 %v1265, %v1267
      %v1269 = vrot.slane %v1261, %v1268
      %v1271 = vunpack.c.l.s4 1966171168
      %v1272 = vunpack.c.0.s8 %v1271
      %v1273 = vlaneseq
      %v1274 = vshrl.u32 %v1273, 7
      %v1275 = vsub.s32 %v1272, %v1274
      %v1276 = vrot.slane %v1262, %v1275
      %v1277 = vcombine.high %v1269, %v1269
      %v1278 = vcombine.high %v1276, %v1276
      %v1280 = vunpack.c.l.s4 1966171168
      %v1281 = vunpack.c.0.s8 %v1280
      %v1282 = vlaneseq
      %v1283 = vshrl.u32 %v1282, 7
      %v1284 = vsub.s32 %v1281, %v1283
      %v1285 = vrot.slane %v1269, %v1284
      %v1287 = vunpack.c.l.s4 1966171168
      %v1288 = vunpack.c.0.s8 %v1287
      %v1289 = vlaneseq
      %v1290 = vshrl.u32 %v1289, 7
      %v1291 = vsub.s32 %v1288, %v1290
      %v1292 = vrot.slane %v1276, %v1291
      %v1294 = vunpack.c.l.s4 1966171168
      %v1295 = vunpack.c.0.s8 %v1294
      %v1296 = vlaneseq
      %v1297 = vshrl.u32 %v1296, 7
      %v1298 = vsub.s32 %v1295, %v1297
      %v1299 = vrot.slane %v1277, %v1298
      %v1301 = vunpack.c.l.s4 1966171168
      %v1302 = vunpack.c.0.s8 %v1301
      %v1303 = vlaneseq
      %v1304 = vshrl.u32 %v1303, 7
      %v1305 = vsub.s32 %v1302, %v1304
      %v1306 = vrot.slane %v1278, %v1305
      %v1307 = vcombine.high %v1285, %v1285
      %v1308 = vcombine.high %v1292, %v1292
      %v1309 = vcombine.high %v1299, %v1299
      %v1310 = vcombine.low %v834, %v768
      %v1311 = vcombine.high %v834, %v768
      %v1313 = vunpack.c.l.s4 1966171168
      %v1314 = vunpack.c.0.s8 %v1313
      %v1315 = vlaneseq
      %v1316 = vshrl.u32 %v1315, 7
      %v1317 = vsub.s32 %v1314, %v1316
      %v1318 = vrot.slane %v1310, %v1317
      %v1320 = vunpack.c.l.s4 1966171168
      %v1321 = vunpack.c.0.s8 %v1320
      %v1322 = vlaneseq
      %v1323 = vshrl.u32 %v1322, 7
      %v1324 = vsub.s32 %v1321, %v1323
      %v1325 = vrot.slane %v1311, %v1324
      %v1326 = vcombine.high %v1318, %v1318
      %v1327 = vcombine.high %v1325, %v1325
      %v1329 = vunpack.c.l.s4 1966171168
      %v1330 = vunpack.c.0.s8 %v1329
      %v1331 = vlaneseq
      %v1332 = vshrl.u32 %v1331, 7
      %v1333 = vsub.s32 %v1330, %v1332
      %v1334 = vrot.slane %v1318, %v1333
      %v1336 = vunpack.c.l.s4 1966171168
      %v1337 = vunpack.c.0.s8 %v1336
      %v1338 = vlaneseq
      %v1339 = vshrl.u32 %v1338, 7
      %v1340 = vsub.s32 %v1337, %v1339
      %v1341 = vrot.slane %v1325, %v1340
      %v1343 = vunpack.c.l.s4 1966171168
      %v1344 = vunpack.c.0.s8 %v1343
      %v1345 = vlaneseq
      %v1346 = vshrl.u32 %v1345, 7
      %v1347 = vsub.s32 %v1344, %v1346
      %v1348 = vrot.slane %v1326, %v1347
      %v1350 = vunpack.c.l.s4 1966171168
      %v1351 = vunpack.c.0.s8 %v1350
      %v1352 = vlaneseq
      %v1353 = vshrl.u32 %v1352, 7
      %v1354 = vsub.s32 %v1351, %v1353
      %v1355 = vrot.slane %v1327, %v1354
      %v1356 = vcombine.high %v1334, %v1334
      %v1357 = vcombine.high %v1341, %v1341
      %v1358 = vcombine.high %v1348, %v1348
      %v1359 = vcombine.low %v836, %v770
      %v1360 = vcombine.high %v836, %v770
      %v1362 = vunpack.c.l.s4 1966171168
      %v1363 = vunpack.c.0.s8 %v1362
      %v1364 = vlaneseq
      %v1365 = vshrl.u32 %v1364, 7
      %v1366 = vsub.s32 %v1363, %v1365
      %v1367 = vrot.slane %v1359, %v1366
      %v1369 = vunpack.c.l.s4 1966171168
      %v1370 = vunpack.c.0.s8 %v1369
      %v1371 = vlaneseq
      %v1372 = vshrl.u32 %v1371, 7
      %v1373 = vsub.s32 %v1370, %v1372
      %v1374 = vrot.slane %v1360, %v1373
      %v1375 = vcombine.high %v1367, %v1367
      %v1376 = vcombine.high %v1374, %v1374
      %v1378 = vunpack.c.l.s4 1966171168
      %v1379 = vunpack.c.0.s8 %v1378
      %v1380 = vlaneseq
      %v1381 = vshrl.u32 %v1380, 7
      %v1382 = vsub.s32 %v1379, %v1381
      %v1383 = vrot.slane %v1367, %v1382
      %v1385 = vunpack.c.l.s4 1966171168
      %v1386 = vunpack.c.0.s8 %v1385
      %v1387 = vlaneseq
      %v1388 = vshrl.u32 %v1387, 7
      %v1389 = vsub.s32 %v1386, %v1388
      %v1390 = vrot.slane %v1374, %v1389
      %v1392 = vunpack.c.l.s4 1966171168
      %v1393 = vunpack.c.0.s8 %v1392
      %v1394 = vlaneseq
      %v1395 = vshrl.u32 %v1394, 7
      %v1396 = vsub.s32 %v1393, %v1395
      %v1397 = vrot.slane %v1375, %v1396
      %v1399 = vunpack.c.l.s4 1966171168
      %v1400 = vunpack.c.0.s8 %v1399
      %v1401 = vlaneseq
      %v1402 = vshrl.u32 %v1401, 7
      %v1403 = vsub.s32 %v1400, %v1402
      %v1404 = vrot.slane %v1376, %v1403
      %v1405 = vcombine.high %v1383, %v1383
      %v1406 = vcombine.high %v1390, %v1390
      %v1407 = vcombine.high %v1397, %v1397
      %v1408 = vcombine.low %v838, %v772
      %v1409 = vcombine.high %v838, %v772
      %v1411 = vunpack.c.l.s4 1966171168
      %v1412 = vunpack.c.0.s8 %v1411
      %v1413 = vlaneseq
      %v1414 = vshrl.u32 %v1413, 7
      %v1415 = vsub.s32 %v1412, %v1414
      %v1416 = vrot.slane %v1408, %v1415
      %v1418 = vunpack.c.l.s4 1966171168
      %v1419 = vunpack.c.0.s8 %v1418
      %v1420 = vlaneseq
      %v1421 = vshrl.u32 %v1420, 7
      %v1422 = vsub.s32 %v1419, %v1421
      %v1423 = vrot.slane %v1409, %v1422
      %v1424 = vcombine.high %v1416, %v1416
      %v1425 = vcombine.high %v1423, %v1423
      %v1427 = vunpack.c.l.s4 1966171168
      %v1428 = vunpack.c.0.s8 %v1427
      %v1429 = vlaneseq
      %v1430 = vshrl.u32 %v1429, 7
      %v1431 = vsub.s32 %v1428, %v1430
      %v1432 = vrot.slane %v1416, %v1431
      %v1434 = vunpack.c.l.s4 1966171168
      %v1435 = vunpack.c.0.s8 %v1434
      %v1436 = vlaneseq
      %v1437 = vshrl.u32 %v1436, 7
      %v1438 = vsub.s32 %v1435, %v1437
      %v1439 = vrot.slane %v1423, %v1438
      %v1441 = vunpack.c.l.s4 1966171168
      %v1442 = vunpack.c.0.s8 %v1441
      %v1443 = vlaneseq
      %v1444 = vshrl.u32 %v1443, 7
      %v1445 = vsub.s32 %v1442, %v1444
      %v1446 = vrot.slane %v1424, %v1445
      %v1448 = vunpack.c.l.s4 1966171168
      %v1449 = vunpack.c.0.s8 %v1448
      %v1450 = vlaneseq
      %v1451 = vshrl.u32 %v1450, 7
      %v1452 = vsub.s32 %v1449, %v1451
      %v1453 = vrot.slane %v1425, %v1452
      %v1454 = vcombine.high %v1432, %v1432
      %v1455 = vcombine.high %v1439, %v1439
      %v1456 = vcombine.high %v1446, %v1446
      %v1457 = vcombine.low %v840, %v774
      %v1458 = vcombine.high %v840, %v774
      %v1460 = vunpack.c.l.s4 1966171168
      %v1461 = vunpack.c.0.s8 %v1460
      %v1462 = vlaneseq
      %v1463 = vshrl.u32 %v1462, 7
      %v1464 = vsub.s32 %v1461, %v1463
      %v1465 = vrot.slane %v1457, %v1464
      %v1467 = vunpack.c.l.s4 1966171168
      %v1468 = vunpack.c.0.s8 %v1467
      %v1469 = vlaneseq
      %v1470 = vshrl.u32 %v1469, 7
      %v1471 = vsub.s32 %v1468, %v1470
      %v1472 = vrot.slane %v1458, %v1471
      %v1473 = vcombine.high %v1465, %v1465
      %v1474 = vcombine.high %v1472, %v1472
      %v1476 = vunpack.c.l.s4 1966171168
      %v1477 = vunpack.c.0.s8 %v1476
      %v1478 = vlaneseq
      %v1479 = vshrl.u32 %v1478, 7
      %v1480 = vsub.s32 %v1477, %v1479
      %v1481 = vrot.slane %v1465, %v1480
      %v1483 = vunpack.c.l.s4 1966171168
      %v1484 = vunpack.c.0.s8 %v1483
      %v1485 = vlaneseq
      %v1486 = vshrl.u32 %v1485, 7
      %v1487 = vsub.s32 %v1484, %v1486
      %v1488 = vrot.slane %v1472, %v1487
      %v1490 = vunpack.c.l.s4 1966171168
      %v1491 = vunpack.c.0.s8 %v1490
      %v1492 = vlaneseq
      %v1493 = vshrl.u32 %v1492, 7
      %v1494 = vsub.s32 %v1491, %v1493
      %v1495 = vrot.slane %v1473, %v1494
      %v1497 = vunpack.c.l.s4 1966171168
      %v1498 = vunpack.c.0.s8 %v1497
      %v1499 = vlaneseq
      %v1500 = vshrl.u32 %v1499, 7
      %v1501 = vsub.s32 %v1498, %v1500
      %v1502 = vrot.slane %v1474, %v1501
      %v1503 = vcombine.high %v1481, %v1481
      %v1504 = vcombine.high %v1488, %v1488
      %v1505 = vcombine.high %v1495, %v1495
      %v1506 = vcombine.low %v842, %v776
      %v1507 = vcombine.high %v842, %v776
      %v1509 = vunpack.c.l.s4 1966171168
      %v1510 = vunpack.c.0.s8 %v1509
      %v1511 = vlaneseq
      %v1512 = vshrl.u32 %v1511, 7
      %v1513 = vsub.s32 %v1510, %v1512
      %v1514 = vrot.slane %v1506, %v1513
      %v1516 = vunpack.c.l.s4 1966171168
      %v1517 = vunpack.c.0.s8 %v1516
      %v1518 = vlaneseq
      %v1519 = vshrl.u32 %v1518, 7
      %v1520 = vsub.s32 %v1517, %v1519
      %v1521 = vrot.slane %v1507, %v1520
      %v1522 = vcombine.high %v1514, %v1514
      %v1523 = vcombine.high %v1521, %v1521
      %v1525 = vunpack.c.l.s4 1966171168
      %v1526 = vunpack.c.0.s8 %v1525
      %v1527 = vlaneseq
      %v1528 = vshrl.u32 %v1527, 7
      %v1529 = vsub.s32 %v1526, %v1528
      %v1530 = vrot.slane %v1514, %v1529
      %v1532 = vunpack.c.l.s4 1966171168
      %v1533 = vunpack.c.0.s8 %v1532
      %v1534 = vlaneseq
      %v1535 = vshrl.u32 %v1534, 7
      %v1536 = vsub.s32 %v1533, %v1535
      %v1537 = vrot.slane %v1521, %v1536
      %v1539 = vunpack.c.l.s4 1966171168
      %v1540 = vunpack.c.0.s8 %v1539
      %v1541 = vlaneseq
      %v1542 = vshrl.u32 %v1541, 7
      %v1543 = vsub.s32 %v1540, %v1542
      %v1544 = vrot.slane %v1522, %v1543
      %v1546 = vunpack.c.l.s4 1966171168
      %v1547 = vunpack.c.0.s8 %v1546
      %v1548 = vlaneseq
      %v1549 = vshrl.u32 %v1548, 7
      %v1550 = vsub.s32 %v1547, %v1549
      %v1551 = vrot.slane %v1523, %v1550
      %v1552 = vcombine.high %v1530, %v1530
      %v1553 = vcombine.high %v1537, %v1537
      %v1554 = vcombine.high %v1544, %v1544
      %v1555 = vcombine.low %v844, %v778
      %v1556 = vcombine.high %v844, %v778
      %v1558 = vunpack.c.l.s4 1966171168
      %v1559 = vunpack.c.0.s8 %v1558
      %v1560 = vlaneseq
      %v1561 = vshrl.u32 %v1560, 7
      %v1562 = vsub.s32 %v1559, %v1561
      %v1563 = vrot.slane %v1555, %v1562
      %v1565 = vunpack.c.l.s4 1966171168
      %v1566 = vunpack.c.0.s8 %v1565
      %v1567 = vlaneseq
      %v1568 = vshrl.u32 %v1567, 7
      %v1569 = vsub.s32 %v1566, %v1568
      %v1570 = vrot.slane %v1556, %v1569
      %v1571 = vcombine.high %v1563, %v1563
      %v1572 = vcombine.high %v1570, %v1570
      %v1574 = vunpack.c.l.s4 1966171168
      %v1575 = vunpack.c.0.s8 %v1574
      %v1576 = vlaneseq
      %v1577 = vshrl.u32 %v1576, 7
      %v1578 = vsub.s32 %v1575, %v1577
      %v1579 = vrot.slane %v1563, %v1578
      %v1581 = vunpack.c.l.s4 1966171168
      %v1582 = vunpack.c.0.s8 %v1581
      %v1583 = vlaneseq
      %v1584 = vshrl.u32 %v1583, 7
      %v1585 = vsub.s32 %v1582, %v1584
      %v1586 = vrot.slane %v1570, %v1585
      %v1588 = vunpack.c.l.s4 1966171168
      %v1589 = vunpack.c.0.s8 %v1588
      %v1590 = vlaneseq
      %v1591 = vshrl.u32 %v1590, 7
      %v1592 = vsub.s32 %v1589, %v1591
      %v1593 = vrot.slane %v1571, %v1592
      %v1595 = vunpack.c.l.s4 1966171168
      %v1596 = vunpack.c.0.s8 %v1595
      %v1597 = vlaneseq
      %v1598 = vshrl.u32 %v1597, 7
      %v1599 = vsub.s32 %v1596, %v1598
      %v1600 = vrot.slane %v1572, %v1599
      %v1601 = vcombine.high %v1579, %v1579
      %v1602 = vcombine.high %v1586, %v1586
      %v1603 = vcombine.high %v1593, %v1593
      %v1605 = vcombine.low %v846, %v780
      %v1606 = vcombine.high %v846, %v780
      %v1608 = vunpack.c.l.s4 1966171168
      %v1609 = vunpack.c.0.s8 %v1608
      %v1610 = vlaneseq
      %v1611 = vshrl.u32 %v1610, 7
      %v1612 = vsub.s32 %v1609, %v1611
      %v1613 = vrot.slane %v1605, %v1612
      %v1615 = vunpack.c.l.s4 1966171168
      %v1616 = vunpack.c.0.s8 %v1615
      %v1617 = vlaneseq
      %v1618 = vshrl.u32 %v1617, 7
      %v1619 = vsub.s32 %v1616, %v1618
      %v1620 = vrot.slane %v1606, %v1619
      %v1621 = vcombine.high %v1613, %v1613
      %v1622 = vcombine.high %v1620, %v1620
      %v1624 = vunpack.c.l.s4 1966171168
      %v1625 = vunpack.c.0.s8 %v1624
      %v1626 = vlaneseq
      %v1627 = vshrl.u32 %v1626, 7
      %v1628 = vsub.s32 %v1625, %v1627
      %v1629 = vrot.slane %v1613, %v1628
      %v1631 = vunpack.c.l.s4 1966171168
      %v1632 = vunpack.c.0.s8 %v1631
      %v1633 = vlaneseq
      %v1634 = vshrl.u32 %v1633, 7
      %v1635 = vsub.s32 %v1632, %v1634
      %v1636 = vrot.slane %v1620, %v1635
      %v1638 = vunpack.c.l.s4 1966171168
      %v1639 = vunpack.c.0.s8 %v1638
      %v1640 = vlaneseq
      %v1641 = vshrl.u32 %v1640, 7
      %v1642 = vsub.s32 %v1639, %v1641
      %v1643 = vrot.slane %v1621, %v1642
      %v1645 = vunpack.c.l.s4 1966171168
      %v1646 = vunpack.c.0.s8 %v1645
      %v1647 = vlaneseq
      %v1648 = vshrl.u32 %v1647, 7
      %v1649 = vsub.s32 %v1646, %v1648
      %v1650 = vrot.slane %v1622, %v1649
      %v1651 = vcombine.high %v1629, %v1629
      %v1652 = vcombine.high %v1636, %v1636
      %v1653 = vcombine.high %v1643, %v1643
      %v1654 = vcombine.low %v991, %v1005
      %v1655 = vcombine.low %v1013, %v1015
      %v1656 = vcombine.low %v998, %v1012
      %v1657 = vcombine.low %v1014, %v1040
      %v1659 = vunpack.c.l.s4 1966171168
      %v1660 = vunpack.c.0.s8 %v1659
      %v1661 = vlaneseq
      %v1662 = vshrl.u32 %v1661, 7
      %v1663 = vsub.s32 %v1660, %v1662
      %v1664 = vrot.slane %v1654, %v1663
      %v1666 = vunpack.c.l.s4 1966171168
      %v1667 = vunpack.c.0.s8 %v1666
      %v1668 = vlaneseq
      %v1669 = vshrl.u32 %v1668, 7
      %v1670 = vsub.s32 %v1667, %v1669
      %v1671 = vrot.slane %v1655, %v1670
      %v1673 = vunpack.c.l.s4 1966171168
      %v1674 = vunpack.c.0.s8 %v1673
      %v1675 = vlaneseq
      %v1676 = vshrl.u32 %v1675, 7
      %v1677 = vsub.s32 %v1674, %v1676
      %v1678 = vrot.slane %v1656, %v1677
      %v1680 = vunpack.c.l.s4 1966171168
      %v1681 = vunpack.c.0.s8 %v1680
      %v1682 = vlaneseq
      %v1683 = vshrl.u32 %v1682, 7
      %v1684 = vsub.s32 %v1681, %v1683
      %v1685 = vrot.slane %v1657, %v1684
      %v1686 = vcombine.low %v1664, %v1671
      %v1687 = vcombine.high %v1664, %v1671
      %v1688 = vcombine.low %v1678, %v1685
      %v1689 = vcombine.high %v1678, %v1685
      %v1691 = vunpack.c.l.s4 1966171168
      %v1692 = vunpack.c.0.s8 %v1691
      %v1693 = vlaneseq
      %v1694 = vshrl.u32 %v1693, 7
      %v1695 = vsub.s32 %v1692, %v1694
      %v1696 = vrot.slane %v1686, %v1695
      %v1698 = vunpack.c.l.s4 1966171168
      %v1699 = vunpack.c.0.s8 %v1698
      %v1700 = vlaneseq
      %v1701 = vshrl.u32 %v1700, 7
      %v1702 = vsub.s32 %v1699, %v1701
      %v1703 = vrot.slane %v1687, %v1702
      %v1705 = vunpack.c.l.s4 1966171168
      %v1706 = vunpack.c.0.s8 %v1705
      %v1707 = vlaneseq
      %v1708 = vshrl.u32 %v1707, 7
      %v1709 = vsub.s32 %v1706, %v1708
      %v1710 = vrot.slane %v1688, %v1709
      %v1712 = vunpack.c.l.s4 1966171168
      %v1713 = vunpack.c.0.s8 %v1712
      %v1714 = vlaneseq
      %v1715 = vshrl.u32 %v1714, 7
      %v1716 = vsub.s32 %v1713, %v1715
      %v1717 = vrot.slane %v1689, %v1716
      %v1718 = vcombine.low %v1696, %v1710
      %v1719 = vcombine.low %v1703, %v1717
      %v1720 = vcombine.low %v1054, %v1062
      %v1721 = vcombine.low %v1064, %v1047
      %v1722 = vcombine.low %v1061, %v1063
      %v1723 = vcombine.low %v1089, %v1103
      %v1725 = vunpack.c.l.s4 1966171168
      %v1726 = vunpack.c.0.s8 %v1725
      %v1727 = vlaneseq
      %v1728 = vshrl.u32 %v1727, 7
      %v1729 = vsub.s32 %v1726, %v1728
      %v1730 = vrot.slane %v1720, %v1729
      %v1732 = vunpack.c.l.s4 1966171168
      %v1733 = vunpack.c.0.s8 %v1732
      %v1734 = vlaneseq
      %v1735 = vshrl.u32 %v1734, 7
      %v1736 = vsub.s32 %v1733, %v1735
      %v1737 = vrot.slane %v1721, %v1736
      %v1739 = vunpack.c.l.s4 1966171168
      %v1740 = vunpack.c.0.s8 %v1739
      %v1741 = vlaneseq
      %v1742 = vshrl.u32 %v1741, 7
      %v1743 = vsub.s32 %v1740, %v1742
      %v1744 = vrot.slane %v1722, %v1743
      %v1746 = vunpack.c.l.s4 1966171168
      %v1747 = vunpack.c.0.s8 %v1746
      %v1748 = vlaneseq
      %v1749 = vshrl.u32 %v1748, 7
      %v1750 = vsub.s32 %v1747, %v1749
      %v1751 = vrot.slane %v1723, %v1750
      %v1752 = vcombine.low %v1730, %v1737
      %v1753 = vcombine.high %v1730, %v1737
      %v1754 = vcombine.low %v1744, %v1751
      %v1755 = vcombine.high %v1744, %v1751
      %v1757 = vunpack.c.l.s4 1966171168
      %v1758 = vunpack.c.0.s8 %v1757
      %v1759 = vlaneseq
      %v1760 = vshrl.u32 %v1759, 7
      %v1761 = vsub.s32 %v1758, %v1760
      %v1762 = vrot.slane %v1752, %v1761
      %v1764 = vunpack.c.l.s4 1966171168
      %v1765 = vunpack.c.0.s8 %v1764
      %v1766 = vlaneseq
      %v1767 = vshrl.u32 %v1766, 7
      %v1768 = vsub.s32 %v1765, %v1767
      %v1769 = vrot.slane %v1753, %v1768
      %v1771 = vunpack.c.l.s4 1966171168
      %v1772 = vunpack.c.0.s8 %v1771
      %v1773 = vlaneseq
      %v1774 = vshrl.u32 %v1773, 7
      %v1775 = vsub.s32 %v1772, %v1774
      %v1776 = vrot.slane %v1754, %v1775
      %v1778 = vunpack.c.l.s4 1966171168
      %v1779 = vunpack.c.0.s8 %v1778
      %v1780 = vlaneseq
      %v1781 = vshrl.u32 %v1780, 7
      %v1782 = vsub.s32 %v1779, %v1781
      %v1783 = vrot.slane %v1755, %v1782
      %v1784 = vcombine.low %v1762, %v1776
      %v1785 = vcombine.low %v1769, %v1783
      %v1786 = vcombine.low %v1111, %v1113
      %v1787 = vcombine.low %v1096, %v1110
      %v1788 = vcombine.low %v1112, %v1138
      %v1789 = vcombine.low %v1152, %v1160
      %v1791 = vunpack.c.l.s4 1966171168
      %v1792 = vunpack.c.0.s8 %v1791
      %v1793 = vlaneseq
      %v1794 = vshrl.u32 %v1793, 7
      %v1795 = vsub.s32 %v1792, %v1794
      %v1796 = vrot.slane %v1786, %v1795
      %v1798 = vunpack.c.l.s4 1966171168
      %v1799 = vunpack.c.0.s8 %v1798
      %v1800 = vlaneseq
      %v1801 = vshrl.u32 %v1800, 7
      %v1802 = vsub.s32 %v1799, %v1801
      %v1803 = vrot.slane %v1787, %v1802
      %v1805 = vunpack.c.l.s4 1966171168
      %v1806 = vunpack.c.0.s8 %v1805
      %v1807 = vlaneseq
      %v1808 = vshrl.u32 %v1807, 7
      %v1809 = vsub.s32 %v1806, %v1808
      %v1810 = vrot.slane %v1788, %v1809
      %v1812 = vunpack.c.l.s4 1966171168
      %v1813 = vunpack.c.0.s8 %v1812
      %v1814 = vlaneseq
      %v1815 = vshrl.u32 %v1814, 7
      %v1816 = vsub.s32 %v1813, %v1815
      %v1817 = vrot.slane %v1789, %v1816
      %v1818 = vcombine.low %v1796, %v1803
      %v1819 = vcombine.high %v1796, %v1803
      %v1820 = vcombine.low %v1810, %v1817
      %v1821 = vcombine.high %v1810, %v1817
      %v1823 = vunpack.c.l.s4 1966171168
      %v1824 = vunpack.c.0.s8 %v1823
      %v1825 = vlaneseq
      %v1826 = vshrl.u32 %v1825, 7
      %v1827 = vsub.s32 %v1824, %v1826
      %v1828 = vrot.slane %v1818, %v1827
      %v1830 = vunpack.c.l.s4 1966171168
      %v1831 = vunpack.c.0.s8 %v1830
      %v1832 = vlaneseq
      %v1833 = vshrl.u32 %v1832, 7
      %v1834 = vsub.s32 %v1831, %v1833
      %v1835 = vrot.slane %v1819, %v1834
      %v1837 = vunpack.c.l.s4 1966171168
      %v1838 = vunpack.c.0.s8 %v1837
      %v1839 = vlaneseq
      %v1840 = vshrl.u32 %v1839, 7
      %v1841 = vsub.s32 %v1838, %v1840
      %v1842 = vrot.slane %v1820, %v1841
      %v1844 = vunpack.c.l.s4 1966171168
      %v1845 = vunpack.c.0.s8 %v1844
      %v1846 = vlaneseq
      %v1847 = vshrl.u32 %v1846, 7
      %v1848 = vsub.s32 %v1845, %v1847
      %v1849 = vrot.slane %v1821, %v1848
      %v1850 = vcombine.low %v1828, %v1842
      %v1851 = vcombine.low %v1835, %v1849
      %v1852 = vcombine.low %v1162, %v1145
      %v1853 = vcombine.low %v1159, %v1161
      %v1854 = vcombine.low %v1187, %v1201
      %v1855 = vcombine.low %v1209, %v1211
      %v1857 = vunpack.c.l.s4 1966171168
      %v1858 = vunpack.c.0.s8 %v1857
      %v1859 = vlaneseq
      %v1860 = vshrl.u32 %v1859, 7
      %v1861 = vsub.s32 %v1858, %v1860
      %v1862 = vrot.slane %v1852, %v1861
      %v1864 = vunpack.c.l.s4 1966171168
      %v1865 = vunpack.c.0.s8 %v1864
      %v1866 = vlaneseq
      %v1867 = vshrl.u32 %v1866, 7
      %v1868 = vsub.s32 %v1865, %v1867
      %v1869 = vrot.slane %v1853, %v1868
      %v1871 = vunpack.c.l.s4 1966171168
      %v1872 = vunpack.c.0.s8 %v1871
      %v1873 = vlaneseq
      %v1874 = vshrl.u32 %v1873, 7
      %v1875 = vsub.s32 %v1872, %v1874
      %v1876 = vrot.slane %v1854, %v1875
      %v1878 = vunpack.c.l.s4 1966171168
      %v1879 = vunpack.c.0.s8 %v1878
      %v1880 = vlaneseq
      %v1881 = vshrl.u32 %v1880, 7
      %v1882 = vsub.s32 %v1879, %v1881
      %v1883 = vrot.slane %v1855, %v1882
      %v1884 = vcombine.low %v1862, %v1869
      %v1885 = vcombine.high %v1862, %v1869
      %v1886 = vcombine.low %v1876, %v1883
      %v1887 = vcombine.high %v1876, %v1883
      %v1889 = vunpack.c.l.s4 1966171168
      %v1890 = vunpack.c.0.s8 %v1889
      %v1891 = vlaneseq
      %v1892 = vshrl.u32 %v1891, 7
      %v1893 = vsub.s32 %v1890, %v1892
      %v1894 = vrot.slane %v1884, %v1893
      %v1896 = vunpack.c.l.s4 1966171168
      %v1897 = vunpack.c.0.s8 %v1896
      %v1898 = vlaneseq
      %v1899 = vshrl.u32 %v1898, 7
      %v1900 = vsub.s32 %v1897, %v1899
      %v1901 = vrot.slane %v1885, %v1900
      %v1903 = vunpack.c.l.s4 1966171168
      %v1904 = vunpack.c.0.s8 %v1903
      %v1905 = vlaneseq
      %v1906 = vshrl.u32 %v1905, 7
      %v1907 = vsub.s32 %v1904, %v1906
      %v1908 = vrot.slane %v1886, %v1907
      %v1910 = vunpack.c.l.s4 1966171168
      %v1911 = vunpack.c.0.s8 %v1910
      %v1912 = vlaneseq
      %v1913 = vshrl.u32 %v1912, 7
      %v1914 = vsub.s32 %v1911, %v1913
      %v1915 = vrot.slane %v1887, %v1914
      %v1916 = vcombine.low %v1894, %v1908
      %v1917 = vcombine.low %v1901, %v1915
      %v1918 = vcombine.low %v1194, %v1208
      %v1919 = vcombine.low %v1210, %v1236
      %v1920 = vcombine.low %v1250, %v1258
      %v1921 = vcombine.low %v1260, %v1243
      %v1923 = vunpack.c.l.s4 1966171168
      %v1924 = vunpack.c.0.s8 %v1923
      %v1925 = vlaneseq
      %v1926 = vshrl.u32 %v1925, 7
      %v1927 = vsub.s32 %v1924, %v1926
      %v1928 = vrot.slane %v1918, %v1927
      %v1930 = vunpack.c.l.s4 1966171168
      %v1931 = vunpack.c.0.s8 %v1930
      %v1932 = vlaneseq
      %v1933 = vshrl.u32 %v1932, 7
      %v1934 = vsub.s32 %v1931, %v1933
      %v1935 = vrot.slane %v1919, %v1934
      %v1937 = vunpack.c.l.s4 1966171168
      %v1938 = vunpack.c.0.s8 %v1937
      %v1939 = vlaneseq
      %v1940 = vshrl.u32 %v1939, 7
      %v1941 = vsub.s32 %v1938, %v1940
      %v1942 = vrot.slane %v1920, %v1941
      %v1944 = vunpack.c.l.s4 1966171168
      %v1945 = vunpack.c.0.s8 %v1944
      %v1946 = vlaneseq
      %v1947 = vshrl.u32 %v1946, 7
      %v1948 = vsub.s32 %v1945, %v1947
      %v1949 = vrot.slane %v1921, %v1948
      %v1950 = vcombine.low %v1928, %v1935
      %v1951 = vcombine.high %v1928, %v1935
      %v1952 = vcombine.low %v1942, %v1949
      %v1953 = vcombine.high %v1942, %v1949
      %v1955 = vunpack.c.l.s4 1966171168
      %v1956 = vunpack.c.0.s8 %v1955
      %v1957 = vlaneseq
      %v1958 = vshrl.u32 %v1957, 7
      %v1959 = vsub.s32 %v1956, %v1958
      %v1960 = vrot.slane %v1950, %v1959
      %v1962 = vunpack.c.l.s4 1966171168
      %v1963 = vunpack.c.0.s8 %v1962
      %v1964 = vlaneseq
      %v1965 = vshrl.u32 %v1964, 7
      %v1966 = vsub.s32 %v1963, %v1965
      %v1967 = vrot.slane %v1951, %v1966
      %v1969 = vunpack.c.l.s4 1966171168
      %v1970 = vunpack.c.0.s8 %v1969
      %v1971 = vlaneseq
      %v1972 = vshrl.u32 %v1971, 7
      %v1973 = vsub.s32 %v1970, %v1972
      %v1974 = vrot.slane %v1952, %v1973
      %v1976 = vunpack.c.l.s4 1966171168
      %v1977 = vunpack.c.0.s8 %v1976
      %v1978 = vlaneseq
      %v1979 = vshrl.u32 %v1978, 7
      %v1980 = vsub.s32 %v1977, %v1979
      %v1981 = vrot.slane %v1953, %v1980
      %v1982 = vcombine.low %v1960, %v1974
      %v1983 = vcombine.low %v1967, %v1981
      %v1984 = vcombine.low %v1257, %v1259
      %v1985 = vcombine.low %v1285, %v1299
      %v1986 = vcombine.low %v1307, %v1309
      %v1987 = vcombine.low %v1292, %v1306
      %v1989 = vunpack.c.l.s4 1966171168
      %v1990 = vunpack.c.0.s8 %v1989
      %v1991 = vlaneseq
      %v1992 = vshrl.u32 %v1991, 7
      %v1993 = vsub.s32 %v1990, %v1992
      %v1994 = vrot.slane %v1984, %v1993
      %v1996 = vunpack.c.l.s4 1966171168
      %v1997 = vunpack.c.0.s8 %v1996
      %v1998 = vlaneseq
      %v1999 = vshrl.u32 %v1998, 7
      %v2000 = vsub.s32 %v1997, %v1999
      %v2001 = vrot.slane %v1985, %v2000
      %v2003 = vunpack.c.l.s4 1966171168
      %v2004 = vunpack.c.0.s8 %v2003
      %v2005 = vlaneseq
      %v2006 = vshrl.u32 %v2005, 7
      %v2007 = vsub.s32 %v2004, %v2006
      %v2008 = vrot.slane %v1986, %v2007
      %v2010 = vunpack.c.l.s4 1966171168
      %v2011 = vunpack.c.0.s8 %v2010
      %v2012 = vlaneseq
      %v2013 = vshrl.u32 %v2012, 7
      %v2014 = vsub.s32 %v2011, %v2013
      %v2015 = vrot.slane %v1987, %v2014
      %v2016 = vcombine.low %v1994, %v2001
      %v2017 = vcombine.high %v1994, %v2001
      %v2018 = vcombine.low %v2008, %v2015
      %v2019 = vcombine.high %v2008, %v2015
      %v2021 = vunpack.c.l.s4 1966171168
      %v2022 = vunpack.c.0.s8 %v2021
      %v2023 = vlaneseq
      %v2024 = vshrl.u32 %v2023, 7
      %v2025 = vsub.s32 %v2022, %v2024
      %v2026 = vrot.slane %v2016, %v2025
      %v2028 = vunpack.c.l.s4 1966171168
      %v2029 = vunpack.c.0.s8 %v2028
      %v2030 = vlaneseq
      %v2031 = vshrl.u32 %v2030, 7
      %v2032 = vsub.s32 %v2029, %v2031
      %v2033 = vrot.slane %v2017, %v2032
      %v2035 = vunpack.c.l.s4 1966171168
      %v2036 = vunpack.c.0.s8 %v2035
      %v2037 = vlaneseq
      %v2038 = vshrl.u32 %v2037, 7
      %v2039 = vsub.s32 %v2036, %v2038
      %v2040 = vrot.slane %v2018, %v2039
      %v2042 = vunpack.c.l.s4 1966171168
      %v2043 = vunpack.c.0.s8 %v2042
      %v2044 = vlaneseq
      %v2045 = vshrl.u32 %v2044, 7
      %v2046 = vsub.s32 %v2043, %v2045
      %v2047 = vrot.slane %v2019, %v2046
      %v2048 = vcombine.low %v2026, %v2040
      %v2049 = vcombine.low %v2033, %v2047
      %v2050 = vcombine.low %v1308, %v1334
      %v2051 = vcombine.low %v1348, %v1356
      %v2052 = vcombine.low %v1358, %v1341
      %v2053 = vcombine.low %v1355, %v1357
      %v2055 = vunpack.c.l.s4 1966171168
      %v2056 = vunpack.c.0.s8 %v2055
      %v2057 = vlaneseq
      %v2058 = vshrl.u32 %v2057, 7
      %v2059 = vsub.s32 %v2056, %v2058
      %v2060 = vrot.slane %v2050, %v2059
      %v2062 = vunpack.c.l.s4 1966171168
      %v2063 = vunpack.c.0.s8 %v2062
      %v2064 = vlaneseq
      %v2065 = vshrl.u32 %v2064, 7
      %v2066 = vsub.s32 %v2063, %v2065
      %v2067 = vrot.slane %v2051, %v2066
      %v2069 = vunpack.c.l.s4 1966171168
      %v2070 = vunpack.c.0.s8 %v2069
      %v2071 = vlaneseq
      %v2072 = vshrl.u32 %v2071, 7
      %v2073 = vsub.s32 %v2070, %v2072
      %v2074 = vrot.slane %v2052, %v2073
      %v2076 = vunpack.c.l.s4 1966171168
      %v2077 = vunpack.c.0.s8 %v2076
      %v2078 = vlaneseq
      %v2079 = vshrl.u32 %v2078, 7
      %v2080 = vsub.s32 %v2077, %v2079
      %v2081 = vrot.slane %v2053, %v2080
      %v2082 = vcombine.low %v2060, %v2067
      %v2083 = vcombine.high %v2060, %v2067
      %v2084 = vcombine.low %v2074, %v2081
      %v2085 = vcombine.high %v2074, %v2081
      %v2087 = vunpack.c.l.s4 1966171168
      %v2088 = vunpack.c.0.s8 %v2087
      %v2089 = vlaneseq
      %v2090 = vshrl.u32 %v2089, 7
      %v2091 = vsub.s32 %v2088, %v2090
      %v2092 = vrot.slane %v2082, %v2091
      %v2094 = vunpack.c.l.s4 1966171168
      %v2095 = vunpack.c.0.s8 %v2094
      %v2096 = vlaneseq
      %v2097 = vshrl.u32 %v2096, 7
      %v2098 = vsub.s32 %v2095, %v2097
      %v2099 = vrot.slane %v2083, %v2098
      %v2101 = vunpack.c.l.s4 1966171168
      %v2102 = vunpack.c.0.s8 %v2101
      %v2103 = vlaneseq
      %v2104 = vshrl.u32 %v2103, 7
      %v2105 = vsub.s32 %v2102, %v2104
      %v2106 = vrot.slane %v2084, %v2105
      %v2108 = vunpack.c.l.s4 1966171168
      %v2109 = vunpack.c.0.s8 %v2108
      %v2110 = vlaneseq
      %v2111 = vshrl.u32 %v2110, 7
      %v2112 = vsub.s32 %v2109, %v2111
      %v2113 = vrot.slane %v2085, %v2112
      %v2114 = vcombine.low %v2092, %v2106
      %v2115 = vcombine.low %v2099, %v2113
      %v2116 = vcombine.low %v1383, %v1397
      %v2117 = vcombine.low %v1405, %v1407
      %v2118 = vcombine.low %v1390, %v1404
      %v2119 = vcombine.low %v1406, %v1432
      %v2121 = vunpack.c.l.s4 1966171168
      %v2122 = vunpack.c.0.s8 %v2121
      %v2123 = vlaneseq
      %v2124 = vshrl.u32 %v2123, 7
      %v2125 = vsub.s32 %v2122, %v2124
      %v2126 = vrot.slane %v2116, %v2125
      %v2128 = vunpack.c.l.s4 1966171168
      %v2129 = vunpack.c.0.s8 %v2128
      %v2130 = vlaneseq
      %v2131 = vshrl.u32 %v2130, 7
      %v2132 = vsub.s32 %v2129, %v2131
      %v2133 = vrot.slane %v2117, %v2132
      %v2135 = vunpack.c.l.s4 1966171168
      %v2136 = vunpack.c.0.s8 %v2135
      %v2137 = vlaneseq
      %v2138 = vshrl.u32 %v2137, 7
      %v2139 = vsub.s32 %v2136, %v2138
      %v2140 = vrot.slane %v2118, %v2139
      %v2142 = vunpack.c.l.s4 1966171168
      %v2143 = vunpack.c.0.s8 %v2142
      %v2144 = vlaneseq
      %v2145 = vshrl.u32 %v2144, 7
      %v2146 = vsub.s32 %v2143, %v2145
      %v2147 = vrot.slane %v2119, %v2146
      %v2148 = vcombine.low %v2126, %v2133
      %v2149 = vcombine.high %v2126, %v2133
      %v2150 = vcombine.low %v2140, %v2147
      %v2151 = vcombine.high %v2140, %v2147
      %v2153 = vunpack.c.l.s4 1966171168
      %v2154 = vunpack.c.0.s8 %v2153
      %v2155 = vlaneseq
      %v2156 = vshrl.u32 %v2155, 7
      %v2157 = vsub.s32 %v2154, %v2156
      %v2158 = vrot.slane %v2148, %v2157
      %v2160 = vunpack.c.l.s4 1966171168
      %v2161 = vunpack.c.0.s8 %v2160
      %v2162 = vlaneseq
      %v2163 = vshrl.u32 %v2162, 7
      %v2164 = vsub.s32 %v2161, %v2163
      %v2165 = vrot.slane %v2149, %v2164
      %v2167 = vunpack.c.l.s4 1966171168
      %v2168 = vunpack.c.0.s8 %v2167
      %v2169 = vlaneseq
      %v2170 = vshrl.u32 %v2169, 7
      %v2171 = vsub.s32 %v2168, %v2170
      %v2172 = vrot.slane %v2150, %v2171
      %v2174 = vunpack.c.l.s4 1966171168
      %v2175 = vunpack.c.0.s8 %v2174
      %v2176 = vlaneseq
      %v2177 = vshrl.u32 %v2176, 7
      %v2178 = vsub.s32 %v2175, %v2177
      %v2179 = vrot.slane %v2151, %v2178
      %v2180 = vcombine.low %v2158, %v2172
      %v2181 = vcombine.low %v2165, %v2179
      %v2182 = vcombine.low %v1446, %v1454
      %v2183 = vcombine.low %v1456, %v1439
      %v2184 = vcombine.low %v1453, %v1455
      %v2185 = vcombine.low %v1481, %v1495
      %v2187 = vunpack.c.l.s4 1966171168
      %v2188 = vunpack.c.0.s8 %v2187
      %v2189 = vlaneseq
      %v2190 = vshrl.u32 %v2189, 7
      %v2191 = vsub.s32 %v2188, %v2190
      %v2192 = vrot.slane %v2182, %v2191
      %v2194 = vunpack.c.l.s4 1966171168
      %v2195 = vunpack.c.0.s8 %v2194
      %v2196 = vlaneseq
      %v2197 = vshrl.u32 %v2196, 7
      %v2198 = vsub.s32 %v2195, %v2197
      %v2199 = vrot.slane %v2183, %v2198
      %v2201 = vunpack.c.l.s4 1966171168
      %v2202 = vunpack.c.0.s8 %v2201
      %v2203 = vlaneseq
      %v2204 = vshrl.u32 %v2203, 7
      %v2205 = vsub.s32 %v2202, %v2204
      %v2206 = vrot.slane %v2184, %v2205
      %v2208 = vunpack.c.l.s4 1966171168
      %v2209 = vunpack.c.0.s8 %v2208
      %v2210 = vlaneseq
      %v2211 = vshrl.u32 %v2210, 7
      %v2212 = vsub.s32 %v2209, %v2211
      %v2213 = vrot.slane %v2185, %v2212
      %v2214 = vcombine.low %v2192, %v2199
      %v2215 = vcombine.high %v2192, %v2199
      %v2216 = vcombine.low %v2206, %v2213
      %v2217 = vcombine.high %v2206, %v2213
      %v2219 = vunpack.c.l.s4 1966171168
      %v2220 = vunpack.c.0.s8 %v2219
      %v2221 = vlaneseq
      %v2222 = vshrl.u32 %v2221, 7
      %v2223 = vsub.s32 %v2220, %v2222
      %v2224 = vrot.slane %v2214, %v2223
      %v2226 = vunpack.c.l.s4 1966171168
      %v2227 = vunpack.c.0.s8 %v2226
      %v2228 = vlaneseq
      %v2229 = vshrl.u32 %v2228, 7
      %v2230 = vsub.s32 %v2227, %v2229
      %v2231 = vrot.slane %v2215, %v2230
      %v2233 = vunpack.c.l.s4 1966171168
      %v2234 = vunpack.c.0.s8 %v2233
      %v2235 = vlaneseq
      %v2236 = vshrl.u32 %v2235, 7
      %v2237 = vsub.s32 %v2234, %v2236
      %v2238 = vrot.slane %v2216, %v2237
      %v2240 = vunpack.c.l.s4 1966171168
      %v2241 = vunpack.c.0.s8 %v2240
      %v2242 = vlaneseq
      %v2243 = vshrl.u32 %v2242, 7
      %v2244 = vsub.s32 %v2241, %v2243
      %v2245 = vrot.slane %v2217, %v2244
      %v2246 = vcombine.low %v2224, %v2238
      %v2247 = vcombine.low %v2231, %v2245
      %v2248 = vcombine.low %v1503, %v1505
      %v2249 = vcombine.low %v1488, %v1502
      %v2250 = vcombine.low %v1504, %v1530
      %v2251 = vcombine.low %v1544, %v1552
      %v2253 = vunpack.c.l.s4 1966171168
      %v2254 = vunpack.c.0.s8 %v2253
      %v2255 = vlaneseq
      %v2256 = vshrl.u32 %v2255, 7
      %v2257 = vsub.s32 %v2254, %v2256
      %v2258 = vrot.slane %v2248, %v2257
      %v2260 = vunpack.c.l.s4 1966171168
      %v2261 = vunpack.c.0.s8 %v2260
      %v2262 = vlaneseq
      %v2263 = vshrl.u32 %v2262, 7
      %v2264 = vsub.s32 %v2261, %v2263
      %v2265 = vrot.slane %v2249, %v2264
      %v2267 = vunpack.c.l.s4 1966171168
      %v2268 = vunpack.c.0.s8 %v2267
      %v2269 = vlaneseq
      %v2270 = vshrl.u32 %v2269, 7
      %v2271 = vsub.s32 %v2268, %v2270
      %v2272 = vrot.slane %v2250, %v2271
      %v2274 = vunpack.c.l.s4 1966171168
      %v2275 = vunpack.c.0.s8 %v2274
      %v2276 = vlaneseq
      %v2277 = vshrl.u32 %v2276, 7
      %v2278 = vsub.s32 %v2275, %v2277
      %v2279 = vrot.slane %v2251, %v2278
      %v2280 = vcombine.low %v2258, %v2265
      %v2281 = vcombine.high %v2258, %v2265
      %v2282 = vcombine.low %v2272, %v2279
      %v2283 = vcombine.high %v2272, %v2279
      %v2285 = vunpack.c.l.s4 1966171168
      %v2286 = vunpack.c.0.s8 %v2285
      %v2287 = vlaneseq
      %v2288 = vshrl.u32 %v2287, 7
      %v2289 = vsub.s32 %v2286, %v2288
      %v2290 = vrot.slane %v2280, %v2289
      %v2292 = vunpack.c.l.s4 1966171168
      %v2293 = vunpack.c.0.s8 %v2292
      %v2294 = vlaneseq
      %v2295 = vshrl.u32 %v2294, 7
      %v2296 = vsub.s32 %v2293, %v2295
      %v2297 = vrot.slane %v2281, %v2296
      %v2299 = vunpack.c.l.s4 1966171168
      %v2300 = vunpack.c.0.s8 %v2299
      %v2301 = vlaneseq
      %v2302 = vshrl.u32 %v2301, 7
      %v2303 = vsub.s32 %v2300, %v2302
      %v2304 = vrot.slane %v2282, %v2303
      %v2306 = vunpack.c.l.s4 1966171168
      %v2307 = vunpack.c.0.s8 %v2306
      %v2308 = vlaneseq
      %v2309 = vshrl.u32 %v2308, 7
      %v2310 = vsub.s32 %v2307, %v2309
      %v2311 = vrot.slane %v2283, %v2310
      %v2312 = vcombine.low %v2290, %v2304
      %v2313 = vcombine.low %v2297, %v2311
      %v2314 = vcombine.low %v1554, %v1537
      %v2315 = vcombine.low %v1551, %v1553
      %v2316 = vcombine.low %v1579, %v1593
      %v2317 = vcombine.low %v1601, %v1603
      %v2319 = vunpack.c.l.s4 1966171168
      %v2320 = vunpack.c.0.s8 %v2319
      %v2321 = vlaneseq
      %v2322 = vshrl.u32 %v2321, 7
      %v2323 = vsub.s32 %v2320, %v2322
      %v2324 = vrot.slane %v2314, %v2323
      %v2326 = vunpack.c.l.s4 1966171168
      %v2327 = vunpack.c.0.s8 %v2326
      %v2328 = vlaneseq
      %v2329 = vshrl.u32 %v2328, 7
      %v2330 = vsub.s32 %v2327, %v2329
      %v2331 = vrot.slane %v2315, %v2330
      %v2333 = vunpack.c.l.s4 1966171168
      %v2334 = vunpack.c.0.s8 %v2333
      %v2335 = vlaneseq
      %v2336 = vshrl.u32 %v2335, 7
      %v2337 = vsub.s32 %v2334, %v2336
      %v2338 = vrot.slane %v2316, %v2337
      %v2340 = vunpack.c.l.s4 1966171168
      %v2341 = vunpack.c.0.s8 %v2340
      %v2342 = vlaneseq
      %v2343 = vshrl.u32 %v2342, 7
      %v2344 = vsub.s32 %v2341, %v2343
      %v2345 = vrot.slane %v2317, %v2344
      %v2346 = vcombine.low %v2324, %v2331
      %v2347 = vcombine.high %v2324, %v2331
      %v2348 = vcombine.low %v2338, %v2345
      %v2349 = vcombine.high %v2338, %v2345
      %v2351 = vunpack.c.l.s4 1966171168
      %v2352 = vunpack.c.0.s8 %v2351
      %v2353 = vlaneseq
      %v2354 = vshrl.u32 %v2353, 7
      %v2355 = vsub.s32 %v2352, %v2354
      %v2356 = vrot.slane %v2346, %v2355
      %v2358 = vunpack.c.l.s4 1966171168
      %v2359 = vunpack.c.0.s8 %v2358
      %v2360 = vlaneseq
      %v2361 = vshrl.u32 %v2360, 7
      %v2362 = vsub.s32 %v2359, %v2361
      %v2363 = vrot.slane %v2347, %v2362
      %v2365 = vunpack.c.l.s4 1966171168
      %v2366 = vunpack.c.0.s8 %v2365
      %v2367 = vlaneseq
      %v2368 = vshrl.u32 %v2367, 7
      %v2369 = vsub.s32 %v2366, %v2368
      %v2370 = vrot.slane %v2348, %v2369
      %v2372 = vunpack.c.l.s4 1966171168
      %v2373 = vunpack.c.0.s8 %v2372
      %v2374 = vlaneseq
      %v2375 = vshrl.u32 %v2374, 7
      %v2376 = vsub.s32 %v2373, %v2375
      %v2377 = vrot.slane %v2349, %v2376
      %v2378 = vcombine.low %v2356, %v2370
      %v2379 = vcombine.low %v2363, %v2377
      %v2380 = vcombine.low %v1586, %v1600
      %v2381 = vcombine.low %v1602, %v1629
      %v2382 = vcombine.low %v1643, %v1651
      %v2383 = vcombine.low %v1653, %v1636
      %v2385 = vunpack.c.l.s4 1966171168
      %v2386 = vunpack.c.0.s8 %v2385
      %v2387 = vlaneseq
      %v2388 = vshrl.u32 %v2387, 7
      %v2389 = vsub.s32 %v2386, %v2388
      %v2390 = vrot.slane %v2380, %v2389
      %v2392 = vunpack.c.l.s4 1966171168
      %v2393 = vunpack.c.0.s8 %v2392
      %v2394 = vlaneseq
      %v2395 = vshrl.u32 %v2394, 7
      %v2396 = vsub.s32 %v2393, %v2395
      %v2397 = vrot.slane %v2381, %v2396
      %v2399 = vunpack.c.l.s4 1966171168
      %v2400 = vunpack.c.0.s8 %v2399
      %v2401 = vlaneseq
      %v2402 = vshrl.u32 %v2401, 7
      %v2403 = vsub.s32 %v2400, %v2402
      %v2404 = vrot.slane %v2382, %v2403
      %v2406 = vunpack.c.l.s4 1966171168
      %v2407 = vunpack.c.0.s8 %v2406
      %v2408 = vlaneseq
      %v2409 = vshrl.u32 %v2408, 7
      %v2410 = vsub.s32 %v2407, %v2409
      %v2411 = vrot.slane %v2383, %v2410
      %v2412 = vcombine.low %v2390, %v2397
      %v2413 = vcombine.high %v2390, %v2397
      %v2414 = vcombine.low %v2404, %v2411
      %v2415 = vcombine.high %v2404, %v2411
      %v2417 = vunpack.c.l.s4 1966171168
      %v2418 = vunpack.c.0.s8 %v2417
      %v2419 = vlaneseq
      %v2420 = vshrl.u32 %v2419, 7
      %v2421 = vsub.s32 %v2418, %v2420
      %v2422 = vrot.slane %v2412, %v2421
      %v2424 = vunpack.c.l.s4 1966171168
      %v2425 = vunpack.c.0.s8 %v2424
      %v2426 = vlaneseq
      %v2427 = vshrl.u32 %v2426, 7
      %v2428 = vsub.s32 %v2425, %v2427
      %v2429 = vrot.slane %v2413, %v2428
      %v2431 = vunpack.c.l.s4 1966171168
      %v2432 = vunpack.c.0.s8 %v2431
      %v2433 = vlaneseq
      %v2434 = vshrl.u32 %v2433, 7
      %v2435 = vsub.s32 %v2432, %v2434
      %v2436 = vrot.slane %v2414, %v2435
      %v2438 = vunpack.c.l.s4 1966171168
      %v2439 = vunpack.c.0.s8 %v2438
      %v2440 = vlaneseq
      %v2441 = vshrl.u32 %v2440, 7
      %v2442 = vsub.s32 %v2439, %v2441
      %v2443 = vrot.slane %v2415, %v2442
      %v2444 = vcombine.low %v2422, %v2436
      %v2445 = vcombine.low %v2429, %v2443
      %v2446 = vcombine.low %v1650, %v1652
      %v2448 = vunpack.c.l.s4 1966171168
      %v2449 = vunpack.c.0.s8 %v2448
      %v2450 = vlaneseq
      %v2451 = vshrl.u32 %v2450, 7
      %v2452 = vsub.s32 %v2449, %v2451
      %v2453 = vrot.slane %v2446, %v2452
      %v2454 = vcombine.high %v2453, %v2453
      %v2456 = vunpack.c.l.s4 1966171168
      %v2457 = vunpack.c.0.s8 %v2456
      %v2458 = vlaneseq
      %v2459 = vshrl.u32 %v2458, 7
      %v2460 = vsub.s32 %v2457, %v2459
      %v2461 = vrot.slane %v2453, %v2460
      %v2463 = vunpack.c.l.s4 1966171168
      %v2464 = vunpack.c.0.s8 %v2463
      %v2465 = vlaneseq
      %v2466 = vshrl.u32 %v2465, 7
      %v2467 = vsub.s32 %v2464, %v2466
      %v2468 = vrot.slane %v2454, %v2467
      %v2500 = vunpack.c.l.b16 %v867
      %v2501 = vunpack.c.l.b16 %v868
      %v2502 = vunpack.c.l.b16 %v869
      %v2503 = vunpack.c.l.b16 %v870
      %v2504 = vunpack.c.l.b16 %v871
      %v2505 = vunpack.c.l.b16 %v872
      %v2506 = vunpack.c.l.b16 %v873
      %v2507 = vunpack.c.l.b16 %v874
      %v2508 = vunpack.c.l.b16 %v875
      %v2509 = vunpack.c.l.b16 %v876
      %v2510 = vunpack.c.l.b16 %v877
      %v2511 = vunpack.c.l.b16 %v878
      %v2512 = vunpack.c.l.b16 %v879
      %v2513 = vunpack.c.l.b16 %v880
      %v2514 = vunpack.c.l.b16 %v881
      %v2515 = vunpack.c.l.b16 %v882
      %v2516 = vunpack.c.l.b16 %v883
      %v2517 = vunpack.c.l.b16 %v884
      %v2518 = vpack.c.b16 %v2501, %v2500
      %v2519 = vpack.c.b16 %v2503, %v2502
      %v2520 = vpack.c.b16 %v2505, %v2504
      %v2521 = vpack.c.b16 %v2507, %v2506
      %v2522 = vpack.c.b16 %v2509, %v2508
      %v2523 = vpack.c.b16 %v2511, %v2510
      %v2524 = vpack.c.b16 %v2513, %v2512
      %v2525 = vpack.c.b16 %v2515, %v2514
      %v2526 = vpack.c.b16 %v2517, %v2516
      %vm2536 = vcmask 130048
      %v2538 = vsel %vm2536, %v1719, 0
      %v2541 = vsel %vm2536, %v1785, 0
      %v2544 = vsel %vm2536, %v1851, 0
      %v2547 = vsel %vm2536, %v1917, 0
      %v2550 = vsel %vm2536, %v1983, 0
      %v2553 = vsel %vm2536, %v2049, 0
      %v2556 = vsel %vm2536, %v2115, 0
      %v2559 = vsel %vm2536, %v2181, 0
      %v2562 = vsel %vm2536, %v2247, 0
      %v2565 = vsel %vm2536, %v2313, 0
      %v2568 = vsel %vm2536, %v2379, 0
      %v2571 = vsel %vm2536, %v2445, 0
      %v2574 = vsel %vm2536, %v2468, 0
      %2576 = vmatprep.subr.bf16.mxu0 0
      %2577 = vmatpush1.bf16.msra.mxu0 %v2525
      %2578 = vmatprep.subr.bf16.mxu0 0
      %2579 = vmatpush1.bf16.msra.mxu0 %v2524
      %2580 = vmatprep.subr.bf16.mxu0 0
      %2581 = vmatpush1.bf16.msra.mxu0 %v2523
      %2582 = vmatprep.subr.bf16.mxu0 0
      %2583 = vmatpush1.bf16.msra.mxu0 %v2522
      %2584 = vmatprep.subr.bf16.mxu0 0
      %2585 = vmatpush1.bf16.msra.mxu0 %v2521
      %2586 = vmatprep.subr.bf16.mxu0 0
      %2587 = vmatpush1.bf16.msra.mxu0 %v2520
      %2588 = vmatprep.subr.bf16.mxu0 0
      %2589 = vmatpush1.bf16.msra.mxu0 %v2519
      %2590 = vmatprep.subr.bf16.mxu0 0
      %2591 = vmatpush1.bf16.msra.mxu0 %v2518
      %2592 = vmatprep.subr.bf16.mxu0 0
      %2593 = vmatpush2.bf16.msra.mxu0 0
      %2594 = vmatprep.subr.bf16.mxu0 0
      %2595 = vmatpush2.bf16.msra.mxu0 0
      %2596 = vmatprep.subr.bf16.mxu0 0
      %2597 = vmatpush2.bf16.msra.mxu0 0
      %2598 = vmatprep.subr.bf16.mxu0 0
      %2599 = vmatpush2.bf16.msra.mxu0 0
      %2600 = vmatprep.subr.bf16.mxu0 0
      %2601 = vmatpush2.bf16.msra.mxu0 0
      %2602 = vmatprep.subr.bf16.mxu0 0
      %2603 = vmatpush2.bf16.msra.mxu0 0
      %2604 = vmatprep.subr.bf16.mxu0 0
      %2605 = vmatpush2.bf16.msra.mxu0 0
      %2606 = vmatprep.subr.bf16.mxu0 0
      %2607 = vmatpush2.bf16.msra.mxu0 %v2526
      %2608 = vmatprep.mubr.bf16.mxu0 %v2538
      %2609 = vmatmul.mubr.bf16.gmra.mxu0 %v1718
      %v2610 = vpop.f32.mrf.mxu0
      %v2611 = vadd.f32 0.0, %v2610
      %v2612 = vpop.f32.mrf.mxu0
      %v2613 = vpop.f32.mrf.mxu0
      %v2614 = vadd.f32 0.0, %v2613
      %v2615 = vpop.f32.mrf.mxu0
      %2616 = vmatprep.mubr.bf16.mxu0 %v2541
      %2617 = vmatmul.mubr.bf16.gmra.mxu0 %v1784
      %v2618 = vpop.f32.mrf.mxu0
      %v2619 = vadd.f32 0.0, %v2618
      %v2620 = vpop.f32.mrf.mxu0
      %v2621 = vpop.f32.mrf.mxu0
      %v2622 = vadd.f32 0.0, %v2621
      %v2623 = vpop.f32.mrf.mxu0
      %2624 = vmatprep.mubr.bf16.mxu0 %v2544
      %2625 = vmatmul.mubr.bf16.gmra.mxu0 %v1850
      %v2626 = vpop.f32.mrf.mxu0
      %v2627 = vadd.f32 0.0, %v2626
      %v2628 = vpop.f32.mrf.mxu0
      %v2629 = vpop.f32.mrf.mxu0
      %v2630 = vadd.f32 0.0, %v2629
      %v2631 = vpop.f32.mrf.mxu0
      %2632 = vmatprep.mubr.bf16.mxu0 %v2547
      %2633 = vmatmul.mubr.bf16.gmra.mxu0 %v1916
      %v2634 = vpop.f32.mrf.mxu0
      %v2635 = vadd.f32 0.0, %v2634
      %v2636 = vpop.f32.mrf.mxu0
      %v2637 = vpop.f32.mrf.mxu0
      %v2638 = vadd.f32 0.0, %v2637
      %v2639 = vpop.f32.mrf.mxu0
      %2640 = vmatprep.mubr.bf16.mxu0 %v2550
      %2641 = vmatmul.mubr.bf16.gmra.mxu0 %v1982
      %v2642 = vpop.f32.mrf.mxu0
      %v2643 = vadd.f32 0.0, %v2642
      %v2644 = vpop.f32.mrf.mxu0
      %v2645 = vpop.f32.mrf.mxu0
      %v2646 = vadd.f32 0.0, %v2645
      %v2647 = vpop.f32.mrf.mxu0
      %2648 = vmatprep.mubr.bf16.mxu0 %v2553
      %2649 = vmatmul.mubr.bf16.gmra.mxu0 %v2048
      %v2650 = vpop.f32.mrf.mxu0
      %v2651 = vadd.f32 0.0, %v2650
      %v2652 = vpop.f32.mrf.mxu0
      %v2653 = vpop.f32.mrf.mxu0
      %v2654 = vadd.f32 0.0, %v2653
      %v2655 = vpop.f32.mrf.mxu0
      %2656 = vmatprep.mubr.bf16.mxu0 %v2556
      %2657 = vmatmul.mubr.bf16.gmra.mxu0 %v2114
      %v2658 = vpop.f32.mrf.mxu0
      %v2659 = vadd.f32 0.0, %v2658
      %v2660 = vpop.f32.mrf.mxu0
      %v2661 = vpop.f32.mrf.mxu0
      %v2662 = vadd.f32 0.0, %v2661
      %v2663 = vpop.f32.mrf.mxu0
      %2664 = vmatprep.mubr.bf16.mxu0 %v2559
      %2665 = vmatmul.mubr.bf16.gmra.mxu0 %v2180
      %v2666 = vpop.f32.mrf.mxu0
      %v2667 = vadd.f32 0.0, %v2666
      %v2668 = vpop.f32.mrf.mxu0
      %v2669 = vpop.f32.mrf.mxu0
      %v2670 = vadd.f32 0.0, %v2669
      %v2671 = vpop.f32.mrf.mxu0
      %2672 = vmatprep.mubr.bf16.mxu0 %v2562
      %2673 = vmatmul.mubr.bf16.gmra.mxu0 %v2246
      %v2674 = vpop.f32.mrf.mxu0
      %v2675 = vadd.f32 0.0, %v2674
      %v2676 = vpop.f32.mrf.mxu0
      %v2677 = vpop.f32.mrf.mxu0
      %v2678 = vadd.f32 0.0, %v2677
      %v2679 = vpop.f32.mrf.mxu0
      %2680 = vmatprep.mubr.bf16.mxu0 %v2565
      %2681 = vmatmul.mubr.bf16.gmra.mxu0 %v2312
      %v2682 = vpop.f32.mrf.mxu0
      %v2683 = vadd.f32 0.0, %v2682
      %v2684 = vpop.f32.mrf.mxu0
      %v2685 = vpop.f32.mrf.mxu0
      %v2686 = vadd.f32 0.0, %v2685
      %v2687 = vpop.f32.mrf.mxu0
      %2688 = vmatprep.mubr.bf16.mxu0 %v2568
      %2689 = vmatmul.mubr.bf16.gmra.mxu0 %v2378
      %v2690 = vpop.f32.mrf.mxu0
      %v2691 = vadd.f32 0.0, %v2690
      %v2692 = vpop.f32.mrf.mxu0
      %v2693 = vpop.f32.mrf.mxu0
      %v2694 = vadd.f32 0.0, %v2693
      %v2695 = vpop.f32.mrf.mxu0
      %2696 = vmatprep.mubr.bf16.mxu0 %v2571
      %2697 = vmatmul.mubr.bf16.gmra.mxu0 %v2444
      %v2698 = vpop.f32.mrf.mxu0
      %v2699 = vadd.f32 0.0, %v2698
      %v2700 = vpop.f32.mrf.mxu0
      %v2701 = vpop.f32.mrf.mxu0
      %v2702 = vadd.f32 0.0, %v2701
      %v2703 = vpop.f32.mrf.mxu0
      %2704 = vmatprep.mubr.bf16.mxu0 %v2574
      %2705 = vmatmul.mubr.bf16.gmra.mxu0 %v2461
      %v2706 = vpop.f32.mrf.mxu0
      %v2707 = vadd.f32 0.0, %v2706
      %v2708 = vpop.f32.mrf.mxu0
      %v2709 = vpop.f32.mrf.mxu0
      %v2710 = vpop.f32.mrf.mxu0
      %2711 = vdwg.mxu0
      %v2712 = vcombine.low %v942, %v956
      %v2713 = vcombine.low %v964, %v966
      %v2714 = vcombine.low %v949, %v963
      %v2715 = vcombine.low %v965, %v991
      %v2717 = vunpack.c.l.s4 1966171168
      %v2718 = vunpack.c.0.s8 %v2717
      %v2719 = vlaneseq
      %v2720 = vshrl.u32 %v2719, 7
      %v2721 = vsub.s32 %v2718, %v2720
      %v2722 = vrot.slane %v2712, %v2721
      %v2724 = vunpack.c.l.s4 1966171168
      %v2725 = vunpack.c.0.s8 %v2724
      %v2726 = vlaneseq
      %v2727 = vshrl.u32 %v2726, 7
      %v2728 = vsub.s32 %v2725, %v2727
      %v2729 = vrot.slane %v2713, %v2728
      %v2731 = vunpack.c.l.s4 1966171168
      %v2732 = vunpack.c.0.s8 %v2731
      %v2733 = vlaneseq
      %v2734 = vshrl.u32 %v2733, 7
      %v2735 = vsub.s32 %v2732, %v2734
      %v2736 = vrot.slane %v2714, %v2735
      %v2738 = vunpack.c.l.s4 1966171168
      %v2739 = vunpack.c.0.s8 %v2738
      %v2740 = vlaneseq
      %v2741 = vshrl.u32 %v2740, 7
      %v2742 = vsub.s32 %v2739, %v2741
      %v2743 = vrot.slane %v2715, %v2742
      %v2744 = vcombine.low %v2722, %v2729
      %v2745 = vcombine.high %v2722, %v2729
      %v2746 = vcombine.low %v2736, %v2743
      %v2747 = vcombine.high %v2736, %v2743
      %v2749 = vunpack.c.l.s4 1966171168
      %v2750 = vunpack.c.0.s8 %v2749
      %v2751 = vlaneseq
      %v2752 = vshrl.u32 %v2751, 7
      %v2753 = vsub.s32 %v2750, %v2752
      %v2754 = vrot.slane %v2744, %v2753
      %v2756 = vunpack.c.l.s4 1966171168
      %v2757 = vunpack.c.0.s8 %v2756
      %v2758 = vlaneseq
      %v2759 = vshrl.u32 %v2758, 7
      %v2760 = vsub.s32 %v2757, %v2759
      %v2761 = vrot.slane %v2745, %v2760
      %v2763 = vunpack.c.l.s4 1966171168
      %v2764 = vunpack.c.0.s8 %v2763
      %v2765 = vlaneseq
      %v2766 = vshrl.u32 %v2765, 7
      %v2767 = vsub.s32 %v2764, %v2766
      %v2768 = vrot.slane %v2746, %v2767
      %v2770 = vunpack.c.l.s4 1966171168
      %v2771 = vunpack.c.0.s8 %v2770
      %v2772 = vlaneseq
      %v2773 = vshrl.u32 %v2772, 7
      %v2774 = vsub.s32 %v2771, %v2773
      %v2775 = vrot.slane %v2747, %v2774
      %v2776 = vcombine.low %v2754, %v2768
      %v2777 = vcombine.low %v2761, %v2775
      %v2778 = vcombine.low %v1005, %v1013
      %v2779 = vcombine.low %v1015, %v998
      %v2780 = vcombine.low %v1012, %v1014
      %v2781 = vcombine.low %v1040, %v1054
      %v2783 = vunpack.c.l.s4 1966171168
      %v2784 = vunpack.c.0.s8 %v2783
      %v2785 = vlaneseq
      %v2786 = vshrl.u32 %v2785, 7
      %v2787 = vsub.s32 %v2784, %v2786
      %v2788 = vrot.slane %v2778, %v2787
      %v2790 = vunpack.c.l.s4 1966171168
      %v2791 = vunpack.c.0.s8 %v2790
      %v2792 = vlaneseq
      %v2793 = vshrl.u32 %v2792, 7
      %v2794 = vsub.s32 %v2791, %v2793
      %v2795 = vrot.slane %v2779, %v2794
      %v2797 = vunpack.c.l.s4 1966171168
      %v2798 = vunpack.c.0.s8 %v2797
      %v2799 = vlaneseq
      %v2800 = vshrl.u32 %v2799, 7
      %v2801 = vsub.s32 %v2798, %v2800
      %v2802 = vrot.slane %v2780, %v2801
      %v2804 = vunpack.c.l.s4 1966171168
      %v2805 = vunpack.c.0.s8 %v2804
      %v2806 = vlaneseq
      %v2807 = vshrl.u32 %v2806, 7
      %v2808 = vsub.s32 %v2805, %v2807
      %v2809 = vrot.slane %v2781, %v2808
      %v2810 = vcombine.low %v2788, %v2795
      %v2811 = vcombine.high %v2788, %v2795
      %v2812 = vcombine.low %v2802, %v2809
      %v2813 = vcombine.high %v2802, %v2809
      %v2815 = vunpack.c.l.s4 1966171168
      %v2816 = vunpack.c.0.s8 %v2815
      %v2817 = vlaneseq
      %v2818 = vshrl.u32 %v2817, 7
      %v2819 = vsub.s32 %v2816, %v2818
      %v2820 = vrot.slane %v2810, %v2819
      %v2822 = vunpack.c.l.s4 1966171168
      %v2823 = vunpack.c.0.s8 %v2822
      %v2824 = vlaneseq
      %v2825 = vshrl.u32 %v2824, 7
      %v2826 = vsub.s32 %v2823, %v2825
      %v2827 = vrot.slane %v2811, %v2826
      %v2829 = vunpack.c.l.s4 1966171168
      %v2830 = vunpack.c.0.s8 %v2829
      %v2831 = vlaneseq
      %v2832 = vshrl.u32 %v2831, 7
      %v2833 = vsub.s32 %v2830, %v2832
      %v2834 = vrot.slane %v2812, %v2833
      %v2836 = vunpack.c.l.s4 1966171168
      %v2837 = vunpack.c.0.s8 %v2836
      %v2838 = vlaneseq
      %v2839 = vshrl.u32 %v2838, 7
      %v2840 = vsub.s32 %v2837, %v2839
      %v2841 = vrot.slane %v2813, %v2840
      %v2842 = vcombine.low %v2820, %v2834
      %v2843 = vcombine.low %v2827, %v2841
      %v2844 = vcombine.low %v1062, %v1064
      %v2845 = vcombine.low %v1047, %v1061
      %v2846 = vcombine.low %v1063, %v1089
      %v2847 = vcombine.low %v1103, %v1111
      %v2849 = vunpack.c.l.s4 1966171168
      %v2850 = vunpack.c.0.s8 %v2849
      %v2851 = vlaneseq
      %v2852 = vshrl.u32 %v2851, 7
      %v2853 = vsub.s32 %v2850, %v2852
      %v2854 = vrot.slane %v2844, %v2853
      %v2856 = vunpack.c.l.s4 1966171168
      %v2857 = vunpack.c.0.s8 %v2856
      %v2858 = vlaneseq
      %v2859 = vshrl.u32 %v2858, 7
      %v2860 = vsub.s32 %v2857, %v2859
      %v2861 = vrot.slane %v2845, %v2860
      %v2863 = vunpack.c.l.s4 1966171168
      %v2864 = vunpack.c.0.s8 %v2863
      %v2865 = vlaneseq
      %v2866 = vshrl.u32 %v2865, 7
      %v2867 = vsub.s32 %v2864, %v2866
      %v2868 = vrot.slane %v2846, %v2867
      %v2870 = vunpack.c.l.s4 1966171168
      %v2871 = vunpack.c.0.s8 %v2870
      %v2872 = vlaneseq
      %v2873 = vshrl.u32 %v2872, 7
      %v2874 = vsub.s32 %v2871, %v2873
      %v2875 = vrot.slane %v2847, %v2874
      %v2876 = vcombine.low %v2854, %v2861
      %v2877 = vcombine.high %v2854, %v2861
      %v2878 = vcombine.low %v2868, %v2875
      %v2879 = vcombine.high %v2868, %v2875
      %v2881 = vunpack.c.l.s4 1966171168
      %v2882 = vunpack.c.0.s8 %v2881
      %v2883 = vlaneseq
      %v2884 = vshrl.u32 %v2883, 7
      %v2885 = vsub.s32 %v2882, %v2884
      %v2886 = vrot.slane %v2876, %v2885
      %v2888 = vunpack.c.l.s4 1966171168
      %v2889 = vunpack.c.0.s8 %v2888
      %v2890 = vlaneseq
      %v2891 = vshrl.u32 %v2890, 7
      %v2892 = vsub.s32 %v2889, %v2891
      %v2893 = vrot.slane %v2877, %v2892
      %v2895 = vunpack.c.l.s4 1966171168
      %v2896 = vunpack.c.0.s8 %v2895
      %v2897 = vlaneseq
      %v2898 = vshrl.u32 %v2897, 7
      %v2899 = vsub.s32 %v2896, %v2898
      %v2900 = vrot.slane %v2878, %v2899
      %v2902 = vunpack.c.l.s4 1966171168
      %v2903 = vunpack.c.0.s8 %v2902
      %v2904 = vlaneseq
      %v2905 = vshrl.u32 %v2904, 7
      %v2906 = vsub.s32 %v2903, %v2905
      %v2907 = vrot.slane %v2879, %v2906
      %v2908 = vcombine.low %v2886, %v2900
      %v2909 = vcombine.low %v2893, %v2907
      %v2910 = vcombine.low %v1113, %v1096
      %v2911 = vcombine.low %v1110, %v1112
      %v2912 = vcombine.low %v1138, %v1152
      %v2913 = vcombine.low %v1160, %v1162
      %v2915 = vunpack.c.l.s4 1966171168
      %v2916 = vunpack.c.0.s8 %v2915
      %v2917 = vlaneseq
      %v2918 = vshrl.u32 %v2917, 7
      %v2919 = vsub.s32 %v2916, %v2918
      %v2920 = vrot.slane %v2910, %v2919
      %v2922 = vunpack.c.l.s4 1966171168
      %v2923 = vunpack.c.0.s8 %v2922
      %v2924 = vlaneseq
      %v2925 = vshrl.u32 %v2924, 7
      %v2926 = vsub.s32 %v2923, %v2925
      %v2927 = vrot.slane %v2911, %v2926
      %v2929 = vunpack.c.l.s4 1966171168
      %v2930 = vunpack.c.0.s8 %v2929
      %v2931 = vlaneseq
      %v2932 = vshrl.u32 %v2931, 7
      %v2933 = vsub.s32 %v2930, %v2932
      %v2934 = vrot.slane %v2912, %v2933
      %v2936 = vunpack.c.l.s4 1966171168
      %v2937 = vunpack.c.0.s8 %v2936
      %v2938 = vlaneseq
      %v2939 = vshrl.u32 %v2938, 7
      %v2940 = vsub.s32 %v2937, %v2939
      %v2941 = vrot.slane %v2913, %v2940
      %v2942 = vcombine.low %v2920, %v2927
      %v2943 = vcombine.high %v2920, %v2927
      %v2944 = vcombine.low %v2934, %v2941
      %v2945 = vcombine.high %v2934, %v2941
      %v2947 = vunpack.c.l.s4 1966171168
      %v2948 = vunpack.c.0.s8 %v2947
      %v2949 = vlaneseq
      %v2950 = vshrl.u32 %v2949, 7
      %v2951 = vsub.s32 %v2948, %v2950
      %v2952 = vrot.slane %v2942, %v2951
      %v2954 = vunpack.c.l.s4 1966171168
      %v2955 = vunpack.c.0.s8 %v2954
      %v2956 = vlaneseq
      %v2957 = vshrl.u32 %v2956, 7
      %v2958 = vsub.s32 %v2955, %v2957
      %v2959 = vrot.slane %v2943, %v2958
      %v2961 = vunpack.c.l.s4 1966171168
      %v2962 = vunpack.c.0.s8 %v2961
      %v2963 = vlaneseq
      %v2964 = vshrl.u32 %v2963, 7
      %v2965 = vsub.s32 %v2962, %v2964
      %v2966 = vrot.slane %v2944, %v2965
      %v2968 = vunpack.c.l.s4 1966171168
      %v2969 = vunpack.c.0.s8 %v2968
      %v2970 = vlaneseq
      %v2971 = vshrl.u32 %v2970, 7
      %v2972 = vsub.s32 %v2969, %v2971
      %v2973 = vrot.slane %v2945, %v2972
      %v2974 = vcombine.low %v2952, %v2966
      %v2975 = vcombine.low %v2959, %v2973
      %v2976 = vcombine.low %v1145, %v1159
      %v2977 = vcombine.low %v1161, %v1187
      %v2978 = vcombine.low %v1201, %v1209
      %v2979 = vcombine.low %v1211, %v1194
      %v2981 = vunpack.c.l.s4 1966171168
      %v2982 = vunpack.c.0.s8 %v2981
      %v2983 = vlaneseq
      %v2984 = vshrl.u32 %v2983, 7
      %v2985 = vsub.s32 %v2982, %v2984
      %v2986 = vrot.slane %v2976, %v2985
      %v2988 = vunpack.c.l.s4 1966171168
      %v2989 = vunpack.c.0.s8 %v2988
      %v2990 = vlaneseq
      %v2991 = vshrl.u32 %v2990, 7
      %v2992 = vsub.s32 %v2989, %v2991
      %v2993 = vrot.slane %v2977, %v2992
      %v2995 = vunpack.c.l.s4 1966171168
      %v2996 = vunpack.c.0.s8 %v2995
      %v2997 = vlaneseq
      %v2998 = vshrl.u32 %v2997, 7
      %v2999 = vsub.s32 %v2996, %v2998
      %v3000 = vrot.slane %v2978, %v2999
      %v3002 = vunpack.c.l.s4 1966171168
      %v3003 = vunpack.c.0.s8 %v3002
      %v3004 = vlaneseq
      %v3005 = vshrl.u32 %v3004, 7
      %v3006 = vsub.s32 %v3003, %v3005
      %v3007 = vrot.slane %v2979, %v3006
      %v3008 = vcombine.low %v2986, %v2993
      %v3009 = vcombine.high %v2986, %v2993
      %v3010 = vcombine.low %v3000, %v3007
      %v3011 = vcombine.high %v3000, %v3007
      %v3013 = vunpack.c.l.s4 1966171168
      %v3014 = vunpack.c.0.s8 %v3013
      %v3015 = vlaneseq
      %v3016 = vshrl.u32 %v3015, 7
      %v3017 = vsub.s32 %v3014, %v3016
      %v3018 = vrot.slane %v3008, %v3017
      %v3020 = vunpack.c.l.s4 1966171168
      %v3021 = vunpack.c.0.s8 %v3020
      %v3022 = vlaneseq
      %v3023 = vshrl.u32 %v3022, 7
      %v3024 = vsub.s32 %v3021, %v3023
      %v3025 = vrot.slane %v3009, %v3024
      %v3027 = vunpack.c.l.s4 1966171168
      %v3028 = vunpack.c.0.s8 %v3027
      %v3029 = vlaneseq
      %v3030 = vshrl.u32 %v3029, 7
      %v3031 = vsub.s32 %v3028, %v3030
      %v3032 = vrot.slane %v3010, %v3031
      %v3034 = vunpack.c.l.s4 1966171168
      %v3035 = vunpack.c.0.s8 %v3034
      %v3036 = vlaneseq
      %v3037 = vshrl.u32 %v3036, 7
      %v3038 = vsub.s32 %v3035, %v3037
      %v3039 = vrot.slane %v3011, %v3038
      %v3040 = vcombine.low %v3018, %v3032
      %v3041 = vcombine.low %v3025, %v3039
      %v3042 = vcombine.low %v1208, %v1210
      %v3043 = vcombine.low %v1236, %v1250
      %v3044 = vcombine.low %v1258, %v1260
      %v3045 = vcombine.low %v1243, %v1257
      %v3047 = vunpack.c.l.s4 1966171168
      %v3048 = vunpack.c.0.s8 %v3047
      %v3049 = vlaneseq
      %v3050 = vshrl.u32 %v3049, 7
      %v3051 = vsub.s32 %v3048, %v3050
      %v3052 = vrot.slane %v3042, %v3051
      %v3054 = vunpack.c.l.s4 1966171168
      %v3055 = vunpack.c.0.s8 %v3054
      %v3056 = vlaneseq
      %v3057 = vshrl.u32 %v3056, 7
      %v3058 = vsub.s32 %v3055, %v3057
      %v3059 = vrot.slane %v3043, %v3058
      %v3061 = vunpack.c.l.s4 1966171168
      %v3062 = vunpack.c.0.s8 %v3061
      %v3063 = vlaneseq
      %v3064 = vshrl.u32 %v3063, 7
      %v3065 = vsub.s32 %v3062, %v3064
      %v3066 = vrot.slane %v3044, %v3065
      %v3068 = vunpack.c.l.s4 1966171168
      %v3069 = vunpack.c.0.s8 %v3068
      %v3070 = vlaneseq
      %v3071 = vshrl.u32 %v3070, 7
      %v3072 = vsub.s32 %v3069, %v3071
      %v3073 = vrot.slane %v3045, %v3072
      %v3074 = vcombine.low %v3052, %v3059
      %v3075 = vcombine.high %v3052, %v3059
      %v3076 = vcombine.low %v3066, %v3073
      %v3077 = vcombine.high %v3066, %v3073
      %v3079 = vunpack.c.l.s4 1966171168
      %v3080 = vunpack.c.0.s8 %v3079
      %v3081 = vlaneseq
      %v3082 = vshrl.u32 %v3081, 7
      %v3083 = vsub.s32 %v3080, %v3082
      %v3084 = vrot.slane %v3074, %v3083
      %v3086 = vunpack.c.l.s4 1966171168
      %v3087 = vunpack.c.0.s8 %v3086
      %v3088 = vlaneseq
      %v3089 = vshrl.u32 %v3088, 7
      %v3090 = vsub.s32 %v3087, %v3089
      %v3091 = vrot.slane %v3075, %v3090
      %v3093 = vunpack.c.l.s4 1966171168
      %v3094 = vunpack.c.0.s8 %v3093
      %v3095 = vlaneseq
      %v3096 = vshrl.u32 %v3095, 7
      %v3097 = vsub.s32 %v3094, %v3096
      %v3098 = vrot.slane %v3076, %v3097
      %v3100 = vunpack.c.l.s4 1966171168
      %v3101 = vunpack.c.0.s8 %v3100
      %v3102 = vlaneseq
      %v3103 = vshrl.u32 %v3102, 7
      %v3104 = vsub.s32 %v3101, %v3103
      %v3105 = vrot.slane %v3077, %v3104
      %v3106 = vcombine.low %v3084, %v3098
      %v3107 = vcombine.low %v3091, %v3105
      %v3108 = vcombine.low %v1259, %v1285
      %v3109 = vcombine.low %v1299, %v1307
      %v3110 = vcombine.low %v1309, %v1292
      %v3111 = vcombine.low %v1306, %v1308
      %v3113 = vunpack.c.l.s4 1966171168
      %v3114 = vunpack.c.0.s8 %v3113
      %v3115 = vlaneseq
      %v3116 = vshrl.u32 %v3115, 7
      %v3117 = vsub.s32 %v3114, %v3116
      %v3118 = vrot.slane %v3108, %v3117
      %v3120 = vunpack.c.l.s4 1966171168
      %v3121 = vunpack.c.0.s8 %v3120
      %v3122 = vlaneseq
      %v3123 = vshrl.u32 %v3122, 7
      %v3124 = vsub.s32 %v3121, %v3123
      %v3125 = vrot.slane %v3109, %v3124
      %v3127 = vunpack.c.l.s4 1966171168
      %v3128 = vunpack.c.0.s8 %v3127
      %v3129 = vlaneseq
      %v3130 = vshrl.u32 %v3129, 7
      %v3131 = vsub.s32 %v3128, %v3130
      %v3132 = vrot.slane %v3110, %v3131
      %v3134 = vunpack.c.l.s4 1966171168
      %v3135 = vunpack.c.0.s8 %v3134
      %v3136 = vlaneseq
      %v3137 = vshrl.u32 %v3136, 7
      %v3138 = vsub.s32 %v3135, %v3137
      %v3139 = vrot.slane %v3111, %v3138
      %v3140 = vcombine.low %v3118, %v3125
      %v3141 = vcombine.high %v3118, %v3125
      %v3142 = vcombine.low %v3132, %v3139
      %v3143 = vcombine.high %v3132, %v3139
      %v3145 = vunpack.c.l.s4 1966171168
      %v3146 = vunpack.c.0.s8 %v3145
      %v3147 = vlaneseq
      %v3148 = vshrl.u32 %v3147, 7
      %v3149 = vsub.s32 %v3146, %v3148
      %v3150 = vrot.slane %v3140, %v3149
      %v3152 = vunpack.c.l.s4 1966171168
      %v3153 = vunpack.c.0.s8 %v3152
      %v3154 = vlaneseq
      %v3155 = vshrl.u32 %v3154, 7
      %v3156 = vsub.s32 %v3153, %v3155
      %v3157 = vrot.slane %v3141, %v3156
      %v3159 = vunpack.c.l.s4 1966171168
      %v3160 = vunpack.c.0.s8 %v3159
      %v3161 = vlaneseq
      %v3162 = vshrl.u32 %v3161, 7
      %v3163 = vsub.s32 %v3160, %v3162
      %v3164 = vrot.slane %v3142, %v3163
      %v3166 = vunpack.c.l.s4 1966171168
      %v3167 = vunpack.c.0.s8 %v3166
      %v3168 = vlaneseq
      %v3169 = vshrl.u32 %v3168, 7
      %v3170 = vsub.s32 %v3167, %v3169
      %v3171 = vrot.slane %v3143, %v3170
      %v3172 = vcombine.low %v3150, %v3164
      %v3173 = vcombine.low %v3157, %v3171
      %v3174 = vcombine.low %v1334, %v1348
      %v3175 = vcombine.low %v1356, %v1358
      %v3176 = vcombine.low %v1341, %v1355
      %v3177 = vcombine.low %v1357, %v1383
      %v3179 = vunpack.c.l.s4 1966171168
      %v3180 = vunpack.c.0.s8 %v3179
      %v3181 = vlaneseq
      %v3182 = vshrl.u32 %v3181, 7
      %v3183 = vsub.s32 %v3180, %v3182
      %v3184 = vrot.slane %v3174, %v3183
      %v3186 = vunpack.c.l.s4 1966171168
      %v3187 = vunpack.c.0.s8 %v3186
      %v3188 = vlaneseq
      %v3189 = vshrl.u32 %v3188, 7
      %v3190 = vsub.s32 %v3187, %v3189
      %v3191 = vrot.slane %v3175, %v3190
      %v3193 = vunpack.c.l.s4 1966171168
      %v3194 = vunpack.c.0.s8 %v3193
      %v3195 = vlaneseq
      %v3196 = vshrl.u32 %v3195, 7
      %v3197 = vsub.s32 %v3194, %v3196
      %v3198 = vrot.slane %v3176, %v3197
      %v3200 = vunpack.c.l.s4 1966171168
      %v3201 = vunpack.c.0.s8 %v3200
      %v3202 = vlaneseq
      %v3203 = vshrl.u32 %v3202, 7
      %v3204 = vsub.s32 %v3201, %v3203
      %v3205 = vrot.slane %v3177, %v3204
      %v3206 = vcombine.low %v3184, %v3191
      %v3207 = vcombine.high %v3184, %v3191
      %v3208 = vcombine.low %v3198, %v3205
      %v3209 = vcombine.high %v3198, %v3205
      %v3211 = vunpack.c.l.s4 1966171168
      %v3212 = vunpack.c.0.s8 %v3211
      %v3213 = vlaneseq
      %v3214 = vshrl.u32 %v3213, 7
      %v3215 = vsub.s32 %v3212, %v3214
      %v3216 = vrot.slane %v3206, %v3215
      %v3218 = vunpack.c.l.s4 1966171168
      %v3219 = vunpack.c.0.s8 %v3218
      %v3220 = vlaneseq
      %v3221 = vshrl.u32 %v3220, 7
      %v3222 = vsub.s32 %v3219, %v3221
      %v3223 = vrot.slane %v3207, %v3222
      %v3225 = vunpack.c.l.s4 1966171168
      %v3226 = vunpack.c.0.s8 %v3225
      %v3227 = vlaneseq
      %v3228 = vshrl.u32 %v3227, 7
      %v3229 = vsub.s32 %v3226, %v3228
      %v3230 = vrot.slane %v3208, %v3229
      %v3232 = vunpack.c.l.s4 1966171168
      %v3233 = vunpack.c.0.s8 %v3232
      %v3234 = vlaneseq
      %v3235 = vshrl.u32 %v3234, 7
      %v3236 = vsub.s32 %v3233, %v3235
      %v3237 = vrot.slane %v3209, %v3236
      %v3238 = vcombine.low %v3216, %v3230
      %v3239 = vcombine.low %v3223, %v3237
      %v3240 = vcombine.low %v1397, %v1405
      %v3241 = vcombine.low %v1407, %v1390
      %v3242 = vcombine.low %v1404, %v1406
      %v3243 = vcombine.low %v1432, %v1446
      %v3245 = vunpack.c.l.s4 1966171168
      %v3246 = vunpack.c.0.s8 %v3245
      %v3247 = vlaneseq
      %v3248 = vshrl.u32 %v3247, 7
      %v3249 = vsub.s32 %v3246, %v3248
      %v3250 = vrot.slane %v3240, %v3249
      %v3252 = vunpack.c.l.s4 1966171168
      %v3253 = vunpack.c.0.s8 %v3252
      %v3254 = vlaneseq
      %v3255 = vshrl.u32 %v3254, 7
      %v3256 = vsub.s32 %v3253, %v3255
      %v3257 = vrot.slane %v3241, %v3256
      %v3259 = vunpack.c.l.s4 1966171168
      %v3260 = vunpack.c.0.s8 %v3259
      %v3261 = vlaneseq
      %v3262 = vshrl.u32 %v3261, 7
      %v3263 = vsub.s32 %v3260, %v3262
      %v3264 = vrot.slane %v3242, %v3263
      %v3266 = vunpack.c.l.s4 1966171168
      %v3267 = vunpack.c.0.s8 %v3266
      %v3268 = vlaneseq
      %v3269 = vshrl.u32 %v3268, 7
      %v3270 = vsub.s32 %v3267, %v3269
      %v3271 = vrot.slane %v3243, %v3270
      %v3272 = vcombine.low %v3250, %v3257
      %v3273 = vcombine.high %v3250, %v3257
      %v3274 = vcombine.low %v3264, %v3271
      %v3275 = vcombine.high %v3264, %v3271
      %v3277 = vunpack.c.l.s4 1966171168
      %v3278 = vunpack.c.0.s8 %v3277
      %v3279 = vlaneseq
      %v3280 = vshrl.u32 %v3279, 7
      %v3281 = vsub.s32 %v3278, %v3280
      %v3282 = vrot.slane %v3272, %v3281
      %v3284 = vunpack.c.l.s4 1966171168
      %v3285 = vunpack.c.0.s8 %v3284
      %v3286 = vlaneseq
      %v3287 = vshrl.u32 %v3286, 7
      %v3288 = vsub.s32 %v3285, %v3287
      %v3289 = vrot.slane %v3273, %v3288
      %v3291 = vunpack.c.l.s4 1966171168
      %v3292 = vunpack.c.0.s8 %v3291
      %v3293 = vlaneseq
      %v3294 = vshrl.u32 %v3293, 7
      %v3295 = vsub.s32 %v3292, %v3294
      %v3296 = vrot.slane %v3274, %v3295
      %v3298 = vunpack.c.l.s4 1966171168
      %v3299 = vunpack.c.0.s8 %v3298
      %v3300 = vlaneseq
      %v3301 = vshrl.u32 %v3300, 7
      %v3302 = vsub.s32 %v3299, %v3301
      %v3303 = vrot.slane %v3275, %v3302
      %v3304 = vcombine.low %v3282, %v3296
      %v3305 = vcombine.low %v3289, %v3303
      %v3306 = vcombine.low %v1454, %v1456
      %v3307 = vcombine.low %v1439, %v1453
      %v3308 = vcombine.low %v1455, %v1481
      %v3309 = vcombine.low %v1495, %v1503
      %v3311 = vunpack.c.l.s4 1966171168
      %v3312 = vunpack.c.0.s8 %v3311
      %v3313 = vlaneseq
      %v3314 = vshrl.u32 %v3313, 7
      %v3315 = vsub.s32 %v3312, %v3314
      %v3316 = vrot.slane %v3306, %v3315
      %v3318 = vunpack.c.l.s4 1966171168
      %v3319 = vunpack.c.0.s8 %v3318
      %v3320 = vlaneseq
      %v3321 = vshrl.u32 %v3320, 7
      %v3322 = vsub.s32 %v3319, %v3321
      %v3323 = vrot.slane %v3307, %v3322
      %v3325 = vunpack.c.l.s4 1966171168
      %v3326 = vunpack.c.0.s8 %v3325
      %v3327 = vlaneseq
      %v3328 = vshrl.u32 %v3327, 7
      %v3329 = vsub.s32 %v3326, %v3328
      %v3330 = vrot.slane %v3308, %v3329
      %v3332 = vunpack.c.l.s4 1966171168
      %v3333 = vunpack.c.0.s8 %v3332
      %v3334 = vlaneseq
      %v3335 = vshrl.u32 %v3334, 7
      %v3336 = vsub.s32 %v3333, %v3335
      %v3337 = vrot.slane %v3309, %v3336
      %v3338 = vcombine.low %v3316, %v3323
      %v3339 = vcombine.high %v3316, %v3323
      %v3340 = vcombine.low %v3330, %v3337
      %v3341 = vcombine.high %v3330, %v3337
      %v3343 = vunpack.c.l.s4 1966171168
      %v3344 = vunpack.c.0.s8 %v3343
      %v3345 = vlaneseq
      %v3346 = vshrl.u32 %v3345, 7
      %v3347 = vsub.s32 %v3344, %v3346
      %v3348 = vrot.slane %v3338, %v3347
      %v3350 = vunpack.c.l.s4 1966171168
      %v3351 = vunpack.c.0.s8 %v3350
      %v3352 = vlaneseq
      %v3353 = vshrl.u32 %v3352, 7
      %v3354 = vsub.s32 %v3351, %v3353
      %v3355 = vrot.slane %v3339, %v3354
      %v3357 = vunpack.c.l.s4 1966171168
      %v3358 = vunpack.c.0.s8 %v3357
      %v3359 = vlaneseq
      %v3360 = vshrl.u32 %v3359, 7
      %v3361 = vsub.s32 %v3358, %v3360
      %v3362 = vrot.slane %v3340, %v3361
      %v3364 = vunpack.c.l.s4 1966171168
      %v3365 = vunpack.c.0.s8 %v3364
      %v3366 = vlaneseq
      %v3367 = vshrl.u32 %v3366, 7
      %v3368 = vsub.s32 %v3365, %v3367
      %v3369 = vrot.slane %v3341, %v3368
      %v3370 = vcombine.low %v3348, %v3362
      %v3371 = vcombine.low %v3355, %v3369
      %v3372 = vcombine.low %v1505, %v1488
      %v3373 = vcombine.low %v1502, %v1504
      %v3374 = vcombine.low %v1530, %v1544
      %v3375 = vcombine.low %v1552, %v1554
      %v3377 = vunpack.c.l.s4 1966171168
      %v3378 = vunpack.c.0.s8 %v3377
      %v3379 = vlaneseq
      %v3380 = vshrl.u32 %v3379, 7
      %v3381 = vsub.s32 %v3378, %v3380
      %v3382 = vrot.slane %v3372, %v3381
      %v3384 = vunpack.c.l.s4 1966171168
      %v3385 = vunpack.c.0.s8 %v3384
      %v3386 = vlaneseq
      %v3387 = vshrl.u32 %v3386, 7
      %v3388 = vsub.s32 %v3385, %v3387
      %v3389 = vrot.slane %v3373, %v3388
      %v3391 = vunpack.c.l.s4 1966171168
      %v3392 = vunpack.c.0.s8 %v3391
      %v3393 = vlaneseq
      %v3394 = vshrl.u32 %v3393, 7
      %v3395 = vsub.s32 %v3392, %v3394
      %v3396 = vrot.slane %v3374, %v3395
      %v3398 = vunpack.c.l.s4 1966171168
      %v3399 = vunpack.c.0.s8 %v3398
      %v3400 = vlaneseq
      %v3401 = vshrl.u32 %v3400, 7
      %v3402 = vsub.s32 %v3399, %v3401
      %v3403 = vrot.slane %v3375, %v3402
      %v3404 = vcombine.low %v3382, %v3389
      %v3405 = vcombine.high %v3382, %v3389
      %v3406 = vcombine.low %v3396, %v3403
      %v3407 = vcombine.high %v3396, %v3403
      %v3409 = vunpack.c.l.s4 1966171168
      %v3410 = vunpack.c.0.s8 %v3409
      %v3411 = vlaneseq
      %v3412 = vshrl.u32 %v3411, 7
      %v3413 = vsub.s32 %v3410, %v3412
      %v3414 = vrot.slane %v3404, %v3413
      %v3416 = vunpack.c.l.s4 1966171168
      %v3417 = vunpack.c.0.s8 %v3416
      %v3418 = vlaneseq
      %v3419 = vshrl.u32 %v3418, 7
      %v3420 = vsub.s32 %v3417, %v3419
      %v3421 = vrot.slane %v3405, %v3420
      %v3423 = vunpack.c.l.s4 1966171168
      %v3424 = vunpack.c.0.s8 %v3423
      %v3425 = vlaneseq
      %v3426 = vshrl.u32 %v3425, 7
      %v3427 = vsub.s32 %v3424, %v3426
      %v3428 = vrot.slane %v3406, %v3427
      %v3430 = vunpack.c.l.s4 1966171168
      %v3431 = vunpack.c.0.s8 %v3430
      %v3432 = vlaneseq
      %v3433 = vshrl.u32 %v3432, 7
      %v3434 = vsub.s32 %v3431, %v3433
      %v3435 = vrot.slane %v3407, %v3434
      %v3436 = vcombine.low %v3414, %v3428
      %v3437 = vcombine.low %v3421, %v3435
      %v3438 = vcombine.low %v1537, %v1551
      %v3439 = vcombine.low %v1553, %v1579
      %v3440 = vcombine.low %v1593, %v1601
      %v3441 = vcombine.low %v1603, %v1586
      %v3443 = vunpack.c.l.s4 1966171168
      %v3444 = vunpack.c.0.s8 %v3443
      %v3445 = vlaneseq
      %v3446 = vshrl.u32 %v3445, 7
      %v3447 = vsub.s32 %v3444, %v3446
      %v3448 = vrot.slane %v3438, %v3447
      %v3450 = vunpack.c.l.s4 1966171168
      %v3451 = vunpack.c.0.s8 %v3450
      %v3452 = vlaneseq
      %v3453 = vshrl.u32 %v3452, 7
      %v3454 = vsub.s32 %v3451, %v3453
      %v3455 = vrot.slane %v3439, %v3454
      %v3457 = vunpack.c.l.s4 1966171168
      %v3458 = vunpack.c.0.s8 %v3457
      %v3459 = vlaneseq
      %v3460 = vshrl.u32 %v3459, 7
      %v3461 = vsub.s32 %v3458, %v3460
      %v3462 = vrot.slane %v3440, %v3461
      %v3464 = vunpack.c.l.s4 1966171168
      %v3465 = vunpack.c.0.s8 %v3464
      %v3466 = vlaneseq
      %v3467 = vshrl.u32 %v3466, 7
      %v3468 = vsub.s32 %v3465, %v3467
      %v3469 = vrot.slane %v3441, %v3468
      %v3470 = vcombine.low %v3448, %v3455
      %v3471 = vcombine.high %v3448, %v3455
      %v3472 = vcombine.low %v3462, %v3469
      %v3473 = vcombine.high %v3462, %v3469
      %v3475 = vunpack.c.l.s4 1966171168
      %v3476 = vunpack.c.0.s8 %v3475
      %v3477 = vlaneseq
      %v3478 = vshrl.u32 %v3477, 7
      %v3479 = vsub.s32 %v3476, %v3478
      %v3480 = vrot.slane %v3470, %v3479
      %v3482 = vunpack.c.l.s4 1966171168
      %v3483 = vunpack.c.0.s8 %v3482
      %v3484 = vlaneseq
      %v3485 = vshrl.u32 %v3484, 7
      %v3486 = vsub.s32 %v3483, %v3485
      %v3487 = vrot.slane %v3471, %v3486
      %v3489 = vunpack.c.l.s4 1966171168
      %v3490 = vunpack.c.0.s8 %v3489
      %v3491 = vlaneseq
      %v3492 = vshrl.u32 %v3491, 7
      %v3493 = vsub.s32 %v3490, %v3492
      %v3494 = vrot.slane %v3472, %v3493
      %v3496 = vunpack.c.l.s4 1966171168
      %v3497 = vunpack.c.0.s8 %v3496
      %v3498 = vlaneseq
      %v3499 = vshrl.u32 %v3498, 7
      %v3500 = vsub.s32 %v3497, %v3499
      %v3501 = vrot.slane %v3473, %v3500
      %v3502 = vcombine.low %v3480, %v3494
      %v3503 = vcombine.low %v3487, %v3501
      %v3504 = vcombine.low %v1600, %v1602
      %v3506 = vunpack.c.l.s4 1966171168
      %v3507 = vunpack.c.0.s8 %v3506
      %v3508 = vlaneseq
      %v3509 = vshrl.u32 %v3508, 7
      %v3510 = vsub.s32 %v3507, %v3509
      %v3511 = vrot.slane %v3504, %v3510
      %v3512 = vcombine.high %v3511, %v3511
      %v3514 = vunpack.c.l.s4 1966171168
      %v3515 = vunpack.c.0.s8 %v3514
      %v3516 = vlaneseq
      %v3517 = vshrl.u32 %v3516, 7
      %v3518 = vsub.s32 %v3515, %v3517
      %v3519 = vrot.slane %v3511, %v3518
      %v3521 = vunpack.c.l.s4 1966171168
      %v3522 = vunpack.c.0.s8 %v3521
      %v3523 = vlaneseq
      %v3524 = vshrl.u32 %v3523, 7
      %v3525 = vsub.s32 %v3522, %v3524
      %v3526 = vrot.slane %v3512, %v3525
      %v3558 = vunpack.c.l.b16 %v849
      %v3559 = vunpack.c.l.b16 %v850
      %v3560 = vunpack.c.l.b16 %v851
      %v3561 = vunpack.c.l.b16 %v852
      %v3562 = vunpack.c.l.b16 %v853
      %v3563 = vunpack.c.l.b16 %v854
      %v3564 = vunpack.c.l.b16 %v855
      %v3565 = vunpack.c.l.b16 %v856
      %v3566 = vunpack.c.l.b16 %v857
      %v3567 = vunpack.c.l.b16 %v858
      %v3568 = vunpack.c.l.b16 %v859
      %v3569 = vunpack.c.l.b16 %v860
      %v3570 = vunpack.c.l.b16 %v861
      %v3571 = vunpack.c.l.b16 %v862
      %v3572 = vunpack.c.l.b16 %v863
      %v3573 = vunpack.c.l.b16 %v864
      %v3574 = vunpack.c.l.b16 %v865
      %v3575 = vunpack.c.l.b16 %v866
      %v3576 = vpack.c.b16 %v3559, %v3558
      %v3577 = vpack.c.b16 %v3561, %v3560
      %v3578 = vpack.c.b16 %v3563, %v3562
      %v3579 = vpack.c.b16 %v3565, %v3564
      %v3580 = vpack.c.b16 %v3567, %v3566
      %v3581 = vpack.c.b16 %v3569, %v3568
      %v3582 = vpack.c.b16 %v3571, %v3570
      %v3583 = vpack.c.b16 %v3573, %v3572
      %v3584 = vpack.c.b16 %v3575, %v3574
      %v3595 = vsel %vm2536, %v2777, 0
      %v3598 = vsel %vm2536, %v2843, 0
      %v3601 = vsel %vm2536, %v2909, 0
      %v3604 = vsel %vm2536, %v2975, 0
      %v3607 = vsel %vm2536, %v3041, 0
      %v3610 = vsel %vm2536, %v3107, 0
      %v3613 = vsel %vm2536, %v3173, 0
      %v3616 = vsel %vm2536, %v3239, 0
      %v3619 = vsel %vm2536, %v3305, 0
      %v3622 = vsel %vm2536, %v3371, 0
      %v3625 = vsel %vm2536, %v3437, 0
      %v3628 = vsel %vm2536, %v3503, 0
      %v3631 = vsel %vm2536, %v3526, 0
      %3633 = vmatprep.subr.bf16.mxu0 0
      %3634 = vmatpush1.bf16.msra.mxu0 %v3583
      %3635 = vmatprep.subr.bf16.mxu0 0
      %3636 = vmatpush1.bf16.msra.mxu0 %v3582
      %3637 = vmatprep.subr.bf16.mxu0 0
      %3638 = vmatpush1.bf16.msra.mxu0 %v3581
      %3639 = vmatprep.subr.bf16.mxu0 0
      %3640 = vmatpush1.bf16.msra.mxu0 %v3580
      %3641 = vmatprep.subr.bf16.mxu0 0
      %3642 = vmatpush1.bf16.msra.mxu0 %v3579
      %3643 = vmatprep.subr.bf16.mxu0 0
      %3644 = vmatpush1.bf16.msra.mxu0 %v3578
      %3645 = vmatprep.subr.bf16.mxu0 0
      %3646 = vmatpush1.bf16.msra.mxu0 %v3577
      %3647 = vmatprep.subr.bf16.mxu0 0
      %3648 = vmatpush1.bf16.msra.mxu0 %v3576
      %3649 = vmatprep.subr.bf16.mxu0 0
      %3650 = vmatpush2.bf16.msra.mxu0 0
      %3651 = vmatprep.subr.bf16.mxu0 0
      %3652 = vmatpush2.bf16.msra.mxu0 0
      %3653 = vmatprep.subr.bf16.mxu0 0
      %3654 = vmatpush2.bf16.msra.mxu0 0
      %3655 = vmatprep.subr.bf16.mxu0 0
      %3656 = vmatpush2.bf16.msra.mxu0 0
      %3657 = vmatprep.subr.bf16.mxu0 0
      %3658 = vmatpush2.bf16.msra.mxu0 0
      %3659 = vmatprep.subr.bf16.mxu0 0
      %3660 = vmatpush2.bf16.msra.mxu0 0
      %3661 = vmatprep.subr.bf16.mxu0 0
      %3662 = vmatpush2.bf16.msra.mxu0 0
      %3663 = vmatprep.subr.bf16.mxu0 0
      %3664 = vmatpush2.bf16.msra.mxu0 %v3584
      %3665 = vmatprep.mubr.bf16.mxu0 %v3595
      %3666 = vmatmul.mubr.bf16.gmra.mxu0 %v2776
      %v3667 = vpop.f32.mrf.mxu0
      %v3668 = vadd.f32 %v2611, %v3667
      %v3669 = vpop.f32.mrf.mxu0
      %v3670 = vpop.f32.mrf.mxu0
      %v3671 = vadd.f32 %v2614, %v3670
      %v3672 = vpop.f32.mrf.mxu0
      %3673 = vmatprep.mubr.bf16.mxu0 %v3598
      %3674 = vmatmul.mubr.bf16.gmra.mxu0 %v2842
      %v3675 = vpop.f32.mrf.mxu0
      %v3676 = vadd.f32 %v2619, %v3675
      %v3677 = vpop.f32.mrf.mxu0
      %v3678 = vpop.f32.mrf.mxu0
      %v3679 = vadd.f32 %v2622, %v3678
      %v3680 = vpop.f32.mrf.mxu0
      %3681 = vmatprep.mubr.bf16.mxu0 %v3601
      %3682 = vmatmul.mubr.bf16.gmra.mxu0 %v2908
      %v3683 = vpop.f32.mrf.mxu0
      %v3684 = vadd.f32 %v2627, %v3683
      %v3685 = vpop.f32.mrf.mxu0
      %v3686 = vpop.f32.mrf.mxu0
      %v3687 = vadd.f32 %v2630, %v3686
      %v3688 = vpop.f32.mrf.mxu0
      %3689 = vmatprep.mubr.bf16.mxu0 %v3604
      %3690 = vmatmul.mubr.bf16.gmra.mxu0 %v2974
      %v3691 = vpop.f32.mrf.mxu0
      %v3692 = vadd.f32 %v2635, %v3691
      %v3693 = vpop.f32.mrf.mxu0
      %v3694 = vpop.f32.mrf.mxu0
      %v3695 = vadd.f32 %v2638, %v3694
      %v3696 = vpop.f32.mrf.mxu0
      %3697 = vmatprep.mubr.bf16.mxu0 %v3607
      %3698 = vmatmul.mubr.bf16.gmra.mxu0 %v3040
      %v3699 = vpop.f32.mrf.mxu0
      %v3700 = vadd.f32 %v2643, %v3699
      %v3701 = vpop.f32.mrf.mxu0
      %v3702 = vpop.f32.mrf.mxu0
      %v3703 = vadd.f32 %v2646, %v3702
      %v3704 = vpop.f32.mrf.mxu0
      %3705 = vmatprep.mubr.bf16.mxu0 %v3610
      %3706 = vmatmul.mubr.bf16.gmra.mxu0 %v3106
      %v3707 = vpop.f32.mrf.mxu0
      %v3708 = vadd.f32 %v2651, %v3707
      %v3709 = vpop.f32.mrf.mxu0
      %v3710 = vpop.f32.mrf.mxu0
      %v3711 = vadd.f32 %v2654, %v3710
      %v3712 = vpop.f32.mrf.mxu0
      %3713 = vmatprep.mubr.bf16.mxu0 %v3613
      %3714 = vmatmul.mubr.bf16.gmra.mxu0 %v3172
      %v3715 = vpop.f32.mrf.mxu0
      %v3716 = vadd.f32 %v2659, %v3715
      %v3717 = vpop.f32.mrf.mxu0
      %v3718 = vpop.f32.mrf.mxu0
      %v3719 = vadd.f32 %v2662, %v3718
      %v3720 = vpop.f32.mrf.mxu0
      %3721 = vmatprep.mubr.bf16.mxu0 %v3616
      %3722 = vmatmul.mubr.bf16.gmra.mxu0 %v3238
      %v3723 = vpop.f32.mrf.mxu0
      %v3724 = vadd.f32 %v2667, %v3723
      %v3725 = vpop.f32.mrf.mxu0
      %v3726 = vpop.f32.mrf.mxu0
      %v3727 = vadd.f32 %v2670, %v3726
      %v3728 = vpop.f32.mrf.mxu0
      %3729 = vmatprep.mubr.bf16.mxu0 %v3619
      %3730 = vmatmul.mubr.bf16.gmra.mxu0 %v3304
      %v3731 = vpop.f32.mrf.mxu0
      %v3732 = vadd.f32 %v2675, %v3731
      %v3733 = vpop.f32.mrf.mxu0
      %v3734 = vpop.f32.mrf.mxu0
      %v3735 = vadd.f32 %v2678, %v3734
      %v3736 = vpop.f32.mrf.mxu0
      %3737 = vmatprep.mubr.bf16.mxu0 %v3622
      %3738 = vmatmul.mubr.bf16.gmra.mxu0 %v3370
      %v3739 = vpop.f32.mrf.mxu0
      %v3740 = vadd.f32 %v2683, %v3739
      %v3741 = vpop.f32.mrf.mxu0
      %v3742 = vpop.f32.mrf.mxu0
      %v3743 = vadd.f32 %v2686, %v3742
      %v3744 = vpop.f32.mrf.mxu0
      %3745 = vmatprep.mubr.bf16.mxu0 %v3625
      %3746 = vmatmul.mubr.bf16.gmra.mxu0 %v3436
      %v3747 = vpop.f32.mrf.mxu0
      %v3748 = vadd.f32 %v2691, %v3747
      %v3749 = vpop.f32.mrf.mxu0
      %v3750 = vpop.f32.mrf.mxu0
      %v3751 = vadd.f32 %v2694, %v3750
      %v3752 = vpop.f32.mrf.mxu0
      %3753 = vmatprep.mubr.bf16.mxu0 %v3628
      %3754 = vmatmul.mubr.bf16.gmra.mxu0 %v3502
      %v3755 = vpop.f32.mrf.mxu0
      %v3756 = vadd.f32 %v2699, %v3755
      %v3757 = vpop.f32.mrf.mxu0
      %v3758 = vpop.f32.mrf.mxu0
      %v3759 = vadd.f32 %v2702, %v3758
      %v3760 = vpop.f32.mrf.mxu0
      %3761 = vmatprep.mubr.bf16.mxu0 %v3631
      %3762 = vmatmul.mubr.bf16.gmra.mxu0 %v3519
      %v3763 = vpop.f32.mrf.mxu0
      %v3764 = vadd.f32 %v2707, %v3763
      %v3765 = vpop.f32.mrf.mxu0
      %v3766 = vpop.f32.mrf.mxu0
      %v3767 = vpop.f32.mrf.mxu0
      %3768 = vdwg.mxu0
      %v3770 = vcombine.low %v848, %v782
      %v3771 = vcombine.high %v848, %v782
      %v3773 = vunpack.c.l.s4 1966171168
      %v3774 = vunpack.c.0.s8 %v3773
      %v3775 = vlaneseq
      %v3776 = vshrl.u32 %v3775, 7
      %v3777 = vsub.s32 %v3774, %v3776
      %v3778 = vrot.slane %v3770, %v3777
      %v3780 = vunpack.c.l.s4 1966171168
      %v3781 = vunpack.c.0.s8 %v3780
      %v3782 = vlaneseq
      %v3783 = vshrl.u32 %v3782, 7
      %v3784 = vsub.s32 %v3781, %v3783
      %v3785 = vrot.slane %v3771, %v3784
      %v3786 = vcombine.high %v3778, %v3778
      %v3787 = vcombine.high %v3785, %v3785
      %v3789 = vunpack.c.l.s4 1966171168
      %v3790 = vunpack.c.0.s8 %v3789
      %v3791 = vlaneseq
      %v3792 = vshrl.u32 %v3791, 7
      %v3793 = vsub.s32 %v3790, %v3792
      %v3794 = vrot.slane %v3778, %v3793
      %v3796 = vunpack.c.l.s4 1966171168
      %v3797 = vunpack.c.0.s8 %v3796
      %v3798 = vlaneseq
      %v3799 = vshrl.u32 %v3798, 7
      %v3800 = vsub.s32 %v3797, %v3799
      %v3801 = vrot.slane %v3785, %v3800
      %v3803 = vunpack.c.l.s4 1966171168
      %v3804 = vunpack.c.0.s8 %v3803
      %v3805 = vlaneseq
      %v3806 = vshrl.u32 %v3805, 7
      %v3807 = vsub.s32 %v3804, %v3806
      %v3808 = vrot.slane %v3786, %v3807
      %v3810 = vunpack.c.l.s4 1966171168
      %v3811 = vunpack.c.0.s8 %v3810
      %v3812 = vlaneseq
      %v3813 = vshrl.u32 %v3812, 7
      %v3814 = vsub.s32 %v3811, %v3813
      %v3815 = vrot.slane %v3787, %v3814
      %v3816 = vcombine.high %v3794, %v3794
      %v3817 = vcombine.high %v3801, %v3801
      %v3818 = vcombine.high %v3808, %v3808
      %v3819 = vcombine.low %v2809, %v2854
      %v3820 = vcombine.high %v2809, %v2854
      %v3821 = vcombine.low %v2861, %v2868
      %v3822 = vcombine.high %v2861, %v2868
      %v3824 = vunpack.c.l.s4 1966171168
      %v3825 = vunpack.c.0.s8 %v3824
      %v3826 = vlaneseq
      %v3827 = vshrl.u32 %v3826, 7
      %v3828 = vsub.s32 %v3825, %v3827
      %v3829 = vrot.slane %v3819, %v3828
      %v3831 = vunpack.c.l.s4 1966171168
      %v3832 = vunpack.c.0.s8 %v3831
      %v3833 = vlaneseq
      %v3834 = vshrl.u32 %v3833, 7
      %v3835 = vsub.s32 %v3832, %v3834
      %v3836 = vrot.slane %v3820, %v3835
      %v3838 = vunpack.c.l.s4 1966171168
      %v3839 = vunpack.c.0.s8 %v3838
      %v3840 = vlaneseq
      %v3841 = vshrl.u32 %v3840, 7
      %v3842 = vsub.s32 %v3839, %v3841
      %v3843 = vrot.slane %v3821, %v3842
      %v3845 = vunpack.c.l.s4 1966171168
      %v3846 = vunpack.c.0.s8 %v3845
      %v3847 = vlaneseq
      %v3848 = vshrl.u32 %v3847, 7
      %v3849 = vsub.s32 %v3846, %v3848
      %v3850 = vrot.slane %v3822, %v3849
      %v3851 = vcombine.low %v3829, %v3843
      %v3852 = vcombine.low %v3836, %v3850
      %v3853 = vcombine.low %v2875, %v2920
      %v3854 = vcombine.high %v2875, %v2920
      %v3855 = vcombine.low %v2927, %v2934
      %v3856 = vcombine.high %v2927, %v2934
      %v3858 = vunpack.c.l.s4 1966171168
      %v3859 = vunpack.c.0.s8 %v3858
      %v3860 = vlaneseq
      %v3861 = vshrl.u32 %v3860, 7
      %v3862 = vsub.s32 %v3859, %v3861
      %v3863 = vrot.slane %v3853, %v3862
      %v3865 = vunpack.c.l.s4 1966171168
      %v3866 = vunpack.c.0.s8 %v3865
      %v3867 = vlaneseq
      %v3868 = vshrl.u32 %v3867, 7
      %v3869 = vsub.s32 %v3866, %v3868
      %v3870 = vrot.slane %v3854, %v3869
      %v3872 = vunpack.c.l.s4 1966171168
      %v3873 = vunpack.c.0.s8 %v3872
      %v3874 = vlaneseq
      %v3875 = vshrl.u32 %v3874, 7
      %v3876 = vsub.s32 %v3873, %v3875
      %v3877 = vrot.slane %v3855, %v3876
      %v3879 = vunpack.c.l.s4 1966171168
      %v3880 = vunpack.c.0.s8 %v3879
      %v3881 = vlaneseq
      %v3882 = vshrl.u32 %v3881, 7
      %v3883 = vsub.s32 %v3880, %v3882
      %v3884 = vrot.slane %v3856, %v3883
      %v3885 = vcombine.low %v3863, %v3877
      %v3886 = vcombine.low %v3870, %v3884
      %v3887 = vcombine.low %v2941, %v2986
      %v3888 = vcombine.high %v2941, %v2986
      %v3889 = vcombine.low %v2993, %v3000
      %v3890 = vcombine.high %v2993, %v3000
      %v3892 = vunpack.c.l.s4 1966171168
      %v3893 = vunpack.c.0.s8 %v3892
      %v3894 = vlaneseq
      %v3895 = vshrl.u32 %v3894, 7
      %v3896 = vsub.s32 %v3893, %v3895
      %v3897 = vrot.slane %v3887, %v3896
      %v3899 = vunpack.c.l.s4 1966171168
      %v3900 = vunpack.c.0.s8 %v3899
      %v3901 = vlaneseq
      %v3902 = vshrl.u32 %v3901, 7
      %v3903 = vsub.s32 %v3900, %v3902
      %v3904 = vrot.slane %v3888, %v3903
      %v3906 = vunpack.c.l.s4 1966171168
      %v3907 = vunpack.c.0.s8 %v3906
      %v3908 = vlaneseq
      %v3909 = vshrl.u32 %v3908, 7
      %v3910 = vsub.s32 %v3907, %v3909
      %v3911 = vrot.slane %v3889, %v3910
      %v3913 = vunpack.c.l.s4 1966171168
      %v3914 = vunpack.c.0.s8 %v3913
      %v3915 = vlaneseq
      %v3916 = vshrl.u32 %v3915, 7
      %v3917 = vsub.s32 %v3914, %v3916
      %v3918 = vrot.slane %v3890, %v3917
      %v3919 = vcombine.low %v3897, %v3911
      %v3920 = vcombine.low %v3904, %v3918
      %v3921 = vcombine.low %v3007, %v3052
      %v3922 = vcombine.high %v3007, %v3052
      %v3923 = vcombine.low %v3059, %v3066
      %v3924 = vcombine.high %v3059, %v3066
      %v3926 = vunpack.c.l.s4 1966171168
      %v3927 = vunpack.c.0.s8 %v3926
      %v3928 = vlaneseq
      %v3929 = vshrl.u32 %v3928, 7
      %v3930 = vsub.s32 %v3927, %v3929
      %v3931 = vrot.slane %v3921, %v3930
      %v3933 = vunpack.c.l.s4 1966171168
      %v3934 = vunpack.c.0.s8 %v3933
      %v3935 = vlaneseq
      %v3936 = vshrl.u32 %v3935, 7
      %v3937 = vsub.s32 %v3934, %v3936
      %v3938 = vrot.slane %v3922, %v3937
      %v3940 = vunpack.c.l.s4 1966171168
      %v3941 = vunpack.c.0.s8 %v3940
      %v3942 = vlaneseq
      %v3943 = vshrl.u32 %v3942, 7
      %v3944 = vsub.s32 %v3941, %v3943
      %v3945 = vrot.slane %v3923, %v3944
      %v3947 = vunpack.c.l.s4 1966171168
      %v3948 = vunpack.c.0.s8 %v3947
      %v3949 = vlaneseq
      %v3950 = vshrl.u32 %v3949, 7
      %v3951 = vsub.s32 %v3948, %v3950
      %v3952 = vrot.slane %v3924, %v3951
      %v3953 = vcombine.low %v3931, %v3945
      %v3954 = vcombine.low %v3938, %v3952
      %v3955 = vcombine.low %v3073, %v3118
      %v3956 = vcombine.high %v3073, %v3118
      %v3957 = vcombine.low %v3125, %v3132
      %v3958 = vcombine.high %v3125, %v3132
      %v3960 = vunpack.c.l.s4 1966171168
      %v3961 = vunpack.c.0.s8 %v3960
      %v3962 = vlaneseq
      %v3963 = vshrl.u32 %v3962, 7
      %v3964 = vsub.s32 %v3961, %v3963
      %v3965 = vrot.slane %v3955, %v3964
      %v3967 = vunpack.c.l.s4 1966171168
      %v3968 = vunpack.c.0.s8 %v3967
      %v3969 = vlaneseq
      %v3970 = vshrl.u32 %v3969, 7
      %v3971 = vsub.s32 %v3968, %v3970
      %v3972 = vrot.slane %v3956, %v3971
      %v3974 = vunpack.c.l.s4 1966171168
      %v3975 = vunpack.c.0.s8 %v3974
      %v3976 = vlaneseq
      %v3977 = vshrl.u32 %v3976, 7
      %v3978 = vsub.s32 %v3975, %v3977
      %v3979 = vrot.slane %v3957, %v3978
      %v3981 = vunpack.c.l.s4 1966171168
      %v3982 = vunpack.c.0.s8 %v3981
      %v3983 = vlaneseq
      %v3984 = vshrl.u32 %v3983, 7
      %v3985 = vsub.s32 %v3982, %v3984
      %v3986 = vrot.slane %v3958, %v3985
      %v3987 = vcombine.low %v3965, %v3979
      %v3988 = vcombine.low %v3972, %v3986
      %v3989 = vcombine.low %v3139, %v3184
      %v3990 = vcombine.high %v3139, %v3184
      %v3991 = vcombine.low %v3191, %v3198
      %v3992 = vcombine.high %v3191, %v3198
      %v3994 = vunpack.c.l.s4 1966171168
      %v3995 = vunpack.c.0.s8 %v3994
      %v3996 = vlaneseq
      %v3997 = vshrl.u32 %v3996, 7
      %v3998 = vsub.s32 %v3995, %v3997
      %v3999 = vrot.slane %v3989, %v3998
      %v4001 = vunpack.c.l.s4 1966171168
      %v4002 = vunpack.c.0.s8 %v4001
      %v4003 = vlaneseq
      %v4004 = vshrl.u32 %v4003, 7
      %v4005 = vsub.s32 %v4002, %v4004
      %v4006 = vrot.slane %v3990, %v4005
      %v4008 = vunpack.c.l.s4 1966171168
      %v4009 = vunpack.c.0.s8 %v4008
      %v4010 = vlaneseq
      %v4011 = vshrl.u32 %v4010, 7
      %v4012 = vsub.s32 %v4009, %v4011
      %v4013 = vrot.slane %v3991, %v4012
      %v4015 = vunpack.c.l.s4 1966171168
      %v4016 = vunpack.c.0.s8 %v4015
      %v4017 = vlaneseq
      %v4018 = vshrl.u32 %v4017, 7
      %v4019 = vsub.s32 %v4016, %v4018
      %v4020 = vrot.slane %v3992, %v4019
      %v4021 = vcombine.low %v3999, %v4013
      %v4022 = vcombine.low %v4006, %v4020
      %v4023 = vcombine.low %v3205, %v3250
      %v4024 = vcombine.high %v3205, %v3250
      %v4025 = vcombine.low %v3257, %v3264
      %v4026 = vcombine.high %v3257, %v3264
      %v4028 = vunpack.c.l.s4 1966171168
      %v4029 = vunpack.c.0.s8 %v4028
      %v4030 = vlaneseq
      %v4031 = vshrl.u32 %v4030, 7
      %v4032 = vsub.s32 %v4029, %v4031
      %v4033 = vrot.slane %v4023, %v4032
      %v4035 = vunpack.c.l.s4 1966171168
      %v4036 = vunpack.c.0.s8 %v4035
      %v4037 = vlaneseq
      %v4038 = vshrl.u32 %v4037, 7
      %v4039 = vsub.s32 %v4036, %v4038
      %v4040 = vrot.slane %v4024, %v4039
      %v4042 = vunpack.c.l.s4 1966171168
      %v4043 = vunpack.c.0.s8 %v4042
      %v4044 = vlaneseq
      %v4045 = vshrl.u32 %v4044, 7
      %v4046 = vsub.s32 %v4043, %v4045
      %v4047 = vrot.slane %v4025, %v4046
      %v4049 = vunpack.c.l.s4 1966171168
      %v4050 = vunpack.c.0.s8 %v4049
      %v4051 = vlaneseq
      %v4052 = vshrl.u32 %v4051, 7
      %v4053 = vsub.s32 %v4050, %v4052
      %v4054 = vrot.slane %v4026, %v4053
      %v4055 = vcombine.low %v4033, %v4047
      %v4056 = vcombine.low %v4040, %v4054
      %v4057 = vcombine.low %v3271, %v3316
      %v4058 = vcombine.high %v3271, %v3316
      %v4059 = vcombine.low %v3323, %v3330
      %v4060 = vcombine.high %v3323, %v3330
      %v4062 = vunpack.c.l.s4 1966171168
      %v4063 = vunpack.c.0.s8 %v4062
      %v4064 = vlaneseq
      %v4065 = vshrl.u32 %v4064, 7
      %v4066 = vsub.s32 %v4063, %v4065
      %v4067 = vrot.slane %v4057, %v4066
      %v4069 = vunpack.c.l.s4 1966171168
      %v4070 = vunpack.c.0.s8 %v4069
      %v4071 = vlaneseq
      %v4072 = vshrl.u32 %v4071, 7
      %v4073 = vsub.s32 %v4070, %v4072
      %v4074 = vrot.slane %v4058, %v4073
      %v4076 = vunpack.c.l.s4 1966171168
      %v4077 = vunpack.c.0.s8 %v4076
      %v4078 = vlaneseq
      %v4079 = vshrl.u32 %v4078, 7
      %v4080 = vsub.s32 %v4077, %v4079
      %v4081 = vrot.slane %v4059, %v4080
      %v4083 = vunpack.c.l.s4 1966171168
      %v4084 = vunpack.c.0.s8 %v4083
      %v4085 = vlaneseq
      %v4086 = vshrl.u32 %v4085, 7
      %v4087 = vsub.s32 %v4084, %v4086
      %v4088 = vrot.slane %v4060, %v4087
      %v4089 = vcombine.low %v4067, %v4081
      %v4090 = vcombine.low %v4074, %v4088
      %v4091 = vcombine.low %v3337, %v3382
      %v4092 = vcombine.high %v3337, %v3382
      %v4093 = vcombine.low %v3389, %v3396
      %v4094 = vcombine.high %v3389, %v3396
      %v4096 = vunpack.c.l.s4 1966171168
      %v4097 = vunpack.c.0.s8 %v4096
      %v4098 = vlaneseq
      %v4099 = vshrl.u32 %v4098, 7
      %v4100 = vsub.s32 %v4097, %v4099
      %v4101 = vrot.slane %v4091, %v4100
      %v4103 = vunpack.c.l.s4 1966171168
      %v4104 = vunpack.c.0.s8 %v4103
      %v4105 = vlaneseq
      %v4106 = vshrl.u32 %v4105, 7
      %v4107 = vsub.s32 %v4104, %v4106
      %v4108 = vrot.slane %v4092, %v4107
      %v4110 = vunpack.c.l.s4 1966171168
      %v4111 = vunpack.c.0.s8 %v4110
      %v4112 = vlaneseq
      %v4113 = vshrl.u32 %v4112, 7
      %v4114 = vsub.s32 %v4111, %v4113
      %v4115 = vrot.slane %v4093, %v4114
      %v4117 = vunpack.c.l.s4 1966171168
      %v4118 = vunpack.c.0.s8 %v4117
      %v4119 = vlaneseq
      %v4120 = vshrl.u32 %v4119, 7
      %v4121 = vsub.s32 %v4118, %v4120
      %v4122 = vrot.slane %v4094, %v4121
      %v4123 = vcombine.low %v4101, %v4115
      %v4124 = vcombine.low %v4108, %v4122
      %v4125 = vcombine.low %v3403, %v3448
      %v4126 = vcombine.high %v3403, %v3448
      %v4127 = vcombine.low %v3455, %v3462
      %v4128 = vcombine.high %v3455, %v3462
      %v4130 = vunpack.c.l.s4 1966171168
      %v4131 = vunpack.c.0.s8 %v4130
      %v4132 = vlaneseq
      %v4133 = vshrl.u32 %v4132, 7
      %v4134 = vsub.s32 %v4131, %v4133
      %v4135 = vrot.slane %v4125, %v4134
      %v4137 = vunpack.c.l.s4 1966171168
      %v4138 = vunpack.c.0.s8 %v4137
      %v4139 = vlaneseq
      %v4140 = vshrl.u32 %v4139, 7
      %v4141 = vsub.s32 %v4138, %v4140
      %v4142 = vrot.slane %v4126, %v4141
      %v4144 = vunpack.c.l.s4 1966171168
      %v4145 = vunpack.c.0.s8 %v4144
      %v4146 = vlaneseq
      %v4147 = vshrl.u32 %v4146, 7
      %v4148 = vsub.s32 %v4145, %v4147
      %v4149 = vrot.slane %v4127, %v4148
      %v4151 = vunpack.c.l.s4 1966171168
      %v4152 = vunpack.c.0.s8 %v4151
      %v4153 = vlaneseq
      %v4154 = vshrl.u32 %v4153, 7
      %v4155 = vsub.s32 %v4152, %v4154
      %v4156 = vrot.slane %v4128, %v4155
      %v4157 = vcombine.low %v4135, %v4149
      %v4158 = vcombine.low %v4142, %v4156
      %v4159 = vcombine.low %v1629, %v1643
      %v4160 = vcombine.low %v1651, %v1653
      %v4162 = vunpack.c.l.s4 1966171168
      %v4163 = vunpack.c.0.s8 %v4162
      %v4164 = vlaneseq
      %v4165 = vshrl.u32 %v4164, 7
      %v4166 = vsub.s32 %v4163, %v4165
      %v4167 = vrot.slane %v4159, %v4166
      %v4169 = vunpack.c.l.s4 1966171168
      %v4170 = vunpack.c.0.s8 %v4169
      %v4171 = vlaneseq
      %v4172 = vshrl.u32 %v4171, 7
      %v4173 = vsub.s32 %v4170, %v4172
      %v4174 = vrot.slane %v4160, %v4173
      %v4175 = vcombine.low %v3469, %v3511
      %v4176 = vcombine.high %v3469, %v3511
      %v4177 = vcombine.low %v4167, %v4174
      %v4178 = vcombine.high %v4167, %v4174
      %v4180 = vunpack.c.l.s4 1966171168
      %v4181 = vunpack.c.0.s8 %v4180
      %v4182 = vlaneseq
      %v4183 = vshrl.u32 %v4182, 7
      %v4184 = vsub.s32 %v4181, %v4183
      %v4185 = vrot.slane %v4175, %v4184
      %v4187 = vunpack.c.l.s4 1966171168
      %v4188 = vunpack.c.0.s8 %v4187
      %v4189 = vlaneseq
      %v4190 = vshrl.u32 %v4189, 7
      %v4191 = vsub.s32 %v4188, %v4190
      %v4192 = vrot.slane %v4176, %v4191
      %v4194 = vunpack.c.l.s4 1966171168
      %v4195 = vunpack.c.0.s8 %v4194
      %v4196 = vlaneseq
      %v4197 = vshrl.u32 %v4196, 7
      %v4198 = vsub.s32 %v4195, %v4197
      %v4199 = vrot.slane %v4177, %v4198
      %v4201 = vunpack.c.l.s4 1966171168
      %v4202 = vunpack.c.0.s8 %v4201
      %v4203 = vlaneseq
      %v4204 = vshrl.u32 %v4203, 7
      %v4205 = vsub.s32 %v4202, %v4204
      %v4206 = vrot.slane %v4178, %v4205
      %v4207 = vcombine.low %v4185, %v4199
      %v4208 = vcombine.low %v4192, %v4206
      %v4209 = vcombine.low %v1636, %v1650
      %v4210 = vcombine.low %v1652, %v3794
      %v4211 = vcombine.low %v3808, %v3816
      %v4212 = vcombine.low %v3818, %v3801
      %v4214 = vunpack.c.l.s4 1966171168
      %v4215 = vunpack.c.0.s8 %v4214
      %v4216 = vlaneseq
      %v4217 = vshrl.u32 %v4216, 7
      %v4218 = vsub.s32 %v4215, %v4217
      %v4219 = vrot.slane %v4209, %v4218
      %v4221 = vunpack.c.l.s4 1966171168
      %v4222 = vunpack.c.0.s8 %v4221
      %v4223 = vlaneseq
      %v4224 = vshrl.u32 %v4223, 7
      %v4225 = vsub.s32 %v4222, %v4224
      %v4226 = vrot.slane %v4210, %v4225
      %v4228 = vunpack.c.l.s4 1966171168
      %v4229 = vunpack.c.0.s8 %v4228
      %v4230 = vlaneseq
      %v4231 = vshrl.u32 %v4230, 7
      %v4232 = vsub.s32 %v4229, %v4231
      %v4233 = vrot.slane %v4211, %v4232
      %v4235 = vunpack.c.l.s4 1966171168
      %v4236 = vunpack.c.0.s8 %v4235
      %v4237 = vlaneseq
      %v4238 = vshrl.u32 %v4237, 7
      %v4239 = vsub.s32 %v4236, %v4238
      %v4240 = vrot.slane %v4212, %v4239
      %v4241 = vcombine.low %v4219, %v4226
      %v4242 = vcombine.high %v4219, %v4226
      %v4243 = vcombine.low %v4233, %v4240
      %v4244 = vcombine.high %v4233, %v4240
      %v4246 = vunpack.c.l.s4 1966171168
      %v4247 = vunpack.c.0.s8 %v4246
      %v4248 = vlaneseq
      %v4249 = vshrl.u32 %v4248, 7
      %v4250 = vsub.s32 %v4247, %v4249
      %v4251 = vrot.slane %v4241, %v4250
      %v4253 = vunpack.c.l.s4 1966171168
      %v4254 = vunpack.c.0.s8 %v4253
      %v4255 = vlaneseq
      %v4256 = vshrl.u32 %v4255, 7
      %v4257 = vsub.s32 %v4254, %v4256
      %v4258 = vrot.slane %v4242, %v4257
      %v4260 = vunpack.c.l.s4 1966171168
      %v4261 = vunpack.c.0.s8 %v4260
      %v4262 = vlaneseq
      %v4263 = vshrl.u32 %v4262, 7
      %v4264 = vsub.s32 %v4261, %v4263
      %v4265 = vrot.slane %v4243, %v4264
      %v4267 = vunpack.c.l.s4 1966171168
      %v4268 = vunpack.c.0.s8 %v4267
      %v4269 = vlaneseq
      %v4270 = vshrl.u32 %v4269, 7
      %v4271 = vsub.s32 %v4268, %v4270
      %v4272 = vrot.slane %v4244, %v4271
      %v4273 = vcombine.low %v4251, %v4265
      %v4274 = vcombine.low %v4258, %v4272
      %v4275 = vcombine.low %v3815, %v3817
      %v4277 = vunpack.c.l.s4 1966171168
      %v4278 = vunpack.c.0.s8 %v4277
      %v4279 = vlaneseq
      %v4280 = vshrl.u32 %v4279, 7
      %v4281 = vsub.s32 %v4278, %v4280
      %v4282 = vrot.slane %v4275, %v4281
      %v4283 = vcombine.high %v4282, %v4282
      %v4285 = vunpack.c.l.s4 1966171168
      %v4286 = vunpack.c.0.s8 %v4285
      %v4287 = vlaneseq
      %v4288 = vshrl.u32 %v4287, 7
      %v4289 = vsub.s32 %v4286, %v4288
      %v4290 = vrot.slane %v4282, %v4289
      %v4292 = vunpack.c.l.s4 1966171168
      %v4293 = vunpack.c.0.s8 %v4292
      %v4294 = vlaneseq
      %v4295 = vshrl.u32 %v4294, 7
      %v4296 = vsub.s32 %v4293, %v4295
      %v4297 = vrot.slane %v4283, %v4296
      %v4329 = vunpack.c.l.b16 %v885
      %v4330 = vunpack.c.l.b16 %v886
      %v4331 = vunpack.c.l.b16 %v887
      %v4332 = vunpack.c.l.b16 %v888
      %v4333 = vunpack.c.l.b16 %v889
      %v4334 = vunpack.c.l.b16 %v890
      %v4335 = vunpack.c.l.b16 %v891
      %v4336 = vunpack.c.l.b16 %v892
      %v4337 = vunpack.c.l.b16 %v893
      %v4338 = vunpack.c.l.b16 %v894
      %v4339 = vunpack.c.l.b16 %v895
      %v4340 = vunpack.c.l.b16 %v896
      %v4341 = vunpack.c.l.b16 %v897
      %v4342 = vunpack.c.l.b16 %v898
      %v4343 = vunpack.c.l.b16 %v899
      %v4344 = vunpack.c.l.b16 %v900
      %v4345 = vunpack.c.l.b16 %v901
      %v4346 = vunpack.c.l.b16 %v902
      %v4347 = vpack.c.b16 %v4330, %v4329
      %v4348 = vpack.c.b16 %v4332, %v4331
      %v4349 = vpack.c.b16 %v4334, %v4333
      %v4350 = vpack.c.b16 %v4336, %v4335
      %v4351 = vpack.c.b16 %v4338, %v4337
      %v4352 = vpack.c.b16 %v4340, %v4339
      %v4353 = vpack.c.b16 %v4342, %v4341
      %v4354 = vpack.c.b16 %v4344, %v4343
      %v4355 = vpack.c.b16 %v4346, %v4345
      %v4366 = vsel %vm2536, %v3852, 0
      %v4369 = vsel %vm2536, %v3886, 0
      %v4372 = vsel %vm2536, %v3920, 0
      %v4375 = vsel %vm2536, %v3954, 0
      %v4378 = vsel %vm2536, %v3988, 0
      %v4381 = vsel %vm2536, %v4022, 0
      %v4384 = vsel %vm2536, %v4056, 0
      %v4387 = vsel %vm2536, %v4090, 0
      %v4390 = vsel %vm2536, %v4124, 0
      %v4393 = vsel %vm2536, %v4158, 0
      %v4396 = vsel %vm2536, %v4208, 0
      %v4399 = vsel %vm2536, %v4274, 0
      %v4402 = vsel %vm2536, %v4297, 0
      %4404 = vmatprep.subr.bf16.mxu0 0
      %4405 = vmatpush1.bf16.msra.mxu0 %v4354
      %4406 = vmatprep.subr.bf16.mxu0 0
      %4407 = vmatpush1.bf16.msra.mxu0 %v4353
      %4408 = vmatprep.subr.bf16.mxu0 0
      %4409 = vmatpush1.bf16.msra.mxu0 %v4352
      %4410 = vmatprep.subr.bf16.mxu0 0
      %4411 = vmatpush1.bf16.msra.mxu0 %v4351
      %4412 = vmatprep.subr.bf16.mxu0 0
      %4413 = vmatpush1.bf16.msra.mxu0 %v4350
      %4414 = vmatprep.subr.bf16.mxu0 0
      %4415 = vmatpush1.bf16.msra.mxu0 %v4349
      %4416 = vmatprep.subr.bf16.mxu0 0
      %4417 = vmatpush1.bf16.msra.mxu0 %v4348
      %4418 = vmatprep.subr.bf16.mxu0 0
      %4419 = vmatpush1.bf16.msra.mxu0 %v4347
      %4420 = vmatprep.subr.bf16.mxu0 0
      %4421 = vmatpush2.bf16.msra.mxu0 0
      %4422 = vmatprep.subr.bf16.mxu0 0
      %4423 = vmatpush2.bf16.msra.mxu0 0
      %4424 = vmatprep.subr.bf16.mxu0 0
      %4425 = vmatpush2.bf16.msra.mxu0 0
      %4426 = vmatprep.subr.bf16.mxu0 0
      %4427 = vmatpush2.bf16.msra.mxu0 0
      %4428 = vmatprep.subr.bf16.mxu0 0
      %4429 = vmatpush2.bf16.msra.mxu0 0
      %4430 = vmatprep.subr.bf16.mxu0 0
      %4431 = vmatpush2.bf16.msra.mxu0 0
      %4432 = vmatprep.subr.bf16.mxu0 0
      %4433 = vmatpush2.bf16.msra.mxu0 0
      %4434 = vmatprep.subr.bf16.mxu0 0
      %4435 = vmatpush2.bf16.msra.mxu0 %v4355
      %4436 = vmatprep.mubr.bf16.mxu0 %v4366
      %4437 = vmatmul.mubr.bf16.gmra.mxu0 %v3851
      %v4438 = vpop.f32.mrf.mxu0
      %v4439 = vadd.f32 0.0, %v4438
      %v4440 = vpop.f32.mrf.mxu0
      %v4441 = vpop.f32.mrf.mxu0
      %v4442 = vadd.f32 0.0, %v4441
      %v4443 = vpop.f32.mrf.mxu0
      %4444 = vmatprep.mubr.bf16.mxu0 %v4369
      %4445 = vmatmul.mubr.bf16.gmra.mxu0 %v3885
      %v4446 = vpop.f32.mrf.mxu0
      %v4447 = vadd.f32 0.0, %v4446
      %v4448 = vpop.f32.mrf.mxu0
      %v4449 = vpop.f32.mrf.mxu0
      %v4450 = vadd.f32 0.0, %v4449
      %v4451 = vpop.f32.mrf.mxu0
      %4452 = vmatprep.mubr.bf16.mxu0 %v4372
      %4453 = vmatmul.mubr.bf16.gmra.mxu0 %v3919
      %v4454 = vpop.f32.mrf.mxu0
      %v4455 = vadd.f32 0.0, %v4454
      %v4456 = vpop.f32.mrf.mxu0
      %v4457 = vpop.f32.mrf.mxu0
      %v4458 = vadd.f32 0.0, %v4457
      %v4459 = vpop.f32.mrf.mxu0
      %4460 = vmatprep.mubr.bf16.mxu0 %v4375
      %4461 = vmatmul.mubr.bf16.gmra.mxu0 %v3953
      %v4462 = vpop.f32.mrf.mxu0
      %v4463 = vadd.f32 0.0, %v4462
      %v4464 = vpop.f32.mrf.mxu0
      %v4465 = vpop.f32.mrf.mxu0
      %v4466 = vadd.f32 0.0, %v4465
      %v4467 = vpop.f32.mrf.mxu0
      %4468 = vmatprep.mubr.bf16.mxu0 %v4378
      %4469 = vmatmul.mubr.bf16.gmra.mxu0 %v3987
      %v4470 = vpop.f32.mrf.mxu0
      %v4471 = vadd.f32 0.0, %v4470
      %v4472 = vpop.f32.mrf.mxu0
      %v4473 = vpop.f32.mrf.mxu0
      %v4474 = vadd.f32 0.0, %v4473
      %v4475 = vpop.f32.mrf.mxu0
      %4476 = vmatprep.mubr.bf16.mxu0 %v4381
      %4477 = vmatmul.mubr.bf16.gmra.mxu0 %v4021
      %v4478 = vpop.f32.mrf.mxu0
      %v4479 = vadd.f32 0.0, %v4478
      %v4480 = vpop.f32.mrf.mxu0
      %v4481 = vpop.f32.mrf.mxu0
      %v4482 = vadd.f32 0.0, %v4481
      %v4483 = vpop.f32.mrf.mxu0
      %4484 = vmatprep.mubr.bf16.mxu0 %v4384
      %4485 = vmatmul.mubr.bf16.gmra.mxu0 %v4055
      %v4486 = vpop.f32.mrf.mxu0
      %v4487 = vadd.f32 0.0, %v4486
      %v4488 = vpop.f32.mrf.mxu0
      %v4489 = vpop.f32.mrf.mxu0
      %v4490 = vadd.f32 0.0, %v4489
      %v4491 = vpop.f32.mrf.mxu0
      %4492 = vmatprep.mubr.bf16.mxu0 %v4387
      %4493 = vmatmul.mubr.bf16.gmra.mxu0 %v4089
      %v4494 = vpop.f32.mrf.mxu0
      %v4495 = vadd.f32 0.0, %v4494
      %v4496 = vpop.f32.mrf.mxu0
      %v4497 = vpop.f32.mrf.mxu0
      %v4498 = vadd.f32 0.0, %v4497
      %v4499 = vpop.f32.mrf.mxu0
      %4500 = vmatprep.mubr.bf16.mxu0 %v4390
      %4501 = vmatmul.mubr.bf16.gmra.mxu0 %v4123
      %v4502 = vpop.f32.mrf.mxu0
      %v4503 = vadd.f32 0.0, %v4502
      %v4504 = vpop.f32.mrf.mxu0
      %v4505 = vpop.f32.mrf.mxu0
      %v4506 = vadd.f32 0.0, %v4505
      %v4507 = vpop.f32.mrf.mxu0
      %4508 = vmatprep.mubr.bf16.mxu0 %v4393
      %4509 = vmatmul.mubr.bf16.gmra.mxu0 %v4157
      %v4510 = vpop.f32.mrf.mxu0
      %v4511 = vadd.f32 0.0, %v4510
      %v4512 = vpop.f32.mrf.mxu0
      %v4513 = vpop.f32.mrf.mxu0
      %v4514 = vadd.f32 0.0, %v4513
      %v4515 = vpop.f32.mrf.mxu0
      %4516 = vmatprep.mubr.bf16.mxu0 %v4396
      %4517 = vmatmul.mubr.bf16.gmra.mxu0 %v4207
      %v4518 = vpop.f32.mrf.mxu0
      %v4519 = vadd.f32 0.0, %v4518
      %v4520 = vpop.f32.mrf.mxu0
      %v4521 = vpop.f32.mrf.mxu0
      %v4522 = vadd.f32 0.0, %v4521
      %v4523 = vpop.f32.mrf.mxu0
      %4524 = vmatprep.mubr.bf16.mxu0 %v4399
      %4525 = vmatmul.mubr.bf16.gmra.mxu0 %v4273
      %v4526 = vpop.f32.mrf.mxu0
      %v4527 = vadd.f32 0.0, %v4526
      %v4528 = vpop.f32.mrf.mxu0
      %v4529 = vpop.f32.mrf.mxu0
      %v4530 = vadd.f32 0.0, %v4529
      %v4531 = vpop.f32.mrf.mxu0
      %4532 = vmatprep.mubr.bf16.mxu0 %v4402
      %4533 = vmatmul.mubr.bf16.gmra.mxu0 %v4290
      %v4534 = vpop.f32.mrf.mxu0
      %v4535 = vadd.f32 0.0, %v4534
      %v4536 = vpop.f32.mrf.mxu0
      %v4537 = vpop.f32.mrf.mxu0
      %v4538 = vpop.f32.mrf.mxu0
      %4539 = vdwg.mxu0
      %v4540 = vadd.f32 %v3668, %v4439
      %v4541 = vadd.f32 %v3671, %v4442
      %v4542 = vadd.f32 %v3676, %v4447
      %v4543 = vadd.f32 %v3679, %v4450
      %v4544 = vadd.f32 %v3684, %v4455
      %v4545 = vadd.f32 %v3687, %v4458
      %v4546 = vadd.f32 %v3692, %v4463
      %v4547 = vadd.f32 %v3695, %v4466
      %v4548 = vadd.f32 %v3700, %v4471
      %v4549 = vadd.f32 %v3703, %v4474
      %v4550 = vadd.f32 %v3708, %v4479
      %v4551 = vadd.f32 %v3711, %v4482
      %v4552 = vadd.f32 %v3716, %v4487
      %v4553 = vadd.f32 %v3719, %v4490
      %v4554 = vadd.f32 %v3724, %v4495
      %v4555 = vadd.f32 %v3727, %v4498
      %v4556 = vadd.f32 %v3732, %v4503
      %v4557 = vadd.f32 %v3735, %v4506
      %v4558 = vadd.f32 %v3740, %v4511
      %v4559 = vadd.f32 %v3743, %v4514
      %v4560 = vadd.f32 %v3748, %v4519
      %v4561 = vadd.f32 %v3751, %v4522
      %v4562 = vadd.f32 %v3756, %v4527
      %v4563 = vadd.f32 %v3759, %v4530
      %v4564 = vadd.f32 %v3764, %v4535
      %v4566 = vlaneseq
      %v4567 = vshrl.u32 %v4566, 7
      %v4568 = vsub.s32 0, %v4567
      %v4569 = vrot.slane %v903, %v4568
      %v4571 = vadd.f32 %v4540, %v4569
      %v4572 = vadd.f32 %v4541, %v4569
      %v4573 = vadd.f32 %v4542, %v4569
      %v4574 = vadd.f32 %v4543, %v4569
      %v4575 = vadd.f32 %v4544, %v4569
      %v4576 = vadd.f32 %v4545, %v4569
      %v4577 = vadd.f32 %v4546, %v4569
      %v4578 = vadd.f32 %v4547, %v4569
      %v4579 = vadd.f32 %v4548, %v4569
      %v4580 = vadd.f32 %v4549, %v4569
      %v4581 = vadd.f32 %v4550, %v4569
      %v4582 = vadd.f32 %v4551, %v4569
      %v4583 = vadd.f32 %v4552, %v4569
      %v4584 = vadd.f32 %v4553, %v4569
      %v4585 = vadd.f32 %v4554, %v4569
      %v4586 = vadd.f32 %v4555, %v4569
      %v4587 = vadd.f32 %v4556, %v4569
      %v4588 = vadd.f32 %v4557, %v4569
      %v4589 = vadd.f32 %v4558, %v4569
      %v4590 = vadd.f32 %v4559, %v4569
      %v4591 = vadd.f32 %v4560, %v4569
      %v4592 = vadd.f32 %v4561, %v4569
      %v4593 = vadd.f32 %v4562, %v4569
      %v4594 = vadd.f32 %v4563, %v4569
      %v4595 = vadd.f32 %v4564, %v4569
      %v4596 = vpack.c.bf16 %v4572, %v4571
      %v4597 = vpack.c.bf16 %v4574, %v4573
      %v4598 = vpack.c.bf16 %v4576, %v4575
      %v4599 = vpack.c.bf16 %v4578, %v4577
      %v4600 = vpack.c.bf16 %v4580, %v4579
      %v4601 = vpack.c.bf16 %v4582, %v4581
      %v4602 = vpack.c.bf16 %v4584, %v4583
      %v4603 = vpack.c.bf16 %v4586, %v4585
      %v4604 = vpack.c.bf16 %v4588, %v4587
      %v4605 = vpack.c.bf16 %v4590, %v4589
      %v4606 = vpack.c.bf16 %v4592, %v4591
      %v4607 = vpack.c.bf16 %v4594, %v4593
      %v4608 = vpack.c.bf16 %v4595, %v4595
      %v4609 = vunpack.c.l.bf16 %v4596
      %v4610 = vunpack.c.h.bf16 %v4596
      %v4611 = vunpack.c.l.bf16 %v4597
      %v4612 = vunpack.c.h.bf16 %v4597
      %v4613 = vunpack.c.l.bf16 %v4598
      %v4614 = vunpack.c.h.bf16 %v4598
      %v4615 = vunpack.c.l.bf16 %v4599
      %v4616 = vunpack.c.h.bf16 %v4599
      %v4617 = vunpack.c.l.bf16 %v4600
      %v4618 = vunpack.c.h.bf16 %v4600
      %v4619 = vunpack.c.l.bf16 %v4601
      %v4620 = vunpack.c.h.bf16 %v4601
      %v4621 = vunpack.c.l.bf16 %v4602
      %v4622 = vunpack.c.h.bf16 %v4602
      %v4623 = vunpack.c.l.bf16 %v4603
      %v4624 = vunpack.c.h.bf16 %v4603
      %v4625 = vunpack.c.l.bf16 %v4604
      %v4626 = vunpack.c.h.bf16 %v4604
      %v4627 = vunpack.c.l.bf16 %v4605
      %v4628 = vunpack.c.h.bf16 %v4605
      %v4629 = vunpack.c.l.bf16 %v4606
      %v4630 = vunpack.c.h.bf16 %v4606
      %v4631 = vunpack.c.l.bf16 %v4607
      %v4632 = vunpack.c.h.bf16 %v4607
      %v4633 = vunpack.c.l.bf16 %v4608
      %v4634 = vlaneseq
      %v4635 = vshrl.u32 %v4634, 7
      %v4636 = vadd.s32 %v4635, 8
      %v4637 = vadd.s32 %v4635, 16
      %v4638 = vadd.s32 %v4635, 24
      %v4639 = vadd.s32 %v4635, 32
      %v4640 = vadd.s32 %v4635, 40
      %v4641 = vadd.s32 %v4635, 48
      %v4642 = vadd.s32 %v4635, 56
      %v4643 = vadd.s32 %v4635, 64
      %v4644 = vadd.s32 %v4635, 72
      %v4645 = vadd.s32 %v4635, 80
      %v4646 = vadd.s32 %v4635, 88
      %v4647 = vadd.s32 %v4635, 96
      %v4648 = vadd.s32 %v4635, 104
      %v4649 = vadd.s32 %v4635, 112
      %v4650 = vadd.s32 %v4635, 120
      %v4651 = vadd.s32 %v4635, 128
      %v4652 = vadd.s32 %v4635, 136
      %v4653 = vadd.s32 %v4635, 144
      %v4654 = vadd.s32 %v4635, 152
      %v4655 = vadd.s32 %v4635, 160
      %v4656 = vadd.s32 %v4635, 168
      %v4657 = vadd.s32 %v4635, 176
      %v4658 = vadd.s32 %v4635, 184
      %v4659 = vadd.s32 %v4635, 192
      %s4660 = ssub.s32 14, %s317
      %s4661 = smul.u32 %s4660, 14
      %v4662 = vstv %s4661
      %vm4663 = vcmp.lt.s32.totalorder %v4635, %v4662
      %vm4664 = vcmp.lt.s32.totalorder %v4636, %v4662
      %vm4665 = vcmp.lt.s32.totalorder %v4637, %v4662
      %vm4666 = vcmp.lt.s32.totalorder %v4638, %v4662
      %vm4667 = vcmp.lt.s32.totalorder %v4639, %v4662
      %vm4668 = vcmp.lt.s32.totalorder %v4640, %v4662
      %vm4669 = vcmp.lt.s32.totalorder %v4641, %v4662
      %vm4670 = vcmp.lt.s32.totalorder %v4642, %v4662
      %vm4671 = vcmp.lt.s32.totalorder %v4643, %v4662
      %vm4672 = vcmp.lt.s32.totalorder %v4644, %v4662
      %vm4673 = vcmp.lt.s32.totalorder %v4645, %v4662
      %vm4674 = vcmp.lt.s32.totalorder %v4646, %v4662
      %vm4675 = vcmp.lt.s32.totalorder %v4647, %v4662
      %vm4676 = vcmp.lt.s32.totalorder %v4648, %v4662
      %vm4677 = vcmp.lt.s32.totalorder %v4649, %v4662
      %vm4678 = vcmp.lt.s32.totalorder %v4650, %v4662
      %vm4679 = vcmp.lt.s32.totalorder %v4651, %v4662
      %vm4680 = vcmp.lt.s32.totalorder %v4652, %v4662
      %vm4681 = vcmp.lt.s32.totalorder %v4653, %v4662
      %vm4682 = vcmp.lt.s32.totalorder %v4654, %v4662
      %vm4683 = vcmp.lt.s32.totalorder %v4655, %v4662
      %vm4684 = vcmp.lt.s32.totalorder %v4656, %v4662
      %vm4685 = vcmp.lt.s32.totalorder %v4657, %v4662
      %vm4686 = vcmp.lt.s32.totalorder %v4658, %v4662
      %vm4687 = vcmp.lt.s32.totalorder %v4659, %v4662
      %v4688 = vsel %vm4663, 1, 0
      %v4689 = vsel %vm4664, 1, 0
      %v4690 = vsel %vm4665, 1, 0
      %v4691 = vsel %vm4666, 1, 0
      %v4692 = vsel %vm4667, 1, 0
      %v4693 = vsel %vm4668, 1, 0
      %v4694 = vsel %vm4669, 1, 0
      %v4695 = vsel %vm4670, 1, 0
      %v4696 = vsel %vm4671, 1, 0
      %v4697 = vsel %vm4672, 1, 0
      %v4698 = vsel %vm4673, 1, 0
      %v4699 = vsel %vm4674, 1, 0
      %v4700 = vsel %vm4675, 1, 0
      %v4701 = vsel %vm4676, 1, 0
      %v4702 = vsel %vm4677, 1, 0
      %v4703 = vsel %vm4678, 1, 0
      %v4704 = vsel %vm4679, 1, 0
      %v4705 = vsel %vm4680, 1, 0
      %v4706 = vsel %vm4681, 1, 0
      %v4707 = vsel %vm4682, 1, 0
      %v4708 = vsel %vm4683, 1, 0
      %v4709 = vsel %vm4684, 1, 0
      %v4710 = vsel %vm4685, 1, 0
      %v4711 = vsel %vm4686, 1, 0
      %v4712 = vsel %vm4687, 1, 0
      %vm4713 = vcmp.eq.s32.totalorder %v4688, 1
      %vm4714 = vcmp.eq.s32.totalorder %v4689, 1
      %vm4715 = vcmp.eq.s32.totalorder %v4690, 1
      %vm4716 = vcmp.eq.s32.totalorder %v4691, 1
      %vm4717 = vcmp.eq.s32.totalorder %v4692, 1
      %vm4718 = vcmp.eq.s32.totalorder %v4693, 1
      %vm4719 = vcmp.eq.s32.totalorder %v4694, 1
      %vm4720 = vcmp.eq.s32.totalorder %v4695, 1
      %vm4721 = vcmp.eq.s32.totalorder %v4696, 1
      %vm4722 = vcmp.eq.s32.totalorder %v4697, 1
      %vm4723 = vcmp.eq.s32.totalorder %v4698, 1
      %vm4724 = vcmp.eq.s32.totalorder %v4699, 1
      %vm4725 = vcmp.eq.s32.totalorder %v4700, 1
      %vm4726 = vcmp.eq.s32.totalorder %v4701, 1
      %vm4727 = vcmp.eq.s32.totalorder %v4702, 1
      %vm4728 = vcmp.eq.s32.totalorder %v4703, 1
      %vm4729 = vcmp.eq.s32.totalorder %v4704, 1
      %vm4730 = vcmp.eq.s32.totalorder %v4705, 1
      %vm4731 = vcmp.eq.s32.totalorder %v4706, 1
      %vm4732 = vcmp.eq.s32.totalorder %v4707, 1
      %vm4733 = vcmp.eq.s32.totalorder %v4708, 1
      %vm4734 = vcmp.eq.s32.totalorder %v4709, 1
      %vm4735 = vcmp.eq.s32.totalorder %v4710, 1
      %vm4736 = vcmp.eq.s32.totalorder %v4711, 1
      %vm4737 = vcmp.eq.s32.totalorder %v4712, 1
      %v4738 = vsel %vm4713, %v4609, 0.0
      %v4739 = vsel %vm4714, %v4610, 0.0
      %v4740 = vsel %vm4715, %v4611, 0.0
      %v4741 = vsel %vm4716, %v4612, 0.0
      %v4742 = vsel %vm4717, %v4613, 0.0
      %v4743 = vsel %vm4718, %v4614, 0.0
      %v4744 = vsel %vm4719, %v4615, 0.0
      %v4745 = vsel %vm4720, %v4616, 0.0
      %v4746 = vsel %vm4721, %v4617, 0.0
      %v4747 = vsel %vm4722, %v4618, 0.0
      %v4748 = vsel %vm4723, %v4619, 0.0
      %v4749 = vsel %vm4724, %v4620, 0.0
      %v4750 = vsel %vm4725, %v4621, 0.0
      %v4751 = vsel %vm4726, %v4622, 0.0
      %v4752 = vsel %vm4727, %v4623, 0.0
      %v4753 = vsel %vm4728, %v4624, 0.0
      %v4754 = vsel %vm4729, %v4625, 0.0
      %v4755 = vsel %vm4730, %v4626, 0.0
      %v4756 = vsel %vm4731, %v4627, 0.0
      %v4757 = vsel %vm4732, %v4628, 0.0
      %v4758 = vsel %vm4733, %v4629, 0.0
      %v4759 = vsel %vm4734, %v4630, 0.0
      %v4760 = vsel %vm4735, %v4631, 0.0
      %v4761 = vsel %vm4736, %v4632, 0.0
      %v4762 = vsel %vm4737, %v4633, 0.0
      %vm4763 = vcmask 523264
      %v4764 = vsel %vm4763, %v4738, 0.0
      %v4765 = vsel %vm4763, %v4739, 0.0
      %v4766 = vadd.f32 %v4764, %v4765
      %v4767 = vsel %vm4763, %v4740, 0.0
      %v4768 = vadd.f32 %v4766, %v4767
      %v4769 = vsel %vm4763, %v4741, 0.0
      %v4770 = vadd.f32 %v4768, %v4769
      %v4771 = vsel %vm4763, %v4742, 0.0
      %v4772 = vadd.f32 %v4770, %v4771
      %v4773 = vsel %vm4763, %v4743, 0.0
      %v4774 = vadd.f32 %v4772, %v4773
      %v4775 = vsel %vm4763, %v4744, 0.0
      %v4776 = vadd.f32 %v4774, %v4775
      %v4777 = vsel %vm4763, %v4745, 0.0
      %v4778 = vadd.f32 %v4776, %v4777
      %v4779 = vsel %vm4763, %v4746, 0.0
      %v4780 = vadd.f32 %v4778, %v4779
      %v4781 = vsel %vm4763, %v4747, 0.0
      %v4782 = vadd.f32 %v4780, %v4781
      %v4783 = vsel %vm4763, %v4748, 0.0
      %v4784 = vadd.f32 %v4782, %v4783
      %v4785 = vsel %vm4763, %v4749, 0.0
      %v4786 = vadd.f32 %v4784, %v4785
      %v4787 = vsel %vm4763, %v4750, 0.0
      %v4788 = vadd.f32 %v4786, %v4787
      %v4789 = vsel %vm4763, %v4751, 0.0
      %v4790 = vadd.f32 %v4788, %v4789
      %v4791 = vsel %vm4763, %v4752, 0.0
      %v4792 = vadd.f32 %v4790, %v4791
      %v4793 = vsel %vm4763, %v4753, 0.0
      %v4794 = vadd.f32 %v4792, %v4793
      %v4795 = vsel %vm4763, %v4754, 0.0
      %v4796 = vadd.f32 %v4794, %v4795
      %v4797 = vsel %vm4763, %v4755, 0.0
      %v4798 = vadd.f32 %v4796, %v4797
      %v4799 = vsel %vm4763, %v4756, 0.0
      %v4800 = vadd.f32 %v4798, %v4799
      %v4801 = vsel %vm4763, %v4757, 0.0
      %v4802 = vadd.f32 %v4800, %v4801
      %v4803 = vsel %vm4763, %v4758, 0.0
      %v4804 = vadd.f32 %v4802, %v4803
      %v4805 = vsel %vm4763, %v4759, 0.0
      %v4806 = vadd.f32 %v4804, %v4805
      %v4807 = vsel %vm4763, %v4760, 0.0
      %v4808 = vadd.f32 %v4806, %v4807
      %v4809 = vsel %vm4763, %v4761, 0.0
      %v4810 = vadd.f32 %v4808, %v4809
      %vm4811 = vcmask 519168
      %v4812 = vsel %vm4811, %v4762, 0.0
      %v4813 = vadd.f32 %v4810, %v4812
      %v4814 = vrot.slane %v4813, 4
      %v4815 = vadd.f32 %v4813, %v4814
      %v4816 = vrot.slane %v4815, 2
      %v4817 = vadd.f32 %v4815, %v4816
      %v4818 = vrot.slane %v4817, 1
      %v4819 = vadd.f32 %v4817, %v4818
      %v4820 = vmul.f32 %v4738, %v4738
      %v4821 = vmul.f32 %v4739, %v4739
      %v4822 = vmul.f32 %v4740, %v4740
      %v4823 = vmul.f32 %v4741, %v4741
      %v4824 = vmul.f32 %v4742, %v4742
      %v4825 = vmul.f32 %v4743, %v4743
      %v4826 = vmul.f32 %v4744, %v4744
      %v4827 = vmul.f32 %v4745, %v4745
      %v4828 = vmul.f32 %v4746, %v4746
      %v4829 = vmul.f32 %v4747, %v4747
      %v4830 = vmul.f32 %v4748, %v4748
      %v4831 = vmul.f32 %v4749, %v4749
      %v4832 = vmul.f32 %v4750, %v4750
      %v4833 = vmul.f32 %v4751, %v4751
      %v4834 = vmul.f32 %v4752, %v4752
      %v4835 = vmul.f32 %v4753, %v4753
      %v4836 = vmul.f32 %v4754, %v4754
      %v4837 = vmul.f32 %v4755, %v4755
      %v4838 = vmul.f32 %v4756, %v4756
      %v4839 = vmul.f32 %v4757, %v4757
      %v4840 = vmul.f32 %v4758, %v4758
      %v4841 = vmul.f32 %v4759, %v4759
      %v4842 = vmul.f32 %v4760, %v4760
      %v4843 = vmul.f32 %v4761, %v4761
      %v4844 = vmul.f32 %v4762, %v4762
      %v4845 = vsel %vm4763, %v4820, 0.0
      %v4846 = vsel %vm4763, %v4821, 0.0
      %v4847 = vadd.f32 %v4845, %v4846
      %v4848 = vsel %vm4763, %v4822, 0.0
      %v4849 = vadd.f32 %v4847, %v4848
      %v4850 = vsel %vm4763, %v4823, 0.0
      %v4851 = vadd.f32 %v4849, %v4850
      %v4852 = vsel %vm4763, %v4824, 0.0
      %v4853 = vadd.f32 %v4851, %v4852
      %v4854 = vsel %vm4763, %v4825, 0.0
      %v4855 = vadd.f32 %v4853, %v4854
      %v4856 = vsel %vm4763, %v4826, 0.0
      %v4857 = vadd.f32 %v4855, %v4856
      %v4858 = vsel %vm4763, %v4827, 0.0
      %v4859 = vadd.f32 %v4857, %v4858
      %v4860 = vsel %vm4763, %v4828, 0.0
      %v4861 = vadd.f32 %v4859, %v4860
      %v4862 = vsel %vm4763, %v4829, 0.0
      %v4863 = vadd.f32 %v4861, %v4862
      %v4864 = vsel %vm4763, %v4830, 0.0
      %v4865 = vadd.f32 %v4863, %v4864
      %v4866 = vsel %vm4763, %v4831, 0.0
      %v4867 = vadd.f32 %v4865, %v4866
      %v4868 = vsel %vm4763, %v4832, 0.0
      %v4869 = vadd.f32 %v4867, %v4868
      %v4870 = vsel %vm4763, %v4833, 0.0
      %v4871 = vadd.f32 %v4869, %v4870
      %v4872 = vsel %vm4763, %v4834, 0.0
      %v4873 = vadd.f32 %v4871, %v4872
      %v4874 = vsel %vm4763, %v4835, 0.0
      %v4875 = vadd.f32 %v4873, %v4874
      %v4876 = vsel %vm4763, %v4836, 0.0
      %v4877 = vadd.f32 %v4875, %v4876
      %v4878 = vsel %vm4763, %v4837, 0.0
      %v4879 = vadd.f32 %v4877, %v4878
      %v4880 = vsel %vm4763, %v4838, 0.0
      %v4881 = vadd.f32 %v4879, %v4880
      %v4882 = vsel %vm4763, %v4839, 0.0
      %v4883 = vadd.f32 %v4881, %v4882
      %v4884 = vsel %vm4763, %v4840, 0.0
      %v4885 = vadd.f32 %v4883, %v4884
      %v4886 = vsel %vm4763, %v4841, 0.0
      %v4887 = vadd.f32 %v4885, %v4886
      %v4888 = vsel %vm4763, %v4842, 0.0
      %v4889 = vadd.f32 %v4887, %v4888
      %v4890 = vsel %vm4763, %v4843, 0.0
      %v4891 = vadd.f32 %v4889, %v4890
      %v4892 = vsel %vm4811, %v4844, 0.0
      %v4893 = vadd.f32 %v4891, %v4892
      %v4894 = vrot.slane %v4893, 4
      %v4895 = vadd.f32 %v4893, %v4894
      %v4896 = vrot.slane %v4895, 2
      %v4897 = vadd.f32 %v4895, %v4896
      %v4898 = vrot.slane %v4897, 1
      %v4899 = vadd.f32 %v4897, %v4898
      %vm4900 = vcmask 1040384
      %v4901 = vsel %vm4900, %v4819, %v4899
      %p4902 = scmp.eq.s32.totalorder %s23, 0
      // Predicated region
      $region41: #{noise_estimator_forward.4} parent=39 // pred_check
        %p4903 = pneg %p4902
      $region42: #{noise_estimator_forward.4} parent=39 // pred_check_branch
        %4905 = sbr.rel (%p4903) target = $region44
      $region43: #{noise_estimator_forward.4} parent=39 // pred_region
        %vm4906 = vcmask 517120
        %4907 = vst.msk [vmem:[%s315] sm:$0x3] %vm4906, 0.0
      $region44: #{noise_estimator_forward.4} parent=39 // pred_fallthru
        _
      %v4908 = vld [vmem:[%s315] sm:$0x3]
      %v4909 = vadd.f32 %v4908, %v4901
      %vm4910 = vcmask 517120
      %4911 = vst.msk [vmem:[%s315] sm:$0x3] %vm4910, %v4909
      %v4925 = vcombine.high %v4596, %v4596
      %v4927 = vunpack.c.l.s4 1966171168
      %v4928 = vunpack.c.0.s8 %v4927
      %v4929 = vlaneseq
      %v4930 = vshrl.u32 %v4929, 7
      %v4931 = vsub.s32 %v4928, %v4930
      %v4932 = vrot.slane %v4596, %v4931
      %v4934 = vunpack.c.l.s4 1966171168
      %v4935 = vunpack.c.0.s8 %v4934
      %v4936 = vlaneseq
      %v4937 = vshrl.u32 %v4936, 7
      %v4938 = vsub.s32 %v4935, %v4937
      %v4939 = vrot.slane %v4925, %v4938
      %v4940 = vcombine.high %v4932, %v4932
      %v4941 = vcombine.high %v4939, %v4939
      %v4943 = vunpack.c.l.s4 1966171168
      %v4944 = vunpack.c.0.s8 %v4943
      %v4945 = vlaneseq
      %v4946 = vshrl.u32 %v4945, 7
      %v4947 = vsub.s32 %v4944, %v4946
      %v4948 = vrot.slane %v4932, %v4947
      %v4950 = vunpack.c.l.s4 1966171168
      %v4951 = vunpack.c.0.s8 %v4950
      %v4952 = vlaneseq
      %v4953 = vshrl.u32 %v4952, 7
      %v4954 = vsub.s32 %v4951, %v4953
      %v4955 = vrot.slane %v4939, %v4954
      %v4957 = vunpack.c.l.s4 1966171168
      %v4958 = vunpack.c.0.s8 %v4957
      %v4959 = vlaneseq
      %v4960 = vshrl.u32 %v4959, 7
      %v4961 = vsub.s32 %v4958, %v4960
      %v4962 = vrot.slane %v4940, %v4961
      %v4964 = vunpack.c.l.s4 1966171168
      %v4965 = vunpack.c.0.s8 %v4964
      %v4966 = vlaneseq
      %v4967 = vshrl.u32 %v4966, 7
      %v4968 = vsub.s32 %v4965, %v4967
      %v4969 = vrot.slane %v4941, %v4968
      %v4970 = vcombine.high %v4948, %v4948
      %v4971 = vcombine.high %v4955, %v4955
      %v4972 = vcombine.high %v4962, %v4962
      %v4973 = vcombine.high %v4969, %v4969
      %v4974 = vcombine.high %v4597, %v4597
      %v4976 = vunpack.c.l.s4 1966171168
      %v4977 = vunpack.c.0.s8 %v4976
      %v4978 = vlaneseq
      %v4979 = vshrl.u32 %v4978, 7
      %v4980 = vsub.s32 %v4977, %v4979
      %v4981 = vrot.slane %v4597, %v4980
      %v4983 = vunpack.c.l.s4 1966171168
      %v4984 = vunpack.c.0.s8 %v4983
      %v4985 = vlaneseq
      %v4986 = vshrl.u32 %v4985, 7
      %v4987 = vsub.s32 %v4984, %v4986
      %v4988 = vrot.slane %v4974, %v4987
      %v4989 = vcombine.high %v4981, %v4981
      %v4990 = vcombine.high %v4988, %v4988
      %v4992 = vunpack.c.l.s4 1966171168
      %v4993 = vunpack.c.0.s8 %v4992
      %v4994 = vlaneseq
      %v4995 = vshrl.u32 %v4994, 7
      %v4996 = vsub.s32 %v4993, %v4995
      %v4997 = vrot.slane %v4981, %v4996
      %v4999 = vunpack.c.l.s4 1966171168
      %v5000 = vunpack.c.0.s8 %v4999
      %v5001 = vlaneseq
      %v5002 = vshrl.u32 %v5001, 7
      %v5003 = vsub.s32 %v5000, %v5002
      %v5004 = vrot.slane %v4988, %v5003
      %v5006 = vunpack.c.l.s4 1966171168
      %v5007 = vunpack.c.0.s8 %v5006
      %v5008 = vlaneseq
      %v5009 = vshrl.u32 %v5008, 7
      %v5010 = vsub.s32 %v5007, %v5009
      %v5011 = vrot.slane %v4989, %v5010
      %v5013 = vunpack.c.l.s4 1966171168
      %v5014 = vunpack.c.0.s8 %v5013
      %v5015 = vlaneseq
      %v5016 = vshrl.u32 %v5015, 7
      %v5017 = vsub.s32 %v5014, %v5016
      %v5018 = vrot.slane %v4990, %v5017
      %v5019 = vcombine.high %v4997, %v4997
      %v5020 = vcombine.high %v5004, %v5004
      %v5021 = vcombine.high %v5011, %v5011
      %v5022 = vcombine.high %v5018, %v5018
      %v5023 = vcombine.high %v4598, %v4598
      %v5025 = vunpack.c.l.s4 1966171168
      %v5026 = vunpack.c.0.s8 %v5025
      %v5027 = vlaneseq
      %v5028 = vshrl.u32 %v5027, 7
      %v5029 = vsub.s32 %v5026, %v5028
      %v5030 = vrot.slane %v4598, %v5029
      %v5032 = vunpack.c.l.s4 1966171168
      %v5033 = vunpack.c.0.s8 %v5032
      %v5034 = vlaneseq
      %v5035 = vshrl.u32 %v5034, 7
      %v5036 = vsub.s32 %v5033, %v5035
      %v5037 = vrot.slane %v5023, %v5036
      %v5038 = vcombine.high %v5030, %v5030
      %v5039 = vcombine.high %v5037, %v5037
      %v5041 = vunpack.c.l.s4 1966171168
      %v5042 = vunpack.c.0.s8 %v5041
      %v5043 = vlaneseq
      %v5044 = vshrl.u32 %v5043, 7
      %v5045 = vsub.s32 %v5042, %v5044
      %v5046 = vrot.slane %v5030, %v5045
      %v5048 = vunpack.c.l.s4 1966171168
      %v5049 = vunpack.c.0.s8 %v5048
      %v5050 = vlaneseq
      %v5051 = vshrl.u32 %v5050, 7
      %v5052 = vsub.s32 %v5049, %v5051
      %v5053 = vrot.slane %v5037, %v5052
      %v5055 = vunpack.c.l.s4 1966171168
      %v5056 = vunpack.c.0.s8 %v5055
      %v5057 = vlaneseq
      %v5058 = vshrl.u32 %v5057, 7
      %v5059 = vsub.s32 %v5056, %v5058
      %v5060 = vrot.slane %v5038, %v5059
      %v5062 = vunpack.c.l.s4 1966171168
      %v5063 = vunpack.c.0.s8 %v5062
      %v5064 = vlaneseq
      %v5065 = vshrl.u32 %v5064, 7
      %v5066 = vsub.s32 %v5063, %v5065
      %v5067 = vrot.slane %v5039, %v5066
      %v5068 = vcombine.high %v5046, %v5046
      %v5069 = vcombine.high %v5053, %v5053
      %v5070 = vcombine.high %v5060, %v5060
      %v5071 = vcombine.high %v5067, %v5067
      %v5072 = vcombine.high %v4599, %v4599
      %v5074 = vunpack.c.l.s4 1966171168
      %v5075 = vunpack.c.0.s8 %v5074
      %v5076 = vlaneseq
      %v5077 = vshrl.u32 %v5076, 7
      %v5078 = vsub.s32 %v5075, %v5077
      %v5079 = vrot.slane %v4599, %v5078
      %v5081 = vunpack.c.l.s4 1966171168
      %v5082 = vunpack.c.0.s8 %v5081
      %v5083 = vlaneseq
      %v5084 = vshrl.u32 %v5083, 7
      %v5085 = vsub.s32 %v5082, %v5084
      %v5086 = vrot.slane %v5072, %v5085
      %v5087 = vcombine.high %v5079, %v5079
      %v5088 = vcombine.high %v5086, %v5086
      %v5090 = vunpack.c.l.s4 1966171168
      %v5091 = vunpack.c.0.s8 %v5090
      %v5092 = vlaneseq
      %v5093 = vshrl.u32 %v5092, 7
      %v5094 = vsub.s32 %v5091, %v5093
      %v5095 = vrot.slane %v5079, %v5094
      %v5097 = vunpack.c.l.s4 1966171168
      %v5098 = vunpack.c.0.s8 %v5097
      %v5099 = vlaneseq
      %v5100 = vshrl.u32 %v5099, 7
      %v5101 = vsub.s32 %v5098, %v5100
      %v5102 = vrot.slane %v5086, %v5101
      %v5104 = vunpack.c.l.s4 1966171168
      %v5105 = vunpack.c.0.s8 %v5104
      %v5106 = vlaneseq
      %v5107 = vshrl.u32 %v5106, 7
      %v5108 = vsub.s32 %v5105, %v5107
      %v5109 = vrot.slane %v5087, %v5108
      %v5111 = vunpack.c.l.s4 1966171168
      %v5112 = vunpack.c.0.s8 %v5111
      %v5113 = vlaneseq
      %v5114 = vshrl.u32 %v5113, 7
      %v5115 = vsub.s32 %v5112, %v5114
      %v5116 = vrot.slane %v5088, %v5115
      %v5117 = vcombine.high %v5095, %v5095
      %v5118 = vcombine.high %v5102, %v5102
      %v5119 = vcombine.high %v5109, %v5109
      %v5120 = vcombine.high %v5116, %v5116
      %v5121 = vcombine.high %v4600, %v4600
      %v5123 = vunpack.c.l.s4 1966171168
      %v5124 = vunpack.c.0.s8 %v5123
      %v5125 = vlaneseq
      %v5126 = vshrl.u32 %v5125, 7
      %v5127 = vsub.s32 %v5124, %v5126
      %v5128 = vrot.slane %v4600, %v5127
      %v5130 = vunpack.c.l.s4 1966171168
      %v5131 = vunpack.c.0.s8 %v5130
      %v5132 = vlaneseq
      %v5133 = vshrl.u32 %v5132, 7
      %v5134 = vsub.s32 %v5131, %v5133
      %v5135 = vrot.slane %v5121, %v5134
      %v5136 = vcombine.high %v5128, %v5128
      %v5137 = vcombine.high %v5135, %v5135
      %v5139 = vunpack.c.l.s4 1966171168
      %v5140 = vunpack.c.0.s8 %v5139
      %v5141 = vlaneseq
      %v5142 = vshrl.u32 %v5141, 7
      %v5143 = vsub.s32 %v5140, %v5142
      %v5144 = vrot.slane %v5128, %v5143
      %v5146 = vunpack.c.l.s4 1966171168
      %v5147 = vunpack.c.0.s8 %v5146
      %v5148 = vlaneseq
      %v5149 = vshrl.u32 %v5148, 7
      %v5150 = vsub.s32 %v5147, %v5149
      %v5151 = vrot.slane %v5135, %v5150
      %v5153 = vunpack.c.l.s4 1966171168
      %v5154 = vunpack.c.0.s8 %v5153
      %v5155 = vlaneseq
      %v5156 = vshrl.u32 %v5155, 7
      %v5157 = vsub.s32 %v5154, %v5156
      %v5158 = vrot.slane %v5136, %v5157
      %v5160 = vunpack.c.l.s4 1966171168
      %v5161 = vunpack.c.0.s8 %v5160
      %v5162 = vlaneseq
      %v5163 = vshrl.u32 %v5162, 7
      %v5164 = vsub.s32 %v5161, %v5163
      %v5165 = vrot.slane %v5137, %v5164
      %v5166 = vcombine.high %v5144, %v5144
      %v5167 = vcombine.high %v5151, %v5151
      %v5168 = vcombine.high %v5158, %v5158
      %v5169 = vcombine.high %v5165, %v5165
      %v5170 = vcombine.high %v4601, %v4601
      %v5172 = vunpack.c.l.s4 1966171168
      %v5173 = vunpack.c.0.s8 %v5172
      %v5174 = vlaneseq
      %v5175 = vshrl.u32 %v5174, 7
      %v5176 = vsub.s32 %v5173, %v5175
      %v5177 = vrot.slane %v4601, %v5176
      %v5179 = vunpack.c.l.s4 1966171168
      %v5180 = vunpack.c.0.s8 %v5179
      %v5181 = vlaneseq
      %v5182 = vshrl.u32 %v5181, 7
      %v5183 = vsub.s32 %v5180, %v5182
      %v5184 = vrot.slane %v5170, %v5183
      %v5185 = vcombine.high %v5177, %v5177
      %v5186 = vcombine.high %v5184, %v5184
      %v5188 = vunpack.c.l.s4 1966171168
      %v5189 = vunpack.c.0.s8 %v5188
      %v5190 = vlaneseq
      %v5191 = vshrl.u32 %v5190, 7
      %v5192 = vsub.s32 %v5189, %v5191
      %v5193 = vrot.slane %v5177, %v5192
      %v5195 = vunpack.c.l.s4 1966171168
      %v5196 = vunpack.c.0.s8 %v5195
      %v5197 = vlaneseq
      %v5198 = vshrl.u32 %v5197, 7
      %v5199 = vsub.s32 %v5196, %v5198
      %v5200 = vrot.slane %v5184, %v5199
      %v5202 = vunpack.c.l.s4 1966171168
      %v5203 = vunpack.c.0.s8 %v5202
      %v5204 = vlaneseq
      %v5205 = vshrl.u32 %v5204, 7
      %v5206 = vsub.s32 %v5203, %v5205
      %v5207 = vrot.slane %v5185, %v5206
      %v5209 = vunpack.c.l.s4 1966171168
      %v5210 = vunpack.c.0.s8 %v5209
      %v5211 = vlaneseq
      %v5212 = vshrl.u32 %v5211, 7
      %v5213 = vsub.s32 %v5210, %v5212
      %v5214 = vrot.slane %v5186, %v5213
      %v5215 = vcombine.high %v5193, %v5193
      %v5216 = vcombine.high %v5200, %v5200
      %v5217 = vcombine.high %v5207, %v5207
      %v5218 = vcombine.high %v5214, %v5214
      %v5219 = vcombine.high %v4602, %v4602
      %v5221 = vunpack.c.l.s4 1966171168
      %v5222 = vunpack.c.0.s8 %v5221
      %v5223 = vlaneseq
      %v5224 = vshrl.u32 %v5223, 7
      %v5225 = vsub.s32 %v5222, %v5224
      %v5226 = vrot.slane %v4602, %v5225
      %v5228 = vunpack.c.l.s4 1966171168
      %v5229 = vunpack.c.0.s8 %v5228
      %v5230 = vlaneseq
      %v5231 = vshrl.u32 %v5230, 7
      %v5232 = vsub.s32 %v5229, %v5231
      %v5233 = vrot.slane %v5219, %v5232
      %v5234 = vcombine.high %v5226, %v5226
      %v5235 = vcombine.high %v5233, %v5233
      %v5237 = vunpack.c.l.s4 1966171168
      %v5238 = vunpack.c.0.s8 %v5237
      %v5239 = vlaneseq
      %v5240 = vshrl.u32 %v5239, 7
      %v5241 = vsub.s32 %v5238, %v5240
      %v5242 = vrot.slane %v5226, %v5241
      %v5244 = vunpack.c.l.s4 1966171168
      %v5245 = vunpack.c.0.s8 %v5244
      %v5246 = vlaneseq
      %v5247 = vshrl.u32 %v5246, 7
      %v5248 = vsub.s32 %v5245, %v5247
      %v5249 = vrot.slane %v5233, %v5248
      %v5251 = vunpack.c.l.s4 1966171168
      %v5252 = vunpack.c.0.s8 %v5251
      %v5253 = vlaneseq
      %v5254 = vshrl.u32 %v5253, 7
      %v5255 = vsub.s32 %v5252, %v5254
      %v5256 = vrot.slane %v5234, %v5255
      %v5258 = vunpack.c.l.s4 1966171168
      %v5259 = vunpack.c.0.s8 %v5258
      %v5260 = vlaneseq
      %v5261 = vshrl.u32 %v5260, 7
      %v5262 = vsub.s32 %v5259, %v5261
      %v5263 = vrot.slane %v5235, %v5262
      %v5264 = vcombine.high %v5242, %v5242
      %v5265 = vcombine.high %v5249, %v5249
      %v5266 = vcombine.high %v5256, %v5256
      %v5267 = vcombine.high %v5263, %v5263
      %v5268 = vcombine.high %v4603, %v4603
      %v5270 = vunpack.c.l.s4 1966171168
      %v5271 = vunpack.c.0.s8 %v5270
      %v5272 = vlaneseq
      %v5273 = vshrl.u32 %v5272, 7
      %v5274 = vsub.s32 %v5271, %v5273
      %v5275 = vrot.slane %v4603, %v5274
      %v5277 = vunpack.c.l.s4 1966171168
      %v5278 = vunpack.c.0.s8 %v5277
      %v5279 = vlaneseq
      %v5280 = vshrl.u32 %v5279, 7
      %v5281 = vsub.s32 %v5278, %v5280
      %v5282 = vrot.slane %v5268, %v5281
      %v5283 = vcombine.high %v5275, %v5275
      %v5284 = vcombine.high %v5282, %v5282
      %v5286 = vunpack.c.l.s4 1966171168
      %v5287 = vunpack.c.0.s8 %v5286
      %v5288 = vlaneseq
      %v5289 = vshrl.u32 %v5288, 7
      %v5290 = vsub.s32 %v5287, %v5289
      %v5291 = vrot.slane %v5275, %v5290
      %v5293 = vunpack.c.l.s4 1966171168
      %v5294 = vunpack.c.0.s8 %v5293
      %v5295 = vlaneseq
      %v5296 = vshrl.u32 %v5295, 7
      %v5297 = vsub.s32 %v5294, %v5296
      %v5298 = vrot.slane %v5282, %v5297
      %v5300 = vunpack.c.l.s4 1966171168
      %v5301 = vunpack.c.0.s8 %v5300
      %v5302 = vlaneseq
      %v5303 = vshrl.u32 %v5302, 7
      %v5304 = vsub.s32 %v5301, %v5303
      %v5305 = vrot.slane %v5283, %v5304
      %v5307 = vunpack.c.l.s4 1966171168
      %v5308 = vunpack.c.0.s8 %v5307
      %v5309 = vlaneseq
      %v5310 = vshrl.u32 %v5309, 7
      %v5311 = vsub.s32 %v5308, %v5310
      %v5312 = vrot.slane %v5284, %v5311
      %v5313 = vcombine.high %v5291, %v5291
      %v5314 = vcombine.high %v5298, %v5298
      %v5315 = vcombine.high %v5305, %v5305
      %v5316 = vcombine.high %v5312, %v5312
      %v5317 = vcombine.high %v4604, %v4604
      %v5319 = vunpack.c.l.s4 1966171168
      %v5320 = vunpack.c.0.s8 %v5319
      %v5321 = vlaneseq
      %v5322 = vshrl.u32 %v5321, 7
      %v5323 = vsub.s32 %v5320, %v5322
      %v5324 = vrot.slane %v4604, %v5323
      %v5326 = vunpack.c.l.s4 1966171168
      %v5327 = vunpack.c.0.s8 %v5326
      %v5328 = vlaneseq
      %v5329 = vshrl.u32 %v5328, 7
      %v5330 = vsub.s32 %v5327, %v5329
      %v5331 = vrot.slane %v5317, %v5330
      %v5332 = vcombine.high %v5324, %v5324
      %v5333 = vcombine.high %v5331, %v5331
      %v5335 = vunpack.c.l.s4 1966171168
      %v5336 = vunpack.c.0.s8 %v5335
      %v5337 = vlaneseq
      %v5338 = vshrl.u32 %v5337, 7
      %v5339 = vsub.s32 %v5336, %v5338
      %v5340 = vrot.slane %v5324, %v5339
      %v5342 = vunpack.c.l.s4 1966171168
      %v5343 = vunpack.c.0.s8 %v5342
      %v5344 = vlaneseq
      %v5345 = vshrl.u32 %v5344, 7
      %v5346 = vsub.s32 %v5343, %v5345
      %v5347 = vrot.slane %v5331, %v5346
      %v5349 = vunpack.c.l.s4 1966171168
      %v5350 = vunpack.c.0.s8 %v5349
      %v5351 = vlaneseq
      %v5352 = vshrl.u32 %v5351, 7
      %v5353 = vsub.s32 %v5350, %v5352
      %v5354 = vrot.slane %v5332, %v5353
      %v5356 = vunpack.c.l.s4 1966171168
      %v5357 = vunpack.c.0.s8 %v5356
      %v5358 = vlaneseq
      %v5359 = vshrl.u32 %v5358, 7
      %v5360 = vsub.s32 %v5357, %v5359
      %v5361 = vrot.slane %v5333, %v5360
      %v5362 = vcombine.high %v5340, %v5340
      %v5363 = vcombine.high %v5347, %v5347
      %v5364 = vcombine.high %v5354, %v5354
      %v5365 = vcombine.high %v5361, %v5361
      %v5366 = vcombine.high %v4605, %v4605
      %v5368 = vunpack.c.l.s4 1966171168
      %v5369 = vunpack.c.0.s8 %v5368
      %v5370 = vlaneseq
      %v5371 = vshrl.u32 %v5370, 7
      %v5372 = vsub.s32 %v5369, %v5371
      %v5373 = vrot.slane %v4605, %v5372
      %v5375 = vunpack.c.l.s4 1966171168
      %v5376 = vunpack.c.0.s8 %v5375
      %v5377 = vlaneseq
      %v5378 = vshrl.u32 %v5377, 7
      %v5379 = vsub.s32 %v5376, %v5378
      %v5380 = vrot.slane %v5366, %v5379
      %v5381 = vcombine.high %v5373, %v5373
      %v5382 = vcombine.high %v5380, %v5380
      %v5384 = vunpack.c.l.s4 1966171168
      %v5385 = vunpack.c.0.s8 %v5384
      %v5386 = vlaneseq
      %v5387 = vshrl.u32 %v5386, 7
      %v5388 = vsub.s32 %v5385, %v5387
      %v5389 = vrot.slane %v5373, %v5388
      %v5391 = vunpack.c.l.s4 1966171168
      %v5392 = vunpack.c.0.s8 %v5391
      %v5393 = vlaneseq
      %v5394 = vshrl.u32 %v5393, 7
      %v5395 = vsub.s32 %v5392, %v5394
      %v5396 = vrot.slane %v5380, %v5395
      %v5398 = vunpack.c.l.s4 1966171168
      %v5399 = vunpack.c.0.s8 %v5398
      %v5400 = vlaneseq
      %v5401 = vshrl.u32 %v5400, 7
      %v5402 = vsub.s32 %v5399, %v5401
      %v5403 = vrot.slane %v5381, %v5402
      %v5405 = vunpack.c.l.s4 1966171168
      %v5406 = vunpack.c.0.s8 %v5405
      %v5407 = vlaneseq
      %v5408 = vshrl.u32 %v5407, 7
      %v5409 = vsub.s32 %v5406, %v5408
      %v5410 = vrot.slane %v5382, %v5409
      %v5411 = vcombine.high %v5389, %v5389
      %v5412 = vcombine.high %v5396, %v5396
      %v5413 = vcombine.high %v5403, %v5403
      %v5414 = vcombine.high %v5410, %v5410
      %v5415 = vcombine.high %v4606, %v4606
      %v5417 = vunpack.c.l.s4 1966171168
      %v5418 = vunpack.c.0.s8 %v5417
      %v5419 = vlaneseq
      %v5420 = vshrl.u32 %v5419, 7
      %v5421 = vsub.s32 %v5418, %v5420
      %v5422 = vrot.slane %v4606, %v5421
      %v5424 = vunpack.c.l.s4 1966171168
      %v5425 = vunpack.c.0.s8 %v5424
      %v5426 = vlaneseq
      %v5427 = vshrl.u32 %v5426, 7
      %v5428 = vsub.s32 %v5425, %v5427
      %v5429 = vrot.slane %v5415, %v5428
      %v5430 = vcombine.high %v5422, %v5422
      %v5431 = vcombine.high %v5429, %v5429
      %v5433 = vunpack.c.l.s4 1966171168
      %v5434 = vunpack.c.0.s8 %v5433
      %v5435 = vlaneseq
      %v5436 = vshrl.u32 %v5435, 7
      %v5437 = vsub.s32 %v5434, %v5436
      %v5438 = vrot.slane %v5422, %v5437
      %v5440 = vunpack.c.l.s4 1966171168
      %v5441 = vunpack.c.0.s8 %v5440
      %v5442 = vlaneseq
      %v5443 = vshrl.u32 %v5442, 7
      %v5444 = vsub.s32 %v5441, %v5443
      %v5445 = vrot.slane %v5429, %v5444
      %v5447 = vunpack.c.l.s4 1966171168
      %v5448 = vunpack.c.0.s8 %v5447
      %v5449 = vlaneseq
      %v5450 = vshrl.u32 %v5449, 7
      %v5451 = vsub.s32 %v5448, %v5450
      %v5452 = vrot.slane %v5430, %v5451
      %v5454 = vunpack.c.l.s4 1966171168
      %v5455 = vunpack.c.0.s8 %v5454
      %v5456 = vlaneseq
      %v5457 = vshrl.u32 %v5456, 7
      %v5458 = vsub.s32 %v5455, %v5457
      %v5459 = vrot.slane %v5431, %v5458
      %v5460 = vcombine.high %v5438, %v5438
      %v5461 = vcombine.high %v5445, %v5445
      %v5462 = vcombine.high %v5452, %v5452
      %v5463 = vcombine.high %v5459, %v5459
      %v5464 = vcombine.high %v4607, %v4607
      %v5466 = vunpack.c.l.s4 1966171168
      %v5467 = vunpack.c.0.s8 %v5466
      %v5468 = vlaneseq
      %v5469 = vshrl.u32 %v5468, 7
      %v5470 = vsub.s32 %v5467, %v5469
      %v5471 = vrot.slane %v4607, %v5470
      %v5473 = vunpack.c.l.s4 1966171168
      %v5474 = vunpack.c.0.s8 %v5473
      %v5475 = vlaneseq
      %v5476 = vshrl.u32 %v5475, 7
      %v5477 = vsub.s32 %v5474, %v5476
      %v5478 = vrot.slane %v5464, %v5477
      %v5479 = vcombine.high %v5471, %v5471
      %v5480 = vcombine.high %v5478, %v5478
      %v5482 = vunpack.c.l.s4 1966171168
      %v5483 = vunpack.c.0.s8 %v5482
      %v5484 = vlaneseq
      %v5485 = vshrl.u32 %v5484, 7
      %v5486 = vsub.s32 %v5483, %v5485
      %v5487 = vrot.slane %v5471, %v5486
      %v5489 = vunpack.c.l.s4 1966171168
      %v5490 = vunpack.c.0.s8 %v5489
      %v5491 = vlaneseq
      %v5492 = vshrl.u32 %v5491, 7
      %v5493 = vsub.s32 %v5490, %v5492
      %v5494 = vrot.slane %v5478, %v5493
      %v5496 = vunpack.c.l.s4 1966171168
      %v5497 = vunpack.c.0.s8 %v5496
      %v5498 = vlaneseq
      %v5499 = vshrl.u32 %v5498, 7
      %v5500 = vsub.s32 %v5497, %v5499
      %v5501 = vrot.slane %v5479, %v5500
      %v5503 = vunpack.c.l.s4 1966171168
      %v5504 = vunpack.c.0.s8 %v5503
      %v5505 = vlaneseq
      %v5506 = vshrl.u32 %v5505, 7
      %v5507 = vsub.s32 %v5504, %v5506
      %v5508 = vrot.slane %v5480, %v5507
      %v5509 = vcombine.high %v5487, %v5487
      %v5510 = vcombine.high %v5494, %v5494
      %v5511 = vcombine.high %v5501, %v5501
      %v5512 = vcombine.high %v5508, %v5508
      %v5514 = vunpack.c.l.s4 1966171168
      %v5515 = vunpack.c.0.s8 %v5514
      %v5516 = vlaneseq
      %v5517 = vshrl.u32 %v5516, 7
      %v5518 = vsub.s32 %v5515, %v5517
      %v5519 = vrot.slane %v4608, %v5518
      %v5520 = vcombine.high %v5519, %v5519
      %v5522 = vunpack.c.l.s4 1966171168
      %v5523 = vunpack.c.0.s8 %v5522
      %v5524 = vlaneseq
      %v5525 = vshrl.u32 %v5524, 7
      %v5526 = vsub.s32 %v5523, %v5525
      %v5527 = vrot.slane %v5519, %v5526
      %v5529 = vunpack.c.l.s4 1966171168
      %v5530 = vunpack.c.0.s8 %v5529
      %v5531 = vlaneseq
      %v5532 = vshrl.u32 %v5531, 7
      %v5533 = vsub.s32 %v5530, %v5532
      %v5534 = vrot.slane %v5520, %v5533
      %v5535 = vcombine.low %v4948, %v4970
      %v5536 = vcombine.low %v4962, %v4972
      %v5538 = vunpack.c.l.s4 1935823168
      %v5539 = vunpack.c.0.s8 %v5538
      %v5540 = vlaneseq
      %v5541 = vshrl.u32 %v5540, 7
      %v5542 = vsub.s32 %v5539, %v5541
      %v5543 = vrot.slane %v5535, %v5542
      %v5545 = vunpack.c.l.s4 1935823168
      %v5546 = vunpack.c.0.s8 %v5545
      %v5547 = vlaneseq
      %v5548 = vshrl.u32 %v5547, 7
      %v5549 = vsub.s32 %v5546, %v5548
      %v5550 = vrot.slane %v5536, %v5549
      %v5551 = vcombine.low %v5543, %v5550
      %v5553 = vunpack.c.l.s4 1935823168
      %v5554 = vunpack.c.0.s8 %v5553
      %v5555 = vlaneseq
      %v5556 = vshrl.u32 %v5555, 7
      %v5557 = vsub.s32 %v5554, %v5556
      %v5558 = vrot.slane %v5551, %v5557
      %v5559 = vcombine.low %v4955, %v4971
      %v5561 = vunpack.c.l.s4 1935823168
      %v5562 = vunpack.c.0.s8 %v5561
      %v5563 = vlaneseq
      %v5564 = vshrl.u32 %v5563, 7
      %v5565 = vsub.s32 %v5562, %v5564
      %v5566 = vrot.slane %v5559, %v5565
      %v5568 = vunpack.c.l.s4 1935823168
      %v5569 = vunpack.c.0.s8 %v5568
      %v5570 = vlaneseq
      %v5571 = vshrl.u32 %v5570, 7
      %v5572 = vsub.s32 %v5569, %v5571
      %v5573 = vrot.slane %v4969, %v5572
      %v5574 = vcombine.low %v5566, %v5573
      %v5576 = vunpack.c.l.s4 1935823168
      %v5577 = vunpack.c.0.s8 %v5576
      %v5578 = vlaneseq
      %v5579 = vshrl.u32 %v5578, 7
      %v5580 = vsub.s32 %v5577, %v5579
      %v5581 = vrot.slane %v5574, %v5580
      %v5582 = vcombine.low %v4973, %v5011
      %v5583 = vcombine.low %v4997, %v5019
      %v5585 = vunpack.c.l.s4 1935823168
      %v5586 = vunpack.c.0.s8 %v5585
      %v5587 = vlaneseq
      %v5588 = vshrl.u32 %v5587, 7
      %v5589 = vsub.s32 %v5586, %v5588
      %v5590 = vrot.slane %v5582, %v5589
      %v5592 = vunpack.c.l.s4 1935823168
      %v5593 = vunpack.c.0.s8 %v5592
      %v5594 = vlaneseq
      %v5595 = vshrl.u32 %v5594, 7
      %v5596 = vsub.s32 %v5593, %v5595
      %v5597 = vrot.slane %v5583, %v5596
      %v5598 = vcombine.low %v5590, %v5597
      %v5600 = vunpack.c.l.s4 1935823168
      %v5601 = vunpack.c.0.s8 %v5600
      %v5602 = vlaneseq
      %v5603 = vshrl.u32 %v5602, 7
      %v5604 = vsub.s32 %v5601, %v5603
      %v5605 = vrot.slane %v5598, %v5604
      %v5606 = vcombine.low %v5021, %v5018
      %v5608 = vunpack.c.l.s4 1935823168
      %v5609 = vunpack.c.0.s8 %v5608
      %v5610 = vlaneseq
      %v5611 = vshrl.u32 %v5610, 7
      %v5612 = vsub.s32 %v5609, %v5611
      %v5613 = vrot.slane %v5606, %v5612
      %v5615 = vunpack.c.l.s4 1935823168
      %v5616 = vunpack.c.0.s8 %v5615
      %v5617 = vlaneseq
      %v5618 = vshrl.u32 %v5617, 7
      %v5619 = vsub.s32 %v5616, %v5618
      %v5620 = vrot.slane %v5004, %v5619
      %v5621 = vcombine.low %v5613, %v5620
      %v5623 = vunpack.c.l.s4 1935823168
      %v5624 = vunpack.c.0.s8 %v5623
      %v5625 = vlaneseq
      %v5626 = vshrl.u32 %v5625, 7
      %v5627 = vsub.s32 %v5624, %v5626
      %v5628 = vrot.slane %v5621, %v5627
      %v5629 = vcombine.low %v5020, %v5046
      %v5630 = vcombine.low %v5022, %v5060
      %v5632 = vunpack.c.l.s4 1935823168
      %v5633 = vunpack.c.0.s8 %v5632
      %v5634 = vlaneseq
      %v5635 = vshrl.u32 %v5634, 7
      %v5636 = vsub.s32 %v5633, %v5635
      %v5637 = vrot.slane %v5629, %v5636
      %v5639 = vunpack.c.l.s4 1935823168
      %v5640 = vunpack.c.0.s8 %v5639
      %v5641 = vlaneseq
      %v5642 = vshrl.u32 %v5641, 7
      %v5643 = vsub.s32 %v5640, %v5642
      %v5644 = vrot.slane %v5630, %v5643
      %v5645 = vcombine.low %v5637, %v5644
      %v5647 = vunpack.c.l.s4 1935823168
      %v5648 = vunpack.c.0.s8 %v5647
      %v5649 = vlaneseq
      %v5650 = vshrl.u32 %v5649, 7
      %v5651 = vsub.s32 %v5648, %v5650
      %v5652 = vrot.slane %v5645, %v5651
      %v5653 = vcombine.low %v5068, %v5053
      %v5655 = vunpack.c.l.s4 1935823168
      %v5656 = vunpack.c.0.s8 %v5655
      %v5657 = vlaneseq
      %v5658 = vshrl.u32 %v5657, 7
      %v5659 = vsub.s32 %v5656, %v5658
      %v5660 = vrot.slane %v5653, %v5659
      %v5662 = vunpack.c.l.s4 1935823168
      %v5663 = vunpack.c.0.s8 %v5662
      %v5664 = vlaneseq
      %v5665 = vshrl.u32 %v5664, 7
      %v5666 = vsub.s32 %v5663, %v5665
      %v5667 = vrot.slane %v5070, %v5666
      %v5668 = vcombine.low %v5660, %v5667
      %v5670 = vunpack.c.l.s4 1935823168
      %v5671 = vunpack.c.0.s8 %v5670
      %v5672 = vlaneseq
      %v5673 = vshrl.u32 %v5672, 7
      %v5674 = vsub.s32 %v5671, %v5673
      %v5675 = vrot.slane %v5668, %v5674
      %v5676 = vcombine.low %v5067, %v5071
      %v5677 = vcombine.low %v5069, %v5095
      %v5679 = vunpack.c.l.s4 1935823168
      %v5680 = vunpack.c.0.s8 %v5679
      %v5681 = vlaneseq
      %v5682 = vshrl.u32 %v5681, 7
      %v5683 = vsub.s32 %v5680, %v5682
      %v5684 = vrot.slane %v5676, %v5683
      %v5686 = vunpack.c.l.s4 1935823168
      %v5687 = vunpack.c.0.s8 %v5686
      %v5688 = vlaneseq
      %v5689 = vshrl.u32 %v5688, 7
      %v5690 = vsub.s32 %v5687, %v5689
      %v5691 = vrot.slane %v5677, %v5690
      %v5692 = vcombine.low %v5684, %v5691
      %v5694 = vunpack.c.l.s4 1935823168
      %v5695 = vunpack.c.0.s8 %v5694
      %v5696 = vlaneseq
      %v5697 = vshrl.u32 %v5696, 7
      %v5698 = vsub.s32 %v5695, %v5697
      %v5699 = vrot.slane %v5692, %v5698
      %v5700 = vcombine.low %v5109, %v5119
      %v5702 = vunpack.c.l.s4 1935823168
      %v5703 = vunpack.c.0.s8 %v5702
      %v5704 = vlaneseq
      %v5705 = vshrl.u32 %v5704, 7
      %v5706 = vsub.s32 %v5703, %v5705
      %v5707 = vrot.slane %v5700, %v5706
      %v5709 = vunpack.c.l.s4 1935823168
      %v5710 = vunpack.c.0.s8 %v5709
      %v5711 = vlaneseq
      %v5712 = vshrl.u32 %v5711, 7
      %v5713 = vsub.s32 %v5710, %v5712
      %v5714 = vrot.slane %v5117, %v5713
      %v5715 = vcombine.low %v5707, %v5714
      %v5717 = vunpack.c.l.s4 1935823168
      %v5718 = vunpack.c.0.s8 %v5717
      %v5719 = vlaneseq
      %v5720 = vshrl.u32 %v5719, 7
      %v5721 = vsub.s32 %v5718, %v5720
      %v5722 = vrot.slane %v5715, %v5721
      %v5723 = vcombine.low %v5102, %v5118
      %v5724 = vcombine.low %v5116, %v5120
      %v5726 = vunpack.c.l.s4 1935823168
      %v5727 = vunpack.c.0.s8 %v5726
      %v5728 = vlaneseq
      %v5729 = vshrl.u32 %v5728, 7
      %v5730 = vsub.s32 %v5727, %v5729
      %v5731 = vrot.slane %v5723, %v5730
      %v5733 = vunpack.c.l.s4 1935823168
      %v5734 = vunpack.c.0.s8 %v5733
      %v5735 = vlaneseq
      %v5736 = vshrl.u32 %v5735, 7
      %v5737 = vsub.s32 %v5734, %v5736
      %v5738 = vrot.slane %v5724, %v5737
      %v5739 = vcombine.low %v5731, %v5738
      %v5741 = vunpack.c.l.s4 1935823168
      %v5742 = vunpack.c.0.s8 %v5741
      %v5743 = vlaneseq
      %v5744 = vshrl.u32 %v5743, 7
      %v5745 = vsub.s32 %v5742, %v5744
      %v5746 = vrot.slane %v5739, %v5745
      %v5747 = vcombine.low %v5144, %v5166
      %v5749 = vunpack.c.l.s4 1935823168
      %v5750 = vunpack.c.0.s8 %v5749
      %v5751 = vlaneseq
      %v5752 = vshrl.u32 %v5751, 7
      %v5753 = vsub.s32 %v5750, %v5752
      %v5754 = vrot.slane %v5747, %v5753
      %v5756 = vunpack.c.l.s4 1935823168
      %v5757 = vunpack.c.0.s8 %v5756
      %v5758 = vlaneseq
      %v5759 = vshrl.u32 %v5758, 7
      %v5760 = vsub.s32 %v5757, %v5759
      %v5761 = vrot.slane %v5158, %v5760
      %v5762 = vcombine.low %v5754, %v5761
      %v5764 = vunpack.c.l.s4 1935823168
      %v5765 = vunpack.c.0.s8 %v5764
      %v5766 = vlaneseq
      %v5767 = vshrl.u32 %v5766, 7
      %v5768 = vsub.s32 %v5765, %v5767
      %v5769 = vrot.slane %v5762, %v5768
      %v5770 = vcombine.low %v5168, %v5165
      %v5771 = vcombine.low %v5151, %v5167
      %v5773 = vunpack.c.l.s4 1935823168
      %v5774 = vunpack.c.0.s8 %v5773
      %v5775 = vlaneseq
      %v5776 = vshrl.u32 %v5775, 7
      %v5777 = vsub.s32 %v5774, %v5776
      %v5778 = vrot.slane %v5770, %v5777
      %v5780 = vunpack.c.l.s4 1935823168
      %v5781 = vunpack.c.0.s8 %v5780
      %v5782 = vlaneseq
      %v5783 = vshrl.u32 %v5782, 7
      %v5784 = vsub.s32 %v5781, %v5783
      %v5785 = vrot.slane %v5771, %v5784
      %v5786 = vcombine.low %v5778, %v5785
      %v5788 = vunpack.c.l.s4 1935823168
      %v5789 = vunpack.c.0.s8 %v5788
      %v5790 = vlaneseq
      %v5791 = vshrl.u32 %v5790, 7
      %v5792 = vsub.s32 %v5789, %v5791
      %v5793 = vrot.slane %v5786, %v5792
      %v5794 = vcombine.low %v5169, %v5207
      %v5796 = vunpack.c.l.s4 1935823168
      %v5797 = vunpack.c.0.s8 %v5796
      %v5798 = vlaneseq
      %v5799 = vshrl.u32 %v5798, 7
      %v5800 = vsub.s32 %v5797, %v5799
      %v5801 = vrot.slane %v5794, %v5800
      %v5803 = vunpack.c.l.s4 1935823168
      %v5804 = vunpack.c.0.s8 %v5803
      %v5805 = vlaneseq
      %v5806 = vshrl.u32 %v5805, 7
      %v5807 = vsub.s32 %v5804, %v5806
      %v5808 = vrot.slane %v5193, %v5807
      %v5809 = vcombine.low %v5801, %v5808
      %v5811 = vunpack.c.l.s4 1935823168
      %v5812 = vunpack.c.0.s8 %v5811
      %v5813 = vlaneseq
      %v5814 = vshrl.u32 %v5813, 7
      %v5815 = vsub.s32 %v5812, %v5814
      %v5816 = vrot.slane %v5809, %v5815
      %v5817 = vcombine.low %v5215, %v5200
      %v5818 = vcombine.low %v5217, %v5214
      %v5820 = vunpack.c.l.s4 1935823168
      %v5821 = vunpack.c.0.s8 %v5820
      %v5822 = vlaneseq
      %v5823 = vshrl.u32 %v5822, 7
      %v5824 = vsub.s32 %v5821, %v5823
      %v5825 = vrot.slane %v5817, %v5824
      %v5827 = vunpack.c.l.s4 1935823168
      %v5828 = vunpack.c.0.s8 %v5827
      %v5829 = vlaneseq
      %v5830 = vshrl.u32 %v5829, 7
      %v5831 = vsub.s32 %v5828, %v5830
      %v5832 = vrot.slane %v5818, %v5831
      %v5833 = vcombine.low %v5825, %v5832
      %v5835 = vunpack.c.l.s4 1935823168
      %v5836 = vunpack.c.0.s8 %v5835
      %v5837 = vlaneseq
      %v5838 = vshrl.u32 %v5837, 7
      %v5839 = vsub.s32 %v5836, %v5838
      %v5840 = vrot.slane %v5833, %v5839
      %v5841 = vcombine.low %v5216, %v5242
      %v5843 = vunpack.c.l.s4 1935823168
      %v5844 = vunpack.c.0.s8 %v5843
      %v5845 = vlaneseq
      %v5846 = vshrl.u32 %v5845, 7
      %v5847 = vsub.s32 %v5844, %v5846
      %v5848 = vrot.slane %v5841, %v5847
      %v5850 = vunpack.c.l.s4 1935823168
      %v5851 = vunpack.c.0.s8 %v5850
      %v5852 = vlaneseq
      %v5853 = vshrl.u32 %v5852, 7
      %v5854 = vsub.s32 %v5851, %v5853
      %v5855 = vrot.slane %v5218, %v5854
      %v5856 = vcombine.low %v5848, %v5855
      %v5858 = vunpack.c.l.s4 1935823168
      %v5859 = vunpack.c.0.s8 %v5858
      %v5860 = vlaneseq
      %v5861 = vshrl.u32 %v5860, 7
      %v5862 = vsub.s32 %v5859, %v5861
      %v5863 = vrot.slane %v5856, %v5862
      %v5864 = vcombine.low %v5256, %v5266
      %v5865 = vcombine.low %v5264, %v5249
      %v5867 = vunpack.c.l.s4 1935823168
      %v5868 = vunpack.c.0.s8 %v5867
      %v5869 = vlaneseq
      %v5870 = vshrl.u32 %v5869, 7
      %v5871 = vsub.s32 %v5868, %v5870
      %v5872 = vrot.slane %v5864, %v5871
      %v5874 = vunpack.c.l.s4 1935823168
      %v5875 = vunpack.c.0.s8 %v5874
      %v5876 = vlaneseq
      %v5877 = vshrl.u32 %v5876, 7
      %v5878 = vsub.s32 %v5875, %v5877
      %v5879 = vrot.slane %v5865, %v5878
      %v5880 = vcombine.low %v5872, %v5879
      %v5882 = vunpack.c.l.s4 1935823168
      %v5883 = vunpack.c.0.s8 %v5882
      %v5884 = vlaneseq
      %v5885 = vshrl.u32 %v5884, 7
      %v5886 = vsub.s32 %v5883, %v5885
      %v5887 = vrot.slane %v5880, %v5886
      %v5888 = vcombine.low %v5263, %v5267
      %v5890 = vunpack.c.l.s4 1935823168
      %v5891 = vunpack.c.0.s8 %v5890
      %v5892 = vlaneseq
      %v5893 = vshrl.u32 %v5892, 7
      %v5894 = vsub.s32 %v5891, %v5893
      %v5895 = vrot.slane %v5888, %v5894
      %v5897 = vunpack.c.l.s4 1935823168
      %v5898 = vunpack.c.0.s8 %v5897
      %v5899 = vlaneseq
      %v5900 = vshrl.u32 %v5899, 7
      %v5901 = vsub.s32 %v5898, %v5900
      %v5902 = vrot.slane %v5265, %v5901
      %v5903 = vcombine.low %v5895, %v5902
      %v5905 = vunpack.c.l.s4 1935823168
      %v5906 = vunpack.c.0.s8 %v5905
      %v5907 = vlaneseq
      %v5908 = vshrl.u32 %v5907, 7
      %v5909 = vsub.s32 %v5906, %v5908
      %v5910 = vrot.slane %v5903, %v5909
      %v5911 = vcombine.low %v5291, %v5313
      %v5912 = vcombine.low %v5305, %v5315
      %v5914 = vunpack.c.l.s4 1935823168
      %v5915 = vunpack.c.0.s8 %v5914
      %v5916 = vlaneseq
      %v5917 = vshrl.u32 %v5916, 7
      %v5918 = vsub.s32 %v5915, %v5917
      %v5919 = vrot.slane %v5911, %v5918
      %v5921 = vunpack.c.l.s4 1935823168
      %v5922 = vunpack.c.0.s8 %v5921
      %v5923 = vlaneseq
      %v5924 = vshrl.u32 %v5923, 7
      %v5925 = vsub.s32 %v5922, %v5924
      %v5926 = vrot.slane %v5912, %v5925
      %v5927 = vcombine.low %v5919, %v5926
      %v5929 = vunpack.c.l.s4 1935823168
      %v5930 = vunpack.c.0.s8 %v5929
      %v5931 = vlaneseq
      %v5932 = vshrl.u32 %v5931, 7
      %v5933 = vsub.s32 %v5930, %v5932
      %v5934 = vrot.slane %v5927, %v5933
      %v5935 = vcombine.low %v5298, %v5314
      %v5937 = vunpack.c.l.s4 1935823168
      %v5938 = vunpack.c.0.s8 %v5937
      %v5939 = vlaneseq
      %v5940 = vshrl.u32 %v5939, 7
      %v5941 = vsub.s32 %v5938, %v5940
      %v5942 = vrot.slane %v5935, %v5941
      %v5944 = vunpack.c.l.s4 1935823168
      %v5945 = vunpack.c.0.s8 %v5944
      %v5946 = vlaneseq
      %v5947 = vshrl.u32 %v5946, 7
      %v5948 = vsub.s32 %v5945, %v5947
      %v5949 = vrot.slane %v5312, %v5948
      %v5950 = vcombine.low %v5942, %v5949
      %v5952 = vunpack.c.l.s4 1935823168
      %v5953 = vunpack.c.0.s8 %v5952
      %v5954 = vlaneseq
      %v5955 = vshrl.u32 %v5954, 7
      %v5956 = vsub.s32 %v5953, %v5955
      %v5957 = vrot.slane %v5950, %v5956
      %v5958 = vcombine.low %v5316, %v5354
      %v5959 = vcombine.low %v5340, %v5362
      %v5961 = vunpack.c.l.s4 1935823168
      %v5962 = vunpack.c.0.s8 %v5961
      %v5963 = vlaneseq
      %v5964 = vshrl.u32 %v5963, 7
      %v5965 = vsub.s32 %v5962, %v5964
      %v5966 = vrot.slane %v5958, %v5965
      %v5968 = vunpack.c.l.s4 1935823168
      %v5969 = vunpack.c.0.s8 %v5968
      %v5970 = vlaneseq
      %v5971 = vshrl.u32 %v5970, 7
      %v5972 = vsub.s32 %v5969, %v5971
      %v5973 = vrot.slane %v5959, %v5972
      %v5974 = vcombine.low %v5966, %v5973
      %v5976 = vunpack.c.l.s4 1935823168
      %v5977 = vunpack.c.0.s8 %v5976
      %v5978 = vlaneseq
      %v5979 = vshrl.u32 %v5978, 7
      %v5980 = vsub.s32 %v5977, %v5979
      %v5981 = vrot.slane %v5974, %v5980
      %v5982 = vcombine.low %v5364, %v5361
      %v5984 = vunpack.c.l.s4 1935823168
      %v5985 = vunpack.c.0.s8 %v5984
      %v5986 = vlaneseq
      %v5987 = vshrl.u32 %v5986, 7
      %v5988 = vsub.s32 %v5985, %v5987
      %v5989 = vrot.slane %v5982, %v5988
      %v5991 = vunpack.c.l.s4 1935823168
      %v5992 = vunpack.c.0.s8 %v5991
      %v5993 = vlaneseq
      %v5994 = vshrl.u32 %v5993, 7
      %v5995 = vsub.s32 %v5992, %v5994
      %v5996 = vrot.slane %v5347, %v5995
      %v5997 = vcombine.low %v5989, %v5996
      %v5999 = vunpack.c.l.s4 1935823168
      %v6000 = vunpack.c.0.s8 %v5999
      %v6001 = vlaneseq
      %v6002 = vshrl.u32 %v6001, 7
      %v6003 = vsub.s32 %v6000, %v6002
      %v6004 = vrot.slane %v5997, %v6003
      %v6005 = vcombine.low %v5363, %v5389
      %v6006 = vcombine.low %v5365, %v5403
      %v6008 = vunpack.c.l.s4 1935823168
      %v6009 = vunpack.c.0.s8 %v6008
      %v6010 = vlaneseq
      %v6011 = vshrl.u32 %v6010, 7
      %v6012 = vsub.s32 %v6009, %v6011
      %v6013 = vrot.slane %v6005, %v6012
      %v6015 = vunpack.c.l.s4 1935823168
      %v6016 = vunpack.c.0.s8 %v6015
      %v6017 = vlaneseq
      %v6018 = vshrl.u32 %v6017, 7
      %v6019 = vsub.s32 %v6016, %v6018
      %v6020 = vrot.slane %v6006, %v6019
      %v6021 = vcombine.low %v6013, %v6020
      %v6023 = vunpack.c.l.s4 1935823168
      %v6024 = vunpack.c.0.s8 %v6023
      %v6025 = vlaneseq
      %v6026 = vshrl.u32 %v6025, 7
      %v6027 = vsub.s32 %v6024, %v6026
      %v6028 = vrot.slane %v6021, %v6027
      %v6029 = vcombine.low %v5411, %v5396
      %v6031 = vunpack.c.l.s4 1935823168
      %v6032 = vunpack.c.0.s8 %v6031
      %v6033 = vlaneseq
      %v6034 = vshrl.u32 %v6033, 7
      %v6035 = vsub.s32 %v6032, %v6034
      %v6036 = vrot.slane %v6029, %v6035
      %v6038 = vunpack.c.l.s4 1935823168
      %v6039 = vunpack.c.0.s8 %v6038
      %v6040 = vlaneseq
      %v6041 = vshrl.u32 %v6040, 7
      %v6042 = vsub.s32 %v6039, %v6041
      %v6043 = vrot.slane %v5413, %v6042
      %v6044 = vcombine.low %v6036, %v6043
      %v6046 = vunpack.c.l.s4 1935823168
      %v6047 = vunpack.c.0.s8 %v6046
      %v6048 = vlaneseq
      %v6049 = vshrl.u32 %v6048, 7
      %v6050 = vsub.s32 %v6047, %v6049
      %v6051 = vrot.slane %v6044, %v6050
      %v6052 = vcombine.low %v5410, %v5414
      %v6053 = vcombine.low %v5412, %v5438
      %v6055 = vunpack.c.l.s4 1935823168
      %v6056 = vunpack.c.0.s8 %v6055
      %v6057 = vlaneseq
      %v6058 = vshrl.u32 %v6057, 7
      %v6059 = vsub.s32 %v6056, %v6058
      %v6060 = vrot.slane %v6052, %v6059
      %v6062 = vunpack.c.l.s4 1935823168
      %v6063 = vunpack.c.0.s8 %v6062
      %v6064 = vlaneseq
      %v6065 = vshrl.u32 %v6064, 7
      %v6066 = vsub.s32 %v6063, %v6065
      %v6067 = vrot.slane %v6053, %v6066
      %v6068 = vcombine.low %v6060, %v6067
      %v6070 = vunpack.c.l.s4 1935823168
      %v6071 = vunpack.c.0.s8 %v6070
      %v6072 = vlaneseq
      %v6073 = vshrl.u32 %v6072, 7
      %v6074 = vsub.s32 %v6071, %v6073
      %v6075 = vrot.slane %v6068, %v6074
      %v6076 = vcombine.low %v5452, %v5462
      %v6078 = vunpack.c.l.s4 1935823168
      %v6079 = vunpack.c.0.s8 %v6078
      %v6080 = vlaneseq
      %v6081 = vshrl.u32 %v6080, 7
      %v6082 = vsub.s32 %v6079, %v6081
      %v6083 = vrot.slane %v6076, %v6082
      %v6085 = vunpack.c.l.s4 1935823168
      %v6086 = vunpack.c.0.s8 %v6085
      %v6087 = vlaneseq
      %v6088 = vshrl.u32 %v6087, 7
      %v6089 = vsub.s32 %v6086, %v6088
      %v6090 = vrot.slane %v5460, %v6089
      %v6091 = vcombine.low %v6083, %v6090
      %v6093 = vunpack.c.l.s4 1935823168
      %v6094 = vunpack.c.0.s8 %v6093
      %v6095 = vlaneseq
      %v6096 = vshrl.u32 %v6095, 7
      %v6097 = vsub.s32 %v6094, %v6096
      %v6098 = vrot.slane %v6091, %v6097
      %v6099 = vcombine.low %v5445, %v5461
      %v6100 = vcombine.low %v5459, %v5463
      %v6102 = vunpack.c.l.s4 1935823168
      %v6103 = vunpack.c.0.s8 %v6102
      %v6104 = vlaneseq
      %v6105 = vshrl.u32 %v6104, 7
      %v6106 = vsub.s32 %v6103, %v6105
      %v6107 = vrot.slane %v6099, %v6106
      %v6109 = vunpack.c.l.s4 1935823168
      %v6110 = vunpack.c.0.s8 %v6109
      %v6111 = vlaneseq
      %v6112 = vshrl.u32 %v6111, 7
      %v6113 = vsub.s32 %v6110, %v6112
      %v6114 = vrot.slane %v6100, %v6113
      %v6115 = vcombine.low %v6107, %v6114
      %v6117 = vunpack.c.l.s4 1935823168
      %v6118 = vunpack.c.0.s8 %v6117
      %v6119 = vlaneseq
      %v6120 = vshrl.u32 %v6119, 7
      %v6121 = vsub.s32 %v6118, %v6120
      %v6122 = vrot.slane %v6115, %v6121
      %v6123 = vcombine.low %v5487, %v5509
      %v6125 = vunpack.c.l.s4 1935823168
      %v6126 = vunpack.c.0.s8 %v6125
      %v6127 = vlaneseq
      %v6128 = vshrl.u32 %v6127, 7
      %v6129 = vsub.s32 %v6126, %v6128
      %v6130 = vrot.slane %v6123, %v6129
      %v6132 = vunpack.c.l.s4 1935823168
      %v6133 = vunpack.c.0.s8 %v6132
      %v6134 = vlaneseq
      %v6135 = vshrl.u32 %v6134, 7
      %v6136 = vsub.s32 %v6133, %v6135
      %v6137 = vrot.slane %v5501, %v6136
      %v6138 = vcombine.low %v6130, %v6137
      %v6140 = vunpack.c.l.s4 1935823168
      %v6141 = vunpack.c.0.s8 %v6140
      %v6142 = vlaneseq
      %v6143 = vshrl.u32 %v6142, 7
      %v6144 = vsub.s32 %v6141, %v6143
      %v6145 = vrot.slane %v6138, %v6144
      %v6146 = vcombine.low %v5511, %v5508
      %v6147 = vcombine.low %v5494, %v5510
      %v6149 = vunpack.c.l.s4 1935823168
      %v6150 = vunpack.c.0.s8 %v6149
      %v6151 = vlaneseq
      %v6152 = vshrl.u32 %v6151, 7
      %v6153 = vsub.s32 %v6150, %v6152
      %v6154 = vrot.slane %v6146, %v6153
      %v6156 = vunpack.c.l.s4 1935823168
      %v6157 = vunpack.c.0.s8 %v6156
      %v6158 = vlaneseq
      %v6159 = vshrl.u32 %v6158, 7
      %v6160 = vsub.s32 %v6157, %v6159
      %v6161 = vrot.slane %v6147, %v6160
      %v6162 = vcombine.low %v6154, %v6161
      %v6164 = vunpack.c.l.s4 1935823168
      %v6165 = vunpack.c.0.s8 %v6164
      %v6166 = vlaneseq
      %v6167 = vshrl.u32 %v6166, 7
      %v6168 = vsub.s32 %v6165, %v6167
      %v6169 = vrot.slane %v6162, %v6168
      %v6170 = vcombine.low %v5512, %v5534
      %v6172 = vunpack.c.l.s4 1935823168
      %v6173 = vunpack.c.0.s8 %v6172
      %v6174 = vlaneseq
      %v6175 = vshrl.u32 %v6174, 7
      %v6176 = vsub.s32 %v6173, %v6175
      %v6177 = vrot.slane %v6170, %v6176
      %v6179 = vunpack.c.l.s4 1935823168
      %v6180 = vunpack.c.0.s8 %v6179
      %v6181 = vlaneseq
      %v6182 = vshrl.u32 %v6181, 7
      %v6183 = vsub.s32 %v6180, %v6182
      %v6184 = vrot.slane %v5527, %v6183
      %v6185 = vcombine.low %v6177, %v6184
      %v6187 = vunpack.c.l.s4 1935823168
      %v6188 = vunpack.c.0.s8 %v6187
      %v6189 = vlaneseq
      %v6190 = vshrl.u32 %v6189, 7
      %v6191 = vsub.s32 %v6188, %v6190
      %v6192 = vrot.slane %v6185, %v6191
      %6221 = vst.msk [vmem:[%s310] sm:$0xf] %vm4811, %v5558
      %vm6222 = vcmask 518144
      %6223 = vst.msk [vmem:[%s310 + $0x4] sm:$0x7] %vm6222, %v5581
      %6224 = vst.msk [vmem:[%s310 + $0x8] sm:$0xf] %vm4811, %v5605
      %6225 = vst.msk [vmem:[%s310 + $0xc] sm:$0x7] %vm6222, %v5628
      %6226 = vst.msk [vmem:[%s310 + $0x10] sm:$0xf] %vm4811, %v5652
      %6227 = vst.msk [vmem:[%s310 + $0x14] sm:$0x7] %vm6222, %v5675
      %6228 = vst.msk [vmem:[%s310 + $0x18] sm:$0xf] %vm4811, %v5699
      %6229 = vst.msk [vmem:[%s310 + $0x1c] sm:$0x7] %vm6222, %v5722
      %6230 = vst.msk [vmem:[%s310 + $0x20] sm:$0xf] %vm4811, %v5746
      %6231 = vst.msk [vmem:[%s310 + $0x24] sm:$0x7] %vm6222, %v5769
      %6232 = vst.msk [vmem:[%s310 + $0x28] sm:$0xf] %vm4811, %v5793
      %6233 = vst.msk [vmem:[%s310 + $0x2c] sm:$0x7] %vm6222, %v5816
      %6234 = vst.msk [vmem:[%s310 + $0x30] sm:$0xf] %vm4811, %v5840
      %6235 = vst.msk [vmem:[%s310 + $0x34] sm:$0x7] %vm6222, %v5863
      %6236 = vst.msk [vmem:[%s310 + $0x38] sm:$0xf] %vm4811, %v5887
      %6237 = vst.msk [vmem:[%s310 + $0x3c] sm:$0x7] %vm6222, %v5910
      %6238 = vst.msk [vmem:[%s310 + $0x40] sm:$0xf] %vm4811, %v5934
      %6239 = vst.msk [vmem:[%s310 + $0x44] sm:$0x7] %vm6222, %v5957
      %6240 = vst.msk [vmem:[%s310 + $0x48] sm:$0xf] %vm4811, %v5981
      %6241 = vst.msk [vmem:[%s310 + $0x4c] sm:$0x7] %vm6222, %v6004
      %6242 = vst.msk [vmem:[%s310 + $0x50] sm:$0xf] %vm4811, %v6028
      %6243 = vst.msk [vmem:[%s310 + $0x54] sm:$0x7] %vm6222, %v6051
      %6244 = vst.msk [vmem:[%s310 + $0x58] sm:$0xf] %vm4811, %v6075
      %6245 = vst.msk [vmem:[%s310 + $0x5c] sm:$0x7] %vm6222, %v6098
      %6246 = vst.msk [vmem:[%s310 + $0x60] sm:$0xf] %vm4811, %v6122
      %6247 = vst.msk [vmem:[%s310 + $0x64] sm:$0x7] %vm6222, %v6145
      %6248 = vst.msk [vmem:[%s310 + $0x68] sm:$0xf] %vm4811, %v6169
      %6249 = vst.msk [vmem:[%s310 + $0x6c] sm:$0x7] %vm6222, %v6192
      %s6250 = smul.u32 14, %s23
      %p6251 = scmp.lt.s32.totalorder %s22, 1
      %s6252 = scalar_select %p6251, %s22, 1
      %p6253 = scmp.lt.s32.totalorder %s6250, 13
      %s6254 = scalar_select %p6253, %s6250, 13
      %s6255 = smul.addr %s6254, 2
      %s6256 = smul.addr %s6252, 28
      %s6257 = sadd.s32 %s6255, %s6256
      %s6258 = smul.addr %s6257, 4
      %s6259 = scalar_lea.vmem %s5, %s6258
      %p6260 = scmp.lt.s32.totalorder %s22, 1
      %s6261 = scalar_select %p6260, %s22, 1
      %s6262 = smul.addr %s6261, 2
      %s6263 = scalar_lea.vmem %s6, %s6262
      // Predicated region
      $region45: #{noise_estimator_forward.4} parent=39 // pred_check
        %p6264 = pneg %p170
      $region46: #{noise_estimator_forward.4} parent=39 // pred_check_branch
        %6266 = sbr.rel (%p6264) target = $region48
      $region47: #{noise_estimator_forward.4} parent=39 // pred_region
        %s6267 = smul.u32 14, %s23
      $region48: #{noise_estimator_forward.4} parent=39 // pred_fallthru
        _
      // Predicated region
      $region49: #{noise_estimator_forward.4} parent=39 // pred_check
        %p6268 = pneg %p196
      $region50: #{noise_estimator_forward.4} parent=39 // pred_check_branch
        %6270 = sbr.rel (%p6268) target = $region52
      $region51: #{noise_estimator_forward.4} parent=39 // pred_region
        _
      $region52: #{noise_estimator_forward.4} parent=39 // pred_fallthru
        _
    $region40: #{noise_estimator_forward.4} parent=5 // pred_fallthru
      _
    %p6271 = scmp.le.s32.totalorder 2, %s13
    // Predicated region
    $region53: #{noise_estimator_forward.4} parent=5 // pred_check
      %p6272 = pneg %p6271
    $region54: #{noise_estimator_forward.4} parent=5 // pred_check_branch
      %6274 = sbr.rel (%p6272) target = $region56
    $region55: #{noise_estimator_forward.4} parent=5 // pred_region
      %s6275 = ssub.s32 %s13, 2
      // Predicated region
      $region57: #{noise_estimator_forward.4} parent=55 // pred_check
        %p6276 = pneg %p176
      $region58: #{noise_estimator_forward.4} parent=55 // pred_check_branch
        %6278 = sbr.rel (%p6276) target = $region60
      $region59: #{noise_estimator_forward.4} parent=55 // pred_region
        %s6279 = smul.u32 14, %s25
        %p6280 = scmp.lt.s32.totalorder %s24, 1
        %s6281 = scalar_select %p6280, %s24, 1
        %p6282 = scmp.lt.s32.totalorder %s6279, 13
        %s6283 = scalar_select %p6282, %s6279, 13
        %s6284 = smul.addr %s6283, 2
        %s6285 = smul.addr %s6281, 28
        %s6286 = sadd.s32 %s6284, %s6285
        %s6287 = smul.addr %s6286, 4
        %s6288 = scalar_lea.vmem %s5, %s6287
      $region60: #{noise_estimator_forward.4} parent=55 // pred_fallthru
        _
      // Predicated region
      $region61: #{noise_estimator_forward.4} parent=55 // pred_check
        %p6289 = pneg %p202
      $region62: #{noise_estimator_forward.4} parent=55 // pred_check_branch
        %6291 = sbr.rel (%p6289) target = $region64
      $region63: #{noise_estimator_forward.4} parent=55 // pred_region
        %p6292 = scmp.lt.s32.totalorder %s24, 1
        %s6293 = scalar_select %p6292, %s24, 1
        %s6294 = smul.addr %s6293, 2
        %s6295 = scalar_lea.vmem %s6, %s6294
      $region64: #{noise_estimator_forward.4} parent=55 // pred_fallthru
        _
    $region56: #{noise_estimator_forward.4} parent=5 // pred_fallthru
      _
  $region6: #{noise_estimator_forward.4} parent=0 // loop_footer
    %s17 = sadd.s32 1, %s13
  $region7: #{noise_estimator_forward.4} parent=0 // loop_footer_branch
    %12 = sbr.rel target = $region3
  $region8: #{noise_estimator_forward.4} parent=0 // loop_exit
    _

</llo_original>
